<compile_context>
chip_gen: v7x
topology: tpu7x:2x2x1
jax: 0.10.0
libtpu: 0.0.40
codegen_flags: <defaults>
</compile_context>

<pallas_src>
import functools
import math

import jax
import jax.numpy as jnp
from jax import lax
from jax.experimental import pallas as pl
from jax.experimental.pallas import tpu as pltpu


_VMEM_LIMIT = 48 * 1024 * 1024          # <= v7x's 64 MiB physical VMEM
_NEG_MASK = float(jnp.finfo(jnp.float32).min) / 2.0   # dtype-aware key mask


def _tile(dim, pref, quantum):
    """Largest tile <= pref that divides dim and is a multiple of `quantum`
    (TPU (8,128) block constraint); falls back to the full dim."""
    if dim <= pref:
        return dim
    t = (pref // quantum) * quantum
    while t >= quantum:
        if dim % t == 0:
            return t
        t -= quantum
    return dim


def _cparams(*sem):
    return pltpu.CompilerParams(dimension_semantics=sem,
                                vmem_limit_bytes=_VMEM_LIMIT)


# ----------------------------------------------------------------------------
# Pallas kernels
# ----------------------------------------------------------------------------

def _layernorm_f32(x, g, b, eps):
    mu = jnp.mean(x, axis=-1, keepdims=True)
    xc = x - mu
    var = jnp.mean(xc * xc, axis=-1, keepdims=True)
    return xc * lax.rsqrt(var + eps) * g + b


def matmul_bias_kernel(x_ref, w_ref, b_ref, o_ref, acc_ref, *, activation):
    """Tiled out = act(x @ w + b) with f32 accumulator over the K grid axis."""
    @pl.when(pl.program_id(2) == 0)
    def _init():
        acc_ref[...] = jnp.zeros_like(acc_ref)

    acc_ref[...] += jnp.dot(x_ref[...], w_ref[...],
                            preferred_element_type=jnp.float32)

    @pl.when(pl.program_id(2) == pl.num_programs(2) - 1)
    def _finalize():
        acc = acc_ref[...] + b_ref[...].astype(jnp.float32)
        if activation == "quick_gelu":
            acc = acc * pl.reciprocal(1.0 + jnp.exp(-1.702 * acc), approx=True)
        o_ref[...] = acc.astype(o_ref.dtype)


def layernorm_kernel(x_ref, g_ref, b_ref, o_ref, *, eps):
    y = _layernorm_f32(x_ref[...].astype(jnp.float32),
                       g_ref[...].astype(jnp.float32),
                       b_ref[...].astype(jnp.float32), eps)
    o_ref[...] = y.astype(o_ref.dtype)


def ln_matmul_kernel(x_ref, g_ref, b_ref, w_ref, bias_ref, o_ref, *,
                     eps, activation):
    """Fused LayerNorm(x) @ w + bias (+ QuickGELU).  Full K per tile."""
    y = _layernorm_f32(x_ref[...].astype(jnp.float32),
                       g_ref[...].astype(jnp.float32),
                       b_ref[...].astype(jnp.float32), eps)
    acc = jnp.dot(y.astype(x_ref.dtype), w_ref[...],
                  preferred_element_type=jnp.float32)
    acc = acc + bias_ref[...].astype(jnp.float32)
    if activation == "quick_gelu":
        acc = acc * pl.reciprocal(1.0 + jnp.exp(-1.702 * acc), approx=True)
    o_ref[...] = acc.astype(o_ref.dtype)


def attention_kernel(qkv_ref, m_ref, o_ref, *, n_head, scale):
    """SDPA for one batch element, all heads; qkv is (1, L, 3E) fused."""
    qkv = qkv_ref[0]                                   # (L, 3E)
    E = qkv.shape[-1] // 3
    Dh = E // n_head
    mask = m_ref[0].astype(jnp.float32)                # (1, L) additive key mask
    outs = []
    for h in range(n_head):
        lo = h * Dh
        q = qkv[:, lo:lo + Dh] * scale                 # scale Q once (L*Dh ops)
        k = qkv[:, E + lo:E + lo + Dh]
        v = qkv[:, 2 * E + lo:2 * E + lo + Dh]
        # contract last dims of q and k: no explicit transpose of K.
        s = lax.dot_general(q, k, (((1,), (1,)), ((), ())),
                            preferred_element_type=jnp.float32)
        s = s + mask
        s = s - jnp.max(s, axis=-1, keepdims=True)
        p = jnp.exp(s)
        p = p * pl.reciprocal(jnp.sum(p, axis=-1, keepdims=True), approx=True)
        outs.append(jnp.dot(p.astype(qkv.dtype), v,
                            preferred_element_type=jnp.float32))
    out = outs[0] if n_head == 1 else jnp.concatenate(outs, axis=-1)
    o_ref[0] = out.astype(o_ref.dtype)                 # lane-dense (L, E) store


def dwconv_kernel(x_ref, w_ref, b_ref, o_ref):
    """Depthwise 3x3 stride-1 conv; taps built from VMEM slices (no im2col)."""
    x = x_ref[0].astype(jnp.float32)                   # (H+2, W+2, C)
    w = w_ref[...].astype(jnp.float32)                 # (3, 3, C)
    H = x.shape[0] - 2
    W = x.shape[1] - 2
    acc = jnp.zeros((H, W, x.shape[2]), jnp.float32)
    for kh in range(3):
        for kw in range(3):
            acc = acc + x[kh:kh + H, kw:kw + W, :] * w[kh:kh + 1, kw:kw + 1, :]
    acc = acc + b_ref[...].astype(jnp.float32)         # (1, C) broadcast
    o_ref[0] = acc.astype(o_ref.dtype)


def gate_mlp_kernel(x_ref, w_ref, b_ref, g_ref, beta_ref, o_ref, *, eps):
    """PosCNN tokens_attention fused: gate -> Linear -> QuickGELU -> LayerNorm."""
    x = x_ref[...].astype(jnp.float32)
    att = jnp.mean(x, axis=-1, keepdims=True)
    gate = pl.reciprocal(1.0 + jnp.exp(-att), approx=True)         # sigmoid
    xg = (x * gate).astype(x_ref.dtype)
    h = jnp.dot(xg, w_ref[...], preferred_element_type=jnp.float32)
    h = h + b_ref[...].astype(jnp.float32)
    h = h * pl.reciprocal(1.0 + jnp.exp(-1.702 * h), approx=True)  # QuickGELU
    y = _layernorm_f32(h, g_ref[...].astype(jnp.float32),
                       beta_ref[...].astype(jnp.float32), eps)
    o_ref[...] = y.astype(o_ref.dtype)


def cosine_sim_kernel(a_ref, b_ref, o_ref, *, eps):
    """sim[i, j] = <a_i, b_j> / max(||a_i|| * ||b_j||, eps)."""
    a = a_ref[...]
    b = b_ref[...]
    num = lax.dot_general(a, b, (((1,), (1,)), ((), ())),
                          preferred_element_type=jnp.float32)
    a32 = a.astype(jnp.float32)
    b32 = b.astype(jnp.float32)
    na = jnp.sqrt(jnp.sum(a32 * a32, axis=-1, keepdims=True))      # (Bi, 1)
    nb = jnp.sqrt(jnp.sum(b32 * b32, axis=-1, keepdims=True))      # (Bt, 1)
    den = jnp.maximum(na * nb.T, eps)
    o_ref[...] = (num * pl.reciprocal(den, approx=True)).astype(o_ref.dtype)


# ----------------------------------------------------------------------------
# Pallas wrappers
# ----------------------------------------------------------------------------

def pallas_linear(x, w, b=None, activation=None,
                  tm_pref=256, tn_pref=256, tk_pref=512):
    """x: (M, K), w: (K, N) pre-transposed, b: (N,) or None."""
    M, K = x.shape
    N = w.shape[1]
    if b is None:
        b = jnp.zeros((N,), x.dtype)
    tm = _tile(M, tm_pref, 8)
    tn = _tile(N, tn_pref, 128)
    tk = _tile(K, tk_pref, 128)
    grid = (M // tm, N // tn, K // tk)
    return pl.pallas_call(
        functools.partial(matmul_bias_kernel, activation=activation),
        out_shape=jax.ShapeDtypeStruct((M, N), x.dtype),
        grid=grid,
        in_specs=[pl.BlockSpec((tm, tk), lambda i, j, k: (i, k)),
                  pl.BlockSpec((tk, tn), lambda i, j, k: (k, j)),
                  pl.BlockSpec((1, tn), lambda i, j, k: (0, j))],
        out_specs=pl.BlockSpec((tm, tn), lambda i, j, k: (i, j)),
        scratch_shapes=[pltpu.VMEM((tm, tn), jnp.float32)],
        compiler_params=_cparams("parallel", "parallel", "arbitrary"),
    )(x, w, b.reshape(1, N))


def pallas_ln_linear(x, g, bln, w, b=None, activation=None, eps=1e-5,
                     tm_pref=256, tn_pref=512):
    """Fused LayerNorm (over K) + linear.  x: (M, K), w: (K, N)."""
    M, K = x.shape
    N = w.shape[1]
    if b is None:
        b = jnp.zeros((N,), x.dtype)
    tm = _tile(M, tm_pref, 8)
    tn = _tile(N, tn_pref, 128)
    grid = (M // tm, N // tn)
    return pl.pallas_call(
        functools.partial(ln_matmul_kernel, eps=eps, activation=activation),
        out_shape=jax.ShapeDtypeStruct((M, N), x.dtype),
        grid=grid,
        in_specs=[pl.BlockSpec((tm, K), lambda i, j: (i, 0)),
                  pl.BlockSpec((1, K), lambda i, j: (0, 0)),
                  pl.BlockSpec((1, K), lambda i, j: (0, 0)),
                  pl.BlockSpec((K, tn), lambda i, j: (0, j)),
                  pl.BlockSpec((1, tn), lambda i, j: (0, j))],
        out_specs=pl.BlockSpec((tm, tn), lambda i, j: (i, j)),
        compiler_params=_cparams("parallel", "parallel"),
    )(x, g.reshape(1, K), bln.reshape(1, K), w, b.reshape(1, N))


def pallas_layer_norm(x, g, b, eps=1e-5, tm_pref=512):
    shp = x.shape
    D = shp[-1]
    x2 = x.reshape(-1, D)
    M = x2.shape[0]
    tm = _tile(M, tm_pref, 8)
    out = pl.pallas_call(
        functools.partial(layernorm_kernel, eps=eps),
        out_shape=jax.ShapeDtypeStruct(x2.shape, x.dtype),
        grid=(M // tm,),
        in_specs=[pl.BlockSpec((tm, D), lambda i: (i, 0)),
                  pl.BlockSpec((1, D), lambda i: (0, 0)),
                  pl.BlockSpec((1, D), lambda i: (0, 0))],
        out_specs=pl.BlockSpec((tm, D), lambda i: (i, 0)),
        compiler_params=_cparams("parallel"),
    )(x2, g.reshape(1, D), b.reshape(1, D))
    return out.reshape(shp)


def pallas_mha(x, p, n_head, key_padding_mask=None):
    """ln_1 -> nn.MultiheadAttention(q=k=v) -> out_proj.  x: (B, L, E).
    QKV projection fuses the LayerNorm; heads are split inside the attention
    kernel (no HBM transposes, lane-dense (L, E) output)."""
    B, L, E = x.shape
    assert n_head >= 1 and E % n_head == 0, (E, n_head)
    Dh = E // n_head
    qkv = pallas_ln_linear(x.reshape(B * L, E), p["ln1_g"], p["ln1_b"],
                           p["in_w"], p["in_b"])
    qkv = qkv.reshape(B, L, 3 * E)
    if key_padding_mask is None:
        maskf = jnp.zeros((B, 1, L), jnp.float32)
    else:
        maskf = jnp.where(key_padding_mask, _NEG_MASK, 0.0).astype(jnp.float32)
        maskf = maskf.reshape(B, 1, L)
    out = pl.pallas_call(
        functools.partial(attention_kernel, n_head=n_head,
                          scale=1.0 / math.sqrt(Dh)),
        out_shape=jax.ShapeDtypeStruct((B, L, E), x.dtype),
        grid=(B,),
        in_specs=[pl.BlockSpec((1, L, 3 * E), lambda b: (b, 0, 0)),
                  pl.BlockSpec((1, 1, L), lambda b: (b, 0, 0))],
        out_specs=pl.BlockSpec((1, L, E), lambda b: (b, 0, 0)),
        compiler_params=_cparams("parallel"),
    )(qkv, maskf)
    out = pallas_linear(out.reshape(B * L, E), p["out_w"], p["out_b"])
    return out.reshape(B, L, E)


def pallas_cosine_sim(a, b, eps=1e-8):
    return pl.pallas_call(
        functools.partial(cosine_sim_kernel, eps=eps),
        out_shape=jax.ShapeDtypeStruct((a.shape[0], b.shape[0]), jnp.float32),
        in_specs=[pl.BlockSpec(memory_space=pltpu.MemorySpace.VMEM),
                  pl.BlockSpec(memory_space=pltpu.MemorySpace.VMEM)],
        out_specs=pl.BlockSpec(memory_space=pltpu.MemorySpace.VMEM),
    )(a, b)


# ----------------------------------------------------------------------------
# Model blocks (glue in plain JAX, compute in Pallas)
# ----------------------------------------------------------------------------

def residual_attention_block(x, p, n_head, key_padding_mask=None):
    x = x + pallas_mha(x, p, n_head, key_padding_mask)          # ln_1 fused in
    B, L, E = x.shape
    h = pallas_ln_linear(x.reshape(B * L, E), p["ln2_g"], p["ln2_b"],
                         p["fc_w"], p["fc_b"], activation="quick_gelu")
    h = pallas_linear(h, p["proj_w"], p["proj_b"])
    return x + h.reshape(B, L, E)


def pos_cnn(x, p):
    """PosCNN: depthwise 3x3 stride-2 conv (pad 1) on non-cls tokens + LN +
    gated (gate -> Linear -> QuickGELU -> LN) residual."""
    B, Np1, C = x.shape
    cls = x[:, :1, :]
    t = x[:, 1:, :]
    N = Np1 - 1
    H = W = int(math.isqrt(N))
    OH = (H - 1) // 2 + 1
    OW = (W - 1) // 2 + 1
    feat = t.reshape(B, H, W, C)                                  # NHWC
    padded = jnp.pad(feat, ((0, 0), (1, 1), (1, 1), (0, 0)))
    full = pl.pallas_call(
        dwconv_kernel,
        out_shape=jax.ShapeDtypeStruct((B, H, W, C), x.dtype),
        grid=(B,),
        in_specs=[pl.BlockSpec((1, H + 2, W + 2, C), lambda b: (b, 0, 0, 0)),
                  pl.BlockSpec((3, 3, C), lambda b: (0, 0, 0)),
                  pl.BlockSpec((1, C), lambda b: (0, 0))],
        out_specs=pl.BlockSpec((1, H, W, C), lambda b: (b, 0, 0, 0)),
        compiler_params=_cparams("parallel"),
    )(padded, p["conv_w"], p["conv_b"].reshape(1, C))
    tokens = full[:, ::2, ::2, :].reshape(B, OH * OW, C)          # stride-2 pick
    tokens = pallas_layer_norm(tokens, p["ln1_g"], p["ln1_b"])
    # tokens_attention, fully fused in one kernel
    M = B * OH * OW
    tm = _tile(M, 256, 8)
    g = pl.pallas_call(
        functools.partial(gate_mlp_kernel, eps=1e-5),
        out_shape=jax.ShapeDtypeStruct((M, C), x.dtype),
        grid=(M // tm,),
        in_specs=[pl.BlockSpec((tm, C), lambda i: (i, 0)),
                  pl.BlockSpec((C, C), lambda i: (0, 0)),
                  pl.BlockSpec((1, C), lambda i: (0, 0)),
                  pl.BlockSpec((1, C), lambda i: (0, 0)),
                  pl.BlockSpec((1, C), lambda i: (0, 0))],
        out_specs=pl.BlockSpec((tm, C), lambda i: (i, 0)),
        compiler_params=_cparams("parallel"),
    )(tokens.reshape(M, C), p["mlp_w"], p["mlp_b"].reshape(1, C),
      p["mlp_ln_g"].reshape(1, C), p["mlp_ln_b"].reshape(1, C))
    tokens = tokens + g.reshape(B, OH * OW, C)
    return jnp.concatenate([cls, tokens], axis=1)


def encode_image(image, vp, cfg):
    B = image.shape[0]
    psz = cfg["vision_patch_size"]
    vw = cfg["vision_width"]
    heads = cfg["vision_heads"]
    Hp = image.shape[2] // psz
    # patch embedding == conv(kernel=stride=patch) == matmul on flattened patches
    x = image.reshape(B, 3, Hp, psz, Hp, psz)
    x = jnp.transpose(x, (0, 2, 4, 1, 3, 5)).reshape(B * Hp * Hp, 3 * psz * psz)
    x = pallas_linear(x, vp["conv1_w"], None).reshape(B, Hp * Hp, vw)
    cls = jnp.broadcast_to(vp["class_embedding"].reshape(1, 1, vw), (B, 1, vw))
    x = jnp.concatenate([cls, x], axis=1)
    x = x + vp["positional_embedding"][None]
    x = pallas_layer_norm(x, vp["ln_pre_g"], vp["ln_pre_b"])
    # plain transformer (vision_layers // 2 blocks)
    for blk in vp["blocks"]:
        x = residual_attention_block(x, blk, heads)
    # pyramid transformer (vision_layers // 6 layers); reproduces the reference
    # indexing resblocks[i], resblocks[i + 1] exactly
    for i in range(cfg["pyr_layers"]):
        x = pos_cnn(x, vp["down"][i])
        x = residual_attention_block(x, vp["pyr_blocks"][i], heads)
        x = residual_attention_block(x, vp["pyr_blocks"][i + 1], heads)
    # ln_post + projection fused, applied to the cls row only (LN is row-wise)
    return pallas_ln_linear(x[:, 0, :], vp["ln_post_g"], vp["ln_post_b"],
                            vp["proj"], None)


def encode_text(text, tp, cfg, key_padding_mask):
    x = tp["token_embedding"][text]                     # gather kept in XLA
    x = x + tp["positional_embedding"][None]
    for blk in tp["blocks"]:
        x = residual_attention_block(x, blk, cfg["transformer_heads"],
                                     key_padding_mask)
    # ln_final + text projection fused on token 0
    return pallas_ln_linear(x[:, 0, :], tp["lnf_g"], tp["lnf_b"],
                            tp["text_projection"], None)


def clip_forward(params, image, text, attn_mask, cfg):
    key_padding_mask = (attn_mask == 0)                 # True = padded key
    img_f = encode_image(image, params["visual"], cfg)  # (Bi, embed_dim)
    txt_f = encode_text(text, params["text"], cfg, key_padding_mask)
    return pallas_cosine_sim(img_f, txt_f)              # (Bi, Bt)


# ----------------------------------------------------------------------------
# Deterministic parameter init (shapes follow the PyTorch __init__, but weights
# are stored pre-transposed in (in_features, out_features) layout).
# ----------------------------------------------------------------------------

def init_resblock(key, d):
    k = jax.random.split(key, 4)
    std = d ** -0.5
    return dict(
        in_w=jax.random.normal(k[0], (d, 3 * d), jnp.float32) * std,
        in_b=jnp.zeros((3 * d,), jnp.float32),
        out_w=jax.random.normal(k[1], (d, d), jnp.float32) * std,
        out_b=jnp.zeros((d,), jnp.float32),
        ln1_g=jnp.ones((d,), jnp.float32), ln1_b=jnp.zeros((d,), jnp.float32),
        fc_w=jax.random.normal(k[2], (d, 4 * d), jnp.float32) * (2 * d) ** -0.5,
        fc_b=jnp.zeros((4 * d,), jnp.float32),
        proj_w=jax.random.normal(k[3], (4 * d, d), jnp.float32) * std,
        proj_b=jnp.zeros((d,), jnp.float32),
        ln2_g=jnp.ones((d,), jnp.float32), ln2_b=jnp.zeros((d,), jnp.float32),
    )


def init_poscnn(key, c):
    k = jax.random.split(key, 2)
    return dict(
        conv_w=jax.random.normal(k[0], (3, 3, c), jnp.float32) / 3.0,  # depthwise
        conv_b=jnp.zeros((c,), jnp.float32),
        ln1_g=jnp.ones((c,), jnp.float32), ln1_b=jnp.zeros((c,), jnp.float32),
        mlp_w=jax.random.normal(k[1], (c, c), jnp.float32) * c ** -0.5,
        mlp_b=jnp.zeros((c,), jnp.float32),
        mlp_ln_g=jnp.ones((c,), jnp.float32), mlp_ln_b=jnp.zeros((c,), jnp.float32),
    )


def init_params(key, cfg):
    vw = cfg["vision_width"]
    tw = cfg["transformer_width"]
    ed = cfg["embed_dim"]
    psz = cfg["vision_patch_size"]
    res = cfg["image_resolution"]
    n_tok = (res // psz) ** 2 + 1
    n_vis_blocks = cfg["vision_layers"] // 2
    n_pyr = cfg["pyr_layers"]
    keys = iter(jax.random.split(key, 128))
    scale = vw ** -0.5

    visual = dict(
        conv1_w=jax.random.normal(next(keys), (3 * psz * psz, vw), jnp.float32) * 0.02,
        class_embedding=jax.random.normal(next(keys), (vw,), jnp.float32) * scale,
        positional_embedding=jax.random.normal(next(keys), (n_tok, vw), jnp.float32) * scale,
        ln_pre_g=jnp.ones((vw,), jnp.float32), ln_pre_b=jnp.zeros((vw,), jnp.float32),
        ln_post_g=jnp.ones((vw,), jnp.float32), ln_post_b=jnp.zeros((vw,), jnp.float32),
        proj=jax.random.normal(next(keys), (vw, ed), jnp.float32) * scale,
        blocks=[init_resblock(next(keys), vw) for _ in range(n_vis_blocks)],
        down=[init_poscnn(next(keys), vw) for _ in range(n_pyr)],
        pyr_blocks=[init_resblock(next(keys), vw) for _ in range(2 * n_pyr)],
    )
    text = dict(
        token_embedding=jax.random.normal(next(keys), (cfg["vocab_size"], tw), jnp.float32) * 0.02,
        positional_embedding=jax.random.normal(next(keys), (cfg["context_length"], tw), jnp.float32) * 0.01,
        blocks=[init_resblock(next(keys), tw) for _ in range(cfg["transformer_layers"])],
        lnf_g=jnp.ones((tw,), jnp.float32), lnf_b=jnp.zeros((tw,), jnp.float32),
        text_projection=jax.random.normal(next(keys), (tw, ed), jnp.float32) * tw ** -0.5,
    )
    return dict(visual=visual, text=text)


# ----------------------------------------------------------------------------
# Main
# ----------------------------------------------------------------------------

if __name__ == "__main__":
    cfg = dict(
        embed_dim=16,
        image_resolution=16,
        vision_layers=6,          # -> 3 plain blocks, 1 pyramid layer
        vision_width=64,
        vision_patch_size=4,
        context_length=8,
        vocab_size=100,
        transformer_width=32,
        transformer_heads=4,
        transformer_layers=2,
    )
    cfg["vision_heads"] = cfg["vision_width"] // 64
    cfg["pyr_layers"] = cfg["vision_layers"] // 6
    assert cfg["vision_heads"] >= 1, "vision_width must be >= 64"

    key = jax.random.PRNGKey(0)
    k_params, k_img, k_txt = jax.random.split(key, 3)
    params = init_params(k_params, cfg)

    batch_image, batch_text = 2, 3
    image = jax.random.normal(
        k_img, (batch_image, 3, cfg["image_resolution"], cfg["image_resolution"]),
        jnp.float32)
    text = jax.random.randint(
        k_txt, (batch_text, cfg["context_length"]), 0, cfg["vocab_size"], jnp.int32)
    attn_mask = jnp.array(
        [[1, 1, 1, 1, 1, 1, 1, 1],
         [1, 1, 1, 1, 1, 0, 0, 0],
         [1, 1, 1, 1, 1, 1, 0, 0]], dtype=jnp.int32)

    fwd = jax.jit(functools.partial(clip_forward, cfg=cfg))
    sim = fwd(params, image, text, attn_mask)
    sim = jax.block_until_ready(sim)

    assert sim.shape == (batch_image, batch_text), sim.shape
    assert bool(jnp.all(jnp.isfinite(sim)))
    print("KERNEL_OK")
</pallas_src>

<mosaic_0001>
module attributes {stable_mosaic.version = 11 : i64} {
  func.func @matmul_bias_kernel(%arg0: i32, %arg1: i32, %arg2: i32, %arg3: memref<32x48xf32, #tpu.memory_space<vmem>>, %arg4: memref<48x64xf32, #tpu.memory_space<vmem>>, %arg5: memref<1x64xf32, #tpu.memory_space<vmem>>, %arg6: memref<32x64xf32, #tpu.memory_space<vmem>>, %arg7: memref<32x64xf32, #tpu.memory_space<vmem>>) attributes {dimension_semantics = [#tpu.dimension_semantics<parallel>, #tpu.dimension_semantics<parallel>, #tpu.dimension_semantics<arbitrary>], iteration_bounds = array<i64: 1, 1, 1>, scalar_prefetch = 0 : i64, scratch_operands = 1 : i64, tpu.core_type = #tpu.core_type<tc>, window_params = [{transform_indices = @transform_0, window_bounds = array<i64: 32, 48>}, {transform_indices = @transform_1, window_bounds = array<i64: 48, 64>}, {transform_indices = @transform_2, window_bounds = array<i64: 1, 64>}, {transform_indices = @transform_3, window_bounds = array<i64: 32, 64>}]} {
    %c0_i32 = arith.constant 0 : i32
    %0 = arith.cmpi eq, %arg2, %c0_i32 : i32
    %1 = arith.extui %0 : i1 to i32
    %c0_i32_0 = arith.constant 0 : i32
    %2 = arith.cmpi ne, %1, %c0_i32_0 : i32
    scf.if %2 {
      %cst_10 = arith.constant 0.000000e+00 : f32
      %12 = vector.broadcast %cst_10 : f32 to vector<32x64xf32>
      %c0_11 = arith.constant 0 : index
      %c0_12 = arith.constant 0 : index
      %13 = vector.load %arg7[%c0_11, %c0_12] : memref<32x64xf32, #tpu.memory_space<vmem>>, vector<32x64xf32>
      tpu.vector_store %arg7[%c0_11, %c0_12], %12 {strides = array<i32>} : memref<32x64xf32, #tpu.memory_space<vmem>>, vector<32x64xf32>,
    } else {
    }
    %c0 = arith.constant 0 : index
    %c0_1 = arith.constant 0 : index
    %3 = vector.load %arg7[%c0, %c0_1] : memref<32x64xf32, #tpu.memory_space<vmem>>, vector<32x64xf32>
    %c0_2 = arith.constant 0 : index
    %c0_3 = arith.constant 0 : index
    %4 = vector.load %arg3[%c0_2, %c0_3] : memref<32x48xf32, #tpu.memory_space<vmem>>, vector<32x48xf32>
    %c0_4 = arith.constant 0 : index
    %c0_5 = arith.constant 0 : index
    %5 = vector.load %arg4[%c0_4, %c0_5] : memref<48x64xf32, #tpu.memory_space<vmem>>, vector<48x64xf32>
    %cst = arith.constant dense<0.000000e+00> : vector<32x64xf32>
    %6 = tpu.matmul %4, %5, %cst {dimension_numbers = #tpu.dot_dimension_numbers<[1], [0], [0], [1], [0, 0, 1, 1], [], []>} : vector<32x48xf32>, vector<48x64xf32>, vector<32x64xf32> -> vector<32x64xf32>
    %7 = arith.addf %3, %6 : vector<32x64xf32>
    %c0_6 = arith.constant 0 : index
    %c0_7 = arith.constant 0 : index
    %8 = vector.load %arg7[%c0_6, %c0_7] : memref<32x64xf32, #tpu.memory_space<vmem>>, vector<32x64xf32>
    tpu.vector_store %arg7[%c0_6, %c0_7], %7 {strides = array<i32>} : memref<32x64xf32, #tpu.memory_space<vmem>>, vector<32x64xf32>,
    %c0_i32_8 = arith.constant 0 : i32
    %9 = arith.cmpi eq, %arg2, %c0_i32_8 : i32
    %10 = arith.extui %9 : i1 to i32
    %c0_i32_9 = arith.constant 0 : i32
    %11 = arith.cmpi ne, %10, %c0_i32_9 : i32
    scf.if %11 {
      %c0_10 = arith.constant 0 : index
      %c0_11 = arith.constant 0 : index
      %12 = vector.load %arg7[%c0_10, %c0_11] : memref<32x64xf32, #tpu.memory_space<vmem>>, vector<32x64xf32>
      %c0_12 = arith.constant 0 : index
      %c0_13 = arith.constant 0 : index
      %13 = vector.load %arg5[%c0_12, %c0_13] : memref<1x64xf32, #tpu.memory_space<vmem>>, vector<1x64xf32>
      %14 = vector.broadcast %13 : vector<1x64xf32> to vector<32x64xf32>
      %15 = arith.addf %12, %14 : vector<32x64xf32>
      %c0_14 = arith.constant 0 : index
      %c0_15 = arith.constant 0 : index
      %16 = vector.load %arg6[%c0_14, %c0_15] : memref<32x64xf32, #tpu.memory_space<vmem>>, vector<32x64xf32>
      tpu.vector_store %arg6[%c0_14, %c0_15], %15 {strides = array<i32>} : memref<32x64xf32, #tpu.memory_space<vmem>>, vector<32x64xf32>,
    } else {
    }
    return
  }
  func.func @transform_0(%arg0: i32, %arg1: i32, %arg2: i32) -> (i32, i32) {
    %c0_i32 = arith.constant 0 : i32
    return %arg0, %arg2 : i32, i32
  }
  func.func @transform_1(%arg0: i32, %arg1: i32, %arg2: i32) -> (i32, i32) {
    %c0_i32 = arith.constant 0 : i32
    return %arg2, %arg1 : i32, i32
  }
  func.func @transform_2(%arg0: i32, %arg1: i32, %arg2: i32) -> (i32, i32) {
    %c0_i32 = arith.constant 0 : i32
    %c0_i32_0 = arith.constant 0 : i32
    return %c0_i32, %arg1 : i32, i32
  }
  func.func @transform_3(%arg0: i32, %arg1: i32, %arg2: i32) -> (i32, i32) {
    %c0_i32 = arith.constant 0 : i32
    return %arg0, %arg1 : i32, i32
  }
}

module attributes {stable_mosaic.version = 11 : i64} {
  func.func @ln_matmul_kernel(%arg0: i32, %arg1: i32, %arg2: memref<34x64xf32, #tpu.memory_space<vmem>>, %arg3: memref<1x64xf32, #tpu.memory_space<vmem>>, %arg4: memref<1x64xf32, #tpu.memory_space<vmem>>, %arg5: memref<64x192xf32, #tpu.memory_space<vmem>>, %arg6: memref<1x192xf32, #tpu.memory_space<vmem>>, %arg7: memref<34x192xf32, #tpu.memory_space<vmem>>) attributes {dimension_semantics = [#tpu.dimension_semantics<parallel>, #tpu.dimension_semantics<parallel>], iteration_bounds = array<i64: 1, 1>, scalar_prefetch = 0 : i64, scratch_operands = 0 : i64, tpu.core_type = #tpu.core_type<tc>, window_params = [{transform_indices = @transform_0, window_bounds = array<i64: 34, 64>}, {pipeline_mode = #tpu.pipeline_mode<synchronous>, transform_indices = @transform_1, window_bounds = array<i64: 1, 64>}, {pipeline_mode = #tpu.pipeline_mode<synchronous>, transform_indices = @transform_2, window_bounds = array<i64: 1, 64>}, {transform_indices = @transform_3, window_bounds = array<i64: 64, 192>}, {transform_indices = @transform_4, window_bounds = array<i64: 1, 192>}, {transform_indices = @transform_5, window_bounds = array<i64: 34, 192>}]} {
    %c0 = arith.constant 0 : index
    %c0_0 = arith.constant 0 : index
    %0 = vector.load %arg2[%c0, %c0_0] : memref<34x64xf32, #tpu.memory_space<vmem>>, vector<34x64xf32>
    %c0_1 = arith.constant 0 : index
    %c0_2 = arith.constant 0 : index
    %1 = vector.load %arg3[%c0_1, %c0_2] : memref<1x64xf32, #tpu.memory_space<vmem>>, vector<1x64xf32>
    %c0_3 = arith.constant 0 : index
    %c0_4 = arith.constant 0 : index
    %2 = vector.load %arg4[%c0_3, %c0_4] : memref<1x64xf32, #tpu.memory_space<vmem>>, vector<1x64xf32>
    %cst = arith.constant dense<0.000000e+00> : vector<34xf32>
    %3 = vector.multi_reduction <add>, %0, %cst [1] : vector<34x64xf32> to vector<34xf32>
    %4 = vector.shape_cast %3 : vector<34xf32> to vector<34x1xf32>
    %cst_5 = arith.constant 6.400000e+01 : f32
    %5 = vector.broadcast %cst_5 : f32 to vector<34x1xf32>
    %6 = arith.divf %4, %5 : vector<34x1xf32>
    %7 = vector.broadcast %6 : vector<34x1xf32> to vector<34x64xf32>
    %8 = arith.subf %0, %7 : vector<34x64xf32>
    %9 = arith.mulf %8, %8 : vector<34x64xf32>
    %cst_6 = arith.constant dense<0.000000e+00> : vector<34xf32>
    %10 = vector.multi_reduction <add>, %9, %cst_6 [1] : vector<34x64xf32> to vector<34xf32>
    %11 = vector.shape_cast %10 : vector<34xf32> to vector<34x1xf32>
    %cst_7 = arith.constant 6.400000e+01 : f32
    %12 = vector.broadcast %cst_7 : f32 to vector<34x1xf32>
    %13 = arith.divf %11, %12 : vector<34x1xf32>
    %cst_8 = arith.constant 9.99999974E-6 : f32
    %14 = vector.broadcast %cst_8 : f32 to vector<34x1xf32>
    %15 = arith.addf %13, %14 : vector<34x1xf32>
    %16 = math.rsqrt %15 : vector<34x1xf32>
    %17 = vector.broadcast %16 : vector<34x1xf32> to vector<34x64xf32>
    %18 = arith.mulf %8, %17 : vector<34x64xf32>
    %19 = vector.broadcast %1 : vector<1x64xf32> to vector<34x64xf32>
    %20 = arith.mulf %18, %19 : vector<34x64xf32>
    %21 = vector.broadcast %2 : vector<1x64xf32> to vector<34x64xf32>
    %22 = arith.addf %20, %21 : vector<34x64xf32>
    %c0_9 = arith.constant 0 : index
    %c0_10 = arith.constant 0 : index
    %23 = vector.load %arg5[%c0_9, %c0_10] : memref<64x192xf32, #tpu.memory_space<vmem>>, vector<64x192xf32>
    %cst_11 = arith.constant dense<0.000000e+00> : vector<34x192xf32>
    %24 = tpu.matmul %22, %23, %cst_11 {dimension_numbers = #tpu.dot_dimension_numbers<[1], [0], [0], [1], [0, 0, 1, 1], [], []>} : vector<34x64xf32>, vector<64x192xf32>, vector<34x192xf32> -> vector<34x192xf32>
    %c0_12 = arith.constant 0 : index
    %c0_13 = arith.constant 0 : index
    %25 = vector.load %arg6[%c0_12, %c0_13] : memref<1x192xf32, #tpu.memory_space<vmem>>, vector<1x192xf32>
    %26 = vector.broadcast %25 : vector<1x192xf32> to vector<34x192xf32>
    %27 = arith.addf %24, %26 : vector<34x192xf32>
    %c0_14 = arith.constant 0 : index
    %c0_15 = arith.constant 0 : index
    %28 = vector.load %arg7[%c0_14, %c0_15] : memref<34x192xf32, #tpu.memory_space<vmem>>, vector<34x192xf32>
    tpu.vector_store %arg7[%c0_14, %c0_15], %27 {strides = array<i32>} : memref<34x192xf32, #tpu.memory_space<vmem>>, vector<34x192xf32>,
    return
  }
  func.func @transform_0(%arg0: i32, %arg1: i32) -> (i32, i32) {
    %c0_i32 = arith.constant 0 : i32
    %c0_i32_0 = arith.constant 0 : i32
    return %arg0, %c0_i32 : i32, i32
  }
  func.func @transform_1(%arg0: i32, %arg1: i32) -> (i32, i32) {
    %c0_i32 = arith.constant 0 : i32
    %c0_i32_0 = arith.constant 0 : i32
    %c0_i32_1 = arith.constant 0 : i32
    return %c0_i32, %c0_i32_0 : i32, i32
  }
  func.func @transform_2(%arg0: i32, %arg1: i32) -> (i32, i32) {
    %c0_i32 = arith.constant 0 : i32
    %c0_i32_0 = arith.constant 0 : i32
    %c0_i32_1 = arith.constant 0 : i32
    return %c0_i32, %c0_i32_0 : i32, i32
  }
  func.func @transform_3(%arg0: i32, %arg1: i32) -> (i32, i32) {
    %c0_i32 = arith.constant 0 : i32
    %c0_i32_0 = arith.constant 0 : i32
    return %c0_i32, %arg1 : i32, i32
  }
  func.func @transform_4(%arg0: i32, %arg1: i32) -> (i32, i32) {
    %c0_i32 = arith.constant 0 : i32
    %c0_i32_0 = arith.constant 0 : i32
    return %c0_i32, %arg1 : i32, i32
  }
  func.func @transform_5(%arg0: i32, %arg1: i32) -> (i32, i32) {
    %c0_i32 = arith.constant 0 : i32
    return %arg0, %arg1 : i32, i32
  }
}

module attributes {stable_mosaic.version = 11 : i64} {
  func.func @layernorm_kernel(%arg0: i32, %arg1: memref<34x64xf32, #tpu.memory_space<vmem>>, %arg2: memref<1x64xf32, #tpu.memory_space<vmem>>, %arg3: memref<1x64xf32, #tpu.memory_space<vmem>>, %arg4: memref<34x64xf32, #tpu.memory_space<vmem>>) attributes {dimension_semantics = [#tpu.dimension_semantics<parallel>], iteration_bounds = array<i64: 1>, scalar_prefetch = 0 : i64, scratch_operands = 0 : i64, tpu.core_type = #tpu.core_type<tc>, window_params = [{transform_indices = @transform_0, window_bounds = array<i64: 34, 64>}, {pipeline_mode = #tpu.pipeline_mode<synchronous>, transform_indices = @transform_1, window_bounds = array<i64: 1, 64>}, {pipeline_mode = #tpu.pipeline_mode<synchronous>, transform_indices = @transform_2, window_bounds = array<i64: 1, 64>}, {transform_indices = @transform_3, window_bounds = array<i64: 34, 64>}]} {
    %c0 = arith.constant 0 : index
    %c0_0 = arith.constant 0 : index
    %0 = vector.load %arg1[%c0, %c0_0] : memref<34x64xf32, #tpu.memory_space<vmem>>, vector<34x64xf32>
    %c0_1 = arith.constant 0 : index
    %c0_2 = arith.constant 0 : index
    %1 = vector.load %arg2[%c0_1, %c0_2] : memref<1x64xf32, #tpu.memory_space<vmem>>, vector<1x64xf32>
    %c0_3 = arith.constant 0 : index
    %c0_4 = arith.constant 0 : index
    %2 = vector.load %arg3[%c0_3, %c0_4] : memref<1x64xf32, #tpu.memory_space<vmem>>, vector<1x64xf32>
    %cst = arith.constant dense<0.000000e+00> : vector<34xf32>
    %3 = vector.multi_reduction <add>, %0, %cst [1] : vector<34x64xf32> to vector<34xf32>
    %4 = vector.shape_cast %3 : vector<34xf32> to vector<34x1xf32>
    %cst_5 = arith.constant 6.400000e+01 : f32
    %5 = vector.broadcast %cst_5 : f32 to vector<34x1xf32>
    %6 = arith.divf %4, %5 : vector<34x1xf32>
    %7 = vector.broadcast %6 : vector<34x1xf32> to vector<34x64xf32>
    %8 = arith.subf %0, %7 : vector<34x64xf32>
    %9 = arith.mulf %8, %8 : vector<34x64xf32>
    %cst_6 = arith.constant dense<0.000000e+00> : vector<34xf32>
    %10 = vector.multi_reduction <add>, %9, %cst_6 [1] : vector<34x64xf32> to vector<34xf32>
    %11 = vector.shape_cast %10 : vector<34xf32> to vector<34x1xf32>
    %cst_7 = arith.constant 6.400000e+01 : f32
    %12 = vector.broadcast %cst_7 : f32 to vector<34x1xf32>
    %13 = arith.divf %11, %12 : vector<34x1xf32>
    %cst_8 = arith.constant 9.99999974E-6 : f32
    %14 = vector.broadcast %cst_8 : f32 to vector<34x1xf32>
    %15 = arith.addf %13, %14 : vector<34x1xf32>
    %16 = math.rsqrt %15 : vector<34x1xf32>
    %17 = vector.broadcast %16 : vector<34x1xf32> to vector<34x64xf32>
    %18 = arith.mulf %8, %17 : vector<34x64xf32>
    %19 = vector.broadcast %1 : vector<1x64xf32> to vector<34x64xf32>
    %20 = arith.mulf %18, %19 : vector<34x64xf32>
    %21 = vector.broadcast %2 : vector<1x64xf32> to vector<34x64xf32>
    %22 = arith.addf %20, %21 : vector<34x64xf32>
    %c0_9 = arith.constant 0 : index
    %c0_10 = arith.constant 0 : index
    %23 = vector.load %arg4[%c0_9, %c0_10] : memref<34x64xf32, #tpu.memory_space<vmem>>, vector<34x64xf32>
    tpu.vector_store %arg4[%c0_9, %c0_10], %22 {strides = array<i32>} : memref<34x64xf32, #tpu.memory_space<vmem>>, vector<34x64xf32>,
    return
  }
  func.func @transform_0(%arg0: i32) -> (i32, i32) {
    %c0_i32 = arith.constant 0 : i32
    %c0_i32_0 = arith.constant 0 : i32
    return %arg0, %c0_i32 : i32, i32
  }
  func.func @transform_1(%arg0: i32) -> (i32, i32) {
    %c0_i32 = arith.constant 0 : i32
    %c0_i32_0 = arith.constant 0 : i32
    %c0_i32_1 = arith.constant 0 : i32
    return %c0_i32, %c0_i32_0 : i32, i32
  }
  func.func @transform_2(%arg0: i32) -> (i32, i32) {
    %c0_i32 = arith.constant 0 : i32
    %c0_i32_0 = arith.constant 0 : i32
    %c0_i32_1 = arith.constant 0 : i32
    return %c0_i32, %c0_i32_0 : i32, i32
  }
  func.func @transform_3(%arg0: i32) -> (i32, i32) {
    %c0_i32 = arith.constant 0 : i32
    %c0_i32_0 = arith.constant 0 : i32
    return %arg0, %c0_i32 : i32, i32
  }
}

module attributes {stable_mosaic.version = 11 : i64} {
  func.func @attention_kernel(%arg0: i32, %arg1: memref<1x17x192xf32, #tpu.memory_space<vmem>>, %arg2: memref<1x1x17xf32, #tpu.memory_space<vmem>>, %arg3: memref<1x17x64xf32, #tpu.memory_space<vmem>>) attributes {dimension_semantics = [#tpu.dimension_semantics<parallel>], iteration_bounds = array<i64: 2>, scalar_prefetch = 0 : i64, scratch_operands = 0 : i64, tpu.core_type = #tpu.core_type<tc>, window_params = [{transform_indices = @transform_0, window_bounds = array<i64: 1, 17, 192>}, {transform_indices = @transform_1, window_bounds = array<i64: 1, 1, 17>}, {transform_indices = @transform_2, window_bounds = array<i64: 1, 17, 64>}]} {
    %c0 = arith.constant 0 : index
    %c0_0 = arith.constant 0 : index
    %c0_1 = arith.constant 0 : index
    %0 = vector.load %arg1[%c0, %c0_0, %c0_1] : memref<1x17x192xf32, #tpu.memory_space<vmem>>, vector<1x17x192xf32>
    %1 = vector.shape_cast %0 : vector<1x17x192xf32> to vector<17x192xf32>
    %c0_2 = arith.constant 0 : index
    %c0_3 = arith.constant 0 : index
    %c0_4 = arith.constant 0 : index
    %2 = vector.load %arg2[%c0_2, %c0_3, %c0_4] : memref<1x1x17xf32, #tpu.memory_space<vmem>>, vector<1x1x17xf32>
    %3 = vector.shape_cast %2 : vector<1x1x17xf32> to vector<1x17xf32>
    %4 = vector.extract_strided_slice %1 {offsets = [0, 0], sizes = [17, 64], strides = [1, 1]} : vector<17x192xf32> to vector<17x64xf32>
    %cst = arith.constant 1.250000e-01 : f32
    %5 = vector.broadcast %cst : f32 to vector<17x64xf32>
    %6 = arith.mulf %4, %5 : vector<17x64xf32>
    %7 = vector.extract_strided_slice %1 {offsets = [0, 64], sizes = [17, 64], strides = [1, 1]} : vector<17x192xf32> to vector<17x64xf32>
    %8 = vector.extract_strided_slice %1 {offsets = [0, 128], sizes = [17, 64], strides = [1, 1]} : vector<17x192xf32> to vector<17x64xf32>
    %cst_5 = arith.constant dense<0.000000e+00> : vector<17x17xf32>
    %9 = tpu.matmul %6, %7, %cst_5 {dimension_numbers = #tpu.dot_dimension_numbers<[1], [1], [0], [0], [0, 0, 1, 0], [], []>} : vector<17x64xf32>, vector<17x64xf32>, vector<17x17xf32> -> vector<17x17xf32>
    %10 = vector.broadcast %3 : vector<1x17xf32> to vector<17x17xf32>
    %11 = arith.addf %9, %10 : vector<17x17xf32>
    %cst_6 = arith.constant dense<0xFF800000> : vector<17xf32>
    %12 = vector.multi_reduction <maximumf>, %11, %cst_6 [1] : vector<17x17xf32> to vector<17xf32>
    %13 = vector.shape_cast %12 : vector<17xf32> to vector<17x1xf32>
    %14 = vector.broadcast %13 : vector<17x1xf32> to vector<17x17xf32>
    %15 = arith.subf %11, %14 : vector<17x17xf32>
    %16 = math.exp %15 : vector<17x17xf32>
    %cst_7 = arith.constant dense<0.000000e+00> : vector<17xf32>
    %17 = vector.multi_reduction <add>, %16, %cst_7 [1] : vector<17x17xf32> to vector<17xf32>
    %18 = vector.shape_cast %17 : vector<17xf32> to vector<17x1xf32>
    %19 = tpu.reciprocal %18 {approx = true} : vector<17x1xf32> -> vector<17x1xf32>
    %20 = vector.broadcast %19 : vector<17x1xf32> to vector<17x17xf32>
    %21 = arith.mulf %16, %20 : vector<17x17xf32>
    %cst_8 = arith.constant dense<0.000000e+00> : vector<17x64xf32>
    %22 = tpu.matmul %21, %8, %cst_8 {dimension_numbers = #tpu.dot_dimension_numbers<[1], [0], [0], [1], [0, 0, 1, 1], [], []>} : vector<17x17xf32>, vector<17x64xf32>, vector<17x64xf32> -> vector<17x64xf32>
    %c0_9 = arith.constant 0 : index
    %c0_10 = arith.constant 0 : index
    %c0_11 = arith.constant 0 : index
    %23 = vector.load %arg3[%c0_9, %c0_10, %c0_11] : memref<1x17x64xf32, #tpu.memory_space<vmem>>, vector<1x17x64xf32>
    %24 = vector.shape_cast %23 : vector<1x17x64xf32> to vector<17x64xf32>
    %25 = vector.shape_cast %22 : vector<17x64xf32> to vector<1x17x64xf32>
    tpu.vector_store %arg3[%c0_9, %c0_10, %c0_11], %25 {strides = array<i32>} : memref<1x17x64xf32, #tpu.memory_space<vmem>>, vector<1x17x64xf32>,
    return
  }
  func.func @transform_0(%arg0: i32) -> (i32, i32, i32) {
    %c0_i32 = arith.constant 0 : i32
    %c0_i32_0 = arith.constant 0 : i32
    %c0_i32_1 = arith.constant 0 : i32
    return %arg0, %c0_i32, %c0_i32_0 : i32, i32, i32
  }
  func.func @transform_1(%arg0: i32) -> (i32, i32, i32) {
    %c0_i32 = arith.constant 0 : i32
    %c0_i32_0 = arith.constant 0 : i32
    %c0_i32_1 = arith.constant 0 : i32
    return %arg0, %c0_i32, %c0_i32_0 : i32, i32, i32
  }
  func.func @transform_2(%arg0: i32) -> (i32, i32, i32) {
    %c0_i32 = arith.constant 0 : i32
    %c0_i32_0 = arith.constant 0 : i32
    %c0_i32_1 = arith.constant 0 : i32
    return %arg0, %c0_i32, %c0_i32_0 : i32, i32, i32
  }
}

module attributes {stable_mosaic.version = 11 : i64} {
  func.func @matmul_bias_kernel(%arg0: i32, %arg1: i32, %arg2: i32, %arg3: memref<34x64xf32, #tpu.memory_space<vmem>>, %arg4: memref<64x64xf32, #tpu.memory_space<vmem>>, %arg5: memref<1x64xf32, #tpu.memory_space<vmem>>, %arg6: memref<34x64xf32, #tpu.memory_space<vmem>>, %arg7: memref<34x64xf32, #tpu.memory_space<vmem>>) attributes {dimension_semantics = [#tpu.dimension_semantics<parallel>, #tpu.dimension_semantics<parallel>, #tpu.dimension_semantics<arbitrary>], iteration_bounds = array<i64: 1, 1, 1>, scalar_prefetch = 0 : i64, scratch_operands = 1 : i64, tpu.core_type = #tpu.core_type<tc>, window_params = [{transform_indices = @transform_0, window_bounds = array<i64: 34, 64>}, {transform_indices = @transform_1, window_bounds = array<i64: 64, 64>}, {transform_indices = @transform_2, window_bounds = array<i64: 1, 64>}, {transform_indices = @transform_3, window_bounds = array<i64: 34, 64>}]} {
    %c0_i32 = arith.constant 0 : i32
    %0 = arith.cmpi eq, %arg2, %c0_i32 : i32
    %1 = arith.extui %0 : i1 to i32
    %c0_i32_0 = arith.constant 0 : i32
    %2 = arith.cmpi ne, %1, %c0_i32_0 : i32
    scf.if %2 {
      %cst_10 = arith.constant 0.000000e+00 : f32
      %12 = vector.broadcast %cst_10 : f32 to vector<34x64xf32>
      %c0_11 = arith.constant 0 : index
      %c0_12 = arith.constant 0 : index
      %13 = vector.load %arg7[%c0_11, %c0_12] : memref<34x64xf32, #tpu.memory_space<vmem>>, vector<34x64xf32>
      tpu.vector_store %arg7[%c0_11, %c0_12], %12 {strides = array<i32>} : memref<34x64xf32, #tpu.memory_space<vmem>>, vector<34x64xf32>,
    } else {
    }
    %c0 = arith.constant 0 : index
    %c0_1 = arith.constant 0 : index
    %3 = vector.load %arg7[%c0, %c0_1] : memref<34x64xf32, #tpu.memory_space<vmem>>, vector<34x64xf32>
    %c0_2 = arith.constant 0 : index
    %c0_3 = arith.constant 0 : index
    %4 = vector.load %arg3[%c0_2, %c0_3] : memref<34x64xf32, #tpu.memory_space<vmem>>, vector<34x64xf32>
    %c0_4 = arith.constant 0 : index
    %c0_5 = arith.constant 0 : index
    %5 = vector.load %arg4[%c0_4, %c0_5] : memref<64x64xf32, #tpu.memory_space<vmem>>, vector<64x64xf32>
    %cst = arith.constant dense<0.000000e+00> : vector<34x64xf32>
    %6 = tpu.matmul %4, %5, %cst {dimension_numbers = #tpu.dot_dimension_numbers<[1], [0], [0], [1], [0, 0, 1, 1], [], []>} : vector<34x64xf32>, vector<64x64xf32>, vector<34x64xf32> -> vector<34x64xf32>
    %7 = arith.addf %3, %6 : vector<34x64xf32>
    %c0_6 = arith.constant 0 : index
    %c0_7 = arith.constant 0 : index
    %8 = vector.load %arg7[%c0_6, %c0_7] : memref<34x64xf32, #tpu.memory_space<vmem>>, vector<34x64xf32>
    tpu.vector_store %arg7[%c0_6, %c0_7], %7 {strides = array<i32>} : memref<34x64xf32, #tpu.memory_space<vmem>>, vector<34x64xf32>,
    %c0_i32_8 = arith.constant 0 : i32
    %9 = arith.cmpi eq, %arg2, %c0_i32_8 : i32
    %10 = arith.extui %9 : i1 to i32
    %c0_i32_9 = arith.constant 0 : i32
    %11 = arith.cmpi ne, %10, %c0_i32_9 : i32
    scf.if %11 {
      %c0_10 = arith.constant 0 : index
      %c0_11 = arith.constant 0 : index
      %12 = vector.load %arg7[%c0_10, %c0_11] : memref<34x64xf32, #tpu.memory_space<vmem>>, vector<34x64xf32>
      %c0_12 = arith.constant 0 : index
      %c0_13 = arith.constant 0 : index
      %13 = vector.load %arg5[%c0_12, %c0_13] : memref<1x64xf32, #tpu.memory_space<vmem>>, vector<1x64xf32>
      %14 = vector.broadcast %13 : vector<1x64xf32> to vector<34x64xf32>
      %15 = arith.addf %12, %14 : vector<34x64xf32>
      %c0_14 = arith.constant 0 : index
      %c0_15 = arith.constant 0 : index
      %16 = vector.load %arg6[%c0_14, %c0_15] : memref<34x64xf32, #tpu.memory_space<vmem>>, vector<34x64xf32>
      tpu.vector_store %arg6[%c0_14, %c0_15], %15 {strides = array<i32>} : memref<34x64xf32, #tpu.memory_space<vmem>>, vector<34x64xf32>,
    } else {
    }
    return
  }
  func.func @transform_0(%arg0: i32, %arg1: i32, %arg2: i32) -> (i32, i32) {
    %c0_i32 = arith.constant 0 : i32
    return %arg0, %arg2 : i32, i32
  }
  func.func @transform_1(%arg0: i32, %arg1: i32, %arg2: i32) -> (i32, i32) {
    %c0_i32 = arith.constant 0 : i32
    return %arg2, %arg1 : i32, i32
  }
  func.func @transform_2(%arg0: i32, %arg1: i32, %arg2: i32) -> (i32, i32) {
    %c0_i32 = arith.constant 0 : i32
    %c0_i32_0 = arith.constant 0 : i32
    return %c0_i32, %arg1 : i32, i32
  }
  func.func @transform_3(%arg0: i32, %arg1: i32, %arg2: i32) -> (i32, i32) {
    %c0_i32 = arith.constant 0 : i32
    return %arg0, %arg1 : i32, i32
  }
}

module attributes {stable_mosaic.version = 11 : i64} {
  func.func @ln_matmul_kernel(%arg0: i32, %arg1: i32, %arg2: memref<34x64xf32, #tpu.memory_space<vmem>>, %arg3: memref<1x64xf32, #tpu.memory_space<vmem>>, %arg4: memref<1x64xf32, #tpu.memory_space<vmem>>, %arg5: memref<64x256xf32, #tpu.memory_space<vmem>>, %arg6: memref<1x256xf32, #tpu.memory_space<vmem>>, %arg7: memref<34x256xf32, #tpu.memory_space<vmem>>) attributes {dimension_semantics = [#tpu.dimension_semantics<parallel>, #tpu.dimension_semantics<parallel>], iteration_bounds = array<i64: 1, 1>, scalar_prefetch = 0 : i64, scratch_operands = 0 : i64, tpu.core_type = #tpu.core_type<tc>, window_params = [{transform_indices = @transform_0, window_bounds = array<i64: 34, 64>}, {pipeline_mode = #tpu.pipeline_mode<synchronous>, transform_indices = @transform_1, window_bounds = array<i64: 1, 64>}, {pipeline_mode = #tpu.pipeline_mode<synchronous>, transform_indices = @transform_2, window_bounds = array<i64: 1, 64>}, {transform_indices = @transform_3, window_bounds = array<i64: 64, 256>}, {transform_indices = @transform_4, window_bounds = array<i64: 1, 256>}, {transform_indices = @transform_5, window_bounds = array<i64: 34, 256>}]} {
    %c0 = arith.constant 0 : index
    %c0_0 = arith.constant 0 : index
    %0 = vector.load %arg2[%c0, %c0_0] : memref<34x64xf32, #tpu.memory_space<vmem>>, vector<34x64xf32>
    %c0_1 = arith.constant 0 : index
    %c0_2 = arith.constant 0 : index
    %1 = vector.load %arg3[%c0_1, %c0_2] : memref<1x64xf32, #tpu.memory_space<vmem>>, vector<1x64xf32>
    %c0_3 = arith.constant 0 : index
    %c0_4 = arith.constant 0 : index
    %2 = vector.load %arg4[%c0_3, %c0_4] : memref<1x64xf32, #tpu.memory_space<vmem>>, vector<1x64xf32>
    %cst = arith.constant dense<0.000000e+00> : vector<34xf32>
    %3 = vector.multi_reduction <add>, %0, %cst [1] : vector<34x64xf32> to vector<34xf32>
    %4 = vector.shape_cast %3 : vector<34xf32> to vector<34x1xf32>
    %cst_5 = arith.constant 6.400000e+01 : f32
    %5 = vector.broadcast %cst_5 : f32 to vector<34x1xf32>
    %6 = arith.divf %4, %5 : vector<34x1xf32>
    %7 = vector.broadcast %6 : vector<34x1xf32> to vector<34x64xf32>
    %8 = arith.subf %0, %7 : vector<34x64xf32>
    %9 = arith.mulf %8, %8 : vector<34x64xf32>
    %cst_6 = arith.constant dense<0.000000e+00> : vector<34xf32>
    %10 = vector.multi_reduction <add>, %9, %cst_6 [1] : vector<34x64xf32> to vector<34xf32>
    %11 = vector.shape_cast %10 : vector<34xf32> to vector<34x1xf32>
    %cst_7 = arith.constant 6.400000e+01 : f32
    %12 = vector.broadcast %cst_7 : f32 to vector<34x1xf32>
    %13 = arith.divf %11, %12 : vector<34x1xf32>
    %cst_8 = arith.constant 9.99999974E-6 : f32
    %14 = vector.broadcast %cst_8 : f32 to vector<34x1xf32>
    %15 = arith.addf %13, %14 : vector<34x1xf32>
    %16 = math.rsqrt %15 : vector<34x1xf32>
    %17 = vector.broadcast %16 : vector<34x1xf32> to vector<34x64xf32>
    %18 = arith.mulf %8, %17 : vector<34x64xf32>
    %19 = vector.broadcast %1 : vector<1x64xf32> to vector<34x64xf32>
    %20 = arith.mulf %18, %19 : vector<34x64xf32>
    %21 = vector.broadcast %2 : vector<1x64xf32> to vector<34x64xf32>
    %22 = arith.addf %20, %21 : vector<34x64xf32>
    %c0_9 = arith.constant 0 : index
    %c0_10 = arith.constant 0 : index
    %23 = vector.load %arg5[%c0_9, %c0_10] : memref<64x256xf32, #tpu.memory_space<vmem>>, vector<64x256xf32>
    %cst_11 = arith.constant dense<0.000000e+00> : vector<34x256xf32>
    %24 = tpu.matmul %22, %23, %cst_11 {dimension_numbers = #tpu.dot_dimension_numbers<[1], [0], [0], [1], [0, 0, 1, 1], [], []>} : vector<34x64xf32>, vector<64x256xf32>, vector<34x256xf32> -> vector<34x256xf32>
    %c0_12 = arith.constant 0 : index
    %c0_13 = arith.constant 0 : index
    %25 = vector.load %arg6[%c0_12, %c0_13] : memref<1x256xf32, #tpu.memory_space<vmem>>, vector<1x256xf32>
    %26 = vector.broadcast %25 : vector<1x256xf32> to vector<34x256xf32>
    %27 = arith.addf %24, %26 : vector<34x256xf32>
    %cst_14 = arith.constant -1.702000e+00 : f32
    %28 = vector.broadcast %cst_14 : f32 to vector<34x256xf32>
    %29 = arith.mulf %28, %27 : vector<34x256xf32>
    %30 = math.exp %29 : vector<34x256xf32>
    %cst_15 = arith.constant 1.000000e+00 : f32
    %31 = vector.broadcast %cst_15 : f32 to vector<34x256xf32>
    %32 = arith.addf %31, %30 : vector<34x256xf32>
    %33 = tpu.reciprocal %32 {approx = true} : vector<34x256xf32> -> vector<34x256xf32>
    %34 = arith.mulf %27, %33 : vector<34x256xf32>
    %c0_16 = arith.constant 0 : index
    %c0_17 = arith.constant 0 : index
    %35 = vector.load %arg7[%c0_16, %c0_17] : memref<34x256xf32, #tpu.memory_space<vmem>>, vector<34x256xf32>
    tpu.vector_store %arg7[%c0_16, %c0_17], %34 {strides = array<i32>} : memref<34x256xf32, #tpu.memory_space<vmem>>, vector<34x256xf32>,
    return
  }
  func.func @transform_0(%arg0: i32, %arg1: i32) -> (i32, i32) {
    %c0_i32 = arith.constant 0 : i32
    %c0_i32_0 = arith.constant 0 : i32
    return %arg0, %c0_i32 : i32, i32
  }
  func.func @transform_1(%arg0: i32, %arg1: i32) -> (i32, i32) {
    %c0_i32 = arith.constant 0 : i32
    %c0_i32_0 = arith.constant 0 : i32
    %c0_i32_1 = arith.constant 0 : i32
    return %c0_i32, %c0_i32_0 : i32, i32
  }
  func.func @transform_2(%arg0: i32, %arg1: i32) -> (i32, i32) {
    %c0_i32 = arith.constant 0 : i32
    %c0_i32_0 = arith.constant 0 : i32
    %c0_i32_1 = arith.constant 0 : i32
    return %c0_i32, %c0_i32_0 : i32, i32
  }
  func.func @transform_3(%arg0: i32, %arg1: i32) -> (i32, i32) {
    %c0_i32 = arith.constant 0 : i32
    %c0_i32_0 = arith.constant 0 : i32
    return %c0_i32, %arg1 : i32, i32
  }
  func.func @transform_4(%arg0: i32, %arg1: i32) -> (i32, i32) {
    %c0_i32 = arith.constant 0 : i32
    %c0_i32_0 = arith.constant 0 : i32
    return %c0_i32, %arg1 : i32, i32
  }
  func.func @transform_5(%arg0: i32, %arg1: i32) -> (i32, i32) {
    %c0_i32 = arith.constant 0 : i32
    return %arg0, %arg1 : i32, i32
  }
}

module attributes {stable_mosaic.version = 11 : i64} {
  func.func @matmul_bias_kernel(%arg0: i32, %arg1: i32, %arg2: i32, %arg3: memref<34x256xf32, #tpu.memory_space<vmem>>, %arg4: memref<256x64xf32, #tpu.memory_space<vmem>>, %arg5: memref<1x64xf32, #tpu.memory_space<vmem>>, %arg6: memref<34x64xf32, #tpu.memory_space<vmem>>, %arg7: memref<34x64xf32, #tpu.memory_space<vmem>>) attributes {dimension_semantics = [#tpu.dimension_semantics<parallel>, #tpu.dimension_semantics<parallel>, #tpu.dimension_semantics<arbitrary>], iteration_bounds = array<i64: 1, 1, 1>, scalar_prefetch = 0 : i64, scratch_operands = 1 : i64, tpu.core_type = #tpu.core_type<tc>, window_params = [{transform_indices = @transform_0, window_bounds = array<i64: 34, 256>}, {transform_indices = @transform_1, window_bounds = array<i64: 256, 64>}, {transform_indices = @transform_2, window_bounds = array<i64: 1, 64>}, {transform_indices = @transform_3, window_bounds = array<i64: 34, 64>}]} {
    %c0_i32 = arith.constant 0 : i32
    %0 = arith.cmpi eq, %arg2, %c0_i32 : i32
    %1 = arith.extui %0 : i1 to i32
    %c0_i32_0 = arith.constant 0 : i32
    %2 = arith.cmpi ne, %1, %c0_i32_0 : i32
    scf.if %2 {
      %cst_10 = arith.constant 0.000000e+00 : f32
      %12 = vector.broadcast %cst_10 : f32 to vector<34x64xf32>
      %c0_11 = arith.constant 0 : index
      %c0_12 = arith.constant 0 : index
      %13 = vector.load %arg7[%c0_11, %c0_12] : memref<34x64xf32, #tpu.memory_space<vmem>>, vector<34x64xf32>
      tpu.vector_store %arg7[%c0_11, %c0_12], %12 {strides = array<i32>} : memref<34x64xf32, #tpu.memory_space<vmem>>, vector<34x64xf32>,
    } else {
    }
    %c0 = arith.constant 0 : index
    %c0_1 = arith.constant 0 : index
    %3 = vector.load %arg7[%c0, %c0_1] : memref<34x64xf32, #tpu.memory_space<vmem>>, vector<34x64xf32>
    %c0_2 = arith.constant 0 : index
    %c0_3 = arith.constant 0 : index
    %4 = vector.load %arg3[%c0_2, %c0_3] : memref<34x256xf32, #tpu.memory_space<vmem>>, vector<34x256xf32>
    %c0_4 = arith.constant 0 : index
    %c0_5 = arith.constant 0 : index
    %5 = vector.load %arg4[%c0_4, %c0_5] : memref<256x64xf32, #tpu.memory_space<vmem>>, vector<256x64xf32>
    %cst = arith.constant dense<0.000000e+00> : vector<34x64xf32>
    %6 = tpu.matmul %4, %5, %cst {dimension_numbers = #tpu.dot_dimension_numbers<[1], [0], [0], [1], [0, 0, 1, 1], [], []>} : vector<34x256xf32>, vector<256x64xf32>, vector<34x64xf32> -> vector<34x64xf32>
    %7 = arith.addf %3, %6 : vector<34x64xf32>
    %c0_6 = arith.constant 0 : index
    %c0_7 = arith.constant 0 : index
    %8 = vector.load %arg7[%c0_6, %c0_7] : memref<34x64xf32, #tpu.memory_space<vmem>>, vector<34x64xf32>
    tpu.vector_store %arg7[%c0_6, %c0_7], %7 {strides = array<i32>} : memref<34x64xf32, #tpu.memory_space<vmem>>, vector<34x64xf32>,
    %c0_i32_8 = arith.constant 0 : i32
    %9 = arith.cmpi eq, %arg2, %c0_i32_8 : i32
    %10 = arith.extui %9 : i1 to i32
    %c0_i32_9 = arith.constant 0 : i32
    %11 = arith.cmpi ne, %10, %c0_i32_9 : i32
    scf.if %11 {
      %c0_10 = arith.constant 0 : index
      %c0_11 = arith.constant 0 : index
      %12 = vector.load %arg7[%c0_10, %c0_11] : memref<34x64xf32, #tpu.memory_space<vmem>>, vector<34x64xf32>
      %c0_12 = arith.constant 0 : index
      %c0_13 = arith.constant 0 : index
      %13 = vector.load %arg5[%c0_12, %c0_13] : memref<1x64xf32, #tpu.memory_space<vmem>>, vector<1x64xf32>
      %14 = vector.broadcast %13 : vector<1x64xf32> to vector<34x64xf32>
      %15 = arith.addf %12, %14 : vector<34x64xf32>
      %c0_14 = arith.constant 0 : index
      %c0_15 = arith.constant 0 : index
      %16 = vector.load %arg6[%c0_14, %c0_15] : memref<34x64xf32, #tpu.memory_space<vmem>>, vector<34x64xf32>
      tpu.vector_store %arg6[%c0_14, %c0_15], %15 {strides = array<i32>} : memref<34x64xf32, #tpu.memory_space<vmem>>, vector<34x64xf32>,
    } else {
    }
    return
  }
  func.func @transform_0(%arg0: i32, %arg1: i32, %arg2: i32) -> (i32, i32) {
    %c0_i32 = arith.constant 0 : i32
    return %arg0, %arg2 : i32, i32
  }
  func.func @transform_1(%arg0: i32, %arg1: i32, %arg2: i32) -> (i32, i32) {
    %c0_i32 = arith.constant 0 : i32
    return %arg2, %arg1 : i32, i32
  }
  func.func @transform_2(%arg0: i32, %arg1: i32, %arg2: i32) -> (i32, i32) {
    %c0_i32 = arith.constant 0 : i32
    %c0_i32_0 = arith.constant 0 : i32
    return %c0_i32, %arg1 : i32, i32
  }
  func.func @transform_3(%arg0: i32, %arg1: i32, %arg2: i32) -> (i32, i32) {
    %c0_i32 = arith.constant 0 : i32
    return %arg0, %arg1 : i32, i32
  }
}

module attributes {stable_mosaic.version = 11 : i64} {
  func.func @dwconv_kernel(%arg0: i32, %arg1: memref<1x6x6x64xf32, #tpu.memory_space<vmem>>, %arg2: memref<3x3x64xf32, #tpu.memory_space<vmem>>, %arg3: memref<1x64xf32, #tpu.memory_space<vmem>>, %arg4: memref<1x4x4x64xf32, #tpu.memory_space<vmem>>) attributes {dimension_semantics = [#tpu.dimension_semantics<parallel>], iteration_bounds = array<i64: 2>, scalar_prefetch = 0 : i64, scratch_operands = 0 : i64, tpu.core_type = #tpu.core_type<tc>, window_params = [{transform_indices = @transform_0, window_bounds = array<i64: 1, 6, 6, 64>}, {pipeline_mode = #tpu.pipeline_mode<synchronous>, transform_indices = @transform_1, window_bounds = array<i64: 3, 3, 64>}, {pipeline_mode = #tpu.pipeline_mode<synchronous>, transform_indices = @transform_2, window_bounds = array<i64: 1, 64>}, {transform_indices = @transform_3, window_bounds = array<i64: 1, 4, 4, 64>}]} {
    %c0 = arith.constant 0 : index
    %c0_0 = arith.constant 0 : index
    %c0_1 = arith.constant 0 : index
    %c0_2 = arith.constant 0 : index
    %0 = vector.load %arg1[%c0, %c0_0, %c0_1, %c0_2] : memref<1x6x6x64xf32, #tpu.memory_space<vmem>>, vector<1x6x6x64xf32>
    %1 = vector.shape_cast %0 : vector<1x6x6x64xf32> to vector<6x6x64xf32>
    %c0_3 = arith.constant 0 : index
    %c0_4 = arith.constant 0 : index
    %c0_5 = arith.constant 0 : index
    %2 = vector.load %arg2[%c0_3, %c0_4, %c0_5] : memref<3x3x64xf32, #tpu.memory_space<vmem>>, vector<3x3x64xf32>
    %cst = arith.constant 0.000000e+00 : f32
    %3 = vector.broadcast %cst : f32 to vector<4x4x64xf32>
    %4 = vector.extract_strided_slice %1 {offsets = [0, 0, 0], sizes = [4, 4, 64], strides = [1, 1, 1]} : vector<6x6x64xf32> to vector<4x4x64xf32>
    %5 = vector.extract_strided_slice %2 {offsets = [0, 0, 0], sizes = [1, 1, 64], strides = [1, 1, 1]} : vector<3x3x64xf32> to vector<1x1x64xf32>
    %6 = vector.broadcast %5 : vector<1x1x64xf32> to vector<4x4x64xf32>
    %7 = arith.mulf %4, %6 : vector<4x4x64xf32>
    %8 = arith.addf %3, %7 : vector<4x4x64xf32>
    %9 = vector.extract_strided_slice %1 {offsets = [0, 1, 0], sizes = [4, 4, 64], strides = [1, 1, 1]} : vector<6x6x64xf32> to vector<4x4x64xf32>
    %10 = vector.extract_strided_slice %2 {offsets = [0, 1, 0], sizes = [1, 1, 64], strides = [1, 1, 1]} : vector<3x3x64xf32> to vector<1x1x64xf32>
    %11 = vector.broadcast %10 : vector<1x1x64xf32> to vector<4x4x64xf32>
    %12 = arith.mulf %9, %11 : vector<4x4x64xf32>
    %13 = arith.addf %8, %12 : vector<4x4x64xf32>
    %14 = vector.extract_strided_slice %1 {offsets = [0, 2, 0], sizes = [4, 4, 64], strides = [1, 1, 1]} : vector<6x6x64xf32> to vector<4x4x64xf32>
    %15 = vector.extract_strided_slice %2 {offsets = [0, 2, 0], sizes = [1, 1, 64], strides = [1, 1, 1]} : vector<3x3x64xf32> to vector<1x1x64xf32>
    %16 = vector.broadcast %15 : vector<1x1x64xf32> to vector<4x4x64xf32>
    %17 = arith.mulf %14, %16 : vector<4x4x64xf32>
    %18 = arith.addf %13, %17 : vector<4x4x64xf32>
    %19 = vector.extract_strided_slice %1 {offsets = [1, 0, 0], sizes = [4, 4, 64], strides = [1, 1, 1]} : vector<6x6x64xf32> to vector<4x4x64xf32>
    %20 = vector.extract_strided_slice %2 {offsets = [1, 0, 0], sizes = [1, 1, 64], strides = [1, 1, 1]} : vector<3x3x64xf32> to vector<1x1x64xf32>
    %21 = vector.broadcast %20 : vector<1x1x64xf32> to vector<4x4x64xf32>
    %22 = arith.mulf %19, %21 : vector<4x4x64xf32>
    %23 = arith.addf %18, %22 : vector<4x4x64xf32>
    %24 = vector.extract_strided_slice %1 {offsets = [1, 1, 0], sizes = [4, 4, 64], strides = [1, 1, 1]} : vector<6x6x64xf32> to vector<4x4x64xf32>
    %25 = vector.extract_strided_slice %2 {offsets = [1, 1, 0], sizes = [1, 1, 64], strides = [1, 1, 1]} : vector<3x3x64xf32> to vector<1x1x64xf32>
    %26 = vector.broadcast %25 : vector<1x1x64xf32> to vector<4x4x64xf32>
    %27 = arith.mulf %24, %26 : vector<4x4x64xf32>
    %28 = arith.addf %23, %27 : vector<4x4x64xf32>
    %29 = vector.extract_strided_slice %1 {offsets = [1, 2, 0], sizes = [4, 4, 64], strides = [1, 1, 1]} : vector<6x6x64xf32> to vector<4x4x64xf32>
    %30 = vector.extract_strided_slice %2 {offsets = [1, 2, 0], sizes = [1, 1, 64], strides = [1, 1, 1]} : vector<3x3x64xf32> to vector<1x1x64xf32>
    %31 = vector.broadcast %30 : vector<1x1x64xf32> to vector<4x4x64xf32>
    %32 = arith.mulf %29, %31 : vector<4x4x64xf32>
    %33 = arith.addf %28, %32 : vector<4x4x64xf32>
    %34 = vector.extract_strided_slice %1 {offsets = [2, 0, 0], sizes = [4, 4, 64], strides = [1, 1, 1]} : vector<6x6x64xf32> to vector<4x4x64xf32>
    %35 = vector.extract_strided_slice %2 {offsets = [2, 0, 0], sizes = [1, 1, 64], strides = [1, 1, 1]} : vector<3x3x64xf32> to vector<1x1x64xf32>
    %36 = vector.broadcast %35 : vector<1x1x64xf32> to vector<4x4x64xf32>
    %37 = arith.mulf %34, %36 : vector<4x4x64xf32>
    %38 = arith.addf %33, %37 : vector<4x4x64xf32>
    %39 = vector.extract_strided_slice %1 {offsets = [2, 1, 0], sizes = [4, 4, 64], strides = [1, 1, 1]} : vector<6x6x64xf32> to vector<4x4x64xf32>
    %40 = vector.extract_strided_slice %2 {offsets = [2, 1, 0], sizes = [1, 1, 64], strides = [1, 1, 1]} : vector<3x3x64xf32> to vector<1x1x64xf32>
    %41 = vector.broadcast %40 : vector<1x1x64xf32> to vector<4x4x64xf32>
    %42 = arith.mulf %39, %41 : vector<4x4x64xf32>
    %43 = arith.addf %38, %42 : vector<4x4x64xf32>
    %44 = vector.extract_strided_slice %1 {offsets = [2, 2, 0], sizes = [4, 4, 64], strides = [1, 1, 1]} : vector<6x6x64xf32> to vector<4x4x64xf32>
    %45 = vector.extract_strided_slice %2 {offsets = [2, 2, 0], sizes = [1, 1, 64], strides = [1, 1, 1]} : vector<3x3x64xf32> to vector<1x1x64xf32>
    %46 = vector.broadcast %45 : vector<1x1x64xf32> to vector<4x4x64xf32>
    %47 = arith.mulf %44, %46 : vector<4x4x64xf32>
    %48 = arith.addf %43, %47 : vector<4x4x64xf32>
    %c0_6 = arith.constant 0 : index
    %c0_7 = arith.constant 0 : index
    %49 = vector.load %arg3[%c0_6, %c0_7] : memref<1x64xf32, #tpu.memory_space<vmem>>, vector<1x64xf32>
    %50 = vector.shape_cast %49 : vector<1x64xf32> to vector<1x1x64xf32>
    %51 = vector.broadcast %50 : vector<1x1x64xf32> to vector<4x4x64xf32>
    %52 = arith.addf %48, %51 : vector<4x4x64xf32>
    %c0_8 = arith.constant 0 : index
    %c0_9 = arith.constant 0 : index
    %c0_10 = arith.constant 0 : index
    %c0_11 = arith.constant 0 : index
    %53 = vector.load %arg4[%c0_8, %c0_9, %c0_10, %c0_11] : memref<1x4x4x64xf32, #tpu.memory_space<vmem>>, vector<1x4x4x64xf32>
    %54 = vector.shape_cast %53 : vector<1x4x4x64xf32> to vector<4x4x64xf32>
    %55 = vector.shape_cast %52 : vector<4x4x64xf32> to vector<1x4x4x64xf32>
    tpu.vector_store %arg4[%c0_8, %c0_9, %c0_10, %c0_11], %55 {strides = array<i32>} : memref<1x4x4x64xf32, #tpu.memory_space<vmem>>, vector<1x4x4x64xf32>,
    return
  }
  func.func @transform_0(%arg0: i32) -> (i32, i32, i32, i32) {
    %c0_i32 = arith.constant 0 : i32
    %c0_i32_0 = arith.constant 0 : i32
    %c0_i32_1 = arith.constant 0 : i32
    %c0_i32_2 = arith.constant 0 : i32
    return %arg0, %c0_i32, %c0_i32_0, %c0_i32_1 : i32, i32, i32, i32
  }
  func.func @transform_1(%arg0: i32) -> (i32, i32, i32) {
    %c0_i32 = arith.constant 0 : i32
    %c0_i32_0 = arith.constant 0 : i32
    %c0_i32_1 = arith.constant 0 : i32
    %c0_i32_2 = arith.constant 0 : i32
    return %c0_i32, %c0_i32_0, %c0_i32_1 : i32, i32, i32
  }
  func.func @transform_2(%arg0: i32) -> (i32, i32) {
    %c0_i32 = arith.constant 0 : i32
    %c0_i32_0 = arith.constant 0 : i32
    %c0_i32_1 = arith.constant 0 : i32
    return %c0_i32, %c0_i32_0 : i32, i32
  }
  func.func @transform_3(%arg0: i32) -> (i32, i32, i32, i32) {
    %c0_i32 = arith.constant 0 : i32
    %c0_i32_0 = arith.constant 0 : i32
    %c0_i32_1 = arith.constant 0 : i32
    %c0_i32_2 = arith.constant 0 : i32
    return %arg0, %c0_i32, %c0_i32_0, %c0_i32_1 : i32, i32, i32, i32
  }
}

module attributes {stable_mosaic.version = 11 : i64} {
  func.func @gate_mlp_kernel(%arg0: i32, %arg1: memref<8x64xf32, #tpu.memory_space<vmem>>, %arg2: memref<64x64xf32, #tpu.memory_space<vmem>>, %arg3: memref<1x64xf32, #tpu.memory_space<vmem>>, %arg4: memref<1x64xf32, #tpu.memory_space<vmem>>, %arg5: memref<1x64xf32, #tpu.memory_space<vmem>>, %arg6: memref<8x64xf32, #tpu.memory_space<vmem>>) attributes {dimension_semantics = [#tpu.dimension_semantics<parallel>], iteration_bounds = array<i64: 1>, scalar_prefetch = 0 : i64, scratch_operands = 0 : i64, tpu.core_type = #tpu.core_type<tc>, window_params = [{transform_indices = @transform_0, window_bounds = array<i64: 8, 64>}, {pipeline_mode = #tpu.pipeline_mode<synchronous>, transform_indices = @transform_1, window_bounds = array<i64: 64, 64>}, {pipeline_mode = #tpu.pipeline_mode<synchronous>, transform_indices = @transform_2, window_bounds = array<i64: 1, 64>}, {pipeline_mode = #tpu.pipeline_mode<synchronous>, transform_indices = @transform_3, window_bounds = array<i64: 1, 64>}, {pipeline_mode = #tpu.pipeline_mode<synchronous>, transform_indices = @transform_4, window_bounds = array<i64: 1, 64>}, {transform_indices = @transform_5, window_bounds = array<i64: 8, 64>}]} {
    %c0 = arith.constant 0 : index
    %c0_0 = arith.constant 0 : index
    %0 = vector.load %arg1[%c0, %c0_0] : memref<8x64xf32, #tpu.memory_space<vmem>>, vector<8x64xf32>
    %cst = arith.constant dense<0.000000e+00> : vector<8xf32>
    %1 = vector.multi_reduction <add>, %0, %cst [1] : vector<8x64xf32> to vector<8xf32>
    %2 = vector.shape_cast %1 : vector<8xf32> to vector<8x1xf32>
    %cst_1 = arith.constant 6.400000e+01 : f32
    %3 = vector.broadcast %cst_1 : f32 to vector<8x1xf32>
    %4 = arith.divf %2, %3 : vector<8x1xf32>
    %cst_2 = arith.constant 0.000000e+00 : f32
    %5 = vector.broadcast %cst_2 : f32 to vector<8x1xf32>
    %6 = arith.subf %5, %4 : vector<8x1xf32>
    %7 = math.exp %6 : vector<8x1xf32>
    %cst_3 = arith.constant 1.000000e+00 : f32
    %8 = vector.broadcast %cst_3 : f32 to vector<8x1xf32>
    %9 = arith.addf %8, %7 : vector<8x1xf32>
    %10 = tpu.reciprocal %9 {approx = true} : vector<8x1xf32> -> vector<8x1xf32>
    %11 = vector.broadcast %10 : vector<8x1xf32> to vector<8x64xf32>
    %12 = arith.mulf %0, %11 : vector<8x64xf32>
    %c0_4 = arith.constant 0 : index
    %c0_5 = arith.constant 0 : index
    %13 = vector.load %arg2[%c0_4, %c0_5] : memref<64x64xf32, #tpu.memory_space<vmem>>, vector<64x64xf32>
    %cst_6 = arith.constant dense<0.000000e+00> : vector<8x64xf32>
    %14 = tpu.matmul %12, %13, %cst_6 {dimension_numbers = #tpu.dot_dimension_numbers<[1], [0], [0], [1], [0, 0, 1, 1], [], []>} : vector<8x64xf32>, vector<64x64xf32>, vector<8x64xf32> -> vector<8x64xf32>
    %c0_7 = arith.constant 0 : index
    %c0_8 = arith.constant 0 : index
    %15 = vector.load %arg3[%c0_7, %c0_8] : memref<1x64xf32, #tpu.memory_space<vmem>>, vector<1x64xf32>
    %16 = vector.broadcast %15 : vector<1x64xf32> to vector<8x64xf32>
    %17 = arith.addf %14, %16 : vector<8x64xf32>
    %cst_9 = arith.constant -1.702000e+00 : f32
    %18 = vector.broadcast %cst_9 : f32 to vector<8x64xf32>
    %19 = arith.mulf %18, %17 : vector<8x64xf32>
    %20 = math.exp %19 : vector<8x64xf32>
    %cst_10 = arith.constant 1.000000e+00 : f32
    %21 = vector.broadcast %cst_10 : f32 to vector<8x64xf32>
    %22 = arith.addf %21, %20 : vector<8x64xf32>
    %23 = tpu.reciprocal %22 {approx = true} : vector<8x64xf32> -> vector<8x64xf32>
    %24 = arith.mulf %17, %23 : vector<8x64xf32>
    %c0_11 = arith.constant 0 : index
    %c0_12 = arith.constant 0 : index
    %25 = vector.load %arg4[%c0_11, %c0_12] : memref<1x64xf32, #tpu.memory_space<vmem>>, vector<1x64xf32>
    %c0_13 = arith.constant 0 : index
    %c0_14 = arith.constant 0 : index
    %26 = vector.load %arg5[%c0_13, %c0_14] : memref<1x64xf32, #tpu.memory_space<vmem>>, vector<1x64xf32>
    %cst_15 = arith.constant dense<0.000000e+00> : vector<8xf32>
    %27 = vector.multi_reduction <add>, %24, %cst_15 [1] : vector<8x64xf32> to vector<8xf32>
    %28 = vector.shape_cast %27 : vector<8xf32> to vector<8x1xf32>
    %cst_16 = arith.constant 6.400000e+01 : f32
    %29 = vector.broadcast %cst_16 : f32 to vector<8x1xf32>
    %30 = arith.divf %28, %29 : vector<8x1xf32>
    %31 = vector.broadcast %30 : vector<8x1xf32> to vector<8x64xf32>
    %32 = arith.subf %24, %31 : vector<8x64xf32>
    %33 = arith.mulf %32, %32 : vector<8x64xf32>
    %cst_17 = arith.constant dense<0.000000e+00> : vector<8xf32>
    %34 = vector.multi_reduction <add>, %33, %cst_17 [1] : vector<8x64xf32> to vector<8xf32>
    %35 = vector.shape_cast %34 : vector<8xf32> to vector<8x1xf32>
    %cst_18 = arith.constant 6.400000e+01 : f32
    %36 = vector.broadcast %cst_18 : f32 to vector<8x1xf32>
    %37 = arith.divf %35, %36 : vector<8x1xf32>
    %cst_19 = arith.constant 9.99999974E-6 : f32
    %38 = vector.broadcast %cst_19 : f32 to vector<8x1xf32>
    %39 = arith.addf %37, %38 : vector<8x1xf32>
    %40 = math.rsqrt %39 : vector<8x1xf32>
    %41 = vector.broadcast %40 : vector<8x1xf32> to vector<8x64xf32>
    %42 = arith.mulf %32, %41 : vector<8x64xf32>
    %43 = vector.broadcast %25 : vector<1x64xf32> to vector<8x64xf32>
    %44 = arith.mulf %42, %43 : vector<8x64xf32>
    %45 = vector.broadcast %26 : vector<1x64xf32> to vector<8x64xf32>
    %46 = arith.addf %44, %45 : vector<8x64xf32>
    %c0_20 = arith.constant 0 : index
    %c0_21 = arith.constant 0 : index
    %47 = vector.load %arg6[%c0_20, %c0_21] : memref<8x64xf32, #tpu.memory_space<vmem>>, vector<8x64xf32>
    tpu.vector_store %arg6[%c0_20, %c0_21], %46 {strides = array<i32>} : memref<8x64xf32, #tpu.memory_space<vmem>>, vector<8x64xf32>,
    return
  }
  func.func @transform_0(%arg0: i32) -> (i32, i32) {
    %c0_i32 = arith.constant 0 : i32
    %c0_i32_0 = arith.constant 0 : i32
    return %arg0, %c0_i32 : i32, i32
  }
  func.func @transform_1(%arg0: i32) -> (i32, i32) {
    %c0_i32 = arith.constant 0 : i32
    %c0_i32_0 = arith.constant 0 : i32
    %c0_i32_1 = arith.constant 0 : i32
    return %c0_i32, %c0_i32_0 : i32, i32
  }
  func.func @transform_2(%arg0: i32) -> (i32, i32) {
    %c0_i32 = arith.constant 0 : i32
    %c0_i32_0 = arith.constant 0 : i32
    %c0_i32_1 = arith.constant 0 : i32
    return %c0_i32, %c0_i32_0 : i32, i32
  }
  func.func @transform_3(%arg0: i32) -> (i32, i32) {
    %c0_i32 = arith.constant 0 : i32
    %c0_i32_0 = arith.constant 0 : i32
    %c0_i32_1 = arith.constant 0 : i32
    return %c0_i32, %c0_i32_0 : i32, i32
  }
  func.func @transform_4(%arg0: i32) -> (i32, i32) {
    %c0_i32 = arith.constant 0 : i32
    %c0_i32_0 = arith.constant 0 : i32
    %c0_i32_1 = arith.constant 0 : i32
    return %c0_i32, %c0_i32_0 : i32, i32
  }
  func.func @transform_5(%arg0: i32) -> (i32, i32) {
    %c0_i32 = arith.constant 0 : i32
    %c0_i32_0 = arith.constant 0 : i32
    return %arg0, %c0_i32 : i32, i32
  }
}

module attributes {stable_mosaic.version = 11 : i64} {
  func.func @layernorm_kernel(%arg0: i32, %arg1: memref<8x64xf32, #tpu.memory_space<vmem>>, %arg2: memref<1x64xf32, #tpu.memory_space<vmem>>, %arg3: memref<1x64xf32, #tpu.memory_space<vmem>>, %arg4: memref<8x64xf32, #tpu.memory_space<vmem>>) attributes {dimension_semantics = [#tpu.dimension_semantics<parallel>], iteration_bounds = array<i64: 1>, scalar_prefetch = 0 : i64, scratch_operands = 0 : i64, tpu.core_type = #tpu.core_type<tc>, window_params = [{transform_indices = @transform_0, window_bounds = array<i64: 8, 64>}, {pipeline_mode = #tpu.pipeline_mode<synchronous>, transform_indices = @transform_1, window_bounds = array<i64: 1, 64>}, {pipeline_mode = #tpu.pipeline_mode<synchronous>, transform_indices = @transform_2, window_bounds = array<i64: 1, 64>}, {transform_indices = @transform_3, window_bounds = array<i64: 8, 64>}]} {
    %c0 = arith.constant 0 : index
    %c0_0 = arith.constant 0 : index
    %0 = vector.load %arg1[%c0, %c0_0] : memref<8x64xf32, #tpu.memory_space<vmem>>, vector<8x64xf32>
    %c0_1 = arith.constant 0 : index
    %c0_2 = arith.constant 0 : index
    %1 = vector.load %arg2[%c0_1, %c0_2] : memref<1x64xf32, #tpu.memory_space<vmem>>, vector<1x64xf32>
    %c0_3 = arith.constant 0 : index
    %c0_4 = arith.constant 0 : index
    %2 = vector.load %arg3[%c0_3, %c0_4] : memref<1x64xf32, #tpu.memory_space<vmem>>, vector<1x64xf32>
    %cst = arith.constant dense<0.000000e+00> : vector<8xf32>
    %3 = vector.multi_reduction <add>, %0, %cst [1] : vector<8x64xf32> to vector<8xf32>
    %4 = vector.shape_cast %3 : vector<8xf32> to vector<8x1xf32>
    %cst_5 = arith.constant 6.400000e+01 : f32
    %5 = vector.broadcast %cst_5 : f32 to vector<8x1xf32>
    %6 = arith.divf %4, %5 : vector<8x1xf32>
    %7 = vector.broadcast %6 : vector<8x1xf32> to vector<8x64xf32>
    %8 = arith.subf %0, %7 : vector<8x64xf32>
    %9 = arith.mulf %8, %8 : vector<8x64xf32>
    %cst_6 = arith.constant dense<0.000000e+00> : vector<8xf32>
    %10 = vector.multi_reduction <add>, %9, %cst_6 [1] : vector<8x64xf32> to vector<8xf32>
    %11 = vector.shape_cast %10 : vector<8xf32> to vector<8x1xf32>
    %cst_7 = arith.constant 6.400000e+01 : f32
    %12 = vector.broadcast %cst_7 : f32 to vector<8x1xf32>
    %13 = arith.divf %11, %12 : vector<8x1xf32>
    %cst_8 = arith.constant 9.99999974E-6 : f32
    %14 = vector.broadcast %cst_8 : f32 to vector<8x1xf32>
    %15 = arith.addf %13, %14 : vector<8x1xf32>
    %16 = math.rsqrt %15 : vector<8x1xf32>
    %17 = vector.broadcast %16 : vector<8x1xf32> to vector<8x64xf32>
    %18 = arith.mulf %8, %17 : vector<8x64xf32>
    %19 = vector.broadcast %1 : vector<1x64xf32> to vector<8x64xf32>
    %20 = arith.mulf %18, %19 : vector<8x64xf32>
    %21 = vector.broadcast %2 : vector<1x64xf32> to vector<8x64xf32>
    %22 = arith.addf %20, %21 : vector<8x64xf32>
    %c0_9 = arith.constant 0 : index
    %c0_10 = arith.constant 0 : index
    %23 = vector.load %arg4[%c0_9, %c0_10] : memref<8x64xf32, #tpu.memory_space<vmem>>, vector<8x64xf32>
    tpu.vector_store %arg4[%c0_9, %c0_10], %22 {strides = array<i32>} : memref<8x64xf32, #tpu.memory_space<vmem>>, vector<8x64xf32>,
    return
  }
  func.func @transform_0(%arg0: i32) -> (i32, i32) {
    %c0_i32 = arith.constant 0 : i32
    %c0_i32_0 = arith.constant 0 : i32
    return %arg0, %c0_i32 : i32, i32
  }
  func.func @transform_1(%arg0: i32) -> (i32, i32) {
    %c0_i32 = arith.constant 0 : i32
    %c0_i32_0 = arith.constant 0 : i32
    %c0_i32_1 = arith.constant 0 : i32
    return %c0_i32, %c0_i32_0 : i32, i32
  }
  func.func @transform_2(%arg0: i32) -> (i32, i32) {
    %c0_i32 = arith.constant 0 : i32
    %c0_i32_0 = arith.constant 0 : i32
    %c0_i32_1 = arith.constant 0 : i32
    return %c0_i32, %c0_i32_0 : i32, i32
  }
  func.func @transform_3(%arg0: i32) -> (i32, i32) {
    %c0_i32 = arith.constant 0 : i32
    %c0_i32_0 = arith.constant 0 : i32
    return %arg0, %c0_i32 : i32, i32
  }
}

module attributes {stable_mosaic.version = 11 : i64} {
  func.func @ln_matmul_kernel(%arg0: i32, %arg1: i32, %arg2: memref<10x64xf32, #tpu.memory_space<vmem>>, %arg3: memref<1x64xf32, #tpu.memory_space<vmem>>, %arg4: memref<1x64xf32, #tpu.memory_space<vmem>>, %arg5: memref<64x192xf32, #tpu.memory_space<vmem>>, %arg6: memref<1x192xf32, #tpu.memory_space<vmem>>, %arg7: memref<10x192xf32, #tpu.memory_space<vmem>>) attributes {dimension_semantics = [#tpu.dimension_semantics<parallel>, #tpu.dimension_semantics<parallel>], iteration_bounds = array<i64: 1, 1>, scalar_prefetch = 0 : i64, scratch_operands = 0 : i64, tpu.core_type = #tpu.core_type<tc>, window_params = [{transform_indices = @transform_0, window_bounds = array<i64: 10, 64>}, {pipeline_mode = #tpu.pipeline_mode<synchronous>, transform_indices = @transform_1, window_bounds = array<i64: 1, 64>}, {pipeline_mode = #tpu.pipeline_mode<synchronous>, transform_indices = @transform_2, window_bounds = array<i64: 1, 64>}, {transform_indices = @transform_3, window_bounds = array<i64: 64, 192>}, {transform_indices = @transform_4, window_bounds = array<i64: 1, 192>}, {transform_indices = @transform_5, window_bounds = array<i64: 10, 192>}]} {
    %c0 = arith.constant 0 : index
    %c0_0 = arith.constant 0 : index
    %0 = vector.load %arg2[%c0, %c0_0] : memref<10x64xf32, #tpu.memory_space<vmem>>, vector<10x64xf32>
    %c0_1 = arith.constant 0 : index
    %c0_2 = arith.constant 0 : index
    %1 = vector.load %arg3[%c0_1, %c0_2] : memref<1x64xf32, #tpu.memory_space<vmem>>, vector<1x64xf32>
    %c0_3 = arith.constant 0 : index
    %c0_4 = arith.constant 0 : index
    %2 = vector.load %arg4[%c0_3, %c0_4] : memref<1x64xf32, #tpu.memory_space<vmem>>, vector<1x64xf32>
    %cst = arith.constant dense<0.000000e+00> : vector<10xf32>
    %3 = vector.multi_reduction <add>, %0, %cst [1] : vector<10x64xf32> to vector<10xf32>
    %4 = vector.shape_cast %3 : vector<10xf32> to vector<10x1xf32>
    %cst_5 = arith.constant 6.400000e+01 : f32
    %5 = vector.broadcast %cst_5 : f32 to vector<10x1xf32>
    %6 = arith.divf %4, %5 : vector<10x1xf32>
    %7 = vector.broadcast %6 : vector<10x1xf32> to vector<10x64xf32>
    %8 = arith.subf %0, %7 : vector<10x64xf32>
    %9 = arith.mulf %8, %8 : vector<10x64xf32>
    %cst_6 = arith.constant dense<0.000000e+00> : vector<10xf32>
    %10 = vector.multi_reduction <add>, %9, %cst_6 [1] : vector<10x64xf32> to vector<10xf32>
    %11 = vector.shape_cast %10 : vector<10xf32> to vector<10x1xf32>
    %cst_7 = arith.constant 6.400000e+01 : f32
    %12 = vector.broadcast %cst_7 : f32 to vector<10x1xf32>
    %13 = arith.divf %11, %12 : vector<10x1xf32>
    %cst_8 = arith.constant 9.99999974E-6 : f32
    %14 = vector.broadcast %cst_8 : f32 to vector<10x1xf32>
    %15 = arith.addf %13, %14 : vector<10x1xf32>
    %16 = math.rsqrt %15 : vector<10x1xf32>
    %17 = vector.broadcast %16 : vector<10x1xf32> to vector<10x64xf32>
    %18 = arith.mulf %8, %17 : vector<10x64xf32>
    %19 = vector.broadcast %1 : vector<1x64xf32> to vector<10x64xf32>
    %20 = arith.mulf %18, %19 : vector<10x64xf32>
    %21 = vector.broadcast %2 : vector<1x64xf32> to vector<10x64xf32>
    %22 = arith.addf %20, %21 : vector<10x64xf32>
    %c0_9 = arith.constant 0 : index
    %c0_10 = arith.constant 0 : index
    %23 = vector.load %arg5[%c0_9, %c0_10] : memref<64x192xf32, #tpu.memory_space<vmem>>, vector<64x192xf32>
    %cst_11 = arith.constant dense<0.000000e+00> : vector<10x192xf32>
    %24 = tpu.matmul %22, %23, %cst_11 {dimension_numbers = #tpu.dot_dimension_numbers<[1], [0], [0], [1], [0, 0, 1, 1], [], []>} : vector<10x64xf32>, vector<64x192xf32>, vector<10x192xf32> -> vector<10x192xf32>
    %c0_12 = arith.constant 0 : index
    %c0_13 = arith.constant 0 : index
    %25 = vector.load %arg6[%c0_12, %c0_13] : memref<1x192xf32, #tpu.memory_space<vmem>>, vector<1x192xf32>
    %26 = vector.broadcast %25 : vector<1x192xf32> to vector<10x192xf32>
    %27 = arith.addf %24, %26 : vector<10x192xf32>
    %c0_14 = arith.constant 0 : index
    %c0_15 = arith.constant 0 : index
    %28 = vector.load %arg7[%c0_14, %c0_15] : memref<10x192xf32, #tpu.memory_space<vmem>>, vector<10x192xf32>
    tpu.vector_store %arg7[%c0_14, %c0_15], %27 {strides = array<i32>} : memref<10x192xf32, #tpu.memory_space<vmem>>, vector<10x192xf32>,
    return
  }
  func.func @transform_0(%arg0: i32, %arg1: i32) -> (i32, i32) {
    %c0_i32 = arith.constant 0 : i32
    %c0_i32_0 = arith.constant 0 : i32
    return %arg0, %c0_i32 : i32, i32
  }
  func.func @transform_1(%arg0: i32, %arg1: i32) -> (i32, i32) {
    %c0_i32 = arith.constant 0 : i32
    %c0_i32_0 = arith.constant 0 : i32
    %c0_i32_1 = arith.constant 0 : i32
    return %c0_i32, %c0_i32_0 : i32, i32
  }
  func.func @transform_2(%arg0: i32, %arg1: i32) -> (i32, i32) {
    %c0_i32 = arith.constant 0 : i32
    %c0_i32_0 = arith.constant 0 : i32
    %c0_i32_1 = arith.constant 0 : i32
    return %c0_i32, %c0_i32_0 : i32, i32
  }
  func.func @transform_3(%arg0: i32, %arg1: i32) -> (i32, i32) {
    %c0_i32 = arith.constant 0 : i32
    %c0_i32_0 = arith.constant 0 : i32
    return %c0_i32, %arg1 : i32, i32
  }
  func.func @transform_4(%arg0: i32, %arg1: i32) -> (i32, i32) {
    %c0_i32 = arith.constant 0 : i32
    %c0_i32_0 = arith.constant 0 : i32
    return %c0_i32, %arg1 : i32, i32
  }
  func.func @transform_5(%arg0: i32, %arg1: i32) -> (i32, i32) {
    %c0_i32 = arith.constant 0 : i32
    return %arg0, %arg1 : i32, i32
  }
}

module attributes {stable_mosaic.version = 11 : i64} {
  func.func @attention_kernel(%arg0: i32, %arg1: memref<1x5x192xf32, #tpu.memory_space<vmem>>, %arg2: memref<1x1x5xf32, #tpu.memory_space<vmem>>, %arg3: memref<1x5x64xf32, #tpu.memory_space<vmem>>) attributes {dimension_semantics = [#tpu.dimension_semantics<parallel>], iteration_bounds = array<i64: 2>, scalar_prefetch = 0 : i64, scratch_operands = 0 : i64, tpu.core_type = #tpu.core_type<tc>, window_params = [{transform_indices = @transform_0, window_bounds = array<i64: 1, 5, 192>}, {transform_indices = @transform_1, window_bounds = array<i64: 1, 1, 5>}, {transform_indices = @transform_2, window_bounds = array<i64: 1, 5, 64>}]} {
    %c0 = arith.constant 0 : index
    %c0_0 = arith.constant 0 : index
    %c0_1 = arith.constant 0 : index
    %0 = vector.load %arg1[%c0, %c0_0, %c0_1] : memref<1x5x192xf32, #tpu.memory_space<vmem>>, vector<1x5x192xf32>
    %1 = vector.shape_cast %0 : vector<1x5x192xf32> to vector<5x192xf32>
    %c0_2 = arith.constant 0 : index
    %c0_3 = arith.constant 0 : index
    %c0_4 = arith.constant 0 : index
    %2 = vector.load %arg2[%c0_2, %c0_3, %c0_4] : memref<1x1x5xf32, #tpu.memory_space<vmem>>, vector<1x1x5xf32>
    %3 = vector.shape_cast %2 : vector<1x1x5xf32> to vector<1x5xf32>
    %4 = vector.extract_strided_slice %1 {offsets = [0, 0], sizes = [5, 64], strides = [1, 1]} : vector<5x192xf32> to vector<5x64xf32>
    %cst = arith.constant 1.250000e-01 : f32
    %5 = vector.broadcast %cst : f32 to vector<5x64xf32>
    %6 = arith.mulf %4, %5 : vector<5x64xf32>
    %7 = vector.extract_strided_slice %1 {offsets = [0, 64], sizes = [5, 64], strides = [1, 1]} : vector<5x192xf32> to vector<5x64xf32>
    %8 = vector.extract_strided_slice %1 {offsets = [0, 128], sizes = [5, 64], strides = [1, 1]} : vector<5x192xf32> to vector<5x64xf32>
    %cst_5 = arith.constant dense<0.000000e+00> : vector<5x5xf32>
    %9 = tpu.matmul %6, %7, %cst_5 {dimension_numbers = #tpu.dot_dimension_numbers<[1], [1], [0], [0], [0, 0, 1, 0], [], []>} : vector<5x64xf32>, vector<5x64xf32>, vector<5x5xf32> -> vector<5x5xf32>
    %10 = vector.broadcast %3 : vector<1x5xf32> to vector<5x5xf32>
    %11 = arith.addf %9, %10 : vector<5x5xf32>
    %cst_6 = arith.constant dense<0xFF800000> : vector<5xf32>
    %12 = vector.multi_reduction <maximumf>, %11, %cst_6 [1] : vector<5x5xf32> to vector<5xf32>
    %13 = vector.shape_cast %12 : vector<5xf32> to vector<5x1xf32>
    %14 = vector.broadcast %13 : vector<5x1xf32> to vector<5x5xf32>
    %15 = arith.subf %11, %14 : vector<5x5xf32>
    %16 = math.exp %15 : vector<5x5xf32>
    %cst_7 = arith.constant dense<0.000000e+00> : vector<5xf32>
    %17 = vector.multi_reduction <add>, %16, %cst_7 [1] : vector<5x5xf32> to vector<5xf32>
    %18 = vector.shape_cast %17 : vector<5xf32> to vector<5x1xf32>
    %19 = tpu.reciprocal %18 {approx = true} : vector<5x1xf32> -> vector<5x1xf32>
    %20 = vector.broadcast %19 : vector<5x1xf32> to vector<5x5xf32>
    %21 = arith.mulf %16, %20 : vector<5x5xf32>
    %cst_8 = arith.constant dense<0.000000e+00> : vector<5x64xf32>
    %22 = tpu.matmul %21, %8, %cst_8 {dimension_numbers = #tpu.dot_dimension_numbers<[1], [0], [0], [1], [0, 0, 1, 1], [], []>} : vector<5x5xf32>, vector<5x64xf32>, vector<5x64xf32> -> vector<5x64xf32>
    %c0_9 = arith.constant 0 : index
    %c0_10 = arith.constant 0 : index
    %c0_11 = arith.constant 0 : index
    %23 = vector.load %arg3[%c0_9, %c0_10, %c0_11] : memref<1x5x64xf32, #tpu.memory_space<vmem>>, vector<1x5x64xf32>
    %24 = vector.shape_cast %23 : vector<1x5x64xf32> to vector<5x64xf32>
    %25 = vector.shape_cast %22 : vector<5x64xf32> to vector<1x5x64xf32>
    tpu.vector_store %arg3[%c0_9, %c0_10, %c0_11], %25 {strides = array<i32>} : memref<1x5x64xf32, #tpu.memory_space<vmem>>, vector<1x5x64xf32>,
    return
  }
  func.func @transform_0(%arg0: i32) -> (i32, i32, i32) {
    %c0_i32 = arith.constant 0 : i32
    %c0_i32_0 = arith.constant 0 : i32
    %c0_i32_1 = arith.constant 0 : i32
    return %arg0, %c0_i32, %c0_i32_0 : i32, i32, i32
  }
  func.func @transform_1(%arg0: i32) -> (i32, i32, i32) {
    %c0_i32 = arith.constant 0 : i32
    %c0_i32_0 = arith.constant 0 : i32
    %c0_i32_1 = arith.constant 0 : i32
    return %arg0, %c0_i32, %c0_i32_0 : i32, i32, i32
  }
  func.func @transform_2(%arg0: i32) -> (i32, i32, i32) {
    %c0_i32 = arith.constant 0 : i32
    %c0_i32_0 = arith.constant 0 : i32
    %c0_i32_1 = arith.constant 0 : i32
    return %arg0, %c0_i32, %c0_i32_0 : i32, i32, i32
  }
}

module attributes {stable_mosaic.version = 11 : i64} {
  func.func @matmul_bias_kernel(%arg0: i32, %arg1: i32, %arg2: i32, %arg3: memref<10x64xf32, #tpu.memory_space<vmem>>, %arg4: memref<64x64xf32, #tpu.memory_space<vmem>>, %arg5: memref<1x64xf32, #tpu.memory_space<vmem>>, %arg6: memref<10x64xf32, #tpu.memory_space<vmem>>, %arg7: memref<10x64xf32, #tpu.memory_space<vmem>>) attributes {dimension_semantics = [#tpu.dimension_semantics<parallel>, #tpu.dimension_semantics<parallel>, #tpu.dimension_semantics<arbitrary>], iteration_bounds = array<i64: 1, 1, 1>, scalar_prefetch = 0 : i64, scratch_operands = 1 : i64, tpu.core_type = #tpu.core_type<tc>, window_params = [{transform_indices = @transform_0, window_bounds = array<i64: 10, 64>}, {transform_indices = @transform_1, window_bounds = array<i64: 64, 64>}, {transform_indices = @transform_2, window_bounds = array<i64: 1, 64>}, {transform_indices = @transform_3, window_bounds = array<i64: 10, 64>}]} {
    %c0_i32 = arith.constant 0 : i32
    %0 = arith.cmpi eq, %arg2, %c0_i32 : i32
    %1 = arith.extui %0 : i1 to i32
    %c0_i32_0 = arith.constant 0 : i32
    %2 = arith.cmpi ne, %1, %c0_i32_0 : i32
    scf.if %2 {
      %cst_10 = arith.constant 0.000000e+00 : f32
      %12 = vector.broadcast %cst_10 : f32 to vector<10x64xf32>
      %c0_11 = arith.constant 0 : index
      %c0_12 = arith.constant 0 : index
      %13 = vector.load %arg7[%c0_11, %c0_12] : memref<10x64xf32, #tpu.memory_space<vmem>>, vector<10x64xf32>
      tpu.vector_store %arg7[%c0_11, %c0_12], %12 {strides = array<i32>} : memref<10x64xf32, #tpu.memory_space<vmem>>, vector<10x64xf32>,
    } else {
    }
    %c0 = arith.constant 0 : index
    %c0_1 = arith.constant 0 : index
    %3 = vector.load %arg7[%c0, %c0_1] : memref<10x64xf32, #tpu.memory_space<vmem>>, vector<10x64xf32>
    %c0_2 = arith.constant 0 : index
    %c0_3 = arith.constant 0 : index
    %4 = vector.load %arg3[%c0_2, %c0_3] : memref<10x64xf32, #tpu.memory_space<vmem>>, vector<10x64xf32>
    %c0_4 = arith.constant 0 : index
    %c0_5 = arith.constant 0 : index
    %5 = vector.load %arg4[%c0_4, %c0_5] : memref<64x64xf32, #tpu.memory_space<vmem>>, vector<64x64xf32>
    %cst = arith.constant dense<0.000000e+00> : vector<10x64xf32>
    %6 = tpu.matmul %4, %5, %cst {dimension_numbers = #tpu.dot_dimension_numbers<[1], [0], [0], [1], [0, 0, 1, 1], [], []>} : vector<10x64xf32>, vector<64x64xf32>, vector<10x64xf32> -> vector<10x64xf32>
    %7 = arith.addf %3, %6 : vector<10x64xf32>
    %c0_6 = arith.constant 0 : index
    %c0_7 = arith.constant 0 : index
    %8 = vector.load %arg7[%c0_6, %c0_7] : memref<10x64xf32, #tpu.memory_space<vmem>>, vector<10x64xf32>
    tpu.vector_store %arg7[%c0_6, %c0_7], %7 {strides = array<i32>} : memref<10x64xf32, #tpu.memory_space<vmem>>, vector<10x64xf32>,
    %c0_i32_8 = arith.constant 0 : i32
    %9 = arith.cmpi eq, %arg2, %c0_i32_8 : i32
    %10 = arith.extui %9 : i1 to i32
    %c0_i32_9 = arith.constant 0 : i32
    %11 = arith.cmpi ne, %10, %c0_i32_9 : i32
    scf.if %11 {
      %c0_10 = arith.constant 0 : index
      %c0_11 = arith.constant 0 : index
      %12 = vector.load %arg7[%c0_10, %c0_11] : memref<10x64xf32, #tpu.memory_space<vmem>>, vector<10x64xf32>
      %c0_12 = arith.constant 0 : index
      %c0_13 = arith.constant 0 : index
      %13 = vector.load %arg5[%c0_12, %c0_13] : memref<1x64xf32, #tpu.memory_space<vmem>>, vector<1x64xf32>
      %14 = vector.broadcast %13 : vector<1x64xf32> to vector<10x64xf32>
      %15 = arith.addf %12, %14 : vector<10x64xf32>
      %c0_14 = arith.constant 0 : index
      %c0_15 = arith.constant 0 : index
      %16 = vector.load %arg6[%c0_14, %c0_15] : memref<10x64xf32, #tpu.memory_space<vmem>>, vector<10x64xf32>
      tpu.vector_store %arg6[%c0_14, %c0_15], %15 {strides = array<i32>} : memref<10x64xf32, #tpu.memory_space<vmem>>, vector<10x64xf32>,
    } else {
    }
    return
  }
  func.func @transform_0(%arg0: i32, %arg1: i32, %arg2: i32) -> (i32, i32) {
    %c0_i32 = arith.constant 0 : i32
    return %arg0, %arg2 : i32, i32
  }
  func.func @transform_1(%arg0: i32, %arg1: i32, %arg2: i32) -> (i32, i32) {
    %c0_i32 = arith.constant 0 : i32
    return %arg2, %arg1 : i32, i32
  }
  func.func @transform_2(%arg0: i32, %arg1: i32, %arg2: i32) -> (i32, i32) {
    %c0_i32 = arith.constant 0 : i32
    %c0_i32_0 = arith.constant 0 : i32
    return %c0_i32, %arg1 : i32, i32
  }
  func.func @transform_3(%arg0: i32, %arg1: i32, %arg2: i32) -> (i32, i32) {
    %c0_i32 = arith.constant 0 : i32
    return %arg0, %arg1 : i32, i32
  }
}

module attributes {stable_mosaic.version = 11 : i64} {
  func.func @ln_matmul_kernel(%arg0: i32, %arg1: i32, %arg2: memref<10x64xf32, #tpu.memory_space<vmem>>, %arg3: memref<1x64xf32, #tpu.memory_space<vmem>>, %arg4: memref<1x64xf32, #tpu.memory_space<vmem>>, %arg5: memref<64x256xf32, #tpu.memory_space<vmem>>, %arg6: memref<1x256xf32, #tpu.memory_space<vmem>>, %arg7: memref<10x256xf32, #tpu.memory_space<vmem>>) attributes {dimension_semantics = [#tpu.dimension_semantics<parallel>, #tpu.dimension_semantics<parallel>], iteration_bounds = array<i64: 1, 1>, scalar_prefetch = 0 : i64, scratch_operands = 0 : i64, tpu.core_type = #tpu.core_type<tc>, window_params = [{transform_indices = @transform_0, window_bounds = array<i64: 10, 64>}, {pipeline_mode = #tpu.pipeline_mode<synchronous>, transform_indices = @transform_1, window_bounds = array<i64: 1, 64>}, {pipeline_mode = #tpu.pipeline_mode<synchronous>, transform_indices = @transform_2, window_bounds = array<i64: 1, 64>}, {transform_indices = @transform_3, window_bounds = array<i64: 64, 256>}, {transform_indices = @transform_4, window_bounds = array<i64: 1, 256>}, {transform_indices = @transform_5, window_bounds = array<i64: 10, 256>}]} {
    %c0 = arith.constant 0 : index
    %c0_0 = arith.constant 0 : index
    %0 = vector.load %arg2[%c0, %c0_0] : memref<10x64xf32, #tpu.memory_space<vmem>>, vector<10x64xf32>
    %c0_1 = arith.constant 0 : index
    %c0_2 = arith.constant 0 : index
    %1 = vector.load %arg3[%c0_1, %c0_2] : memref<1x64xf32, #tpu.memory_space<vmem>>, vector<1x64xf32>
    %c0_3 = arith.constant 0 : index
    %c0_4 = arith.constant 0 : index
    %2 = vector.load %arg4[%c0_3, %c0_4] : memref<1x64xf32, #tpu.memory_space<vmem>>, vector<1x64xf32>
    %cst = arith.constant dense<0.000000e+00> : vector<10xf32>
    %3 = vector.multi_reduction <add>, %0, %cst [1] : vector<10x64xf32> to vector<10xf32>
    %4 = vector.shape_cast %3 : vector<10xf32> to vector<10x1xf32>
    %cst_5 = arith.constant 6.400000e+01 : f32
    %5 = vector.broadcast %cst_5 : f32 to vector<10x1xf32>
    %6 = arith.divf %4, %5 : vector<10x1xf32>
    %7 = vector.broadcast %6 : vector<10x1xf32> to vector<10x64xf32>
    %8 = arith.subf %0, %7 : vector<10x64xf32>
    %9 = arith.mulf %8, %8 : vector<10x64xf32>
    %cst_6 = arith.constant dense<0.000000e+00> : vector<10xf32>
    %10 = vector.multi_reduction <add>, %9, %cst_6 [1] : vector<10x64xf32> to vector<10xf32>
    %11 = vector.shape_cast %10 : vector<10xf32> to vector<10x1xf32>
    %cst_7 = arith.constant 6.400000e+01 : f32
    %12 = vector.broadcast %cst_7 : f32 to vector<10x1xf32>
    %13 = arith.divf %11, %12 : vector<10x1xf32>
    %cst_8 = arith.constant 9.99999974E-6 : f32
    %14 = vector.broadcast %cst_8 : f32 to vector<10x1xf32>
    %15 = arith.addf %13, %14 : vector<10x1xf32>
    %16 = math.rsqrt %15 : vector<10x1xf32>
    %17 = vector.broadcast %16 : vector<10x1xf32> to vector<10x64xf32>
    %18 = arith.mulf %8, %17 : vector<10x64xf32>
    %19 = vector.broadcast %1 : vector<1x64xf32> to vector<10x64xf32>
    %20 = arith.mulf %18, %19 : vector<10x64xf32>
    %21 = vector.broadcast %2 : vector<1x64xf32> to vector<10x64xf32>
    %22 = arith.addf %20, %21 : vector<10x64xf32>
    %c0_9 = arith.constant 0 : index
    %c0_10 = arith.constant 0 : index
    %23 = vector.load %arg5[%c0_9, %c0_10] : memref<64x256xf32, #tpu.memory_space<vmem>>, vector<64x256xf32>
    %cst_11 = arith.constant dense<0.000000e+00> : vector<10x256xf32>
    %24 = tpu.matmul %22, %23, %cst_11 {dimension_numbers = #tpu.dot_dimension_numbers<[1], [0], [0], [1], [0, 0, 1, 1], [], []>} : vector<10x64xf32>, vector<64x256xf32>, vector<10x256xf32> -> vector<10x256xf32>
    %c0_12 = arith.constant 0 : index
    %c0_13 = arith.constant 0 : index
    %25 = vector.load %arg6[%c0_12, %c0_13] : memref<1x256xf32, #tpu.memory_space<vmem>>, vector<1x256xf32>
    %26 = vector.broadcast %25 : vector<1x256xf32> to vector<10x256xf32>
    %27 = arith.addf %24, %26 : vector<10x256xf32>
    %cst_14 = arith.constant -1.702000e+00 : f32
    %28 = vector.broadcast %cst_14 : f32 to vector<10x256xf32>
    %29 = arith.mulf %28, %27 : vector<10x256xf32>
    %30 = math.exp %29 : vector<10x256xf32>
    %cst_15 = arith.constant 1.000000e+00 : f32
    %31 = vector.broadcast %cst_15 : f32 to vector<10x256xf32>
    %32 = arith.addf %31, %30 : vector<10x256xf32>
    %33 = tpu.reciprocal %32 {approx = true} : vector<10x256xf32> -> vector<10x256xf32>
    %34 = arith.mulf %27, %33 : vector<10x256xf32>
    %c0_16 = arith.constant 0 : index
    %c0_17 = arith.constant 0 : index
    %35 = vector.load %arg7[%c0_16, %c0_17] : memref<10x256xf32, #tpu.memory_space<vmem>>, vector<10x256xf32>
    tpu.vector_store %arg7[%c0_16, %c0_17], %34 {strides = array<i32>} : memref<10x256xf32, #tpu.memory_space<vmem>>, vector<10x256xf32>,
    return
  }
  func.func @transform_0(%arg0: i32, %arg1: i32) -> (i32, i32) {
    %c0_i32 = arith.constant 0 : i32
    %c0_i32_0 = arith.constant 0 : i32
    return %arg0, %c0_i32 : i32, i32
  }
  func.func @transform_1(%arg0: i32, %arg1: i32) -> (i32, i32) {
    %c0_i32 = arith.constant 0 : i32
    %c0_i32_0 = arith.constant 0 : i32
    %c0_i32_1 = arith.constant 0 : i32
    return %c0_i32, %c0_i32_0 : i32, i32
  }
  func.func @transform_2(%arg0: i32, %arg1: i32) -> (i32, i32) {
    %c0_i32 = arith.constant 0 : i32
    %c0_i32_0 = arith.constant 0 : i32
    %c0_i32_1 = arith.constant 0 : i32
    return %c0_i32, %c0_i32_0 : i32, i32
  }
  func.func @transform_3(%arg0: i32, %arg1: i32) -> (i32, i32) {
    %c0_i32 = arith.constant 0 : i32
    %c0_i32_0 = arith.constant 0 : i32
    return %c0_i32, %arg1 : i32, i32
  }
  func.func @transform_4(%arg0: i32, %arg1: i32) -> (i32, i32) {
    %c0_i32 = arith.constant 0 : i32
    %c0_i32_0 = arith.constant 0 : i32
    return %c0_i32, %arg1 : i32, i32
  }
  func.func @transform_5(%arg0: i32, %arg1: i32) -> (i32, i32) {
    %c0_i32 = arith.constant 0 : i32
    return %arg0, %arg1 : i32, i32
  }
}

module attributes {stable_mosaic.version = 11 : i64} {
  func.func @matmul_bias_kernel(%arg0: i32, %arg1: i32, %arg2: i32, %arg3: memref<10x256xf32, #tpu.memory_space<vmem>>, %arg4: memref<256x64xf32, #tpu.memory_space<vmem>>, %arg5: memref<1x64xf32, #tpu.memory_space<vmem>>, %arg6: memref<10x64xf32, #tpu.memory_space<vmem>>, %arg7: memref<10x64xf32, #tpu.memory_space<vmem>>) attributes {dimension_semantics = [#tpu.dimension_semantics<parallel>, #tpu.dimension_semantics<parallel>, #tpu.dimension_semantics<arbitrary>], iteration_bounds = array<i64: 1, 1, 1>, scalar_prefetch = 0 : i64, scratch_operands = 1 : i64, tpu.core_type = #tpu.core_type<tc>, window_params = [{transform_indices = @transform_0, window_bounds = array<i64: 10, 256>}, {transform_indices = @transform_1, window_bounds = array<i64: 256, 64>}, {transform_indices = @transform_2, window_bounds = array<i64: 1, 64>}, {transform_indices = @transform_3, window_bounds = array<i64: 10, 64>}]} {
    %c0_i32 = arith.constant 0 : i32
    %0 = arith.cmpi eq, %arg2, %c0_i32 : i32
    %1 = arith.extui %0 : i1 to i32
    %c0_i32_0 = arith.constant 0 : i32
    %2 = arith.cmpi ne, %1, %c0_i32_0 : i32
    scf.if %2 {
      %cst_10 = arith.constant 0.000000e+00 : f32
      %12 = vector.broadcast %cst_10 : f32 to vector<10x64xf32>
      %c0_11 = arith.constant 0 : index
      %c0_12 = arith.constant 0 : index
      %13 = vector.load %arg7[%c0_11, %c0_12] : memref<10x64xf32, #tpu.memory_space<vmem>>, vector<10x64xf32>
      tpu.vector_store %arg7[%c0_11, %c0_12], %12 {strides = array<i32>} : memref<10x64xf32, #tpu.memory_space<vmem>>, vector<10x64xf32>,
    } else {
    }
    %c0 = arith.constant 0 : index
    %c0_1 = arith.constant 0 : index
    %3 = vector.load %arg7[%c0, %c0_1] : memref<10x64xf32, #tpu.memory_space<vmem>>, vector<10x64xf32>
    %c0_2 = arith.constant 0 : index
    %c0_3 = arith.constant 0 : index
    %4 = vector.load %arg3[%c0_2, %c0_3] : memref<10x256xf32, #tpu.memory_space<vmem>>, vector<10x256xf32>
    %c0_4 = arith.constant 0 : index
    %c0_5 = arith.constant 0 : index
    %5 = vector.load %arg4[%c0_4, %c0_5] : memref<256x64xf32, #tpu.memory_space<vmem>>, vector<256x64xf32>
    %cst = arith.constant dense<0.000000e+00> : vector<10x64xf32>
    %6 = tpu.matmul %4, %5, %cst {dimension_numbers = #tpu.dot_dimension_numbers<[1], [0], [0], [1], [0, 0, 1, 1], [], []>} : vector<10x256xf32>, vector<256x64xf32>, vector<10x64xf32> -> vector<10x64xf32>
    %7 = arith.addf %3, %6 : vector<10x64xf32>
    %c0_6 = arith.constant 0 : index
    %c0_7 = arith.constant 0 : index
    %8 = vector.load %arg7[%c0_6, %c0_7] : memref<10x64xf32, #tpu.memory_space<vmem>>, vector<10x64xf32>
    tpu.vector_store %arg7[%c0_6, %c0_7], %7 {strides = array<i32>} : memref<10x64xf32, #tpu.memory_space<vmem>>, vector<10x64xf32>,
    %c0_i32_8 = arith.constant 0 : i32
    %9 = arith.cmpi eq, %arg2, %c0_i32_8 : i32
    %10 = arith.extui %9 : i1 to i32
    %c0_i32_9 = arith.constant 0 : i32
    %11 = arith.cmpi ne, %10, %c0_i32_9 : i32
    scf.if %11 {
      %c0_10 = arith.constant 0 : index
      %c0_11 = arith.constant 0 : index
      %12 = vector.load %arg7[%c0_10, %c0_11] : memref<10x64xf32, #tpu.memory_space<vmem>>, vector<10x64xf32>
      %c0_12 = arith.constant 0 : index
      %c0_13 = arith.constant 0 : index
      %13 = vector.load %arg5[%c0_12, %c0_13] : memref<1x64xf32, #tpu.memory_space<vmem>>, vector<1x64xf32>
      %14 = vector.broadcast %13 : vector<1x64xf32> to vector<10x64xf32>
      %15 = arith.addf %12, %14 : vector<10x64xf32>
      %c0_14 = arith.constant 0 : index
      %c0_15 = arith.constant 0 : index
      %16 = vector.load %arg6[%c0_14, %c0_15] : memref<10x64xf32, #tpu.memory_space<vmem>>, vector<10x64xf32>
      tpu.vector_store %arg6[%c0_14, %c0_15], %15 {strides = array<i32>} : memref<10x64xf32, #tpu.memory_space<vmem>>, vector<10x64xf32>,
    } else {
    }
    return
  }
  func.func @transform_0(%arg0: i32, %arg1: i32, %arg2: i32) -> (i32, i32) {
    %c0_i32 = arith.constant 0 : i32
    return %arg0, %arg2 : i32, i32
  }
  func.func @transform_1(%arg0: i32, %arg1: i32, %arg2: i32) -> (i32, i32) {
    %c0_i32 = arith.constant 0 : i32
    return %arg2, %arg1 : i32, i32
  }
  func.func @transform_2(%arg0: i32, %arg1: i32, %arg2: i32) -> (i32, i32) {
    %c0_i32 = arith.constant 0 : i32
    %c0_i32_0 = arith.constant 0 : i32
    return %c0_i32, %arg1 : i32, i32
  }
  func.func @transform_3(%arg0: i32, %arg1: i32, %arg2: i32) -> (i32, i32) {
    %c0_i32 = arith.constant 0 : i32
    return %arg0, %arg1 : i32, i32
  }
}

module attributes {stable_mosaic.version = 11 : i64} {
  func.func @ln_matmul_kernel(%arg0: i32, %arg1: i32, %arg2: memref<2x64xf32, #tpu.memory_space<vmem>>, %arg3: memref<1x64xf32, #tpu.memory_space<vmem>>, %arg4: memref<1x64xf32, #tpu.memory_space<vmem>>, %arg5: memref<64x16xf32, #tpu.memory_space<vmem>>, %arg6: memref<1x16xf32, #tpu.memory_space<vmem>>, %arg7: memref<2x16xf32, #tpu.memory_space<vmem>>) attributes {dimension_semantics = [#tpu.dimension_semantics<parallel>, #tpu.dimension_semantics<parallel>], iteration_bounds = array<i64: 1, 1>, scalar_prefetch = 0 : i64, scratch_operands = 0 : i64, tpu.core_type = #tpu.core_type<tc>, window_params = [{transform_indices = @transform_0, window_bounds = array<i64: 2, 64>}, {pipeline_mode = #tpu.pipeline_mode<synchronous>, transform_indices = @transform_1, window_bounds = array<i64: 1, 64>}, {pipeline_mode = #tpu.pipeline_mode<synchronous>, transform_indices = @transform_2, window_bounds = array<i64: 1, 64>}, {transform_indices = @transform_3, window_bounds = array<i64: 64, 16>}, {transform_indices = @transform_4, window_bounds = array<i64: 1, 16>}, {transform_indices = @transform_5, window_bounds = array<i64: 2, 16>}]} {
    %c0 = arith.constant 0 : index
    %c0_0 = arith.constant 0 : index
    %0 = vector.load %arg2[%c0, %c0_0] : memref<2x64xf32, #tpu.memory_space<vmem>>, vector<2x64xf32>
    %c0_1 = arith.constant 0 : index
    %c0_2 = arith.constant 0 : index
    %1 = vector.load %arg3[%c0_1, %c0_2] : memref<1x64xf32, #tpu.memory_space<vmem>>, vector<1x64xf32>
    %c0_3 = arith.constant 0 : index
    %c0_4 = arith.constant 0 : index
    %2 = vector.load %arg4[%c0_3, %c0_4] : memref<1x64xf32, #tpu.memory_space<vmem>>, vector<1x64xf32>
    %cst = arith.constant dense<0.000000e+00> : vector<2xf32>
    %3 = vector.multi_reduction <add>, %0, %cst [1] : vector<2x64xf32> to vector<2xf32>
    %4 = vector.shape_cast %3 : vector<2xf32> to vector<2x1xf32>
    %cst_5 = arith.constant 6.400000e+01 : f32
    %5 = vector.broadcast %cst_5 : f32 to vector<2x1xf32>
    %6 = arith.divf %4, %5 : vector<2x1xf32>
    %7 = vector.broadcast %6 : vector<2x1xf32> to vector<2x64xf32>
    %8 = arith.subf %0, %7 : vector<2x64xf32>
    %9 = arith.mulf %8, %8 : vector<2x64xf32>
    %cst_6 = arith.constant dense<0.000000e+00> : vector<2xf32>
    %10 = vector.multi_reduction <add>, %9, %cst_6 [1] : vector<2x64xf32> to vector<2xf32>
    %11 = vector.shape_cast %10 : vector<2xf32> to vector<2x1xf32>
    %cst_7 = arith.constant 6.400000e+01 : f32
    %12 = vector.broadcast %cst_7 : f32 to vector<2x1xf32>
    %13 = arith.divf %11, %12 : vector<2x1xf32>
    %cst_8 = arith.constant 9.99999974E-6 : f32
    %14 = vector.broadcast %cst_8 : f32 to vector<2x1xf32>
    %15 = arith.addf %13, %14 : vector<2x1xf32>
    %16 = math.rsqrt %15 : vector<2x1xf32>
    %17 = vector.broadcast %16 : vector<2x1xf32> to vector<2x64xf32>
    %18 = arith.mulf %8, %17 : vector<2x64xf32>
    %19 = vector.broadcast %1 : vector<1x64xf32> to vector<2x64xf32>
    %20 = arith.mulf %18, %19 : vector<2x64xf32>
    %21 = vector.broadcast %2 : vector<1x64xf32> to vector<2x64xf32>
    %22 = arith.addf %20, %21 : vector<2x64xf32>
    %c0_9 = arith.constant 0 : index
    %c0_10 = arith.constant 0 : index
    %23 = vector.load %arg5[%c0_9, %c0_10] : memref<64x16xf32, #tpu.memory_space<vmem>>, vector<64x16xf32>
    %cst_11 = arith.constant dense<0.000000e+00> : vector<2x16xf32>
    %24 = tpu.matmul %22, %23, %cst_11 {dimension_numbers = #tpu.dot_dimension_numbers<[1], [0], [0], [1], [0, 0, 1, 1], [], []>} : vector<2x64xf32>, vector<64x16xf32>, vector<2x16xf32> -> vector<2x16xf32>
    %c0_12 = arith.constant 0 : index
    %c0_13 = arith.constant 0 : index
    %25 = vector.load %arg6[%c0_12, %c0_13] : memref<1x16xf32, #tpu.memory_space<vmem>>, vector<1x16xf32>
    %26 = vector.broadcast %25 : vector<1x16xf32> to vector<2x16xf32>
    %27 = arith.addf %24, %26 : vector<2x16xf32>
    %c0_14 = arith.constant 0 : index
    %c0_15 = arith.constant 0 : index
    %28 = vector.load %arg7[%c0_14, %c0_15] : memref<2x16xf32, #tpu.memory_space<vmem>>, vector<2x16xf32>
    tpu.vector_store %arg7[%c0_14, %c0_15], %27 {strides = array<i32>} : memref<2x16xf32, #tpu.memory_space<vmem>>, vector<2x16xf32>,
    return
  }
  func.func @transform_0(%arg0: i32, %arg1: i32) -> (i32, i32) {
    %c0_i32 = arith.constant 0 : i32
    %c0_i32_0 = arith.constant 0 : i32
    return %arg0, %c0_i32 : i32, i32
  }
  func.func @transform_1(%arg0: i32, %arg1: i32) -> (i32, i32) {
    %c0_i32 = arith.constant 0 : i32
    %c0_i32_0 = arith.constant 0 : i32
    %c0_i32_1 = arith.constant 0 : i32
    return %c0_i32, %c0_i32_0 : i32, i32
  }
  func.func @transform_2(%arg0: i32, %arg1: i32) -> (i32, i32) {
    %c0_i32 = arith.constant 0 : i32
    %c0_i32_0 = arith.constant 0 : i32
    %c0_i32_1 = arith.constant 0 : i32
    return %c0_i32, %c0_i32_0 : i32, i32
  }
  func.func @transform_3(%arg0: i32, %arg1: i32) -> (i32, i32) {
    %c0_i32 = arith.constant 0 : i32
    %c0_i32_0 = arith.constant 0 : i32
    return %c0_i32, %arg1 : i32, i32
  }
  func.func @transform_4(%arg0: i32, %arg1: i32) -> (i32, i32) {
    %c0_i32 = arith.constant 0 : i32
    %c0_i32_0 = arith.constant 0 : i32
    return %c0_i32, %arg1 : i32, i32
  }
  func.func @transform_5(%arg0: i32, %arg1: i32) -> (i32, i32) {
    %c0_i32 = arith.constant 0 : i32
    return %arg0, %arg1 : i32, i32
  }
}

module attributes {stable_mosaic.version = 11 : i64} {
  func.func @ln_matmul_kernel(%arg0: i32, %arg1: i32, %arg2: memref<24x32xf32, #tpu.memory_space<vmem>>, %arg3: memref<1x32xf32, #tpu.memory_space<vmem>>, %arg4: memref<1x32xf32, #tpu.memory_space<vmem>>, %arg5: memref<32x96xf32, #tpu.memory_space<vmem>>, %arg6: memref<1x96xf32, #tpu.memory_space<vmem>>, %arg7: memref<24x96xf32, #tpu.memory_space<vmem>>) attributes {dimension_semantics = [#tpu.dimension_semantics<parallel>, #tpu.dimension_semantics<parallel>], iteration_bounds = array<i64: 1, 1>, scalar_prefetch = 0 : i64, scratch_operands = 0 : i64, tpu.core_type = #tpu.core_type<tc>, window_params = [{transform_indices = @transform_0, window_bounds = array<i64: 24, 32>}, {pipeline_mode = #tpu.pipeline_mode<synchronous>, transform_indices = @transform_1, window_bounds = array<i64: 1, 32>}, {pipeline_mode = #tpu.pipeline_mode<synchronous>, transform_indices = @transform_2, window_bounds = array<i64: 1, 32>}, {transform_indices = @transform_3, window_bounds = array<i64: 32, 96>}, {transform_indices = @transform_4, window_bounds = array<i64: 1, 96>}, {transform_indices = @transform_5, window_bounds = array<i64: 24, 96>}]} {
    %c0 = arith.constant 0 : index
    %c0_0 = arith.constant 0 : index
    %0 = vector.load %arg2[%c0, %c0_0] : memref<24x32xf32, #tpu.memory_space<vmem>>, vector<24x32xf32>
    %c0_1 = arith.constant 0 : index
    %c0_2 = arith.constant 0 : index
    %1 = vector.load %arg3[%c0_1, %c0_2] : memref<1x32xf32, #tpu.memory_space<vmem>>, vector<1x32xf32>
    %c0_3 = arith.constant 0 : index
    %c0_4 = arith.constant 0 : index
    %2 = vector.load %arg4[%c0_3, %c0_4] : memref<1x32xf32, #tpu.memory_space<vmem>>, vector<1x32xf32>
    %cst = arith.constant dense<0.000000e+00> : vector<24xf32>
    %3 = vector.multi_reduction <add>, %0, %cst [1] : vector<24x32xf32> to vector<24xf32>
    %4 = vector.shape_cast %3 : vector<24xf32> to vector<24x1xf32>
    %cst_5 = arith.constant 3.200000e+01 : f32
    %5 = vector.broadcast %cst_5 : f32 to vector<24x1xf32>
    %6 = arith.divf %4, %5 : vector<24x1xf32>
    %7 = vector.broadcast %6 : vector<24x1xf32> to vector<24x32xf32>
    %8 = arith.subf %0, %7 : vector<24x32xf32>
    %9 = arith.mulf %8, %8 : vector<24x32xf32>
    %cst_6 = arith.constant dense<0.000000e+00> : vector<24xf32>
    %10 = vector.multi_reduction <add>, %9, %cst_6 [1] : vector<24x32xf32> to vector<24xf32>
    %11 = vector.shape_cast %10 : vector<24xf32> to vector<24x1xf32>
    %cst_7 = arith.constant 3.200000e+01 : f32
    %12 = vector.broadcast %cst_7 : f32 to vector<24x1xf32>
    %13 = arith.divf %11, %12 : vector<24x1xf32>
    %cst_8 = arith.constant 9.99999974E-6 : f32
    %14 = vector.broadcast %cst_8 : f32 to vector<24x1xf32>
    %15 = arith.addf %13, %14 : vector<24x1xf32>
    %16 = math.rsqrt %15 : vector<24x1xf32>
    %17 = vector.broadcast %16 : vector<24x1xf32> to vector<24x32xf32>
    %18 = arith.mulf %8, %17 : vector<24x32xf32>
    %19 = vector.broadcast %1 : vector<1x32xf32> to vector<24x32xf32>
    %20 = arith.mulf %18, %19 : vector<24x32xf32>
    %21 = vector.broadcast %2 : vector<1x32xf32> to vector<24x32xf32>
    %22 = arith.addf %20, %21 : vector<24x32xf32>
    %c0_9 = arith.constant 0 : index
    %c0_10 = arith.constant 0 : index
    %23 = vector.load %arg5[%c0_9, %c0_10] : memref<32x96xf32, #tpu.memory_space<vmem>>, vector<32x96xf32>
    %cst_11 = arith.constant dense<0.000000e+00> : vector<24x96xf32>
    %24 = tpu.matmul %22, %23, %cst_11 {dimension_numbers = #tpu.dot_dimension_numbers<[1], [0], [0], [1], [0, 0, 1, 1], [], []>} : vector<24x32xf32>, vector<32x96xf32>, vector<24x96xf32> -> vector<24x96xf32>
    %c0_12 = arith.constant 0 : index
    %c0_13 = arith.constant 0 : index
    %25 = vector.load %arg6[%c0_12, %c0_13] : memref<1x96xf32, #tpu.memory_space<vmem>>, vector<1x96xf32>
    %26 = vector.broadcast %25 : vector<1x96xf32> to vector<24x96xf32>
    %27 = arith.addf %24, %26 : vector<24x96xf32>
    %c0_14 = arith.constant 0 : index
    %c0_15 = arith.constant 0 : index
    %28 = vector.load %arg7[%c0_14, %c0_15] : memref<24x96xf32, #tpu.memory_space<vmem>>, vector<24x96xf32>
    tpu.vector_store %arg7[%c0_14, %c0_15], %27 {strides = array<i32>} : memref<24x96xf32, #tpu.memory_space<vmem>>, vector<24x96xf32>,
    return
  }
  func.func @transform_0(%arg0: i32, %arg1: i32) -> (i32, i32) {
    %c0_i32 = arith.constant 0 : i32
    %c0_i32_0 = arith.constant 0 : i32
    return %arg0, %c0_i32 : i32, i32
  }
  func.func @transform_1(%arg0: i32, %arg1: i32) -> (i32, i32) {
    %c0_i32 = arith.constant 0 : i32
    %c0_i32_0 = arith.constant 0 : i32
    %c0_i32_1 = arith.constant 0 : i32
    return %c0_i32, %c0_i32_0 : i32, i32
  }
  func.func @transform_2(%arg0: i32, %arg1: i32) -> (i32, i32) {
    %c0_i32 = arith.constant 0 : i32
    %c0_i32_0 = arith.constant 0 : i32
    %c0_i32_1 = arith.constant 0 : i32
    return %c0_i32, %c0_i32_0 : i32, i32
  }
  func.func @transform_3(%arg0: i32, %arg1: i32) -> (i32, i32) {
    %c0_i32 = arith.constant 0 : i32
    %c0_i32_0 = arith.constant 0 : i32
    return %c0_i32, %arg1 : i32, i32
  }
  func.func @transform_4(%arg0: i32, %arg1: i32) -> (i32, i32) {
    %c0_i32 = arith.constant 0 : i32
    %c0_i32_0 = arith.constant 0 : i32
    return %c0_i32, %arg1 : i32, i32
  }
  func.func @transform_5(%arg0: i32, %arg1: i32) -> (i32, i32) {
    %c0_i32 = arith.constant 0 : i32
    return %arg0, %arg1 : i32, i32
  }
}

module attributes {stable_mosaic.version = 11 : i64} {
  func.func @matmul_bias_kernel(%arg0: i32, %arg1: i32, %arg2: i32, %arg3: memref<24x32xf32, #tpu.memory_space<vmem>>, %arg4: memref<32x32xf32, #tpu.memory_space<vmem>>, %arg5: memref<1x32xf32, #tpu.memory_space<vmem>>, %arg6: memref<24x32xf32, #tpu.memory_space<vmem>>, %arg7: memref<24x32xf32, #tpu.memory_space<vmem>>) attributes {dimension_semantics = [#tpu.dimension_semantics<parallel>, #tpu.dimension_semantics<parallel>, #tpu.dimension_semantics<arbitrary>], iteration_bounds = array<i64: 1, 1, 1>, scalar_prefetch = 0 : i64, scratch_operands = 1 : i64, tpu.core_type = #tpu.core_type<tc>, window_params = [{transform_indices = @transform_0, window_bounds = array<i64: 24, 32>}, {transform_indices = @transform_1, window_bounds = array<i64: 32, 32>}, {transform_indices = @transform_2, window_bounds = array<i64: 1, 32>}, {transform_indices = @transform_3, window_bounds = array<i64: 24, 32>}]} {
    %c0_i32 = arith.constant 0 : i32
    %0 = arith.cmpi eq, %arg2, %c0_i32 : i32
    %1 = arith.extui %0 : i1 to i32
    %c0_i32_0 = arith.constant 0 : i32
    %2 = arith.cmpi ne, %1, %c0_i32_0 : i32
    scf.if %2 {
      %cst_10 = arith.constant 0.000000e+00 : f32
      %12 = vector.broadcast %cst_10 : f32 to vector<24x32xf32>
      %c0_11 = arith.constant 0 : index
      %c0_12 = arith.constant 0 : index
      %13 = vector.load %arg7[%c0_11, %c0_12] : memref<24x32xf32, #tpu.memory_space<vmem>>, vector<24x32xf32>
      tpu.vector_store %arg7[%c0_11, %c0_12], %12 {strides = array<i32>} : memref<24x32xf32, #tpu.memory_space<vmem>>, vector<24x32xf32>,
    } else {
    }
    %c0 = arith.constant 0 : index
    %c0_1 = arith.constant 0 : index
    %3 = vector.load %arg7[%c0, %c0_1] : memref<24x32xf32, #tpu.memory_space<vmem>>, vector<24x32xf32>
    %c0_2 = arith.constant 0 : index
    %c0_3 = arith.constant 0 : index
    %4 = vector.load %arg3[%c0_2, %c0_3] : memref<24x32xf32, #tpu.memory_space<vmem>>, vector<24x32xf32>
    %c0_4 = arith.constant 0 : index
    %c0_5 = arith.constant 0 : index
    %5 = vector.load %arg4[%c0_4, %c0_5] : memref<32x32xf32, #tpu.memory_space<vmem>>, vector<32x32xf32>
    %cst = arith.constant dense<0.000000e+00> : vector<24x32xf32>
    %6 = tpu.matmul %4, %5, %cst {dimension_numbers = #tpu.dot_dimension_numbers<[1], [0], [0], [1], [0, 0, 1, 1], [], []>} : vector<24x32xf32>, vector<32x32xf32>, vector<24x32xf32> -> vector<24x32xf32>
    %7 = arith.addf %3, %6 : vector<24x32xf32>
    %c0_6 = arith.constant 0 : index
    %c0_7 = arith.constant 0 : index
    %8 = vector.load %arg7[%c0_6, %c0_7] : memref<24x32xf32, #tpu.memory_space<vmem>>, vector<24x32xf32>
    tpu.vector_store %arg7[%c0_6, %c0_7], %7 {strides = array<i32>} : memref<24x32xf32, #tpu.memory_space<vmem>>, vector<24x32xf32>,
    %c0_i32_8 = arith.constant 0 : i32
    %9 = arith.cmpi eq, %arg2, %c0_i32_8 : i32
    %10 = arith.extui %9 : i1 to i32
    %c0_i32_9 = arith.constant 0 : i32
    %11 = arith.cmpi ne, %10, %c0_i32_9 : i32
    scf.if %11 {
      %c0_10 = arith.constant 0 : index
      %c0_11 = arith.constant 0 : index
      %12 = vector.load %arg7[%c0_10, %c0_11] : memref<24x32xf32, #tpu.memory_space<vmem>>, vector<24x32xf32>
      %c0_12 = arith.constant 0 : index
      %c0_13 = arith.constant 0 : index
      %13 = vector.load %arg5[%c0_12, %c0_13] : memref<1x32xf32, #tpu.memory_space<vmem>>, vector<1x32xf32>
      %14 = vector.broadcast %13 : vector<1x32xf32> to vector<24x32xf32>
      %15 = arith.addf %12, %14 : vector<24x32xf32>
      %c0_14 = arith.constant 0 : index
      %c0_15 = arith.constant 0 : index
      %16 = vector.load %arg6[%c0_14, %c0_15] : memref<24x32xf32, #tpu.memory_space<vmem>>, vector<24x32xf32>
      tpu.vector_store %arg6[%c0_14, %c0_15], %15 {strides = array<i32>} : memref<24x32xf32, #tpu.memory_space<vmem>>, vector<24x32xf32>,
    } else {
    }
    return
  }
  func.func @transform_0(%arg0: i32, %arg1: i32, %arg2: i32) -> (i32, i32) {
    %c0_i32 = arith.constant 0 : i32
    return %arg0, %arg2 : i32, i32
  }
  func.func @transform_1(%arg0: i32, %arg1: i32, %arg2: i32) -> (i32, i32) {
    %c0_i32 = arith.constant 0 : i32
    return %arg2, %arg1 : i32, i32
  }
  func.func @transform_2(%arg0: i32, %arg1: i32, %arg2: i32) -> (i32, i32) {
    %c0_i32 = arith.constant 0 : i32
    %c0_i32_0 = arith.constant 0 : i32
    return %c0_i32, %arg1 : i32, i32
  }
  func.func @transform_3(%arg0: i32, %arg1: i32, %arg2: i32) -> (i32, i32) {
    %c0_i32 = arith.constant 0 : i32
    return %arg0, %arg1 : i32, i32
  }
}

module attributes {stable_mosaic.version = 11 : i64} {
  func.func @attention_kernel(%arg0: i32, %arg1: memref<1x8x96xf32, #tpu.memory_space<vmem>>, %arg2: memref<1x1x8xf32, #tpu.memory_space<vmem>>, %arg3: memref<1x8x32xf32, #tpu.memory_space<vmem>>) attributes {dimension_semantics = [#tpu.dimension_semantics<parallel>], iteration_bounds = array<i64: 3>, scalar_prefetch = 0 : i64, scratch_operands = 0 : i64, tpu.core_type = #tpu.core_type<tc>, window_params = [{transform_indices = @transform_0, window_bounds = array<i64: 1, 8, 96>}, {transform_indices = @transform_1, window_bounds = array<i64: 1, 1, 8>}, {transform_indices = @transform_2, window_bounds = array<i64: 1, 8, 32>}]} {
    %c0 = arith.constant 0 : index
    %c0_0 = arith.constant 0 : index
    %c0_1 = arith.constant 0 : index
    %0 = vector.load %arg1[%c0, %c0_0, %c0_1] : memref<1x8x96xf32, #tpu.memory_space<vmem>>, vector<1x8x96xf32>
    %1 = vector.shape_cast %0 : vector<1x8x96xf32> to vector<8x96xf32>
    %c0_2 = arith.constant 0 : index
    %c0_3 = arith.constant 0 : index
    %c0_4 = arith.constant 0 : index
    %2 = vector.load %arg2[%c0_2, %c0_3, %c0_4] : memref<1x1x8xf32, #tpu.memory_space<vmem>>, vector<1x1x8xf32>
    %3 = vector.shape_cast %2 : vector<1x1x8xf32> to vector<1x8xf32>
    %4 = vector.extract_strided_slice %1 {offsets = [0, 0], sizes = [8, 8], strides = [1, 1]} : vector<8x96xf32> to vector<8x8xf32>
    %cst = arith.constant 0.353553385 : f32
    %5 = vector.broadcast %cst : f32 to vector<8x8xf32>
    %6 = arith.mulf %4, %5 : vector<8x8xf32>
    %7 = vector.extract_strided_slice %1 {offsets = [0, 32], sizes = [8, 8], strides = [1, 1]} : vector<8x96xf32> to vector<8x8xf32>
    %8 = vector.extract_strided_slice %1 {offsets = [0, 64], sizes = [8, 8], strides = [1, 1]} : vector<8x96xf32> to vector<8x8xf32>
    %cst_5 = arith.constant dense<0.000000e+00> : vector<8x8xf32>
    %9 = tpu.matmul %6, %7, %cst_5 {dimension_numbers = #tpu.dot_dimension_numbers<[1], [1], [0], [0], [0, 0, 1, 0], [], []>} : vector<8x8xf32>, vector<8x8xf32>, vector<8x8xf32> -> vector<8x8xf32>
    %10 = vector.broadcast %3 : vector<1x8xf32> to vector<8x8xf32>
    %11 = arith.addf %9, %10 : vector<8x8xf32>
    %cst_6 = arith.constant dense<0xFF800000> : vector<8xf32>
    %12 = vector.multi_reduction <maximumf>, %11, %cst_6 [1] : vector<8x8xf32> to vector<8xf32>
    %13 = vector.shape_cast %12 : vector<8xf32> to vector<8x1xf32>
    %14 = vector.broadcast %13 : vector<8x1xf32> to vector<8x8xf32>
    %15 = arith.subf %11, %14 : vector<8x8xf32>
    %16 = math.exp %15 : vector<8x8xf32>
    %cst_7 = arith.constant dense<0.000000e+00> : vector<8xf32>
    %17 = vector.multi_reduction <add>, %16, %cst_7 [1] : vector<8x8xf32> to vector<8xf32>
    %18 = vector.shape_cast %17 : vector<8xf32> to vector<8x1xf32>
    %19 = tpu.reciprocal %18 {approx = true} : vector<8x1xf32> -> vector<8x1xf32>
    %20 = vector.broadcast %19 : vector<8x1xf32> to vector<8x8xf32>
    %21 = arith.mulf %16, %20 : vector<8x8xf32>
    %cst_8 = arith.constant dense<0.000000e+00> : vector<8x8xf32>
    %22 = tpu.matmul %21, %8, %cst_8 {dimension_numbers = #tpu.dot_dimension_numbers<[1], [0], [0], [1], [0, 0, 1, 1], [], []>} : vector<8x8xf32>, vector<8x8xf32>, vector<8x8xf32> -> vector<8x8xf32>
    %23 = vector.extract_strided_slice %1 {offsets = [0, 8], sizes = [8, 8], strides = [1, 1]} : vector<8x96xf32> to vector<8x8xf32>
    %cst_9 = arith.constant 0.353553385 : f32
    %24 = vector.broadcast %cst_9 : f32 to vector<8x8xf32>
    %25 = arith.mulf %23, %24 : vector<8x8xf32>
    %26 = vector.extract_strided_slice %1 {offsets = [0, 40], sizes = [8, 8], strides = [1, 1]} : vector<8x96xf32> to vector<8x8xf32>
    %27 = vector.extract_strided_slice %1 {offsets = [0, 72], sizes = [8, 8], strides = [1, 1]} : vector<8x96xf32> to vector<8x8xf32>
    %cst_10 = arith.constant dense<0.000000e+00> : vector<8x8xf32>
    %28 = tpu.matmul %25, %26, %cst_10 {dimension_numbers = #tpu.dot_dimension_numbers<[1], [1], [0], [0], [0, 0, 1, 0], [], []>} : vector<8x8xf32>, vector<8x8xf32>, vector<8x8xf32> -> vector<8x8xf32>
    %29 = vector.broadcast %3 : vector<1x8xf32> to vector<8x8xf32>
    %30 = arith.addf %28, %29 : vector<8x8xf32>
    %cst_11 = arith.constant dense<0xFF800000> : vector<8xf32>
    %31 = vector.multi_reduction <maximumf>, %30, %cst_11 [1] : vector<8x8xf32> to vector<8xf32>
    %32 = vector.shape_cast %31 : vector<8xf32> to vector<8x1xf32>
    %33 = vector.broadcast %32 : vector<8x1xf32> to vector<8x8xf32>
    %34 = arith.subf %30, %33 : vector<8x8xf32>
    %35 = math.exp %34 : vector<8x8xf32>
    %cst_12 = arith.constant dense<0.000000e+00> : vector<8xf32>
    %36 = vector.multi_reduction <add>, %35, %cst_12 [1] : vector<8x8xf32> to vector<8xf32>
    %37 = vector.shape_cast %36 : vector<8xf32> to vector<8x1xf32>
    %38 = tpu.reciprocal %37 {approx = true} : vector<8x1xf32> -> vector<8x1xf32>
    %39 = vector.broadcast %38 : vector<8x1xf32> to vector<8x8xf32>
    %40 = arith.mulf %35, %39 : vector<8x8xf32>
    %cst_13 = arith.constant dense<0.000000e+00> : vector<8x8xf32>
    %41 = tpu.matmul %40, %27, %cst_13 {dimension_numbers = #tpu.dot_dimension_numbers<[1], [0], [0], [1], [0, 0, 1, 1], [], []>} : vector<8x8xf32>, vector<8x8xf32>, vector<8x8xf32> -> vector<8x8xf32>
    %42 = vector.extract_strided_slice %1 {offsets = [0, 16], sizes = [8, 8], strides = [1, 1]} : vector<8x96xf32> to vector<8x8xf32>
    %cst_14 = arith.constant 0.353553385 : f32
    %43 = vector.broadcast %cst_14 : f32 to vector<8x8xf32>
    %44 = arith.mulf %42, %43 : vector<8x8xf32>
    %45 = vector.extract_strided_slice %1 {offsets = [0, 48], sizes = [8, 8], strides = [1, 1]} : vector<8x96xf32> to vector<8x8xf32>
    %46 = vector.extract_strided_slice %1 {offsets = [0, 80], sizes = [8, 8], strides = [1, 1]} : vector<8x96xf32> to vector<8x8xf32>
    %cst_15 = arith.constant dense<0.000000e+00> : vector<8x8xf32>
    %47 = tpu.matmul %44, %45, %cst_15 {dimension_numbers = #tpu.dot_dimension_numbers<[1], [1], [0], [0], [0, 0, 1, 0], [], []>} : vector<8x8xf32>, vector<8x8xf32>, vector<8x8xf32> -> vector<8x8xf32>
    %48 = vector.broadcast %3 : vector<1x8xf32> to vector<8x8xf32>
    %49 = arith.addf %47, %48 : vector<8x8xf32>
    %cst_16 = arith.constant dense<0xFF800000> : vector<8xf32>
    %50 = vector.multi_reduction <maximumf>, %49, %cst_16 [1] : vector<8x8xf32> to vector<8xf32>
    %51 = vector.shape_cast %50 : vector<8xf32> to vector<8x1xf32>
    %52 = vector.broadcast %51 : vector<8x1xf32> to vector<8x8xf32>
    %53 = arith.subf %49, %52 : vector<8x8xf32>
    %54 = math.exp %53 : vector<8x8xf32>
    %cst_17 = arith.constant dense<0.000000e+00> : vector<8xf32>
    %55 = vector.multi_reduction <add>, %54, %cst_17 [1] : vector<8x8xf32> to vector<8xf32>
    %56 = vector.shape_cast %55 : vector<8xf32> to vector<8x1xf32>
    %57 = tpu.reciprocal %56 {approx = true} : vector<8x1xf32> -> vector<8x1xf32>
    %58 = vector.broadcast %57 : vector<8x1xf32> to vector<8x8xf32>
    %59 = arith.mulf %54, %58 : vector<8x8xf32>
    %cst_18 = arith.constant dense<0.000000e+00> : vector<8x8xf32>
    %60 = tpu.matmul %59, %46, %cst_18 {dimension_numbers = #tpu.dot_dimension_numbers<[1], [0], [0], [1], [0, 0, 1, 1], [], []>} : vector<8x8xf32>, vector<8x8xf32>, vector<8x8xf32> -> vector<8x8xf32>
    %61 = vector.extract_strided_slice %1 {offsets = [0, 24], sizes = [8, 8], strides = [1, 1]} : vector<8x96xf32> to vector<8x8xf32>
    %cst_19 = arith.constant 0.353553385 : f32
    %62 = vector.broadcast %cst_19 : f32 to vector<8x8xf32>
    %63 = arith.mulf %61, %62 : vector<8x8xf32>
    %64 = vector.extract_strided_slice %1 {offsets = [0, 56], sizes = [8, 8], strides = [1, 1]} : vector<8x96xf32> to vector<8x8xf32>
    %65 = vector.extract_strided_slice %1 {offsets = [0, 88], sizes = [8, 8], strides = [1, 1]} : vector<8x96xf32> to vector<8x8xf32>
    %cst_20 = arith.constant dense<0.000000e+00> : vector<8x8xf32>
    %66 = tpu.matmul %63, %64, %cst_20 {dimension_numbers = #tpu.dot_dimension_numbers<[1], [1], [0], [0], [0, 0, 1, 0], [], []>} : vector<8x8xf32>, vector<8x8xf32>, vector<8x8xf32> -> vector<8x8xf32>
    %67 = vector.broadcast %3 : vector<1x8xf32> to vector<8x8xf32>
    %68 = arith.addf %66, %67 : vector<8x8xf32>
    %cst_21 = arith.constant dense<0xFF800000> : vector<8xf32>
    %69 = vector.multi_reduction <maximumf>, %68, %cst_21 [1] : vector<8x8xf32> to vector<8xf32>
    %70 = vector.shape_cast %69 : vector<8xf32> to vector<8x1xf32>
    %71 = vector.broadcast %70 : vector<8x1xf32> to vector<8x8xf32>
    %72 = arith.subf %68, %71 : vector<8x8xf32>
    %73 = math.exp %72 : vector<8x8xf32>
    %cst_22 = arith.constant dense<0.000000e+00> : vector<8xf32>
    %74 = vector.multi_reduction <add>, %73, %cst_22 [1] : vector<8x8xf32> to vector<8xf32>
    %75 = vector.shape_cast %74 : vector<8xf32> to vector<8x1xf32>
    %76 = tpu.reciprocal %75 {approx = true} : vector<8x1xf32> -> vector<8x1xf32>
    %77 = vector.broadcast %76 : vector<8x1xf32> to vector<8x8xf32>
    %78 = arith.mulf %73, %77 : vector<8x8xf32>
    %cst_23 = arith.constant dense<0.000000e+00> : vector<8x8xf32>
    %79 = tpu.matmul %78, %65, %cst_23 {dimension_numbers = #tpu.dot_dimension_numbers<[1], [0], [0], [1], [0, 0, 1, 1], [], []>} : vector<8x8xf32>, vector<8x8xf32>, vector<8x8xf32> -> vector<8x8xf32>
    %80 = tpu.concatenate %22, %41, %60, %79 in 1 : vector<8x8xf32>, vector<8x8xf32>, vector<8x8xf32>, vector<8x8xf32> -> vector<8x32xf32>
    %c0_24 = arith.constant 0 : index
    %c0_25 = arith.constant 0 : index
    %c0_26 = arith.constant 0 : index
    %81 = vector.load %arg3[%c0_24, %c0_25, %c0_26] : memref<1x8x32xf32, #tpu.memory_space<vmem>>, vector<1x8x32xf32>
    %82 = vector.shape_cast %81 : vector<1x8x32xf32> to vector<8x32xf32>
    %83 = vector.shape_cast %80 : vector<8x32xf32> to vector<1x8x32xf32>
    tpu.vector_store %arg3[%c0_24, %c0_25, %c0_26], %83 {strides = array<i32>} : memref<1x8x32xf32, #tpu.memory_space<vmem>>, vector<1x8x32xf32>,
    return
  }
  func.func @transform_0(%arg0: i32) -> (i32, i32, i32) {
    %c0_i32 = arith.constant 0 : i32
    %c0_i32_0 = arith.constant 0 : i32
    %c0_i32_1 = arith.constant 0 : i32
    return %arg0, %c0_i32, %c0_i32_0 : i32, i32, i32
  }
  func.func @transform_1(%arg0: i32) -> (i32, i32, i32) {
    %c0_i32 = arith.constant 0 : i32
    %c0_i32_0 = arith.constant 0 : i32
    %c0_i32_1 = arith.constant 0 : i32
    return %arg0, %c0_i32, %c0_i32_0 : i32, i32, i32
  }
  func.func @transform_2(%arg0: i32) -> (i32, i32, i32) {
    %c0_i32 = arith.constant 0 : i32
    %c0_i32_0 = arith.constant 0 : i32
    %c0_i32_1 = arith.constant 0 : i32
    return %arg0, %c0_i32, %c0_i32_0 : i32, i32, i32
  }
}

module attributes {stable_mosaic.version = 11 : i64} {
  func.func @ln_matmul_kernel(%arg0: i32, %arg1: i32, %arg2: memref<24x32xf32, #tpu.memory_space<vmem>>, %arg3: memref<1x32xf32, #tpu.memory_space<vmem>>, %arg4: memref<1x32xf32, #tpu.memory_space<vmem>>, %arg5: memref<32x128xf32, #tpu.memory_space<vmem>>, %arg6: memref<1x128xf32, #tpu.memory_space<vmem>>, %arg7: memref<24x128xf32, #tpu.memory_space<vmem>>) attributes {dimension_semantics = [#tpu.dimension_semantics<parallel>, #tpu.dimension_semantics<parallel>], iteration_bounds = array<i64: 1, 1>, scalar_prefetch = 0 : i64, scratch_operands = 0 : i64, tpu.core_type = #tpu.core_type<tc>, window_params = [{transform_indices = @transform_0, window_bounds = array<i64: 24, 32>}, {pipeline_mode = #tpu.pipeline_mode<synchronous>, transform_indices = @transform_1, window_bounds = array<i64: 1, 32>}, {pipeline_mode = #tpu.pipeline_mode<synchronous>, transform_indices = @transform_2, window_bounds = array<i64: 1, 32>}, {transform_indices = @transform_3, window_bounds = array<i64: 32, 128>}, {transform_indices = @transform_4, window_bounds = array<i64: 1, 128>}, {transform_indices = @transform_5, window_bounds = array<i64: 24, 128>}]} {
    %c0 = arith.constant 0 : index
    %c0_0 = arith.constant 0 : index
    %0 = vector.load %arg2[%c0, %c0_0] : memref<24x32xf32, #tpu.memory_space<vmem>>, vector<24x32xf32>
    %c0_1 = arith.constant 0 : index
    %c0_2 = arith.constant 0 : index
    %1 = vector.load %arg3[%c0_1, %c0_2] : memref<1x32xf32, #tpu.memory_space<vmem>>, vector<1x32xf32>
    %c0_3 = arith.constant 0 : index
    %c0_4 = arith.constant 0 : index
    %2 = vector.load %arg4[%c0_3, %c0_4] : memref<1x32xf32, #tpu.memory_space<vmem>>, vector<1x32xf32>
    %cst = arith.constant dense<0.000000e+00> : vector<24xf32>
    %3 = vector.multi_reduction <add>, %0, %cst [1] : vector<24x32xf32> to vector<24xf32>
    %4 = vector.shape_cast %3 : vector<24xf32> to vector<24x1xf32>
    %cst_5 = arith.constant 3.200000e+01 : f32
    %5 = vector.broadcast %cst_5 : f32 to vector<24x1xf32>
    %6 = arith.divf %4, %5 : vector<24x1xf32>
    %7 = vector.broadcast %6 : vector<24x1xf32> to vector<24x32xf32>
    %8 = arith.subf %0, %7 : vector<24x32xf32>
    %9 = arith.mulf %8, %8 : vector<24x32xf32>
    %cst_6 = arith.constant dense<0.000000e+00> : vector<24xf32>
    %10 = vector.multi_reduction <add>, %9, %cst_6 [1] : vector<24x32xf32> to vector<24xf32>
    %11 = vector.shape_cast %10 : vector<24xf32> to vector<24x1xf32>
    %cst_7 = arith.constant 3.200000e+01 : f32
    %12 = vector.broadcast %cst_7 : f32 to vector<24x1xf32>
    %13 = arith.divf %11, %12 : vector<24x1xf32>
    %cst_8 = arith.constant 9.99999974E-6 : f32
    %14 = vector.broadcast %cst_8 : f32 to vector<24x1xf32>
    %15 = arith.addf %13, %14 : vector<24x1xf32>
    %16 = math.rsqrt %15 : vector<24x1xf32>
    %17 = vector.broadcast %16 : vector<24x1xf32> to vector<24x32xf32>
    %18 = arith.mulf %8, %17 : vector<24x32xf32>
    %19 = vector.broadcast %1 : vector<1x32xf32> to vector<24x32xf32>
    %20 = arith.mulf %18, %19 : vector<24x32xf32>
    %21 = vector.broadcast %2 : vector<1x32xf32> to vector<24x32xf32>
    %22 = arith.addf %20, %21 : vector<24x32xf32>
    %c0_9 = arith.constant 0 : index
    %c0_10 = arith.constant 0 : index
    %23 = vector.load %arg5[%c0_9, %c0_10] : memref<32x128xf32, #tpu.memory_space<vmem>>, vector<32x128xf32>
    %cst_11 = arith.constant dense<0.000000e+00> : vector<24x128xf32>
    %24 = tpu.matmul %22, %23, %cst_11 {dimension_numbers = #tpu.dot_dimension_numbers<[1], [0], [0], [1], [0, 0, 1, 1], [], []>} : vector<24x32xf32>, vector<32x128xf32>, vector<24x128xf32> -> vector<24x128xf32>
    %c0_12 = arith.constant 0 : index
    %c0_13 = arith.constant 0 : index
    %25 = vector.load %arg6[%c0_12, %c0_13] : memref<1x128xf32, #tpu.memory_space<vmem>>, vector<1x128xf32>
    %26 = vector.broadcast %25 : vector<1x128xf32> to vector<24x128xf32>
    %27 = arith.addf %24, %26 : vector<24x128xf32>
    %cst_14 = arith.constant -1.702000e+00 : f32
    %28 = vector.broadcast %cst_14 : f32 to vector<24x128xf32>
    %29 = arith.mulf %28, %27 : vector<24x128xf32>
    %30 = math.exp %29 : vector<24x128xf32>
    %cst_15 = arith.constant 1.000000e+00 : f32
    %31 = vector.broadcast %cst_15 : f32 to vector<24x128xf32>
    %32 = arith.addf %31, %30 : vector<24x128xf32>
    %33 = tpu.reciprocal %32 {approx = true} : vector<24x128xf32> -> vector<24x128xf32>
    %34 = arith.mulf %27, %33 : vector<24x128xf32>
    %c0_16 = arith.constant 0 : index
    %c0_17 = arith.constant 0 : index
    %35 = vector.load %arg7[%c0_16, %c0_17] : memref<24x128xf32, #tpu.memory_space<vmem>>, vector<24x128xf32>
    tpu.vector_store %arg7[%c0_16, %c0_17], %34 {strides = array<i32>} : memref<24x128xf32, #tpu.memory_space<vmem>>, vector<24x128xf32>,
    return
  }
  func.func @transform_0(%arg0: i32, %arg1: i32) -> (i32, i32) {
    %c0_i32 = arith.constant 0 : i32
    %c0_i32_0 = arith.constant 0 : i32
    return %arg0, %c0_i32 : i32, i32
  }
  func.func @transform_1(%arg0: i32, %arg1: i32) -> (i32, i32) {
    %c0_i32 = arith.constant 0 : i32
    %c0_i32_0 = arith.constant 0 : i32
    %c0_i32_1 = arith.constant 0 : i32
    return %c0_i32, %c0_i32_0 : i32, i32
  }
  func.func @transform_2(%arg0: i32, %arg1: i32) -> (i32, i32) {
    %c0_i32 = arith.constant 0 : i32
    %c0_i32_0 = arith.constant 0 : i32
    %c0_i32_1 = arith.constant 0 : i32
    return %c0_i32, %c0_i32_0 : i32, i32
  }
  func.func @transform_3(%arg0: i32, %arg1: i32) -> (i32, i32) {
    %c0_i32 = arith.constant 0 : i32
    %c0_i32_0 = arith.constant 0 : i32
    return %c0_i32, %arg1 : i32, i32
  }
  func.func @transform_4(%arg0: i32, %arg1: i32) -> (i32, i32) {
    %c0_i32 = arith.constant 0 : i32
    %c0_i32_0 = arith.constant 0 : i32
    return %c0_i32, %arg1 : i32, i32
  }
  func.func @transform_5(%arg0: i32, %arg1: i32) -> (i32, i32) {
    %c0_i32 = arith.constant 0 : i32
    return %arg0, %arg1 : i32, i32
  }
}

module attributes {stable_mosaic.version = 11 : i64} {
  func.func @matmul_bias_kernel(%arg0: i32, %arg1: i32, %arg2: i32, %arg3: memref<24x128xf32, #tpu.memory_space<vmem>>, %arg4: memref<128x32xf32, #tpu.memory_space<vmem>>, %arg5: memref<1x32xf32, #tpu.memory_space<vmem>>, %arg6: memref<24x32xf32, #tpu.memory_space<vmem>>, %arg7: memref<24x32xf32, #tpu.memory_space<vmem>>) attributes {dimension_semantics = [#tpu.dimension_semantics<parallel>, #tpu.dimension_semantics<parallel>, #tpu.dimension_semantics<arbitrary>], iteration_bounds = array<i64: 1, 1, 1>, scalar_prefetch = 0 : i64, scratch_operands = 1 : i64, tpu.core_type = #tpu.core_type<tc>, window_params = [{transform_indices = @transform_0, window_bounds = array<i64: 24, 128>}, {transform_indices = @transform_1, window_bounds = array<i64: 128, 32>}, {transform_indices = @transform_2, window_bounds = array<i64: 1, 32>}, {transform_indices = @transform_3, window_bounds = array<i64: 24, 32>}]} {
    %c0_i32 = arith.constant 0 : i32
    %0 = arith.cmpi eq, %arg2, %c0_i32 : i32
    %1 = arith.extui %0 : i1 to i32
    %c0_i32_0 = arith.constant 0 : i32
    %2 = arith.cmpi ne, %1, %c0_i32_0 : i32
    scf.if %2 {
      %cst_10 = arith.constant 0.000000e+00 : f32
      %12 = vector.broadcast %cst_10 : f32 to vector<24x32xf32>
      %c0_11 = arith.constant 0 : index
      %c0_12 = arith.constant 0 : index
      %13 = vector.load %arg7[%c0_11, %c0_12] : memref<24x32xf32, #tpu.memory_space<vmem>>, vector<24x32xf32>
      tpu.vector_store %arg7[%c0_11, %c0_12], %12 {strides = array<i32>} : memref<24x32xf32, #tpu.memory_space<vmem>>, vector<24x32xf32>,
    } else {
    }
    %c0 = arith.constant 0 : index
    %c0_1 = arith.constant 0 : index
    %3 = vector.load %arg7[%c0, %c0_1] : memref<24x32xf32, #tpu.memory_space<vmem>>, vector<24x32xf32>
    %c0_2 = arith.constant 0 : index
    %c0_3 = arith.constant 0 : index
    %4 = vector.load %arg3[%c0_2, %c0_3] : memref<24x128xf32, #tpu.memory_space<vmem>>, vector<24x128xf32>
    %c0_4 = arith.constant 0 : index
    %c0_5 = arith.constant 0 : index
    %5 = vector.load %arg4[%c0_4, %c0_5] : memref<128x32xf32, #tpu.memory_space<vmem>>, vector<128x32xf32>
    %cst = arith.constant dense<0.000000e+00> : vector<24x32xf32>
    %6 = tpu.matmul %4, %5, %cst {dimension_numbers = #tpu.dot_dimension_numbers<[1], [0], [0], [1], [0, 0, 1, 1], [], []>} : vector<24x128xf32>, vector<128x32xf32>, vector<24x32xf32> -> vector<24x32xf32>
    %7 = arith.addf %3, %6 : vector<24x32xf32>
    %c0_6 = arith.constant 0 : index
    %c0_7 = arith.constant 0 : index
    %8 = vector.load %arg7[%c0_6, %c0_7] : memref<24x32xf32, #tpu.memory_space<vmem>>, vector<24x32xf32>
    tpu.vector_store %arg7[%c0_6, %c0_7], %7 {strides = array<i32>} : memref<24x32xf32, #tpu.memory_space<vmem>>, vector<24x32xf32>,
    %c0_i32_8 = arith.constant 0 : i32
    %9 = arith.cmpi eq, %arg2, %c0_i32_8 : i32
    %10 = arith.extui %9 : i1 to i32
    %c0_i32_9 = arith.constant 0 : i32
    %11 = arith.cmpi ne, %10, %c0_i32_9 : i32
    scf.if %11 {
      %c0_10 = arith.constant 0 : index
      %c0_11 = arith.constant 0 : index
      %12 = vector.load %arg7[%c0_10, %c0_11] : memref<24x32xf32, #tpu.memory_space<vmem>>, vector<24x32xf32>
      %c0_12 = arith.constant 0 : index
      %c0_13 = arith.constant 0 : index
      %13 = vector.load %arg5[%c0_12, %c0_13] : memref<1x32xf32, #tpu.memory_space<vmem>>, vector<1x32xf32>
      %14 = vector.broadcast %13 : vector<1x32xf32> to vector<24x32xf32>
      %15 = arith.addf %12, %14 : vector<24x32xf32>
      %c0_14 = arith.constant 0 : index
      %c0_15 = arith.constant 0 : index
      %16 = vector.load %arg6[%c0_14, %c0_15] : memref<24x32xf32, #tpu.memory_space<vmem>>, vector<24x32xf32>
      tpu.vector_store %arg6[%c0_14, %c0_15], %15 {strides = array<i32>} : memref<24x32xf32, #tpu.memory_space<vmem>>, vector<24x32xf32>,
    } else {
    }
    return
  }
  func.func @transform_0(%arg0: i32, %arg1: i32, %arg2: i32) -> (i32, i32) {
    %c0_i32 = arith.constant 0 : i32
    return %arg0, %arg2 : i32, i32
  }
  func.func @transform_1(%arg0: i32, %arg1: i32, %arg2: i32) -> (i32, i32) {
    %c0_i32 = arith.constant 0 : i32
    return %arg2, %arg1 : i32, i32
  }
  func.func @transform_2(%arg0: i32, %arg1: i32, %arg2: i32) -> (i32, i32) {
    %c0_i32 = arith.constant 0 : i32
    %c0_i32_0 = arith.constant 0 : i32
    return %c0_i32, %arg1 : i32, i32
  }
  func.func @transform_3(%arg0: i32, %arg1: i32, %arg2: i32) -> (i32, i32) {
    %c0_i32 = arith.constant 0 : i32
    return %arg0, %arg1 : i32, i32
  }
}

module attributes {stable_mosaic.version = 11 : i64} {
  func.func @ln_matmul_kernel(%arg0: i32, %arg1: i32, %arg2: memref<3x32xf32, #tpu.memory_space<vmem>>, %arg3: memref<1x32xf32, #tpu.memory_space<vmem>>, %arg4: memref<1x32xf32, #tpu.memory_space<vmem>>, %arg5: memref<32x16xf32, #tpu.memory_space<vmem>>, %arg6: memref<1x16xf32, #tpu.memory_space<vmem>>, %arg7: memref<3x16xf32, #tpu.memory_space<vmem>>) attributes {dimension_semantics = [#tpu.dimension_semantics<parallel>, #tpu.dimension_semantics<parallel>], iteration_bounds = array<i64: 1, 1>, scalar_prefetch = 0 : i64, scratch_operands = 0 : i64, tpu.core_type = #tpu.core_type<tc>, window_params = [{transform_indices = @transform_0, window_bounds = array<i64: 3, 32>}, {pipeline_mode = #tpu.pipeline_mode<synchronous>, transform_indices = @transform_1, window_bounds = array<i64: 1, 32>}, {pipeline_mode = #tpu.pipeline_mode<synchronous>, transform_indices = @transform_2, window_bounds = array<i64: 1, 32>}, {transform_indices = @transform_3, window_bounds = array<i64: 32, 16>}, {transform_indices = @transform_4, window_bounds = array<i64: 1, 16>}, {transform_indices = @transform_5, window_bounds = array<i64: 3, 16>}]} {
    %c0 = arith.constant 0 : index
    %c0_0 = arith.constant 0 : index
    %0 = vector.load %arg2[%c0, %c0_0] : memref<3x32xf32, #tpu.memory_space<vmem>>, vector<3x32xf32>
    %c0_1 = arith.constant 0 : index
    %c0_2 = arith.constant 0 : index
    %1 = vector.load %arg3[%c0_1, %c0_2] : memref<1x32xf32, #tpu.memory_space<vmem>>, vector<1x32xf32>
    %c0_3 = arith.constant 0 : index
    %c0_4 = arith.constant 0 : index
    %2 = vector.load %arg4[%c0_3, %c0_4] : memref<1x32xf32, #tpu.memory_space<vmem>>, vector<1x32xf32>
    %cst = arith.constant dense<0.000000e+00> : vector<3xf32>
    %3 = vector.multi_reduction <add>, %0, %cst [1] : vector<3x32xf32> to vector<3xf32>
    %4 = vector.shape_cast %3 : vector<3xf32> to vector<3x1xf32>
    %cst_5 = arith.constant 3.200000e+01 : f32
    %5 = vector.broadcast %cst_5 : f32 to vector<3x1xf32>
    %6 = arith.divf %4, %5 : vector<3x1xf32>
    %7 = vector.broadcast %6 : vector<3x1xf32> to vector<3x32xf32>
    %8 = arith.subf %0, %7 : vector<3x32xf32>
    %9 = arith.mulf %8, %8 : vector<3x32xf32>
    %cst_6 = arith.constant dense<0.000000e+00> : vector<3xf32>
    %10 = vector.multi_reduction <add>, %9, %cst_6 [1] : vector<3x32xf32> to vector<3xf32>
    %11 = vector.shape_cast %10 : vector<3xf32> to vector<3x1xf32>
    %cst_7 = arith.constant 3.200000e+01 : f32
    %12 = vector.broadcast %cst_7 : f32 to vector<3x1xf32>
    %13 = arith.divf %11, %12 : vector<3x1xf32>
    %cst_8 = arith.constant 9.99999974E-6 : f32
    %14 = vector.broadcast %cst_8 : f32 to vector<3x1xf32>
    %15 = arith.addf %13, %14 : vector<3x1xf32>
    %16 = math.rsqrt %15 : vector<3x1xf32>
    %17 = vector.broadcast %16 : vector<3x1xf32> to vector<3x32xf32>
    %18 = arith.mulf %8, %17 : vector<3x32xf32>
    %19 = vector.broadcast %1 : vector<1x32xf32> to vector<3x32xf32>
    %20 = arith.mulf %18, %19 : vector<3x32xf32>
    %21 = vector.broadcast %2 : vector<1x32xf32> to vector<3x32xf32>
    %22 = arith.addf %20, %21 : vector<3x32xf32>
    %c0_9 = arith.constant 0 : index
    %c0_10 = arith.constant 0 : index
    %23 = vector.load %arg5[%c0_9, %c0_10] : memref<32x16xf32, #tpu.memory_space<vmem>>, vector<32x16xf32>
    %cst_11 = arith.constant dense<0.000000e+00> : vector<3x16xf32>
    %24 = tpu.matmul %22, %23, %cst_11 {dimension_numbers = #tpu.dot_dimension_numbers<[1], [0], [0], [1], [0, 0, 1, 1], [], []>} : vector<3x32xf32>, vector<32x16xf32>, vector<3x16xf32> -> vector<3x16xf32>
    %c0_12 = arith.constant 0 : index
    %c0_13 = arith.constant 0 : index
    %25 = vector.load %arg6[%c0_12, %c0_13] : memref<1x16xf32, #tpu.memory_space<vmem>>, vector<1x16xf32>
    %26 = vector.broadcast %25 : vector<1x16xf32> to vector<3x16xf32>
    %27 = arith.addf %24, %26 : vector<3x16xf32>
    %c0_14 = arith.constant 0 : index
    %c0_15 = arith.constant 0 : index
    %28 = vector.load %arg7[%c0_14, %c0_15] : memref<3x16xf32, #tpu.memory_space<vmem>>, vector<3x16xf32>
    tpu.vector_store %arg7[%c0_14, %c0_15], %27 {strides = array<i32>} : memref<3x16xf32, #tpu.memory_space<vmem>>, vector<3x16xf32>,
    return
  }
  func.func @transform_0(%arg0: i32, %arg1: i32) -> (i32, i32) {
    %c0_i32 = arith.constant 0 : i32
    %c0_i32_0 = arith.constant 0 : i32
    return %arg0, %c0_i32 : i32, i32
  }
  func.func @transform_1(%arg0: i32, %arg1: i32) -> (i32, i32) {
    %c0_i32 = arith.constant 0 : i32
    %c0_i32_0 = arith.constant 0 : i32
    %c0_i32_1 = arith.constant 0 : i32
    return %c0_i32, %c0_i32_0 : i32, i32
  }
  func.func @transform_2(%arg0: i32, %arg1: i32) -> (i32, i32) {
    %c0_i32 = arith.constant 0 : i32
    %c0_i32_0 = arith.constant 0 : i32
    %c0_i32_1 = arith.constant 0 : i32
    return %c0_i32, %c0_i32_0 : i32, i32
  }
  func.func @transform_3(%arg0: i32, %arg1: i32) -> (i32, i32) {
    %c0_i32 = arith.constant 0 : i32
    %c0_i32_0 = arith.constant 0 : i32
    return %c0_i32, %arg1 : i32, i32
  }
  func.func @transform_4(%arg0: i32, %arg1: i32) -> (i32, i32) {
    %c0_i32 = arith.constant 0 : i32
    %c0_i32_0 = arith.constant 0 : i32
    return %c0_i32, %arg1 : i32, i32
  }
  func.func @transform_5(%arg0: i32, %arg1: i32) -> (i32, i32) {
    %c0_i32 = arith.constant 0 : i32
    return %arg0, %arg1 : i32, i32
  }
}

module attributes {stable_mosaic.version = 11 : i64} {
  func.func @cosine_sim_kernel(%arg0: memref<2x16xf32, #tpu.memory_space<vmem>>, %arg1: memref<3x16xf32, #tpu.memory_space<vmem>>, %arg2: memref<2x3xf32, #tpu.memory_space<vmem>>) attributes {dimension_semantics = [], scalar_prefetch = 0 : i64, scratch_operands = 0 : i64, tpu.core_type = #tpu.core_type<tc>} {
    %c0 = arith.constant 0 : index
    %c0_0 = arith.constant 0 : index
    %0 = vector.load %arg0[%c0, %c0_0] : memref<2x16xf32, #tpu.memory_space<vmem>>, vector<2x16xf32>
    %c0_1 = arith.constant 0 : index
    %c0_2 = arith.constant 0 : index
    %1 = vector.load %arg1[%c0_1, %c0_2] : memref<3x16xf32, #tpu.memory_space<vmem>>, vector<3x16xf32>
    %cst = arith.constant dense<0.000000e+00> : vector<2x3xf32>
    %2 = tpu.matmul %0, %1, %cst {dimension_numbers = #tpu.dot_dimension_numbers<[1], [1], [0], [0], [0, 0, 1, 0], [], []>} : vector<2x16xf32>, vector<3x16xf32>, vector<2x3xf32> -> vector<2x3xf32>
    %3 = arith.mulf %0, %0 : vector<2x16xf32>
    %cst_3 = arith.constant dense<0.000000e+00> : vector<2xf32>
    %4 = vector.multi_reduction <add>, %3, %cst_3 [1] : vector<2x16xf32> to vector<2xf32>
    %5 = vector.shape_cast %4 : vector<2xf32> to vector<2x1xf32>
    %6 = math.sqrt %5 : vector<2x1xf32>
    %7 = arith.mulf %1, %1 : vector<3x16xf32>
    %cst_4 = arith.constant dense<0.000000e+00> : vector<3xf32>
    %8 = vector.multi_reduction <add>, %7, %cst_4 [1] : vector<3x16xf32> to vector<3xf32>
    %9 = vector.shape_cast %8 : vector<3xf32> to vector<3x1xf32>
    %10 = math.sqrt %9 : vector<3x1xf32>
    %11 = tpu.transpose %10, [1, 0] : vector<3x1xf32> -> vector<1x3xf32>
    %12 = vector.broadcast %6 : vector<2x1xf32> to vector<2x3xf32>
    %13 = vector.broadcast %11 : vector<1x3xf32> to vector<2x3xf32>
    %14 = arith.mulf %12, %13 : vector<2x3xf32>
    %cst_5 = arith.constant 9.99999993E-9 : f32
    %15 = vector.broadcast %cst_5 : f32 to vector<2x3xf32>
    %16 = arith.maximumf %14, %15 : vector<2x3xf32>
    %17 = tpu.reciprocal %16 {approx = true} : vector<2x3xf32> -> vector<2x3xf32>
    %18 = arith.mulf %2, %17 : vector<2x3xf32>
    %c0_6 = arith.constant 0 : index
    %c0_7 = arith.constant 0 : index
    %19 = vector.load %arg2[%c0_6, %c0_7] : memref<2x3xf32, #tpu.memory_space<vmem>>, vector<2x3xf32>
    tpu.vector_store %arg2[%c0_6, %c0_7], %18 {strides = array<i32>} : memref<2x3xf32, #tpu.memory_space<vmem>>, vector<2x3xf32>,
    return
  }
}

</mosaic_0001>

<llo_original>
// kernel: clip_forward.44
$region0: #{clip_forward.44}
  #allocation0 [shape = 'u32[]', space=smem, size = 0x4, offset = 0x4, fixed_abs, tag = 'smem constant byte address 0x4 - core index']
  #allocation1 [shape = 'u32[144,128]{1,0:T(1,128)}', space=vmem, size = 0x12000, scoped, tag = 'internal scratch']
  %s0 = inlined_call_operand.vmem [shape: f32[34,64], index: 0, kind: input, shape index: {}]
  %s1 = inlined_call_operand.vmem [shape: f32[1,64], index: 1, kind: input, shape index: {}]
  %s2 = inlined_call_operand.vmem [shape: f32[1,64], index: 2, kind: input, shape index: {}]
  %s3 = inlined_call_operand.vmem [shape: f32[34,64], index: 3, kind: output, shape index: {}]
  %s4 = sld [smem:[#allocation0]]
  $region22: #{clip_forward.44} parent=0
    _
  %s6 = ssub.s32 1, %s4
  %s7 = scalar_select 0, %s6, %s4
  // Predicated region
  $region2: #{clip_forward.44} parent=0 // pred_check
    _
  $region3: #{clip_forward.44} parent=0 // pred_check_branch
    %9 = sbr.rel (0) target = $region5
  $region4: #{clip_forward.44} parent=0 // pred_region
    _
  $region5: #{clip_forward.44} parent=0 // pred_fallthru
    _
  // Predicated region
  $region6: #{clip_forward.44} parent=0 // pred_check
    _
  $region7: #{clip_forward.44} parent=0 // pred_check_branch
    %11 = sbr.rel (0) target = $region9
  $region8: #{clip_forward.44} parent=0 // pred_region
    _
  $region9: #{clip_forward.44} parent=0 // pred_fallthru
    _
  // Predicated region
  $region10: #{clip_forward.44} parent=0 // pred_check
    _
  $region11: #{clip_forward.44} parent=0 // pred_check_branch
    %13 = sbr.rel (0) target = $region13
  $region12: #{clip_forward.44} parent=0 // pred_region
    _
  $region13: #{clip_forward.44} parent=0 // pred_fallthru
    _
  %v14 = vld [vmem:[%s0] sm:$0xff]
  %v15 = vld [vmem:[%s0 + $0x8] sm:$0xff]
  %v16 = vld [vmem:[%s0 + $0x10] sm:$0xff]
  %v17 = vld [vmem:[%s0 + $0x18] sm:$0xff]
  %v18 = vld [vmem:[%s0 + $0x20] sm:$0x3]
  %v19 = vld [vmem:[%s1] sm:$0x1]
  %v20 = vld [vmem:[%s2] sm:$0x1]
  %vm21 = vcmask 523264
  %v22 = vsel %vm21, %v14, 0.0
  %23 = vadd.xlane.f32.xlu0 %v22
  %v24 = vpop.xlane.xlu0 %23
  %v25 = vsel %vm21, %v15, 0.0
  %26 = vadd.xlane.f32.xlu0 %v25
  %v27 = vpop.xlane.xlu0 %26
  %v28 = vsel %vm21, %v16, 0.0
  %29 = vadd.xlane.f32.xlu0 %v28
  %v30 = vpop.xlane.xlu0 %29
  %v31 = vsel %vm21, %v17, 0.0
  %32 = vadd.xlane.f32.xlu0 %v31
  %v33 = vpop.xlane.xlu0 %32
  %vm34 = vcmask 517120
  %v35 = vsel %vm34, %v18, 0.0
  %36 = vadd.xlane.f32.xlu0 %v35
  %v37 = vpop.xlane.xlu0 %36
  %v38 = vrcp.pop 64.0
  %v39 = vmul.f32 %v24, %v38
  %v40 = vmul.f32 %v27, %v38
  %v41 = vmul.f32 %v30, %v38
  %v42 = vmul.f32 %v33, %v38
  %v43 = vmul.f32 %v37, %v38
  %v44 = vsub.f32 %v14, %v39
  %v45 = vsub.f32 %v15, %v40
  %v46 = vsub.f32 %v16, %v41
  %v47 = vsub.f32 %v17, %v42
  %v48 = vsub.f32 %v18, %v43
  %v49 = vmul.f32 %v44, %v44
  %v50 = vmul.f32 %v45, %v45
  %v51 = vmul.f32 %v46, %v46
  %v52 = vmul.f32 %v47, %v47
  %v53 = vmul.f32 %v48, %v48
  %v54 = vsel %vm21, %v49, 0.0
  %55 = vadd.xlane.f32.xlu0 %v54
  %v56 = vpop.xlane.xlu0 %55
  %v57 = vsel %vm21, %v50, 0.0
  %58 = vadd.xlane.f32.xlu0 %v57
  %v59 = vpop.xlane.xlu0 %58
  %v60 = vsel %vm21, %v51, 0.0
  %61 = vadd.xlane.f32.xlu0 %v60
  %v62 = vpop.xlane.xlu0 %61
  %v63 = vsel %vm21, %v52, 0.0
  %64 = vadd.xlane.f32.xlu0 %v63
  %v65 = vpop.xlane.xlu0 %64
  %v66 = vsel %vm34, %v53, 0.0
  %67 = vadd.xlane.f32.xlu0 %v66
  %v68 = vpop.xlane.xlu0 %67
  %v69 = vmul.f32 %v56, %v38
  %v70 = vmul.f32 %v59, %v38
  %v71 = vmul.f32 %v62, %v38
  %v72 = vmul.f32 %v65, %v38
  %v73 = vmul.f32 %v68, %v38
  %v74 = vadd.f32 %v69, 1e-05
  %v75 = vadd.f32 %v70, 1e-05
  %v76 = vadd.f32 %v71, 1e-05
  %v77 = vadd.f32 %v72, 1e-05
  %v78 = vadd.f32 %v73, 1e-05
  %v79 = vrsqrt.pop %v74
  %v80 = vrsqrt.pop %v75
  %v81 = vrsqrt.pop %v76
  %v82 = vrsqrt.pop %v77
  %v83 = vrsqrt.pop %v78
  %v84 = vmul.f32 %v44, %v79
  %v85 = vmul.f32 %v45, %v80
  %v86 = vmul.f32 %v46, %v81
  %v87 = vmul.f32 %v47, %v82
  %v88 = vmul.f32 %v48, %v83
  %v90 = vlaneseq
  %v91 = vshrl.u32 %v90, 7
  %v92 = vsub.s32 0, %v91
  %v93 = vrot.slane %v19, %v92
  %v95 = vmul.f32 %v84, %v93
  %v96 = vmul.f32 %v85, %v93
  %v97 = vmul.f32 %v86, %v93
  %v98 = vmul.f32 %v87, %v93
  %v99 = vmul.f32 %v88, %v93
  %v101 = vlaneseq
  %v102 = vshrl.u32 %v101, 7
  %v103 = vsub.s32 0, %v102
  %v104 = vrot.slane %v20, %v103
  %v106 = vadd.f32 %v95, %v104
  %v107 = vadd.f32 %v96, %v104
  %v108 = vadd.f32 %v97, %v104
  %v109 = vadd.f32 %v98, %v104
  %v110 = vadd.f32 %v99, %v104
  %111 = vst.msk [vmem:[%s3] sm:$0xff] %vm21, %v106
  %112 = vst.msk [vmem:[%s3 + $0x8] sm:$0xff] %vm21, %v107
  %113 = vst.msk [vmem:[%s3 + $0x10] sm:$0xff] %vm21, %v108
  %114 = vst.msk [vmem:[%s3 + $0x18] sm:$0xff] %vm21, %v109
  %115 = vst.msk [vmem:[%s3 + $0x20] sm:$0x3] %vm34, %v110
  // Predicated region
  $region14: #{clip_forward.44} parent=0 // pred_check
    _
  $region15: #{clip_forward.44} parent=0 // pred_check_branch
    %117 = sbr.rel (0) target = $region17
  $region16: #{clip_forward.44} parent=0 // pred_region
    _
  $region17: #{clip_forward.44} parent=0 // pred_fallthru
    _
  // Predicated region
  $region18: #{clip_forward.44} parent=0 // pred_check
    _
  $region19: #{clip_forward.44} parent=0 // pred_check_branch
    %119 = sbr.rel (0) target = $region21
  $region20: #{clip_forward.44} parent=0 // pred_region
    _
  $region21: #{clip_forward.44} parent=0 // pred_fallthru
    _

// kernel: clip_forward.43
$region0: #{clip_forward.43}
  #allocation0 [shape = 'u32[]', space=smem, size = 0x4, offset = 0x4, fixed_abs, tag = 'smem constant byte address 0x4 - core index']
  #allocation1 [shape = 'u32[144,128]{1,0:T(1,128)}', space=vmem, size = 0x12000, scoped, tag = 'internal scratch']
  #allocation2 [shape = 'f32[32,64]{1,0:T(8,128)}', space=vmem, size = 0x4000, scoped, tag = 'scratch operand']
  %s0 = inlined_call_operand.vmem [shape: f32[32,48], index: 0, kind: input, shape index: {}]
  %s1 = inlined_call_operand.vmem [shape: f32[48,64], index: 1, kind: input, shape index: {}]
  %s2 = inlined_call_operand.vmem [shape: f32[1,64], index: 2, kind: input, shape index: {}]
  %s3 = inlined_call_operand.vmem [shape: f32[32,64], index: 3, kind: output, shape index: {}]
  %s4 = sld [smem:[#allocation0]]
  $region30: #{clip_forward.43} parent=0
    _
  %s6 = ssub.s32 1, %s4
  %s7 = scalar_select 0, %s6, %s4
  // Predicated region
  $region2: #{clip_forward.43} parent=0 // pred_check
    _
  $region3: #{clip_forward.43} parent=0 // pred_check_branch
    %9 = sbr.rel (0) target = $region5
  $region4: #{clip_forward.43} parent=0 // pred_region
    _
  $region5: #{clip_forward.43} parent=0 // pred_fallthru
    _
  // Predicated region
  $region6: #{clip_forward.43} parent=0 // pred_check
    _
  $region7: #{clip_forward.43} parent=0 // pred_check_branch
    %11 = sbr.rel (0) target = $region9
  $region8: #{clip_forward.43} parent=0 // pred_region
    _
  $region9: #{clip_forward.43} parent=0 // pred_fallthru
    _
  // Predicated region
  $region10: #{clip_forward.43} parent=0 // pred_check
    _
  $region11: #{clip_forward.43} parent=0 // pred_check_branch
    %13 = sbr.rel (0) target = $region13
  $region12: #{clip_forward.43} parent=0 // pred_region
    _
  $region13: #{clip_forward.43} parent=0 // pred_fallthru
    _
  %p14 = scmp.eq.s32.totalorder 0, 0
  // Predicated region
  $region14: #{clip_forward.43} parent=0 // pred_check
    %p15 = pneg %p14
  $region15: #{clip_forward.43} parent=0 // pred_check_branch
    %17 = sbr.rel (%p15) target = $region17
  $region16: #{clip_forward.43} parent=0 // pred_region
    %vm18 = vcmask 523264
    %19 = vst.msk [vmem:[#allocation2] sm:$0xff] %vm18, 0.0
    %20 = vst.msk [vmem:[#allocation2 + $0x8] sm:$0xff] %vm18, 0.0
    %21 = vst.msk [vmem:[#allocation2 + $0x10] sm:$0xff] %vm18, 0.0
    %22 = vst.msk [vmem:[#allocation2 + $0x18] sm:$0xff] %vm18, 0.0
  $region17: #{clip_forward.43} parent=0 // pred_fallthru
    _
  %v23 = vld [vmem:[#allocation2] sm:$0xff]
  %v24 = vld [vmem:[#allocation2 + $0x8] sm:$0xff]
  %v25 = vld [vmem:[#allocation2 + $0x10] sm:$0xff]
  %v26 = vld [vmem:[#allocation2 + $0x18] sm:$0xff]
  %v27 = vld [vmem:[%s0] sm:$0xff]
  %v28 = vld [vmem:[%s0 + $0x8] sm:$0xff]
  %v29 = vld [vmem:[%s0 + $0x10] sm:$0xff]
  %v30 = vld [vmem:[%s0 + $0x18] sm:$0xff]
  %v31 = vld [vmem:[%s1] sm:$0xff]
  %v32 = vld [vmem:[%s1 + $0x8] sm:$0xff]
  %v33 = vld [vmem:[%s1 + $0x10] sm:$0xff]
  %v34 = vld [vmem:[%s1 + $0x18] sm:$0xff]
  %v35 = vld [vmem:[%s1 + $0x20] sm:$0xff]
  %v36 = vld [vmem:[%s1 + $0x28] sm:$0xff]
  %vm37 = vcmask 392192
  %v39 = vsel %vm37, %v27, 0
  %v42 = vsel %vm37, %v28, 0
  %v45 = vsel %vm37, %v29, 0
  %v48 = vsel %vm37, %v30, 0
  %50 = vmatprep.subr.mxu0 0.0
  %51 = vmatpush1.msra.mxu0 %v31
  %52 = vmatprep.subr.mxu0 0.0
  %53 = vmatpush1.msra.mxu0 %v32
  %54 = vmatprep.subr.mxu0 0.0
  %55 = vmatpush1.msra.mxu0 %v33
  %56 = vmatprep.subr.mxu0 0.0
  %57 = vmatpush1.msra.mxu0 %v34
  %58 = vmatprep.subr.mxu0 0.0
  %59 = vmatpush1.msra.mxu0 %v35
  %60 = vmatprep.subr.mxu0 0.0
  %61 = vmatpush1.msra.mxu0 %v36
  %62 = vmatprep.subr.mxu0 0.0
  %63 = vmatpush1.msra.mxu0 0.0
  %64 = vmatprep.subr.mxu0 0.0
  %65 = vmatpush1.msra.mxu0 0.0
  %66 = vmatprep.subr.mxu0 0.0
  %67 = vmatpush1.msra.mxu0 0.0
  %68 = vmatprep.subr.mxu0 0.0
  %69 = vmatpush1.msra.mxu0 0.0
  %70 = vmatprep.subr.mxu0 0.0
  %71 = vmatpush1.msra.mxu0 0.0
  %72 = vmatprep.subr.mxu0 0.0
  %73 = vmatpush1.msra.mxu0 0.0
  %74 = vmatprep.subr.mxu0 0.0
  %75 = vmatpush1.msra.mxu0 0.0
  %76 = vmatprep.subr.mxu0 0.0
  %77 = vmatpush1.msra.mxu0 0.0
  %78 = vmatprep.subr.mxu0 0.0
  %79 = vmatpush1.msra.mxu0 0.0
  %80 = vmatprep.subr.mxu0 0.0
  %81 = vmatpush1.msra.mxu0 0.0
  %82 = vmatprep.subr.mxu0 0.0
  %83 = vmatpush1.msra.mxu0 0.0
  %84 = vmatprep.subr.mxu0 0.0
  %85 = vmatpush1.msra.mxu0 0.0
  %86 = vmatprep.subr.mxu0 0.0
  %87 = vmatpush1.msra.mxu0 0.0
  %88 = vmatprep.subr.mxu0 0.0
  %89 = vmatpush1.msra.mxu0 0.0
  %90 = vmatprep.subr.mxu0 0.0
  %91 = vmatpush1.msra.mxu0 0.0
  %92 = vmatprep.subr.mxu0 0.0
  %93 = vmatpush1.msra.mxu0 0.0
  %94 = vmatprep.subr.mxu0 0.0
  %95 = vmatpush1.msra.mxu0 0.0
  %96 = vmatprep.subr.mxu0 0.0
  %97 = vmatpush1.msra.mxu0 0.0
  %98 = vmatprep.subr.mxu0 0.0
  %99 = vmatpush1.msra.mxu0 0.0
  %100 = vmatprep.subr.mxu0 0.0
  %101 = vmatpush1.msra.mxu0 0.0
  %102 = vmatprep.subr.mxu0 0.0
  %103 = vmatpush1.msra.mxu0 0.0
  %104 = vmatprep.subr.mxu0 0.0
  %105 = vmatpush1.msra.mxu0 0.0
  %106 = vmatprep.subr.mxu0 0.0
  %107 = vmatpush1.msra.mxu0 0.0
  %108 = vmatprep.subr.mxu0 0.0
  %109 = vmatpush1.msra.mxu0 0.0
  %110 = vmatprep.subr.mxu0 0.0
  %111 = vmatpush1.msra.mxu0 0.0
  %112 = vmatprep.subr.mxu0 0.0
  %113 = vmatpush1.msra.mxu0 0.0
  %114 = vmatprep.mubr.f32.mxu0 0.0
  %115 = vmatmul.mubr.f32.gmra.mrb[0].mxu0 %v39
  %v116 = vpop.f32.mrb[0].mxu0
  %v117 = vadd.f32 0.0, %v116
  %v118 = vpop.f32.mrb[0].mxu0
  %119 = vmatprep.mubr.f32.mxu0 0.0
  %120 = vmatmul.mubr.f32.gmra.mrb[0].mxu0 %v42
  %v121 = vpop.f32.mrb[0].mxu0
  %v122 = vadd.f32 0.0, %v121
  %v123 = vpop.f32.mrb[0].mxu0
  %124 = vmatprep.mubr.f32.mxu0 0.0
  %125 = vmatmul.mubr.f32.gmra.mrb[0].mxu0 %v45
  %v126 = vpop.f32.mrb[0].mxu0
  %v127 = vadd.f32 0.0, %v126
  %v128 = vpop.f32.mrb[0].mxu0
  %129 = vmatprep.mubr.f32.mxu0 0.0
  %130 = vmatmul.mubr.f32.gmra.mrb[0].mxu0 %v48
  %v131 = vpop.f32.mrb[0].mxu0
  %v132 = vadd.f32 0.0, %v131
  %v133 = vpop.f32.mrb[0].mxu0
  %134 = vdwg.mxu0
  %v135 = vadd.f32 %v23, %v117
  %v136 = vadd.f32 %v24, %v122
  %v137 = vadd.f32 %v25, %v127
  %v138 = vadd.f32 %v26, %v132
  %vm139 = vcmask 523264
  %140 = vst.msk [vmem:[#allocation2] sm:$0xff] %vm139, %v135
  %141 = vst.msk [vmem:[#allocation2 + $0x8] sm:$0xff] %vm139, %v136
  %142 = vst.msk [vmem:[#allocation2 + $0x10] sm:$0xff] %vm139, %v137
  %143 = vst.msk [vmem:[#allocation2 + $0x18] sm:$0xff] %vm139, %v138
  // Predicated region
  $region18: #{clip_forward.43} parent=0 // pred_check
    %p144 = pneg %p14
  $region19: #{clip_forward.43} parent=0 // pred_check_branch
    %146 = sbr.rel (%p144) target = $region21
  $region20: #{clip_forward.43} parent=0 // pred_region
    %v147 = vld [vmem:[#allocation2] sm:$0xff]
    %v148 = vld [vmem:[#allocation2 + $0x8] sm:$0xff]
    %v149 = vld [vmem:[#allocation2 + $0x10] sm:$0xff]
    %v150 = vld [vmem:[#allocation2 + $0x18] sm:$0xff]
    %v151 = vld [vmem:[%s2] sm:$0x1]
    %v153 = vlaneseq
    %v154 = vshrl.u32 %v153, 7
    %v155 = vsub.s32 0, %v154
    %v156 = vrot.slane %v151, %v155
    %v158 = vadd.f32 %v147, %v156
    %v159 = vadd.f32 %v148, %v156
    %v160 = vadd.f32 %v149, %v156
    %v161 = vadd.f32 %v150, %v156
    %162 = vst.msk [vmem:[%s3] sm:$0xff] %vm139, %v158
    %163 = vst.msk [vmem:[%s3 + $0x8] sm:$0xff] %vm139, %v159
    %164 = vst.msk [vmem:[%s3 + $0x10] sm:$0xff] %vm139, %v160
    %165 = vst.msk [vmem:[%s3 + $0x18] sm:$0xff] %vm139, %v161
  $region21: #{clip_forward.43} parent=0 // pred_fallthru
    _
  // Predicated region
  $region22: #{clip_forward.43} parent=0 // pred_check
    _
  $region23: #{clip_forward.43} parent=0 // pred_check_branch
    %167 = sbr.rel (0) target = $region25
  $region24: #{clip_forward.43} parent=0 // pred_region
    _
  $region25: #{clip_forward.43} parent=0 // pred_fallthru
    _
  // Predicated region
  $region26: #{clip_forward.43} parent=0 // pred_check
    _
  $region27: #{clip_forward.43} parent=0 // pred_check_branch
    %169 = sbr.rel (0) target = $region29
  $region28: #{clip_forward.43} parent=0 // pred_region
    _
  $region29: #{clip_forward.43} parent=0 // pred_fallthru
    _

// kernel: clip_forward.45
$region0: #{clip_forward.45}
  #allocation0 [shape = 'u32[]', space=smem, size = 0x4, offset = 0x4, fixed_abs, tag = 'smem constant byte address 0x4 - core index']
  #allocation1 [shape = 'u32[144,128]{1,0:T(1,128)}', space=vmem, size = 0x12000, scoped, tag = 'internal scratch']
  %s0 = inlined_call_operand.vmem [shape: f32[34,64], index: 0, kind: input, shape index: {}]
  %s1 = inlined_call_operand.vmem [shape: f32[1,64], index: 1, kind: input, shape index: {}]
  %s2 = inlined_call_operand.vmem [shape: f32[1,64], index: 2, kind: input, shape index: {}]
  %s3 = inlined_call_operand.vmem [shape: f32[64,192], index: 3, kind: input, shape index: {}]
  %s4 = inlined_call_operand.vmem [shape: f32[1,192], index: 4, kind: input, shape index: {}]
  %s5 = inlined_call_operand.vmem [shape: f32[34,192], index: 5, kind: output, shape index: {}]
  %s6 = sld [smem:[#allocation0]]
  $region30: #{clip_forward.45} parent=0
    _
  %s8 = ssub.s32 1, %s6
  %s9 = scalar_select 0, %s8, %s6
  // Predicated region
  $region2: #{clip_forward.45} parent=0 // pred_check
    _
  $region3: #{clip_forward.45} parent=0 // pred_check_branch
    %11 = sbr.rel (0) target = $region5
  $region4: #{clip_forward.45} parent=0 // pred_region
    _
  $region5: #{clip_forward.45} parent=0 // pred_fallthru
    _
  // Predicated region
  $region6: #{clip_forward.45} parent=0 // pred_check
    _
  $region7: #{clip_forward.45} parent=0 // pred_check_branch
    %13 = sbr.rel (0) target = $region9
  $region8: #{clip_forward.45} parent=0 // pred_region
    _
  $region9: #{clip_forward.45} parent=0 // pred_fallthru
    _
  // Predicated region
  $region10: #{clip_forward.45} parent=0 // pred_check
    _
  $region11: #{clip_forward.45} parent=0 // pred_check_branch
    %15 = sbr.rel (0) target = $region13
  $region12: #{clip_forward.45} parent=0 // pred_region
    _
  $region13: #{clip_forward.45} parent=0 // pred_fallthru
    _
  // Predicated region
  $region14: #{clip_forward.45} parent=0 // pred_check
    _
  $region15: #{clip_forward.45} parent=0 // pred_check_branch
    %17 = sbr.rel (0) target = $region17
  $region16: #{clip_forward.45} parent=0 // pred_region
    _
  $region17: #{clip_forward.45} parent=0 // pred_fallthru
    _
  // Predicated region
  $region18: #{clip_forward.45} parent=0 // pred_check
    _
  $region19: #{clip_forward.45} parent=0 // pred_check_branch
    %19 = sbr.rel (0) target = $region21
  $region20: #{clip_forward.45} parent=0 // pred_region
    _
  $region21: #{clip_forward.45} parent=0 // pred_fallthru
    _
  %v20 = vld [vmem:[%s0] sm:$0xff]
  %v21 = vld [vmem:[%s0 + $0x8] sm:$0xff]
  %v22 = vld [vmem:[%s0 + $0x10] sm:$0xff]
  %v23 = vld [vmem:[%s0 + $0x18] sm:$0xff]
  %v24 = vld [vmem:[%s0 + $0x20] sm:$0x3]
  %v25 = vld [vmem:[%s1] sm:$0x1]
  %v26 = vld [vmem:[%s2] sm:$0x1]
  %vm27 = vcmask 523264
  %v28 = vsel %vm27, %v20, 0.0
  %29 = vadd.xlane.f32.xlu0 %v28
  %v30 = vpop.xlane.xlu0 %29
  %v31 = vsel %vm27, %v21, 0.0
  %32 = vadd.xlane.f32.xlu0 %v31
  %v33 = vpop.xlane.xlu0 %32
  %v34 = vsel %vm27, %v22, 0.0
  %35 = vadd.xlane.f32.xlu0 %v34
  %v36 = vpop.xlane.xlu0 %35
  %v37 = vsel %vm27, %v23, 0.0
  %38 = vadd.xlane.f32.xlu0 %v37
  %v39 = vpop.xlane.xlu0 %38
  %vm40 = vcmask 517120
  %v41 = vsel %vm40, %v24, 0.0
  %42 = vadd.xlane.f32.xlu0 %v41
  %v43 = vpop.xlane.xlu0 %42
  %v44 = vrcp.pop 64.0
  %v45 = vmul.f32 %v30, %v44
  %v46 = vmul.f32 %v33, %v44
  %v47 = vmul.f32 %v36, %v44
  %v48 = vmul.f32 %v39, %v44
  %v49 = vmul.f32 %v43, %v44
  %v50 = vsub.f32 %v20, %v45
  %v51 = vsub.f32 %v21, %v46
  %v52 = vsub.f32 %v22, %v47
  %v53 = vsub.f32 %v23, %v48
  %v54 = vsub.f32 %v24, %v49
  %v55 = vmul.f32 %v50, %v50
  %v56 = vmul.f32 %v51, %v51
  %v57 = vmul.f32 %v52, %v52
  %v58 = vmul.f32 %v53, %v53
  %v59 = vmul.f32 %v54, %v54
  %v60 = vsel %vm27, %v55, 0.0
  %61 = vadd.xlane.f32.xlu0 %v60
  %v62 = vpop.xlane.xlu0 %61
  %v63 = vsel %vm27, %v56, 0.0
  %64 = vadd.xlane.f32.xlu0 %v63
  %v65 = vpop.xlane.xlu0 %64
  %v66 = vsel %vm27, %v57, 0.0
  %67 = vadd.xlane.f32.xlu0 %v66
  %v68 = vpop.xlane.xlu0 %67
  %v69 = vsel %vm27, %v58, 0.0
  %70 = vadd.xlane.f32.xlu0 %v69
  %v71 = vpop.xlane.xlu0 %70
  %v72 = vsel %vm40, %v59, 0.0
  %73 = vadd.xlane.f32.xlu0 %v72
  %v74 = vpop.xlane.xlu0 %73
  %v75 = vmul.f32 %v62, %v44
  %v76 = vmul.f32 %v65, %v44
  %v77 = vmul.f32 %v68, %v44
  %v78 = vmul.f32 %v71, %v44
  %v79 = vmul.f32 %v74, %v44
  %v80 = vadd.f32 %v75, 1e-05
  %v81 = vadd.f32 %v76, 1e-05
  %v82 = vadd.f32 %v77, 1e-05
  %v83 = vadd.f32 %v78, 1e-05
  %v84 = vadd.f32 %v79, 1e-05
  %v85 = vrsqrt.pop %v80
  %v86 = vrsqrt.pop %v81
  %v87 = vrsqrt.pop %v82
  %v88 = vrsqrt.pop %v83
  %v89 = vrsqrt.pop %v84
  %v90 = vmul.f32 %v50, %v85
  %v91 = vmul.f32 %v51, %v86
  %v92 = vmul.f32 %v52, %v87
  %v93 = vmul.f32 %v53, %v88
  %v94 = vmul.f32 %v54, %v89
  %v96 = vlaneseq
  %v97 = vshrl.u32 %v96, 7
  %v98 = vsub.s32 0, %v97
  %v99 = vrot.slane %v25, %v98
  %v101 = vmul.f32 %v90, %v99
  %v102 = vmul.f32 %v91, %v99
  %v103 = vmul.f32 %v92, %v99
  %v104 = vmul.f32 %v93, %v99
  %v105 = vmul.f32 %v94, %v99
  %v107 = vlaneseq
  %v108 = vshrl.u32 %v107, 7
  %v109 = vsub.s32 0, %v108
  %v110 = vrot.slane %v26, %v109
  %v112 = vadd.f32 %v101, %v110
  %v113 = vadd.f32 %v102, %v110
  %v114 = vadd.f32 %v103, %v110
  %v115 = vadd.f32 %v104, %v110
  %v116 = vadd.f32 %v105, %v110
  %v117 = vld [vmem:[%s3] sm:$0xff]
  %v118 = vld [vmem:[%s3 + $0x8] sm:$0xff]
  %v119 = vld [vmem:[%s3 + $0x10] sm:$0xff]
  %v120 = vld [vmem:[%s3 + $0x18] sm:$0xff]
  %v121 = vld [vmem:[%s3 + $0x20] sm:$0xff]
  %v122 = vld [vmem:[%s3 + $0x28] sm:$0xff]
  %v123 = vld [vmem:[%s3 + $0x30] sm:$0xff]
  %v124 = vld [vmem:[%s3 + $0x38] sm:$0xff]
  %v125 = vld [vmem:[%s3 + $0x40] sm:$0xff]
  %v126 = vld [vmem:[%s3 + $0x48] sm:$0xff]
  %v127 = vld [vmem:[%s3 + $0x50] sm:$0xff]
  %v128 = vld [vmem:[%s3 + $0x58] sm:$0xff]
  %v129 = vld [vmem:[%s3 + $0x60] sm:$0xff]
  %v130 = vld [vmem:[%s3 + $0x68] sm:$0xff]
  %v131 = vld [vmem:[%s3 + $0x70] sm:$0xff]
  %v132 = vld [vmem:[%s3 + $0x78] sm:$0xff]
  %v133 = vld [vmem:[%s4] sm:$0x3]
  %v135 = vlaneseq
  %v136 = vshrl.u32 %v135, 7
  %v137 = vsub.s32 0, %v136
  %v138 = vrot.slane %v133, %v137
  %v139 = vlaneseq
  %v140 = vshrl.u32 %v139, 7
  %v141 = vsub.s32 1, %v140
  %v142 = vrot.slane %v133, %v141
  %v146 = vsel %vm27, %v112, 0
  %v149 = vsel %vm27, %v113, 0
  %v152 = vsel %vm27, %v114, 0
  %v155 = vsel %vm27, %v115, 0
  %v158 = vsel %vm27, %v116, 0
  %160 = vmatprep.subr.mxu0 %v118
  %161 = vmatpush1.msra.mxu0 %v117
  %162 = vmatprep.subr.mxu0 %v120
  %163 = vmatpush1.msra.mxu0 %v119
  %164 = vmatprep.subr.mxu0 %v122
  %165 = vmatpush1.msra.mxu0 %v121
  %166 = vmatprep.subr.mxu0 %v124
  %167 = vmatpush1.msra.mxu0 %v123
  %168 = vmatprep.subr.mxu0 %v126
  %169 = vmatpush1.msra.mxu0 %v125
  %170 = vmatprep.subr.mxu0 %v128
  %171 = vmatpush1.msra.mxu0 %v127
  %172 = vmatprep.subr.mxu0 %v130
  %173 = vmatpush1.msra.mxu0 %v129
  %174 = vmatprep.subr.mxu0 %v132
  %175 = vmatpush1.msra.mxu0 %v131
  %176 = vmatprep.subr.mxu0 0.0
  %177 = vmatpush1.msra.mxu0 0.0
  %178 = vmatprep.subr.mxu0 0.0
  %179 = vmatpush1.msra.mxu0 0.0
  %180 = vmatprep.subr.mxu0 0.0
  %181 = vmatpush1.msra.mxu0 0.0
  %182 = vmatprep.subr.mxu0 0.0
  %183 = vmatpush1.msra.mxu0 0.0
  %184 = vmatprep.subr.mxu0 0.0
  %185 = vmatpush1.msra.mxu0 0.0
  %186 = vmatprep.subr.mxu0 0.0
  %187 = vmatpush1.msra.mxu0 0.0
  %188 = vmatprep.subr.mxu0 0.0
  %189 = vmatpush1.msra.mxu0 0.0
  %190 = vmatprep.subr.mxu0 0.0
  %191 = vmatpush1.msra.mxu0 0.0
  %192 = vmatprep.subr.mxu0 0.0
  %193 = vmatpush1.msra.mxu0 0.0
  %194 = vmatprep.subr.mxu0 0.0
  %195 = vmatpush1.msra.mxu0 0.0
  %196 = vmatprep.subr.mxu0 0.0
  %197 = vmatpush1.msra.mxu0 0.0
  %198 = vmatprep.subr.mxu0 0.0
  %199 = vmatpush1.msra.mxu0 0.0
  %200 = vmatprep.subr.mxu0 0.0
  %201 = vmatpush1.msra.mxu0 0.0
  %202 = vmatprep.subr.mxu0 0.0
  %203 = vmatpush1.msra.mxu0 0.0
  %204 = vmatprep.subr.mxu0 0.0
  %205 = vmatpush1.msra.mxu0 0.0
  %206 = vmatprep.subr.mxu0 0.0
  %207 = vmatpush1.msra.mxu0 0.0
  %208 = vmatprep.subr.mxu0 0.0
  %209 = vmatpush1.msra.mxu0 0.0
  %210 = vmatprep.subr.mxu0 0.0
  %211 = vmatpush1.msra.mxu0 0.0
  %212 = vmatprep.subr.mxu0 0.0
  %213 = vmatpush1.msra.mxu0 0.0
  %214 = vmatprep.subr.mxu0 0.0
  %215 = vmatpush1.msra.mxu0 0.0
  %216 = vmatprep.subr.mxu0 0.0
  %217 = vmatpush1.msra.mxu0 0.0
  %218 = vmatprep.subr.mxu0 0.0
  %219 = vmatpush1.msra.mxu0 0.0
  %220 = vmatprep.subr.mxu0 0.0
  %221 = vmatpush1.msra.mxu0 0.0
  %222 = vmatprep.subr.mxu0 0.0
  %223 = vmatpush1.msra.mxu0 0.0
  %224 = vmatprep.mubr.f32.mxu0 0.0
  %225 = vmatmul.mubr.f32.gmra.mrb[0].mxu0 %v146
  %v226 = vpop.f32.mrb[0].mxu0
  %v227 = vadd.f32 %v138, %v226
  %v228 = vpop.f32.mrb[0].mxu0
  %v229 = vadd.f32 %v142, %v228
  %230 = vmatprep.mubr.f32.mxu0 0.0
  %231 = vmatmul.mubr.f32.gmra.mrb[0].mxu0 %v149
  %v232 = vpop.f32.mrb[0].mxu0
  %v233 = vadd.f32 %v138, %v232
  %v234 = vpop.f32.mrb[0].mxu0
  %v235 = vadd.f32 %v142, %v234
  %236 = vmatprep.mubr.f32.mxu0 0.0
  %237 = vmatmul.mubr.f32.gmra.mrb[0].mxu0 %v152
  %v238 = vpop.f32.mrb[0].mxu0
  %v239 = vadd.f32 %v138, %v238
  %v240 = vpop.f32.mrb[0].mxu0
  %v241 = vadd.f32 %v142, %v240
  %242 = vmatprep.mubr.f32.mxu0 0.0
  %243 = vmatmul.mubr.f32.gmra.mrb[0].mxu0 %v155
  %v244 = vpop.f32.mrb[0].mxu0
  %v245 = vadd.f32 %v138, %v244
  %v246 = vpop.f32.mrb[0].mxu0
  %v247 = vadd.f32 %v142, %v246
  %248 = vmatprep.mubr.f32.mxu0 0.0
  %249 = vmatmul.mubr.f32.gmra.mrb[0].mxu0 %v158
  %v250 = vpop.f32.mrb[0].mxu0
  %v251 = vadd.f32 %v138, %v250
  %v252 = vpop.f32.mrb[0].mxu0
  %v253 = vadd.f32 %v142, %v252
  %254 = vdwg.mxu0
  %255 = vst [vmem:[%s5] sm:$0xff] %v227
  %256 = vst.msk [vmem:[%s5 + $0x8] sm:$0xff] %vm27, %v229
  %257 = vst [vmem:[%s5 + $0x10] sm:$0xff] %v233
  %258 = vst.msk [vmem:[%s5 + $0x18] sm:$0xff] %vm27, %v235
  %259 = vst [vmem:[%s5 + $0x20] sm:$0xff] %v239
  %260 = vst.msk [vmem:[%s5 + $0x28] sm:$0xff] %vm27, %v241
  %261 = vst [vmem:[%s5 + $0x30] sm:$0xff] %v245
  %262 = vst.msk [vmem:[%s5 + $0x38] sm:$0xff] %vm27, %v247
  %263 = vst [vmem:[%s5 + $0x40] sm:$0x3] %v251
  %264 = vst.msk [vmem:[%s5 + $0x48] sm:$0x3] %vm40, %v253
  // Predicated region
  $region22: #{clip_forward.45} parent=0 // pred_check
    _
  $region23: #{clip_forward.45} parent=0 // pred_check_branch
    %266 = sbr.rel (0) target = $region25
  $region24: #{clip_forward.45} parent=0 // pred_region
    _
  $region25: #{clip_forward.45} parent=0 // pred_fallthru
    _
  // Predicated region
  $region26: #{clip_forward.45} parent=0 // pred_check
    _
  $region27: #{clip_forward.45} parent=0 // pred_check_branch
    %268 = sbr.rel (0) target = $region29
  $region28: #{clip_forward.45} parent=0 // pred_region
    _
  $region29: #{clip_forward.45} parent=0 // pred_fallthru
    _

// kernel: clip_forward.46
$region0: #{clip_forward.46}
  #allocation0 [shape = 'u32[]', space=smem, size = 0x4, offset = 0x4, fixed_abs, tag = 'smem constant byte address 0x4 - core index']
  #allocation1 [shape = 'u32[144,128]{1,0:T(1,128)}', space=vmem, size = 0x12000, scoped, tag = 'internal scratch']
  %s0 = inlined_call_operand.vmem [shape: f32[2,17,192], index: 0, kind: input, shape index: {}]
  %s1 = inlined_call_operand.vmem [shape: f32[2,1,17], index: 1, kind: input, shape index: {}]
  %s2 = inlined_call_operand.vmem [shape: f32[2,17,64], index: 2, kind: output, shape index: {}]
  %s3 = sld [smem:[#allocation0]]
  $region41: #{clip_forward.46} parent=0
    _
  %s5 = ssub.s32 1, %s3
  %s6 = scalar_select 0, %s5, %s3
  loop: start=0, step=1, limit=4
  $region2: #{clip_forward.46} parent=0 // loop_pre_header
    _
  $region3: #{clip_forward.46} parent=0 // loop_header
    %s8 = sphi 0, %s12
    %p9 = scmp.ge.s32.totalorder %s8, 4
    %s18 = sphi 0, %s20
    %s21 = sphi 0, %s18
    %s22 = sphi 0, %s21
    %s38 = sphi 0, %s22
    %s44 = sphi 0, %s46
    %s47 = sphi 0, %s44
    %s48 = sphi 0, %s47
    %s64 = sphi 0, %s48
    %s70 = sphi 0, %s72
    %s73 = sphi 0, %s70
    %s74 = sphi 0, %s73
    %s90 = sphi 0, %s74
  $region4: #{clip_forward.46} parent=0 // loop_header_branch
    %11 = sbr.rel (%p9) target = $region8
  $region5: #{clip_forward.46} parent=0 // loop_body
    %s13 = ssub.s32 %s8, 1
    %s14 = ssub.s32 %s8, 2
    %s15 = sadd.s32 %s8, 1
    %s16 = ssub.s32 %s8, %s15
    %p17 = scmp.eq.s32.totalorder %s16, 0
    %s19 = sadd.s32 %s18, 1
    %s20 = scalar_select %p17, %s18, %s19
    %p23 = pneg %p17
    %p24 = scmp.eq.s32.totalorder %s8, 1
    %p25 = por %p23, %p24
    %p26 = scmp.ne.s32.totalorder %s18, %s21
    %p27 = scmp.eq.s32.totalorder %s8, 0
    %p28 = por %p26, %p27
    %p29 = scmp.ne.s32.totalorder %s18, %s21
    %p30 = scmp.eq.s32.totalorder %s13, 1
    %p31 = por %p29, %p30
    %p32 = scmp.ne.s32.totalorder %s21, %s22
    %p33 = scmp.eq.s32.totalorder %s13, 0
    %p34 = por %p32, %p33
    %p35 = scmp.ne.s32.totalorder %s21, %s22
    %p36 = scmp.eq.s32.totalorder %s14, 1
    %p37 = por %p35, %p36
    %p39 = scmp.ne.s32.totalorder %s22, %s38
    %p40 = scmp.eq.s32.totalorder %s14, 0
    %p41 = por %p39, %p40
    %s42 = ssub.s32 %s8, %s15
    %p43 = scmp.eq.s32.totalorder %s42, 0
    %s45 = sadd.s32 %s44, 1
    %s46 = scalar_select %p43, %s44, %s45
    %p49 = pneg %p43
    %p50 = scmp.eq.s32.totalorder %s8, 1
    %p51 = por %p49, %p50
    %p52 = scmp.ne.s32.totalorder %s44, %s47
    %p53 = scmp.eq.s32.totalorder %s8, 0
    %p54 = por %p52, %p53
    %p55 = scmp.ne.s32.totalorder %s44, %s47
    %p56 = scmp.eq.s32.totalorder %s13, 1
    %p57 = por %p55, %p56
    %p58 = scmp.ne.s32.totalorder %s47, %s48
    %p59 = scmp.eq.s32.totalorder %s13, 0
    %p60 = por %p58, %p59
    %p61 = scmp.ne.s32.totalorder %s47, %s48
    %p62 = scmp.eq.s32.totalorder %s14, 1
    %p63 = por %p61, %p62
    %p65 = scmp.ne.s32.totalorder %s48, %s64
    %p66 = scmp.eq.s32.totalorder %s14, 0
    %p67 = por %p65, %p66
    %s68 = ssub.s32 %s8, %s15
    %p69 = scmp.eq.s32.totalorder %s68, 0
    %s71 = sadd.s32 %s70, 1
    %s72 = scalar_select %p69, %s70, %s71
    %p75 = pneg %p69
    %p76 = scmp.eq.s32.totalorder %s8, 1
    %p77 = por %p75, %p76
    %p78 = scmp.ne.s32.totalorder %s70, %s73
    %p79 = scmp.eq.s32.totalorder %s8, 0
    %p80 = por %p78, %p79
    %p81 = scmp.ne.s32.totalorder %s70, %s73
    %p82 = scmp.eq.s32.totalorder %s13, 1
    %p83 = por %p81, %p82
    %p84 = scmp.ne.s32.totalorder %s73, %s74
    %p85 = scmp.eq.s32.totalorder %s13, 0
    %p86 = por %p84, %p85
    %p87 = scmp.ne.s32.totalorder %s73, %s74
    %p88 = scmp.eq.s32.totalorder %s14, 1
    %p89 = por %p87, %p88
    %p91 = scmp.ne.s32.totalorder %s74, %s90
    %p92 = scmp.eq.s32.totalorder %s14, 0
    %p93 = por %p91, %p92
    %p94 = scmp.le.s32.totalorder 1, %s8
    %p95 = scmp.lt.s32.totalorder %s8, 3
    %p96 = pnand %p94, %p95
    %p97 = pneg %p96
    // Predicated region
    $region9: #{clip_forward.46} parent=5 // pred_check
      _
    $region10: #{clip_forward.46} parent=5 // pred_check_branch
      %99 = sbr.rel (%p96) target = $region12
    $region11: #{clip_forward.46} parent=5 // pred_region
      %s100 = ssub.s32 %s8, 1
    $region12: #{clip_forward.46} parent=5 // pred_fallthru
      _
    %p101 = scmp.lt.s32.totalorder %s8, 2
    // Predicated region
    $region13: #{clip_forward.46} parent=5 // pred_check
      %p102 = pneg %p101
    $region14: #{clip_forward.46} parent=5 // pred_check_branch
      %104 = sbr.rel (%p102) target = $region16
    $region15: #{clip_forward.46} parent=5 // pred_region
      // Predicated region
      $region17: #{clip_forward.46} parent=15 // pred_check
        %p105 = pneg %p28
      $region18: #{clip_forward.46} parent=15 // pred_check_branch
        %107 = sbr.rel (%p105) target = $region20
      $region19: #{clip_forward.46} parent=15 // pred_region
        %p108 = scmp.lt.s32.totalorder %s8, 1
        %s109 = scalar_select %p108, %s8, 1
        %s110 = smul.addr %s109, 6
        %s111 = smul.addr %s110, 8
        %s112 = scalar_lea.vmem %s0, %s111
      $region20: #{clip_forward.46} parent=15 // pred_fallthru
        _
      // Predicated region
      $region21: #{clip_forward.46} parent=15 // pred_check
        %p113 = pneg %p54
      $region22: #{clip_forward.46} parent=15 // pred_check_branch
        %115 = sbr.rel (%p113) target = $region24
      $region23: #{clip_forward.46} parent=15 // pred_region
        %p116 = scmp.lt.s32.totalorder %s8, 1
        %s117 = scalar_select %p116, %s8, 1
        %s118 = scalar_lea.vmem %s1, %s117
      $region24: #{clip_forward.46} parent=15 // pred_fallthru
        _
    $region16: #{clip_forward.46} parent=5 // pred_fallthru
      _
    %p119 = scmp.le.s32.totalorder 1, %s8
    %p120 = scmp.lt.s32.totalorder %s8, 3
    %p121 = pnand %p119, %p120
    %p122 = pneg %p121
    // Predicated region
    $region25: #{clip_forward.46} parent=5 // pred_check
      _
    $region26: #{clip_forward.46} parent=5 // pred_check_branch
      %124 = sbr.rel (%p121) target = $region28
    $region27: #{clip_forward.46} parent=5 // pred_region
      %s125 = ssub.s32 %s8, 1
      %p126 = scmp.lt.s32.totalorder %s13, 1
      %s127 = scalar_select %p126, %s13, 1
      %s128 = smul.addr %s127, 6
      %s129 = smul.addr %s128, 8
      %s130 = scalar_lea.vmem %s0, %s129
      %p131 = pneg %p34
      %p132 = pneg %p31
      %p133 = scmp.lt.s32.totalorder %s13, 1
      %s134 = scalar_select %p133, %s13, 1
      %s135 = scalar_lea.vmem %s1, %s134
      %p136 = pneg %p60
      %p137 = pneg %p57
      %p138 = pneg %p86
      %p139 = pneg %p83
      %p140 = scmp.lt.s32.totalorder %s13, 1
      %s141 = scalar_select %p140, %s13, 1
      %s142 = smul.addr %s141, 3
      %s143 = smul.addr %s142, 8
      %s144 = scalar_lea.vmem %s2, %s143
      %p145 = scmp.lt.s32.totalorder %s13, 1
      %s146 = scalar_select %p145, %s13, 1
      %s147 = smul.addr %s146, 6
      %s148 = smul.addr %s147, 8
      %s149 = scalar_lea.vmem %s0, %s148
      %p150 = scmp.lt.s32.totalorder %s13, 1
      %s151 = scalar_select %p150, %s13, 1
      %s152 = scalar_lea.vmem %s1, %s151
      %p153 = scmp.lt.s32.totalorder %s13, 1
      %s154 = scalar_select %p153, %s13, 1
      %s155 = smul.addr %s154, 3
      %s156 = smul.addr %s155, 8
      %s157 = scalar_lea.vmem %s2, %s156
      %v158 = vld [vmem:[%s149] sm:$0xff]
      %v159 = vld [vmem:[%s149 + $0x8] sm:$0xff]
      %v160 = vld [vmem:[%s149 + $0x10] sm:$0xff]
      %v161 = vld [vmem:[%s149 + $0x18] sm:$0xff]
      %v162 = vld [vmem:[%s149 + $0x20] sm:$0x1]
      %v163 = vld [vmem:[%s149 + $0x28] sm:$0x1]
      %v164 = vld [vmem:[%s152] sm:$0x1]
      %v165 = vmul.f32 %v158, 0.125
      %v166 = vmul.f32 %v160, 0.125
      %v167 = vmul.f32 %v162, 0.125
      %v169 = vlaneseq
      %v170 = vshrl.u32 %v169, 7
      %v171 = vsub.s32 0, %v170
      %v172 = vrot.slane %v164, %v171
      %177 = vrot.lane.b32.xlu0 %v158, 64
      %v178 = vpop.permute.xlu0 %177
      %179 = vrot.lane.b32.xlu0 %v160, 64
      %v180 = vpop.permute.xlu0 %179
      %181 = vrot.lane.b32.xlu0 %v162, 64
      %v182 = vpop.permute.xlu0 %181
      %vm183 = vcmask 523264
      %v185 = vsel %vm183, %v165, 0
      %v188 = vsel %vm183, %v166, 0
      %v191 = vsel %vm183, %v167, 0
      %v193 = vsel %vm183, %v178, 0
      %v195 = vsel %vm183, %v180, 0
      %v197 = vsel %vm183, %v182, 0
      %199 = vmatprep.subr.mxu0 0.0
      %200 = vmatpush1.xpose.msra.mxu0 %v193
      %201 = vmatprep.subr.mxu0 0.0
      %202 = vmatpush1.xpose.msra.mxu0 %v195
      %203 = vmatprep.subr.mxu0 0.0
      %204 = vmatpush1.xpose.msra.mxu0 %v197
      %205 = vmatprep.subr.mxu0 0.0
      %206 = vmatpush1.xpose.msra.mxu0 0.0
      %207 = vmatprep.subr.mxu0 0.0
      %208 = vmatpush1.xpose.msra.mxu0 0.0
      %209 = vmatprep.subr.mxu0 0.0
      %210 = vmatpush1.xpose.msra.mxu0 0.0
      %211 = vmatprep.subr.mxu0 0.0
      %212 = vmatpush1.xpose.msra.mxu0 0.0
      %213 = vmatprep.subr.mxu0 0.0
      %214 = vmatpush1.xpose.msra.mxu0 0.0
      %215 = vmatprep.subr.mxu0 0.0
      %216 = vmatpush1.xpose.msra.mxu0 0.0
      %217 = vmatprep.subr.mxu0 0.0
      %218 = vmatpush1.xpose.msra.mxu0 0.0
      %219 = vmatprep.subr.mxu0 0.0
      %220 = vmatpush1.xpose.msra.mxu0 0.0
      %221 = vmatprep.subr.mxu0 0.0
      %222 = vmatpush1.xpose.msra.mxu0 0.0
      %223 = vmatprep.subr.mxu0 0.0
      %224 = vmatpush1.xpose.msra.mxu0 0.0
      %225 = vmatprep.subr.mxu0 0.0
      %226 = vmatpush1.xpose.msra.mxu0 0.0
      %227 = vmatprep.subr.mxu0 0.0
      %228 = vmatpush1.xpose.msra.mxu0 0.0
      %229 = vmatprep.subr.mxu0 0.0
      %230 = vmatpush1.xpose.msra.mxu0 0.0
      %231 = vmatprep.subr.mxu0 0.0
      %232 = vmatpush1.xpose.msra.mxu0 0.0
      %233 = vmatprep.subr.mxu0 0.0
      %234 = vmatpush1.xpose.msra.mxu0 0.0
      %235 = vmatprep.subr.mxu0 0.0
      %236 = vmatpush1.xpose.msra.mxu0 0.0
      %237 = vmatprep.subr.mxu0 0.0
      %238 = vmatpush1.xpose.msra.mxu0 0.0
      %239 = vmatprep.subr.mxu0 0.0
      %240 = vmatpush1.xpose.msra.mxu0 0.0
      %241 = vmatprep.subr.mxu0 0.0
      %242 = vmatpush1.xpose.msra.mxu0 0.0
      %243 = vmatprep.subr.mxu0 0.0
      %244 = vmatpush1.xpose.msra.mxu0 0.0
      %245 = vmatprep.subr.mxu0 0.0
      %246 = vmatpush1.xpose.msra.mxu0 0.0
      %247 = vmatprep.subr.mxu0 0.0
      %248 = vmatpush1.xpose.msra.mxu0 0.0
      %249 = vmatprep.subr.mxu0 0.0
      %250 = vmatpush1.xpose.msra.mxu0 0.0
      %251 = vmatprep.subr.mxu0 0.0
      %252 = vmatpush1.xpose.msra.mxu0 0.0
      %253 = vmatprep.subr.mxu0 0.0
      %254 = vmatpush1.xpose.msra.mxu0 0.0
      %255 = vmatprep.subr.mxu0 0.0
      %256 = vmatpush1.xpose.msra.mxu0 0.0
      %257 = vmatprep.subr.mxu0 0.0
      %258 = vmatpush1.xpose.msra.mxu0 0.0
      %259 = vmatprep.subr.mxu0 0.0
      %260 = vmatpush1.xpose.msra.mxu0 0.0
      %261 = vmatprep.subr.mxu0 0.0
      %262 = vmatpush1.xpose.msra.mxu0 0.0
      %263 = vmatprep.mubr.f32.mxu0 0.0
      %264 = vmatmul.mubr.f32.gmra.mrb[0].mxu0 %v185
      %v265 = vpop.f32.mrb[0].mxu0
      %v266 = vadd.f32 %v172, %v265
      %v267 = vpop.f32.mrb[0].mxu0
      %268 = vmatprep.mubr.f32.mxu0 0.0
      %269 = vmatmul.mubr.f32.gmra.mrb[0].mxu0 %v188
      %v270 = vpop.f32.mrb[0].mxu0
      %v271 = vadd.f32 %v172, %v270
      %v272 = vpop.f32.mrb[0].mxu0
      %273 = vmatprep.mubr.f32.mxu0 0.0
      %274 = vmatmul.mubr.f32.gmra.mrb[0].mxu0 %v191
      %v275 = vpop.f32.mrb[0].mxu0
      %v276 = vadd.f32 %v172, %v275
      %v277 = vpop.f32.mrb[0].mxu0
      %278 = vdwg.mxu0
      %vm279 = vcmask 138240
      %v280 = vsel %vm279, %v266, -inf
      %281 = vmax.xlane.f32.xlu0 %v280
      %v282 = vpop.xlane.xlu0 %281
      %v283 = vsel %vm279, %v271, -inf
      %284 = vmax.xlane.f32.xlu0 %v283
      %v285 = vpop.xlane.xlu0 %284
      %vm286 = vcmask 131072
      %v287 = vsel %vm286, %v276, -inf
      %288 = vmax.xlane.f32.xlu0 %v287
      %v289 = vpop.xlane.xlu0 %288
      %v290 = vsub.f32 %v266, %v282
      %v291 = vsub.f32 %v271, %v285
      %v292 = vsub.f32 %v276, %v289
      %v293 = vmul.f32 %v290, 1.442695
      %v294 = vpow.pop %v293
      %v295 = vmul.f32 %v291, 1.442695
      %v296 = vpow.pop %v295
      %v297 = vmul.f32 %v292, 1.442695
      %v298 = vpow.pop %v297
      %v299 = vsel %vm279, %v294, 0.0
      %300 = vadd.xlane.f32.xlu0 %v299
      %v301 = vpop.xlane.xlu0 %300
      %v302 = vsel %vm279, %v296, 0.0
      %303 = vadd.xlane.f32.xlu0 %v302
      %v304 = vpop.xlane.xlu0 %303
      %v305 = vsel %vm286, %v298, 0.0
      %306 = vadd.xlane.f32.xlu0 %v305
      %v307 = vpop.xlane.xlu0 %306
      %v308 = vrcp.pop %v301
      %v309 = vrcp.pop %v304
      %v310 = vrcp.pop %v307
      %v311 = vmul.f32 %v294, %v308
      %v312 = vmul.f32 %v296, %v309
      %v313 = vmul.f32 %v298, %v310
      %v315 = vsel %vm279, %v311, 0
      %v318 = vsel %vm279, %v312, 0
      %v321 = vsel %vm279, %v313, 0
      %vm323 = vcmask 1040384
      %v325 = vsel %vm323, %v163, 0
      %327 = vmatprep.subr.mxu0 0.0
      %328 = vmatpush1.msra.mxu0 %v159
      %329 = vmatprep.subr.mxu0 0.0
      %330 = vmatpush1.msra.mxu0 %v161
      %331 = vmatprep.subr.mxu0 0.0
      %332 = vmatpush1.msra.mxu0 %v325
      %333 = vmatprep.subr.mxu0 0.0
      %334 = vmatpush1.msra.mxu0 0.0
      %335 = vmatprep.subr.mxu0 0.0
      %336 = vmatpush1.msra.mxu0 0.0
      %337 = vmatprep.subr.mxu0 0.0
      %338 = vmatpush1.msra.mxu0 0.0
      %339 = vmatprep.subr.mxu0 0.0
      %340 = vmatpush1.msra.mxu0 0.0
      %341 = vmatprep.subr.mxu0 0.0
      %342 = vmatpush1.msra.mxu0 0.0
      %343 = vmatprep.subr.mxu0 0.0
      %344 = vmatpush1.msra.mxu0 0.0
      %345 = vmatprep.subr.mxu0 0.0
      %346 = vmatpush1.msra.mxu0 0.0
      %347 = vmatprep.subr.mxu0 0.0
      %348 = vmatpush1.msra.mxu0 0.0
      %349 = vmatprep.subr.mxu0 0.0
      %350 = vmatpush1.msra.mxu0 0.0
      %351 = vmatprep.subr.mxu0 0.0
      %352 = vmatpush1.msra.mxu0 0.0
      %353 = vmatprep.subr.mxu0 0.0
      %354 = vmatpush1.msra.mxu0 0.0
      %355 = vmatprep.subr.mxu0 0.0
      %356 = vmatpush1.msra.mxu0 0.0
      %357 = vmatprep.subr.mxu0 0.0
      %358 = vmatpush1.msra.mxu0 0.0
      %359 = vmatprep.subr.mxu0 0.0
      %360 = vmatpush1.msra.mxu0 0.0
      %361 = vmatprep.subr.mxu0 0.0
      %362 = vmatpush1.msra.mxu0 0.0
      %363 = vmatprep.subr.mxu0 0.0
      %364 = vmatpush1.msra.mxu0 0.0
      %365 = vmatprep.subr.mxu0 0.0
      %366 = vmatpush1.msra.mxu0 0.0
      %367 = vmatprep.subr.mxu0 0.0
      %368 = vmatpush1.msra.mxu0 0.0
      %369 = vmatprep.subr.mxu0 0.0
      %370 = vmatpush1.msra.mxu0 0.0
      %371 = vmatprep.subr.mxu0 0.0
      %372 = vmatpush1.msra.mxu0 0.0
      %373 = vmatprep.subr.mxu0 0.0
      %374 = vmatpush1.msra.mxu0 0.0
      %375 = vmatprep.subr.mxu0 0.0
      %376 = vmatpush1.msra.mxu0 0.0
      %377 = vmatprep.subr.mxu0 0.0
      %378 = vmatpush1.msra.mxu0 0.0
      %379 = vmatprep.subr.mxu0 0.0
      %380 = vmatpush1.msra.mxu0 0.0
      %381 = vmatprep.subr.mxu0 0.0
      %382 = vmatpush1.msra.mxu0 0.0
      %383 = vmatprep.subr.mxu0 0.0
      %384 = vmatpush1.msra.mxu0 0.0
      %385 = vmatprep.subr.mxu0 0.0
      %386 = vmatpush1.msra.mxu0 0.0
      %387 = vmatprep.subr.mxu0 0.0
      %388 = vmatpush1.msra.mxu0 0.0
      %389 = vmatprep.subr.mxu0 0.0
      %390 = vmatpush1.msra.mxu0 0.0
      %391 = vmatprep.mubr.f32.mxu0 0.0
      %392 = vmatmul.mubr.f32.gmra.mrb[0].mxu0 %v315
      %v393 = vpop.f32.mrb[0].mxu0
      %v394 = vadd.f32 0.0, %v393
      %v395 = vpop.f32.mrb[0].mxu0
      %396 = vmatprep.mubr.f32.mxu0 0.0
      %397 = vmatmul.mubr.f32.gmra.mrb[0].mxu0 %v318
      %v398 = vpop.f32.mrb[0].mxu0
      %v399 = vadd.f32 0.0, %v398
      %v400 = vpop.f32.mrb[0].mxu0
      %401 = vmatprep.mubr.f32.mxu0 0.0
      %402 = vmatmul.mubr.f32.gmra.mrb[0].mxu0 %v321
      %v403 = vpop.f32.mrb[0].mxu0
      %v404 = vadd.f32 0.0, %v403
      %v405 = vpop.f32.mrb[0].mxu0
      %406 = vdwg.mxu0
      %407 = vst.msk [vmem:[%s157] sm:$0xff] %vm183, %v394
      %408 = vst.msk [vmem:[%s157 + $0x8] sm:$0xff] %vm183, %v399
      %vm409 = vcmask 516096
      %410 = vst.msk [vmem:[%s157 + $0x10] sm:$0x1] %vm409, %v404
      %p411 = scmp.lt.s32.totalorder %s13, 1
      %s412 = scalar_select %p411, %s13, 1
      %s413 = smul.addr %s412, 3
      %s414 = smul.addr %s413, 8
      %s415 = scalar_lea.vmem %s2, %s414
      // Predicated region
      $region29: #{clip_forward.46} parent=27 // pred_check
        %p416 = pneg %p83
      $region30: #{clip_forward.46} parent=27 // pred_check_branch
        %418 = sbr.rel (%p416) target = $region32
      $region31: #{clip_forward.46} parent=27 // pred_region
        _
      $region32: #{clip_forward.46} parent=27 // pred_fallthru
        _
    $region28: #{clip_forward.46} parent=5 // pred_fallthru
      _
    %p419 = scmp.le.s32.totalorder 2, %s8
    // Predicated region
    $region33: #{clip_forward.46} parent=5 // pred_check
      %p420 = pneg %p419
    $region34: #{clip_forward.46} parent=5 // pred_check_branch
      %422 = sbr.rel (%p420) target = $region36
    $region35: #{clip_forward.46} parent=5 // pred_region
      %s423 = ssub.s32 %s8, 2
      // Predicated region
      $region37: #{clip_forward.46} parent=35 // pred_check
        %p424 = pneg %p89
      $region38: #{clip_forward.46} parent=35 // pred_check_branch
        %426 = sbr.rel (%p424) target = $region40
      $region39: #{clip_forward.46} parent=35 // pred_region
        %p427 = scmp.lt.s32.totalorder %s14, 1
        %s428 = scalar_select %p427, %s14, 1
        %s429 = smul.addr %s428, 3
        %s430 = smul.addr %s429, 8
        %s431 = scalar_lea.vmem %s2, %s430
      $region40: #{clip_forward.46} parent=35 // pred_fallthru
        _
    $region36: #{clip_forward.46} parent=5 // pred_fallthru
      _
  $region6: #{clip_forward.46} parent=0 // loop_footer
    %s12 = sadd.s32 1, %s8
  $region7: #{clip_forward.46} parent=0 // loop_footer_branch
    %7 = sbr.rel target = $region3
  $region8: #{clip_forward.46} parent=0 // loop_exit
    _

// kernel: clip_forward.47
$region0: #{clip_forward.47}
  #allocation0 [shape = 'u32[]', space=smem, size = 0x4, offset = 0x4, fixed_abs, tag = 'smem constant byte address 0x4 - core index']
  #allocation1 [shape = 'u32[144,128]{1,0:T(1,128)}', space=vmem, size = 0x12000, scoped, tag = 'internal scratch']
  #allocation2 [shape = 'f32[34,64]{1,0:T(8,128)}', space=vmem, size = 0x5000, scoped, tag = 'scratch operand']
  %s0 = inlined_call_operand.vmem [shape: f32[34,64], index: 0, kind: input, shape index: {}]
  %s1 = inlined_call_operand.vmem [shape: f32[64,64], index: 1, kind: input, shape index: {}]
  %s2 = inlined_call_operand.vmem [shape: f32[1,64], index: 2, kind: input, shape index: {}]
  %s3 = inlined_call_operand.vmem [shape: f32[34,64], index: 3, kind: output, shape index: {}]
  %s4 = sld [smem:[#allocation0]]
  $region30: #{clip_forward.47} parent=0
    _
  %s6 = ssub.s32 1, %s4
  %s7 = scalar_select 0, %s6, %s4
  // Predicated region
  $region2: #{clip_forward.47} parent=0 // pred_check
    _
  $region3: #{clip_forward.47} parent=0 // pred_check_branch
    %9 = sbr.rel (0) target = $region5
  $region4: #{clip_forward.47} parent=0 // pred_region
    _
  $region5: #{clip_forward.47} parent=0 // pred_fallthru
    _
  // Predicated region
  $region6: #{clip_forward.47} parent=0 // pred_check
    _
  $region7: #{clip_forward.47} parent=0 // pred_check_branch
    %11 = sbr.rel (0) target = $region9
  $region8: #{clip_forward.47} parent=0 // pred_region
    _
  $region9: #{clip_forward.47} parent=0 // pred_fallthru
    _
  // Predicated region
  $region10: #{clip_forward.47} parent=0 // pred_check
    _
  $region11: #{clip_forward.47} parent=0 // pred_check_branch
    %13 = sbr.rel (0) target = $region13
  $region12: #{clip_forward.47} parent=0 // pred_region
    _
  $region13: #{clip_forward.47} parent=0 // pred_fallthru
    _
  %p14 = scmp.eq.s32.totalorder 0, 0
  // Predicated region
  $region14: #{clip_forward.47} parent=0 // pred_check
    %p15 = pneg %p14
  $region15: #{clip_forward.47} parent=0 // pred_check_branch
    %17 = sbr.rel (%p15) target = $region17
  $region16: #{clip_forward.47} parent=0 // pred_region
    %vm18 = vcmask 523264
    %19 = vst.msk [vmem:[#allocation2] sm:$0xff] %vm18, 0.0
    %20 = vst.msk [vmem:[#allocation2 + $0x8] sm:$0xff] %vm18, 0.0
    %21 = vst.msk [vmem:[#allocation2 + $0x10] sm:$0xff] %vm18, 0.0
    %22 = vst.msk [vmem:[#allocation2 + $0x18] sm:$0xff] %vm18, 0.0
    %vm23 = vcmask 517120
    %24 = vst.msk [vmem:[#allocation2 + $0x20] sm:$0x3] %vm23, 0.0
  $region17: #{clip_forward.47} parent=0 // pred_fallthru
    _
  %v25 = vld [vmem:[#allocation2] sm:$0xff]
  %v26 = vld [vmem:[#allocation2 + $0x8] sm:$0xff]
  %v27 = vld [vmem:[#allocation2 + $0x10] sm:$0xff]
  %v28 = vld [vmem:[#allocation2 + $0x18] sm:$0xff]
  %v29 = vld [vmem:[#allocation2 + $0x20] sm:$0x3]
  %v30 = vld [vmem:[%s0] sm:$0xff]
  %v31 = vld [vmem:[%s0 + $0x8] sm:$0xff]
  %v32 = vld [vmem:[%s0 + $0x10] sm:$0xff]
  %v33 = vld [vmem:[%s0 + $0x18] sm:$0xff]
  %v34 = vld [vmem:[%s0 + $0x20] sm:$0x3]
  %v35 = vld [vmem:[%s1] sm:$0xff]
  %v36 = vld [vmem:[%s1 + $0x8] sm:$0xff]
  %v37 = vld [vmem:[%s1 + $0x10] sm:$0xff]
  %v38 = vld [vmem:[%s1 + $0x18] sm:$0xff]
  %v39 = vld [vmem:[%s1 + $0x20] sm:$0xff]
  %v40 = vld [vmem:[%s1 + $0x28] sm:$0xff]
  %v41 = vld [vmem:[%s1 + $0x30] sm:$0xff]
  %v42 = vld [vmem:[%s1 + $0x38] sm:$0xff]
  %vm43 = vcmask 523264
  %v45 = vsel %vm43, %v30, 0
  %v48 = vsel %vm43, %v31, 0
  %v51 = vsel %vm43, %v32, 0
  %v54 = vsel %vm43, %v33, 0
  %v57 = vsel %vm43, %v34, 0
  %59 = vmatprep.subr.mxu0 0.0
  %60 = vmatpush1.msra.mxu0 %v35
  %61 = vmatprep.subr.mxu0 0.0
  %62 = vmatpush1.msra.mxu0 %v36
  %63 = vmatprep.subr.mxu0 0.0
  %64 = vmatpush1.msra.mxu0 %v37
  %65 = vmatprep.subr.mxu0 0.0
  %66 = vmatpush1.msra.mxu0 %v38
  %67 = vmatprep.subr.mxu0 0.0
  %68 = vmatpush1.msra.mxu0 %v39
  %69 = vmatprep.subr.mxu0 0.0
  %70 = vmatpush1.msra.mxu0 %v40
  %71 = vmatprep.subr.mxu0 0.0
  %72 = vmatpush1.msra.mxu0 %v41
  %73 = vmatprep.subr.mxu0 0.0
  %74 = vmatpush1.msra.mxu0 %v42
  %75 = vmatprep.subr.mxu0 0.0
  %76 = vmatpush1.msra.mxu0 0.0
  %77 = vmatprep.subr.mxu0 0.0
  %78 = vmatpush1.msra.mxu0 0.0
  %79 = vmatprep.subr.mxu0 0.0
  %80 = vmatpush1.msra.mxu0 0.0
  %81 = vmatprep.subr.mxu0 0.0
  %82 = vmatpush1.msra.mxu0 0.0
  %83 = vmatprep.subr.mxu0 0.0
  %84 = vmatpush1.msra.mxu0 0.0
  %85 = vmatprep.subr.mxu0 0.0
  %86 = vmatpush1.msra.mxu0 0.0
  %87 = vmatprep.subr.mxu0 0.0
  %88 = vmatpush1.msra.mxu0 0.0
  %89 = vmatprep.subr.mxu0 0.0
  %90 = vmatpush1.msra.mxu0 0.0
  %91 = vmatprep.subr.mxu0 0.0
  %92 = vmatpush1.msra.mxu0 0.0
  %93 = vmatprep.subr.mxu0 0.0
  %94 = vmatpush1.msra.mxu0 0.0
  %95 = vmatprep.subr.mxu0 0.0
  %96 = vmatpush1.msra.mxu0 0.0
  %97 = vmatprep.subr.mxu0 0.0
  %98 = vmatpush1.msra.mxu0 0.0
  %99 = vmatprep.subr.mxu0 0.0
  %100 = vmatpush1.msra.mxu0 0.0
  %101 = vmatprep.subr.mxu0 0.0
  %102 = vmatpush1.msra.mxu0 0.0
  %103 = vmatprep.subr.mxu0 0.0
  %104 = vmatpush1.msra.mxu0 0.0
  %105 = vmatprep.subr.mxu0 0.0
  %106 = vmatpush1.msra.mxu0 0.0
  %107 = vmatprep.subr.mxu0 0.0
  %108 = vmatpush1.msra.mxu0 0.0
  %109 = vmatprep.subr.mxu0 0.0
  %110 = vmatpush1.msra.mxu0 0.0
  %111 = vmatprep.subr.mxu0 0.0
  %112 = vmatpush1.msra.mxu0 0.0
  %113 = vmatprep.subr.mxu0 0.0
  %114 = vmatpush1.msra.mxu0 0.0
  %115 = vmatprep.subr.mxu0 0.0
  %116 = vmatpush1.msra.mxu0 0.0
  %117 = vmatprep.subr.mxu0 0.0
  %118 = vmatpush1.msra.mxu0 0.0
  %119 = vmatprep.subr.mxu0 0.0
  %120 = vmatpush1.msra.mxu0 0.0
  %121 = vmatprep.subr.mxu0 0.0
  %122 = vmatpush1.msra.mxu0 0.0
  %123 = vmatprep.mubr.f32.mxu0 0.0
  %124 = vmatmul.mubr.f32.gmra.mrb[0].mxu0 %v45
  %v125 = vpop.f32.mrb[0].mxu0
  %v126 = vadd.f32 0.0, %v125
  %v127 = vpop.f32.mrb[0].mxu0
  %128 = vmatprep.mubr.f32.mxu0 0.0
  %129 = vmatmul.mubr.f32.gmra.mrb[0].mxu0 %v48
  %v130 = vpop.f32.mrb[0].mxu0
  %v131 = vadd.f32 0.0, %v130
  %v132 = vpop.f32.mrb[0].mxu0
  %133 = vmatprep.mubr.f32.mxu0 0.0
  %134 = vmatmul.mubr.f32.gmra.mrb[0].mxu0 %v51
  %v135 = vpop.f32.mrb[0].mxu0
  %v136 = vadd.f32 0.0, %v135
  %v137 = vpop.f32.mrb[0].mxu0
  %138 = vmatprep.mubr.f32.mxu0 0.0
  %139 = vmatmul.mubr.f32.gmra.mrb[0].mxu0 %v54
  %v140 = vpop.f32.mrb[0].mxu0
  %v141 = vadd.f32 0.0, %v140
  %v142 = vpop.f32.mrb[0].mxu0
  %143 = vmatprep.mubr.f32.mxu0 0.0
  %144 = vmatmul.mubr.f32.gmra.mrb[0].mxu0 %v57
  %v145 = vpop.f32.mrb[0].mxu0
  %v146 = vadd.f32 0.0, %v145
  %v147 = vpop.f32.mrb[0].mxu0
  %148 = vdwg.mxu0
  %v149 = vadd.f32 %v25, %v126
  %v150 = vadd.f32 %v26, %v131
  %v151 = vadd.f32 %v27, %v136
  %v152 = vadd.f32 %v28, %v141
  %v153 = vadd.f32 %v29, %v146
  %154 = vst.msk [vmem:[#allocation2] sm:$0xff] %vm43, %v149
  %155 = vst.msk [vmem:[#allocation2 + $0x8] sm:$0xff] %vm43, %v150
  %156 = vst.msk [vmem:[#allocation2 + $0x10] sm:$0xff] %vm43, %v151
  %157 = vst.msk [vmem:[#allocation2 + $0x18] sm:$0xff] %vm43, %v152
  %vm158 = vcmask 517120
  %159 = vst.msk [vmem:[#allocation2 + $0x20] sm:$0x3] %vm158, %v153
  // Predicated region
  $region18: #{clip_forward.47} parent=0 // pred_check
    %p160 = pneg %p14
  $region19: #{clip_forward.47} parent=0 // pred_check_branch
    %162 = sbr.rel (%p160) target = $region21
  $region20: #{clip_forward.47} parent=0 // pred_region
    %v163 = vld [vmem:[#allocation2] sm:$0xff]
    %v164 = vld [vmem:[#allocation2 + $0x8] sm:$0xff]
    %v165 = vld [vmem:[#allocation2 + $0x10] sm:$0xff]
    %v166 = vld [vmem:[#allocation2 + $0x18] sm:$0xff]
    %v167 = vld [vmem:[#allocation2 + $0x20] sm:$0x3]
    %v168 = vld [vmem:[%s2] sm:$0x1]
    %v170 = vlaneseq
    %v171 = vshrl.u32 %v170, 7
    %v172 = vsub.s32 0, %v171
    %v173 = vrot.slane %v168, %v172
    %v175 = vadd.f32 %v163, %v173
    %v176 = vadd.f32 %v164, %v173
    %v177 = vadd.f32 %v165, %v173
    %v178 = vadd.f32 %v166, %v173
    %v179 = vadd.f32 %v167, %v173
    %180 = vst.msk [vmem:[%s3] sm:$0xff] %vm43, %v175
    %181 = vst.msk [vmem:[%s3 + $0x8] sm:$0xff] %vm43, %v176
    %182 = vst.msk [vmem:[%s3 + $0x10] sm:$0xff] %vm43, %v177
    %183 = vst.msk [vmem:[%s3 + $0x18] sm:$0xff] %vm43, %v178
    %184 = vst.msk [vmem:[%s3 + $0x20] sm:$0x3] %vm158, %v179
  $region21: #{clip_forward.47} parent=0 // pred_fallthru
    _
  // Predicated region
  $region22: #{clip_forward.47} parent=0 // pred_check
    _
  $region23: #{clip_forward.47} parent=0 // pred_check_branch
    %186 = sbr.rel (0) target = $region25
  $region24: #{clip_forward.47} parent=0 // pred_region
    _
  $region25: #{clip_forward.47} parent=0 // pred_fallthru
    _
  // Predicated region
  $region26: #{clip_forward.47} parent=0 // pred_check
    _
  $region27: #{clip_forward.47} parent=0 // pred_check_branch
    %188 = sbr.rel (0) target = $region29
  $region28: #{clip_forward.47} parent=0 // pred_region
    _
  $region29: #{clip_forward.47} parent=0 // pred_fallthru
    _

// kernel: clip_forward.48
$region0: #{clip_forward.48}
  #allocation0 [shape = 'u32[]', space=smem, size = 0x4, offset = 0x4, fixed_abs, tag = 'smem constant byte address 0x4 - core index']
  #allocation1 [shape = 'u32[144,128]{1,0:T(1,128)}', space=vmem, size = 0x12000, scoped, tag = 'internal scratch']
  %s0 = inlined_call_operand.vmem [shape: f32[34,64], index: 0, kind: input, shape index: {}]
  %s1 = inlined_call_operand.vmem [shape: f32[1,64], index: 1, kind: input, shape index: {}]
  %s2 = inlined_call_operand.vmem [shape: f32[1,64], index: 2, kind: input, shape index: {}]
  %s3 = inlined_call_operand.vmem [shape: f32[64,256], index: 3, kind: input, shape index: {}]
  %s4 = inlined_call_operand.vmem [shape: f32[1,256], index: 4, kind: input, shape index: {}]
  %s5 = inlined_call_operand.vmem [shape: f32[34,256], index: 5, kind: output, shape index: {}]
  %s6 = sld [smem:[#allocation0]]
  $region30: #{clip_forward.48} parent=0
    _
  %s8 = ssub.s32 1, %s6
  %s9 = scalar_select 0, %s8, %s6
  // Predicated region
  $region2: #{clip_forward.48} parent=0 // pred_check
    _
  $region3: #{clip_forward.48} parent=0 // pred_check_branch
    %11 = sbr.rel (0) target = $region5
  $region4: #{clip_forward.48} parent=0 // pred_region
    _
  $region5: #{clip_forward.48} parent=0 // pred_fallthru
    _
  // Predicated region
  $region6: #{clip_forward.48} parent=0 // pred_check
    _
  $region7: #{clip_forward.48} parent=0 // pred_check_branch
    %13 = sbr.rel (0) target = $region9
  $region8: #{clip_forward.48} parent=0 // pred_region
    _
  $region9: #{clip_forward.48} parent=0 // pred_fallthru
    _
  // Predicated region
  $region10: #{clip_forward.48} parent=0 // pred_check
    _
  $region11: #{clip_forward.48} parent=0 // pred_check_branch
    %15 = sbr.rel (0) target = $region13
  $region12: #{clip_forward.48} parent=0 // pred_region
    _
  $region13: #{clip_forward.48} parent=0 // pred_fallthru
    _
  // Predicated region
  $region14: #{clip_forward.48} parent=0 // pred_check
    _
  $region15: #{clip_forward.48} parent=0 // pred_check_branch
    %17 = sbr.rel (0) target = $region17
  $region16: #{clip_forward.48} parent=0 // pred_region
    _
  $region17: #{clip_forward.48} parent=0 // pred_fallthru
    _
  // Predicated region
  $region18: #{clip_forward.48} parent=0 // pred_check
    _
  $region19: #{clip_forward.48} parent=0 // pred_check_branch
    %19 = sbr.rel (0) target = $region21
  $region20: #{clip_forward.48} parent=0 // pred_region
    _
  $region21: #{clip_forward.48} parent=0 // pred_fallthru
    _
  %v20 = vld [vmem:[%s0] sm:$0xff]
  %v21 = vld [vmem:[%s0 + $0x8] sm:$0xff]
  %v22 = vld [vmem:[%s0 + $0x10] sm:$0xff]
  %v23 = vld [vmem:[%s0 + $0x18] sm:$0xff]
  %v24 = vld [vmem:[%s0 + $0x20] sm:$0x3]
  %v25 = vld [vmem:[%s1] sm:$0x1]
  %v26 = vld [vmem:[%s2] sm:$0x1]
  %vm27 = vcmask 523264
  %v28 = vsel %vm27, %v20, 0.0
  %29 = vadd.xlane.f32.xlu0 %v28
  %v30 = vpop.xlane.xlu0 %29
  %v31 = vsel %vm27, %v21, 0.0
  %32 = vadd.xlane.f32.xlu0 %v31
  %v33 = vpop.xlane.xlu0 %32
  %v34 = vsel %vm27, %v22, 0.0
  %35 = vadd.xlane.f32.xlu0 %v34
  %v36 = vpop.xlane.xlu0 %35
  %v37 = vsel %vm27, %v23, 0.0
  %38 = vadd.xlane.f32.xlu0 %v37
  %v39 = vpop.xlane.xlu0 %38
  %vm40 = vcmask 517120
  %v41 = vsel %vm40, %v24, 0.0
  %42 = vadd.xlane.f32.xlu0 %v41
  %v43 = vpop.xlane.xlu0 %42
  %v44 = vrcp.pop 64.0
  %v45 = vmul.f32 %v30, %v44
  %v46 = vmul.f32 %v33, %v44
  %v47 = vmul.f32 %v36, %v44
  %v48 = vmul.f32 %v39, %v44
  %v49 = vmul.f32 %v43, %v44
  %v50 = vsub.f32 %v20, %v45
  %v51 = vsub.f32 %v21, %v46
  %v52 = vsub.f32 %v22, %v47
  %v53 = vsub.f32 %v23, %v48
  %v54 = vsub.f32 %v24, %v49
  %v55 = vmul.f32 %v50, %v50
  %v56 = vmul.f32 %v51, %v51
  %v57 = vmul.f32 %v52, %v52
  %v58 = vmul.f32 %v53, %v53
  %v59 = vmul.f32 %v54, %v54
  %v60 = vsel %vm27, %v55, 0.0
  %61 = vadd.xlane.f32.xlu0 %v60
  %v62 = vpop.xlane.xlu0 %61
  %v63 = vsel %vm27, %v56, 0.0
  %64 = vadd.xlane.f32.xlu0 %v63
  %v65 = vpop.xlane.xlu0 %64
  %v66 = vsel %vm27, %v57, 0.0
  %67 = vadd.xlane.f32.xlu0 %v66
  %v68 = vpop.xlane.xlu0 %67
  %v69 = vsel %vm27, %v58, 0.0
  %70 = vadd.xlane.f32.xlu0 %v69
  %v71 = vpop.xlane.xlu0 %70
  %v72 = vsel %vm40, %v59, 0.0
  %73 = vadd.xlane.f32.xlu0 %v72
  %v74 = vpop.xlane.xlu0 %73
  %v75 = vmul.f32 %v62, %v44
  %v76 = vmul.f32 %v65, %v44
  %v77 = vmul.f32 %v68, %v44
  %v78 = vmul.f32 %v71, %v44
  %v79 = vmul.f32 %v74, %v44
  %v80 = vadd.f32 %v75, 1e-05
  %v81 = vadd.f32 %v76, 1e-05
  %v82 = vadd.f32 %v77, 1e-05
  %v83 = vadd.f32 %v78, 1e-05
  %v84 = vadd.f32 %v79, 1e-05
  %v85 = vrsqrt.pop %v80
  %v86 = vrsqrt.pop %v81
  %v87 = vrsqrt.pop %v82
  %v88 = vrsqrt.pop %v83
  %v89 = vrsqrt.pop %v84
  %v90 = vmul.f32 %v50, %v85
  %v91 = vmul.f32 %v51, %v86
  %v92 = vmul.f32 %v52, %v87
  %v93 = vmul.f32 %v53, %v88
  %v94 = vmul.f32 %v54, %v89
  %v96 = vlaneseq
  %v97 = vshrl.u32 %v96, 7
  %v98 = vsub.s32 0, %v97
  %v99 = vrot.slane %v25, %v98
  %v101 = vmul.f32 %v90, %v99
  %v102 = vmul.f32 %v91, %v99
  %v103 = vmul.f32 %v92, %v99
  %v104 = vmul.f32 %v93, %v99
  %v105 = vmul.f32 %v94, %v99
  %v107 = vlaneseq
  %v108 = vshrl.u32 %v107, 7
  %v109 = vsub.s32 0, %v108
  %v110 = vrot.slane %v26, %v109
  %v112 = vadd.f32 %v101, %v110
  %v113 = vadd.f32 %v102, %v110
  %v114 = vadd.f32 %v103, %v110
  %v115 = vadd.f32 %v104, %v110
  %v116 = vadd.f32 %v105, %v110
  %v117 = vld [vmem:[%s3] sm:$0xff]
  %v118 = vld [vmem:[%s3 + $0x8] sm:$0xff]
  %v119 = vld [vmem:[%s3 + $0x10] sm:$0xff]
  %v120 = vld [vmem:[%s3 + $0x18] sm:$0xff]
  %v121 = vld [vmem:[%s3 + $0x20] sm:$0xff]
  %v122 = vld [vmem:[%s3 + $0x28] sm:$0xff]
  %v123 = vld [vmem:[%s3 + $0x30] sm:$0xff]
  %v124 = vld [vmem:[%s3 + $0x38] sm:$0xff]
  %v125 = vld [vmem:[%s3 + $0x40] sm:$0xff]
  %v126 = vld [vmem:[%s3 + $0x48] sm:$0xff]
  %v127 = vld [vmem:[%s3 + $0x50] sm:$0xff]
  %v128 = vld [vmem:[%s3 + $0x58] sm:$0xff]
  %v129 = vld [vmem:[%s3 + $0x60] sm:$0xff]
  %v130 = vld [vmem:[%s3 + $0x68] sm:$0xff]
  %v131 = vld [vmem:[%s3 + $0x70] sm:$0xff]
  %v132 = vld [vmem:[%s3 + $0x78] sm:$0xff]
  %v133 = vld [vmem:[%s4] sm:$0x3]
  %v135 = vlaneseq
  %v136 = vshrl.u32 %v135, 7
  %v137 = vsub.s32 0, %v136
  %v138 = vrot.slane %v133, %v137
  %v139 = vlaneseq
  %v140 = vshrl.u32 %v139, 7
  %v141 = vsub.s32 1, %v140
  %v142 = vrot.slane %v133, %v141
  %v146 = vsel %vm27, %v112, 0
  %v149 = vsel %vm27, %v113, 0
  %v152 = vsel %vm27, %v114, 0
  %v155 = vsel %vm27, %v115, 0
  %v158 = vsel %vm27, %v116, 0
  %160 = vmatprep.subr.mxu0 %v118
  %161 = vmatpush1.msra.mxu0 %v117
  %162 = vmatprep.subr.mxu0 %v120
  %163 = vmatpush1.msra.mxu0 %v119
  %164 = vmatprep.subr.mxu0 %v122
  %165 = vmatpush1.msra.mxu0 %v121
  %166 = vmatprep.subr.mxu0 %v124
  %167 = vmatpush1.msra.mxu0 %v123
  %168 = vmatprep.subr.mxu0 %v126
  %169 = vmatpush1.msra.mxu0 %v125
  %170 = vmatprep.subr.mxu0 %v128
  %171 = vmatpush1.msra.mxu0 %v127
  %172 = vmatprep.subr.mxu0 %v130
  %173 = vmatpush1.msra.mxu0 %v129
  %174 = vmatprep.subr.mxu0 %v132
  %175 = vmatpush1.msra.mxu0 %v131
  %176 = vmatprep.subr.mxu0 0.0
  %177 = vmatpush1.msra.mxu0 0.0
  %178 = vmatprep.subr.mxu0 0.0
  %179 = vmatpush1.msra.mxu0 0.0
  %180 = vmatprep.subr.mxu0 0.0
  %181 = vmatpush1.msra.mxu0 0.0
  %182 = vmatprep.subr.mxu0 0.0
  %183 = vmatpush1.msra.mxu0 0.0
  %184 = vmatprep.subr.mxu0 0.0
  %185 = vmatpush1.msra.mxu0 0.0
  %186 = vmatprep.subr.mxu0 0.0
  %187 = vmatpush1.msra.mxu0 0.0
  %188 = vmatprep.subr.mxu0 0.0
  %189 = vmatpush1.msra.mxu0 0.0
  %190 = vmatprep.subr.mxu0 0.0
  %191 = vmatpush1.msra.mxu0 0.0
  %192 = vmatprep.subr.mxu0 0.0
  %193 = vmatpush1.msra.mxu0 0.0
  %194 = vmatprep.subr.mxu0 0.0
  %195 = vmatpush1.msra.mxu0 0.0
  %196 = vmatprep.subr.mxu0 0.0
  %197 = vmatpush1.msra.mxu0 0.0
  %198 = vmatprep.subr.mxu0 0.0
  %199 = vmatpush1.msra.mxu0 0.0
  %200 = vmatprep.subr.mxu0 0.0
  %201 = vmatpush1.msra.mxu0 0.0
  %202 = vmatprep.subr.mxu0 0.0
  %203 = vmatpush1.msra.mxu0 0.0
  %204 = vmatprep.subr.mxu0 0.0
  %205 = vmatpush1.msra.mxu0 0.0
  %206 = vmatprep.subr.mxu0 0.0
  %207 = vmatpush1.msra.mxu0 0.0
  %208 = vmatprep.subr.mxu0 0.0
  %209 = vmatpush1.msra.mxu0 0.0
  %210 = vmatprep.subr.mxu0 0.0
  %211 = vmatpush1.msra.mxu0 0.0
  %212 = vmatprep.subr.mxu0 0.0
  %213 = vmatpush1.msra.mxu0 0.0
  %214 = vmatprep.subr.mxu0 0.0
  %215 = vmatpush1.msra.mxu0 0.0
  %216 = vmatprep.subr.mxu0 0.0
  %217 = vmatpush1.msra.mxu0 0.0
  %218 = vmatprep.subr.mxu0 0.0
  %219 = vmatpush1.msra.mxu0 0.0
  %220 = vmatprep.subr.mxu0 0.0
  %221 = vmatpush1.msra.mxu0 0.0
  %222 = vmatprep.subr.mxu0 0.0
  %223 = vmatpush1.msra.mxu0 0.0
  %224 = vmatprep.mubr.f32.mxu0 0.0
  %225 = vmatmul.mubr.f32.gmra.mrb[0].mxu0 %v146
  %v226 = vpop.f32.mrb[0].mxu0
  %v227 = vadd.f32 %v138, %v226
  %v228 = vpop.f32.mrb[0].mxu0
  %v229 = vadd.f32 %v142, %v228
  %230 = vmatprep.mubr.f32.mxu0 0.0
  %231 = vmatmul.mubr.f32.gmra.mrb[0].mxu0 %v149
  %v232 = vpop.f32.mrb[0].mxu0
  %v233 = vadd.f32 %v138, %v232
  %v234 = vpop.f32.mrb[0].mxu0
  %v235 = vadd.f32 %v142, %v234
  %236 = vmatprep.mubr.f32.mxu0 0.0
  %237 = vmatmul.mubr.f32.gmra.mrb[0].mxu0 %v152
  %v238 = vpop.f32.mrb[0].mxu0
  %v239 = vadd.f32 %v138, %v238
  %v240 = vpop.f32.mrb[0].mxu0
  %v241 = vadd.f32 %v142, %v240
  %242 = vmatprep.mubr.f32.mxu0 0.0
  %243 = vmatmul.mubr.f32.gmra.mrb[0].mxu0 %v155
  %v244 = vpop.f32.mrb[0].mxu0
  %v245 = vadd.f32 %v138, %v244
  %v246 = vpop.f32.mrb[0].mxu0
  %v247 = vadd.f32 %v142, %v246
  %248 = vmatprep.mubr.f32.mxu0 0.0
  %249 = vmatmul.mubr.f32.gmra.mrb[0].mxu0 %v158
  %v250 = vpop.f32.mrb[0].mxu0
  %v251 = vadd.f32 %v138, %v250
  %v252 = vpop.f32.mrb[0].mxu0
  %v253 = vadd.f32 %v142, %v252
  %254 = vdwg.mxu0
  %v255 = vmul.f32 %v227, -1.702
  %v256 = vmul.f32 %v229, -1.702
  %v257 = vmul.f32 %v233, -1.702
  %v258 = vmul.f32 %v235, -1.702
  %v259 = vmul.f32 %v239, -1.702
  %v260 = vmul.f32 %v241, -1.702
  %v261 = vmul.f32 %v245, -1.702
  %v262 = vmul.f32 %v247, -1.702
  %v263 = vmul.f32 %v251, -1.702
  %v264 = vmul.f32 %v253, -1.702
  %v265 = vmul.f32 %v255, 1.442695
  %v266 = vpow.pop %v265
  %v267 = vmul.f32 %v256, 1.442695
  %v268 = vpow.pop %v267
  %v269 = vmul.f32 %v257, 1.442695
  %v270 = vpow.pop %v269
  %v271 = vmul.f32 %v258, 1.442695
  %v272 = vpow.pop %v271
  %v273 = vmul.f32 %v259, 1.442695
  %v274 = vpow.pop %v273
  %v275 = vmul.f32 %v260, 1.442695
  %v276 = vpow.pop %v275
  %v277 = vmul.f32 %v261, 1.442695
  %v278 = vpow.pop %v277
  %v279 = vmul.f32 %v262, 1.442695
  %v280 = vpow.pop %v279
  %v281 = vmul.f32 %v263, 1.442695
  %v282 = vpow.pop %v281
  %v283 = vmul.f32 %v264, 1.442695
  %v284 = vpow.pop %v283
  %v285 = vadd.f32 %v266, 1.0
  %v286 = vadd.f32 %v268, 1.0
  %v287 = vadd.f32 %v270, 1.0
  %v288 = vadd.f32 %v272, 1.0
  %v289 = vadd.f32 %v274, 1.0
  %v290 = vadd.f32 %v276, 1.0
  %v291 = vadd.f32 %v278, 1.0
  %v292 = vadd.f32 %v280, 1.0
  %v293 = vadd.f32 %v282, 1.0
  %v294 = vadd.f32 %v284, 1.0
  %v295 = vrcp.pop %v285
  %v296 = vrcp.pop %v286
  %v297 = vrcp.pop %v287
  %v298 = vrcp.pop %v288
  %v299 = vrcp.pop %v289
  %v300 = vrcp.pop %v290
  %v301 = vrcp.pop %v291
  %v302 = vrcp.pop %v292
  %v303 = vrcp.pop %v293
  %v304 = vrcp.pop %v294
  %v305 = vmul.f32 %v227, %v295
  %v306 = vmul.f32 %v229, %v296
  %v307 = vmul.f32 %v233, %v297
  %v308 = vmul.f32 %v235, %v298
  %v309 = vmul.f32 %v239, %v299
  %v310 = vmul.f32 %v241, %v300
  %v311 = vmul.f32 %v245, %v301
  %v312 = vmul.f32 %v247, %v302
  %v313 = vmul.f32 %v251, %v303
  %v314 = vmul.f32 %v253, %v304
  %315 = vst [vmem:[%s5] sm:$0xff] %v305
  %316 = vst [vmem:[%s5 + $0x8] sm:$0xff] %v306
  %317 = vst [vmem:[%s5 + $0x10] sm:$0xff] %v307
  %318 = vst [vmem:[%s5 + $0x18] sm:$0xff] %v308
  %319 = vst [vmem:[%s5 + $0x20] sm:$0xff] %v309
  %320 = vst [vmem:[%s5 + $0x28] sm:$0xff] %v310
  %321 = vst [vmem:[%s5 + $0x30] sm:$0xff] %v311
  %322 = vst [vmem:[%s5 + $0x38] sm:$0xff] %v312
  %323 = vst [vmem:[%s5 + $0x40] sm:$0x3] %v313
  %324 = vst [vmem:[%s5 + $0x48] sm:$0x3] %v314
  // Predicated region
  $region22: #{clip_forward.48} parent=0 // pred_check
    _
  $region23: #{clip_forward.48} parent=0 // pred_check_branch
    %326 = sbr.rel (0) target = $region25
  $region24: #{clip_forward.48} parent=0 // pred_region
    _
  $region25: #{clip_forward.48} parent=0 // pred_fallthru
    _
  // Predicated region
  $region26: #{clip_forward.48} parent=0 // pred_check
    _
  $region27: #{clip_forward.48} parent=0 // pred_check_branch
    %328 = sbr.rel (0) target = $region29
  $region28: #{clip_forward.48} parent=0 // pred_region
    _
  $region29: #{clip_forward.48} parent=0 // pred_fallthru
    _

// kernel: clip_forward.49
$region0: #{clip_forward.49}
  #allocation0 [shape = 'u32[]', space=smem, size = 0x4, offset = 0x4, fixed_abs, tag = 'smem constant byte address 0x4 - core index']
  #allocation1 [shape = 'u32[144,128]{1,0:T(1,128)}', space=vmem, size = 0x12000, scoped, tag = 'internal scratch']
  #allocation2 [shape = 'f32[34,64]{1,0:T(8,128)}', space=vmem, size = 0x5000, scoped, tag = 'scratch operand']
  %s0 = inlined_call_operand.vmem [shape: f32[34,256], index: 0, kind: input, shape index: {}]
  %s1 = inlined_call_operand.vmem [shape: f32[256,64], index: 1, kind: input, shape index: {}]
  %s2 = inlined_call_operand.vmem [shape: f32[1,64], index: 2, kind: input, shape index: {}]
  %s3 = inlined_call_operand.vmem [shape: f32[34,64], index: 3, kind: output, shape index: {}]
  %s4 = sld [smem:[#allocation0]]
  $region30: #{clip_forward.49} parent=0
    _
  %s6 = ssub.s32 1, %s4
  %s7 = scalar_select 0, %s6, %s4
  // Predicated region
  $region2: #{clip_forward.49} parent=0 // pred_check
    _
  $region3: #{clip_forward.49} parent=0 // pred_check_branch
    %9 = sbr.rel (0) target = $region5
  $region4: #{clip_forward.49} parent=0 // pred_region
    _
  $region5: #{clip_forward.49} parent=0 // pred_fallthru
    _
  // Predicated region
  $region6: #{clip_forward.49} parent=0 // pred_check
    _
  $region7: #{clip_forward.49} parent=0 // pred_check_branch
    %11 = sbr.rel (0) target = $region9
  $region8: #{clip_forward.49} parent=0 // pred_region
    _
  $region9: #{clip_forward.49} parent=0 // pred_fallthru
    _
  // Predicated region
  $region10: #{clip_forward.49} parent=0 // pred_check
    _
  $region11: #{clip_forward.49} parent=0 // pred_check_branch
    %13 = sbr.rel (0) target = $region13
  $region12: #{clip_forward.49} parent=0 // pred_region
    _
  $region13: #{clip_forward.49} parent=0 // pred_fallthru
    _
  %p14 = scmp.eq.s32.totalorder 0, 0
  // Predicated region
  $region14: #{clip_forward.49} parent=0 // pred_check
    %p15 = pneg %p14
  $region15: #{clip_forward.49} parent=0 // pred_check_branch
    %17 = sbr.rel (%p15) target = $region17
  $region16: #{clip_forward.49} parent=0 // pred_region
    %vm18 = vcmask 523264
    %19 = vst.msk [vmem:[#allocation2] sm:$0xff] %vm18, 0.0
    %20 = vst.msk [vmem:[#allocation2 + $0x8] sm:$0xff] %vm18, 0.0
    %21 = vst.msk [vmem:[#allocation2 + $0x10] sm:$0xff] %vm18, 0.0
    %22 = vst.msk [vmem:[#allocation2 + $0x18] sm:$0xff] %vm18, 0.0
    %vm23 = vcmask 517120
    %24 = vst.msk [vmem:[#allocation2 + $0x20] sm:$0x3] %vm23, 0.0
  $region17: #{clip_forward.49} parent=0 // pred_fallthru
    _
  %v25 = vld [vmem:[#allocation2] sm:$0xff]
  %v26 = vld [vmem:[#allocation2 + $0x8] sm:$0xff]
  %v27 = vld [vmem:[#allocation2 + $0x10] sm:$0xff]
  %v28 = vld [vmem:[#allocation2 + $0x18] sm:$0xff]
  %v29 = vld [vmem:[#allocation2 + $0x20] sm:$0x3]
  %v30 = vld [vmem:[%s0] sm:$0xff]
  %v31 = vld [vmem:[%s0 + $0x8] sm:$0xff]
  %v32 = vld [vmem:[%s0 + $0x10] sm:$0xff]
  %v33 = vld [vmem:[%s0 + $0x18] sm:$0xff]
  %v34 = vld [vmem:[%s0 + $0x20] sm:$0xff]
  %v35 = vld [vmem:[%s0 + $0x28] sm:$0xff]
  %v36 = vld [vmem:[%s0 + $0x30] sm:$0xff]
  %v37 = vld [vmem:[%s0 + $0x38] sm:$0xff]
  %v38 = vld [vmem:[%s0 + $0x40] sm:$0x3]
  %v39 = vld [vmem:[%s0 + $0x48] sm:$0x3]
  %v40 = vld [vmem:[%s1] sm:$0xff]
  %v41 = vld [vmem:[%s1 + $0x8] sm:$0xff]
  %v42 = vld [vmem:[%s1 + $0x10] sm:$0xff]
  %v43 = vld [vmem:[%s1 + $0x18] sm:$0xff]
  %v44 = vld [vmem:[%s1 + $0x20] sm:$0xff]
  %v45 = vld [vmem:[%s1 + $0x28] sm:$0xff]
  %v46 = vld [vmem:[%s1 + $0x30] sm:$0xff]
  %v47 = vld [vmem:[%s1 + $0x38] sm:$0xff]
  %v48 = vld [vmem:[%s1 + $0x40] sm:$0xff]
  %v49 = vld [vmem:[%s1 + $0x48] sm:$0xff]
  %v50 = vld [vmem:[%s1 + $0x50] sm:$0xff]
  %v51 = vld [vmem:[%s1 + $0x58] sm:$0xff]
  %v52 = vld [vmem:[%s1 + $0x60] sm:$0xff]
  %v53 = vld [vmem:[%s1 + $0x68] sm:$0xff]
  %v54 = vld [vmem:[%s1 + $0x70] sm:$0xff]
  %v55 = vld [vmem:[%s1 + $0x78] sm:$0xff]
  %v56 = vld [vmem:[%s1 + $0x80] sm:$0xff]
  %v57 = vld [vmem:[%s1 + $0x88] sm:$0xff]
  %v58 = vld [vmem:[%s1 + $0x90] sm:$0xff]
  %v59 = vld [vmem:[%s1 + $0x98] sm:$0xff]
  %v60 = vld [vmem:[%s1 + $0xa0] sm:$0xff]
  %v61 = vld [vmem:[%s1 + $0xa8] sm:$0xff]
  %v62 = vld [vmem:[%s1 + $0xb0] sm:$0xff]
  %v63 = vld [vmem:[%s1 + $0xb8] sm:$0xff]
  %v64 = vld [vmem:[%s1 + $0xc0] sm:$0xff]
  %v65 = vld [vmem:[%s1 + $0xc8] sm:$0xff]
  %v66 = vld [vmem:[%s1 + $0xd0] sm:$0xff]
  %v67 = vld [vmem:[%s1 + $0xd8] sm:$0xff]
  %v68 = vld [vmem:[%s1 + $0xe0] sm:$0xff]
  %v69 = vld [vmem:[%s1 + $0xe8] sm:$0xff]
  %v70 = vld [vmem:[%s1 + $0xf0] sm:$0xff]
  %v71 = vld [vmem:[%s1 + $0xf8] sm:$0xff]
  %72 = vmatprep.subr.mxu0 0.0
  %73 = vmatpush1.msra.mxu0 %v40
  %74 = vmatprep.subr.mxu0 0.0
  %75 = vmatpush1.msra.mxu0 %v41
  %76 = vmatprep.subr.mxu0 0.0
  %77 = vmatpush1.msra.mxu0 %v42
  %78 = vmatprep.subr.mxu0 0.0
  %79 = vmatpush1.msra.mxu0 %v43
  %80 = vmatprep.subr.mxu0 0.0
  %81 = vmatpush1.msra.mxu0 %v44
  %82 = vmatprep.subr.mxu0 0.0
  %83 = vmatpush1.msra.mxu0 %v45
  %84 = vmatprep.subr.mxu0 0.0
  %85 = vmatpush1.msra.mxu0 %v46
  %86 = vmatprep.subr.mxu0 0.0
  %87 = vmatpush1.msra.mxu0 %v47
  %88 = vmatprep.subr.mxu0 0.0
  %89 = vmatpush1.msra.mxu0 %v48
  %90 = vmatprep.subr.mxu0 0.0
  %91 = vmatpush1.msra.mxu0 %v49
  %92 = vmatprep.subr.mxu0 0.0
  %93 = vmatpush1.msra.mxu0 %v50
  %94 = vmatprep.subr.mxu0 0.0
  %95 = vmatpush1.msra.mxu0 %v51
  %96 = vmatprep.subr.mxu0 0.0
  %97 = vmatpush1.msra.mxu0 %v52
  %98 = vmatprep.subr.mxu0 0.0
  %99 = vmatpush1.msra.mxu0 %v53
  %100 = vmatprep.subr.mxu0 0.0
  %101 = vmatpush1.msra.mxu0 %v54
  %102 = vmatprep.subr.mxu0 0.0
  %103 = vmatpush1.msra.mxu0 %v55
  %104 = vmatprep.subr.mxu0 0.0
  %105 = vmatpush1.msra.mxu0 %v56
  %106 = vmatprep.subr.mxu0 0.0
  %107 = vmatpush1.msra.mxu0 %v57
  %108 = vmatprep.subr.mxu0 0.0
  %109 = vmatpush1.msra.mxu0 %v58
  %110 = vmatprep.subr.mxu0 0.0
  %111 = vmatpush1.msra.mxu0 %v59
  %112 = vmatprep.subr.mxu0 0.0
  %113 = vmatpush1.msra.mxu0 %v60
  %114 = vmatprep.subr.mxu0 0.0
  %115 = vmatpush1.msra.mxu0 %v61
  %116 = vmatprep.subr.mxu0 0.0
  %117 = vmatpush1.msra.mxu0 %v62
  %118 = vmatprep.subr.mxu0 0.0
  %119 = vmatpush1.msra.mxu0 %v63
  %120 = vmatprep.subr.mxu0 0.0
  %121 = vmatpush1.msra.mxu0 %v64
  %122 = vmatprep.subr.mxu0 0.0
  %123 = vmatpush1.msra.mxu0 %v65
  %124 = vmatprep.subr.mxu0 0.0
  %125 = vmatpush1.msra.mxu0 %v66
  %126 = vmatprep.subr.mxu0 0.0
  %127 = vmatpush1.msra.mxu0 %v67
  %128 = vmatprep.subr.mxu0 0.0
  %129 = vmatpush1.msra.mxu0 %v68
  %130 = vmatprep.subr.mxu0 0.0
  %131 = vmatpush1.msra.mxu0 %v69
  %132 = vmatprep.subr.mxu0 0.0
  %133 = vmatpush1.msra.mxu0 %v70
  %134 = vmatprep.subr.mxu0 0.0
  %135 = vmatpush1.msra.mxu0 %v71
  %136 = vmatprep.mubr.f32.mxu0 %v31
  %137 = vmatmul.mubr.f32.gmra.mrb[0].mxu0 %v30
  %v138 = vpop.f32.mrb[0].mxu0
  %v139 = vadd.f32 0.0, %v138
  %v140 = vpop.f32.mrb[0].mxu0
  %141 = vmatprep.mubr.f32.mxu0 %v33
  %142 = vmatmul.mubr.f32.gmra.mrb[0].mxu0 %v32
  %v143 = vpop.f32.mrb[0].mxu0
  %v144 = vadd.f32 0.0, %v143
  %v145 = vpop.f32.mrb[0].mxu0
  %146 = vmatprep.mubr.f32.mxu0 %v35
  %147 = vmatmul.mubr.f32.gmra.mrb[0].mxu0 %v34
  %v148 = vpop.f32.mrb[0].mxu0
  %v149 = vadd.f32 0.0, %v148
  %v150 = vpop.f32.mrb[0].mxu0
  %151 = vmatprep.mubr.f32.mxu0 %v37
  %152 = vmatmul.mubr.f32.gmra.mrb[0].mxu0 %v36
  %v153 = vpop.f32.mrb[0].mxu0
  %v154 = vadd.f32 0.0, %v153
  %v155 = vpop.f32.mrb[0].mxu0
  %156 = vmatprep.mubr.f32.mxu0 %v39
  %157 = vmatmul.mubr.f32.gmra.mrb[0].mxu0 %v38
  %v158 = vpop.f32.mrb[0].mxu0
  %v159 = vadd.f32 0.0, %v158
  %v160 = vpop.f32.mrb[0].mxu0
  %161 = vdwg.mxu0
  %v162 = vadd.f32 %v25, %v139
  %v163 = vadd.f32 %v26, %v144
  %v164 = vadd.f32 %v27, %v149
  %v165 = vadd.f32 %v28, %v154
  %v166 = vadd.f32 %v29, %v159
  %vm167 = vcmask 523264
  %168 = vst.msk [vmem:[#allocation2] sm:$0xff] %vm167, %v162
  %169 = vst.msk [vmem:[#allocation2 + $0x8] sm:$0xff] %vm167, %v163
  %170 = vst.msk [vmem:[#allocation2 + $0x10] sm:$0xff] %vm167, %v164
  %171 = vst.msk [vmem:[#allocation2 + $0x18] sm:$0xff] %vm167, %v165
  %vm172 = vcmask 517120
  %173 = vst.msk [vmem:[#allocation2 + $0x20] sm:$0x3] %vm172, %v166
  // Predicated region
  $region18: #{clip_forward.49} parent=0 // pred_check
    %p174 = pneg %p14
  $region19: #{clip_forward.49} parent=0 // pred_check_branch
    %176 = sbr.rel (%p174) target = $region21
  $region20: #{clip_forward.49} parent=0 // pred_region
    %v177 = vld [vmem:[#allocation2] sm:$0xff]
    %v178 = vld [vmem:[#allocation2 + $0x8] sm:$0xff]
    %v179 = vld [vmem:[#allocation2 + $0x10] sm:$0xff]
    %v180 = vld [vmem:[#allocation2 + $0x18] sm:$0xff]
    %v181 = vld [vmem:[#allocation2 + $0x20] sm:$0x3]
    %v182 = vld [vmem:[%s2] sm:$0x1]
    %v184 = vlaneseq
    %v185 = vshrl.u32 %v184, 7
    %v186 = vsub.s32 0, %v185
    %v187 = vrot.slane %v182, %v186
    %v189 = vadd.f32 %v177, %v187
    %v190 = vadd.f32 %v178, %v187
    %v191 = vadd.f32 %v179, %v187
    %v192 = vadd.f32 %v180, %v187
    %v193 = vadd.f32 %v181, %v187
    %194 = vst.msk [vmem:[%s3] sm:$0xff] %vm167, %v189
    %195 = vst.msk [vmem:[%s3 + $0x8] sm:$0xff] %vm167, %v190
    %196 = vst.msk [vmem:[%s3 + $0x10] sm:$0xff] %vm167, %v191
    %197 = vst.msk [vmem:[%s3 + $0x18] sm:$0xff] %vm167, %v192
    %198 = vst.msk [vmem:[%s3 + $0x20] sm:$0x3] %vm172, %v193
  $region21: #{clip_forward.49} parent=0 // pred_fallthru
    _
  // Predicated region
  $region22: #{clip_forward.49} parent=0 // pred_check
    _
  $region23: #{clip_forward.49} parent=0 // pred_check_branch
    %200 = sbr.rel (0) target = $region25
  $region24: #{clip_forward.49} parent=0 // pred_region
    _
  $region25: #{clip_forward.49} parent=0 // pred_fallthru
    _
  // Predicated region
  $region26: #{clip_forward.49} parent=0 // pred_check
    _
  $region27: #{clip_forward.49} parent=0 // pred_check_branch
    %202 = sbr.rel (0) target = $region29
  $region28: #{clip_forward.49} parent=0 // pred_region
    _
  $region29: #{clip_forward.49} parent=0 // pred_fallthru
    _

// kernel: clip_forward.60
$region0: #{clip_forward.60}
  #allocation0 [shape = 'u32[]', space=smem, size = 0x4, offset = 0x4, fixed_abs, tag = 'smem constant byte address 0x4 - core index']
  #allocation1 [shape = 'u32[144,128]{1,0:T(1,128)}', space=vmem, size = 0x12000, scoped, tag = 'internal scratch']
  %s0 = inlined_call_operand.vmem [shape: f32[2,6,6,64], index: 0, kind: input, shape index: {}]
  %s1 = inlined_call_operand.vmem [shape: f32[3,3,64], index: 1, kind: input, shape index: {}]
  %s2 = inlined_call_operand.vmem [shape: f32[1,64], index: 2, kind: input, shape index: {}]
  %s3 = inlined_call_operand.vmem [shape: f32[2,4,4,64], index: 3, kind: output, shape index: {}]
  %s4 = sld [smem:[#allocation0]]
  $region45: #{clip_forward.60} parent=0
    _
  %s6 = ssub.s32 1, %s4
  %s7 = scalar_select 0, %s6, %s4
  loop: start=0, step=1, limit=4
  $region2: #{clip_forward.60} parent=0 // loop_pre_header
    _
  $region3: #{clip_forward.60} parent=0 // loop_header
    %s9 = sphi 0, %s13
    %p10 = scmp.ge.s32.totalorder %s9, 4
    %s19 = sphi 0, %s21
    %s22 = sphi 0, %s19
    %s23 = sphi 0, %s22
    %s39 = sphi 0, %s23
    %s43 = sphi 0, %s43
    %s45 = sphi 0, %s43
    %s46 = sphi 0, %s45
    %s60 = sphi 0, %s46
    %s64 = sphi 0, %s64
    %s66 = sphi 0, %s64
    %s67 = sphi 0, %s66
    %s81 = sphi 0, %s67
    %s87 = sphi 0, %s89
    %s90 = sphi 0, %s87
    %s91 = sphi 0, %s90
    %s107 = sphi 0, %s91
  $region4: #{clip_forward.60} parent=0 // loop_header_branch
    %12 = sbr.rel (%p10) target = $region8
  $region5: #{clip_forward.60} parent=0 // loop_body
    %s14 = ssub.s32 %s9, 1
    %s15 = ssub.s32 %s9, 2
    %s16 = sadd.s32 %s9, 1
    %s17 = ssub.s32 %s9, %s16
    %p18 = scmp.eq.s32.totalorder %s17, 0
    %s20 = sadd.s32 %s19, 1
    %s21 = scalar_select %p18, %s19, %s20
    %p24 = pneg %p18
    %p25 = scmp.eq.s32.totalorder %s9, 1
    %p26 = por %p24, %p25
    %p27 = scmp.ne.s32.totalorder %s19, %s22
    %p28 = scmp.eq.s32.totalorder %s9, 0
    %p29 = por %p27, %p28
    %p30 = scmp.ne.s32.totalorder %s19, %s22
    %p31 = scmp.eq.s32.totalorder %s14, 1
    %p32 = por %p30, %p31
    %p33 = scmp.ne.s32.totalorder %s22, %s23
    %p34 = scmp.eq.s32.totalorder %s14, 0
    %p35 = por %p33, %p34
    %p36 = scmp.ne.s32.totalorder %s22, %s23
    %p37 = scmp.eq.s32.totalorder %s15, 1
    %p38 = por %p36, %p37
    %p40 = scmp.ne.s32.totalorder %s23, %s39
    %p41 = scmp.eq.s32.totalorder %s15, 0
    %p42 = por %p40, %p41
    %s44 = sadd.s32 %s43, 1
    %p47 = scmp.eq.s32.totalorder %s9, 1
    %p48 = scmp.ne.s32.totalorder %s43, %s45
    %p49 = scmp.eq.s32.totalorder %s9, 0
    %p50 = por %p48, %p49
    %p51 = scmp.ne.s32.totalorder %s43, %s45
    %p52 = scmp.eq.s32.totalorder %s14, 1
    %p53 = por %p51, %p52
    %p54 = scmp.ne.s32.totalorder %s45, %s46
    %p55 = scmp.eq.s32.totalorder %s14, 0
    %p56 = por %p54, %p55
    %p57 = scmp.ne.s32.totalorder %s45, %s46
    %p58 = scmp.eq.s32.totalorder %s15, 1
    %p59 = por %p57, %p58
    %p61 = scmp.ne.s32.totalorder %s46, %s60
    %p62 = scmp.eq.s32.totalorder %s15, 0
    %p63 = por %p61, %p62
    %s65 = sadd.s32 %s64, 1
    %p68 = scmp.eq.s32.totalorder %s9, 1
    %p69 = scmp.ne.s32.totalorder %s64, %s66
    %p70 = scmp.eq.s32.totalorder %s9, 0
    %p71 = por %p69, %p70
    %p72 = scmp.ne.s32.totalorder %s64, %s66
    %p73 = scmp.eq.s32.totalorder %s14, 1
    %p74 = por %p72, %p73
    %p75 = scmp.ne.s32.totalorder %s66, %s67
    %p76 = scmp.eq.s32.totalorder %s14, 0
    %p77 = por %p75, %p76
    %p78 = scmp.ne.s32.totalorder %s66, %s67
    %p79 = scmp.eq.s32.totalorder %s15, 1
    %p80 = por %p78, %p79
    %p82 = scmp.ne.s32.totalorder %s67, %s81
    %p83 = scmp.eq.s32.totalorder %s15, 0
    %p84 = por %p82, %p83
    %s85 = ssub.s32 %s9, %s16
    %p86 = scmp.eq.s32.totalorder %s85, 0
    %s88 = sadd.s32 %s87, 1
    %s89 = scalar_select %p86, %s87, %s88
    %p92 = pneg %p86
    %p93 = scmp.eq.s32.totalorder %s9, 1
    %p94 = por %p92, %p93
    %p95 = scmp.ne.s32.totalorder %s87, %s90
    %p96 = scmp.eq.s32.totalorder %s9, 0
    %p97 = por %p95, %p96
    %p98 = scmp.ne.s32.totalorder %s87, %s90
    %p99 = scmp.eq.s32.totalorder %s14, 1
    %p100 = por %p98, %p99
    %p101 = scmp.ne.s32.totalorder %s90, %s91
    %p102 = scmp.eq.s32.totalorder %s14, 0
    %p103 = por %p101, %p102
    %p104 = scmp.ne.s32.totalorder %s90, %s91
    %p105 = scmp.eq.s32.totalorder %s15, 1
    %p106 = por %p104, %p105
    %p108 = scmp.ne.s32.totalorder %s91, %s107
    %p109 = scmp.eq.s32.totalorder %s15, 0
    %p110 = por %p108, %p109
    %p111 = scmp.le.s32.totalorder 1, %s9
    %p112 = scmp.lt.s32.totalorder %s9, 3
    %p113 = pnand %p111, %p112
    %p114 = pneg %p113
    // Predicated region
    $region9: #{clip_forward.60} parent=5 // pred_check
      _
    $region10: #{clip_forward.60} parent=5 // pred_check_branch
      %116 = sbr.rel (%p113) target = $region12
    $region11: #{clip_forward.60} parent=5 // pred_region
      %s117 = ssub.s32 %s9, 1
      // Predicated region
      $region13: #{clip_forward.60} parent=11 // pred_check
        %p118 = pneg %p56
      $region14: #{clip_forward.60} parent=11 // pred_check_branch
        %120 = sbr.rel (%p118) target = $region16
      $region15: #{clip_forward.60} parent=11 // pred_region
        _
      $region16: #{clip_forward.60} parent=11 // pred_fallthru
        _
      // Predicated region
      $region17: #{clip_forward.60} parent=11 // pred_check
        %p121 = pneg %p77
      $region18: #{clip_forward.60} parent=11 // pred_check_branch
        %123 = sbr.rel (%p121) target = $region20
      $region19: #{clip_forward.60} parent=11 // pred_region
        _
      $region20: #{clip_forward.60} parent=11 // pred_fallthru
        _
    $region12: #{clip_forward.60} parent=5 // pred_fallthru
      _
    %p124 = scmp.lt.s32.totalorder %s9, 2
    // Predicated region
    $region21: #{clip_forward.60} parent=5 // pred_check
      %p125 = pneg %p124
    $region22: #{clip_forward.60} parent=5 // pred_check_branch
      %127 = sbr.rel (%p125) target = $region24
    $region23: #{clip_forward.60} parent=5 // pred_region
      // Predicated region
      $region25: #{clip_forward.60} parent=23 // pred_check
        %p128 = pneg %p29
      $region26: #{clip_forward.60} parent=23 // pred_check_branch
        %130 = sbr.rel (%p128) target = $region28
      $region27: #{clip_forward.60} parent=23 // pred_region
        %p131 = scmp.lt.s32.totalorder %s9, 1
        %s132 = scalar_select %p131, %s9, 1
        %s133 = smul.addr %s132, 6
        %s134 = smul.addr %s133, 8
        %s135 = scalar_lea.vmem %s0, %s134
      $region28: #{clip_forward.60} parent=23 // pred_fallthru
        _
    $region24: #{clip_forward.60} parent=5 // pred_fallthru
      _
    %p136 = scmp.le.s32.totalorder 1, %s9
    %p137 = scmp.lt.s32.totalorder %s9, 3
    %p138 = pnand %p136, %p137
    %p139 = pneg %p138
    // Predicated region
    $region29: #{clip_forward.60} parent=5 // pred_check
      _
    $region30: #{clip_forward.60} parent=5 // pred_check_branch
      %141 = sbr.rel (%p138) target = $region32
    $region31: #{clip_forward.60} parent=5 // pred_region
      %s142 = ssub.s32 %s9, 1
      %p143 = scmp.lt.s32.totalorder %s14, 1
      %s144 = scalar_select %p143, %s14, 1
      %s145 = smul.addr %s144, 6
      %s146 = smul.addr %s145, 8
      %s147 = scalar_lea.vmem %s0, %s146
      %p148 = pneg %p35
      %p149 = pneg %p32
      %p150 = pneg %p56
      %p151 = pneg %p53
      %p152 = pneg %p77
      %p153 = pneg %p74
      %p154 = pneg %p103
      %p155 = pneg %p100
      %p156 = scmp.lt.s32.totalorder %s14, 1
      %s157 = scalar_select %p156, %s14, 1
      %s158 = smul.addr %s157, 4
      %s159 = smul.addr %s158, 4
      %s160 = scalar_lea.vmem %s3, %s159
      %p161 = scmp.lt.s32.totalorder %s14, 1
      %s162 = scalar_select %p161, %s14, 1
      %s163 = smul.addr %s162, 6
      %s164 = smul.addr %s163, 8
      %s165 = scalar_lea.vmem %s0, %s164
      %p166 = scmp.lt.s32.totalorder %s14, 1
      %s167 = scalar_select %p166, %s14, 1
      %s168 = smul.addr %s167, 4
      %s169 = smul.addr %s168, 4
      %s170 = scalar_lea.vmem %s3, %s169
      %v171 = vld [vmem:[%s165] sm:$0x3f]
      %v172 = vld [vmem:[%s165 + $0x8] sm:$0x3f]
      %v173 = vld [vmem:[%s165 + $0x10] sm:$0x3f]
      %v174 = vld [vmem:[%s165 + $0x18] sm:$0x3f]
      %v175 = vld [vmem:[%s165 + $0x20] sm:$0x3f]
      %v176 = vld [vmem:[%s165 + $0x28] sm:$0x3f]
      %v177 = vld [vmem:[%s1] sm:$0x7]
      %v178 = vld [vmem:[%s1 + $0x4] sm:$0x7]
      %v179 = vld [vmem:[%s1 + $0x8] sm:$0x7]
      %v180 = vlaneseq
      %v181 = vshrl.u32 %v180, 7
      %v182 = vsub.s32 0, %v181
      %v183 = vrot.slane %v177, %v182
      %v184 = vmul.f32 %v171, %v183
      %v185 = vmul.f32 %v172, %v183
      %v186 = vmul.f32 %v173, %v183
      %v187 = vmul.f32 %v174, %v183
      %v188 = vadd.f32 %v184, 0.0
      %v189 = vadd.f32 %v185, 0.0
      %v190 = vadd.f32 %v186, 0.0
      %v191 = vadd.f32 %v187, 0.0
      %v192 = vlaneseq
      %v193 = vshrl.u32 %v192, 7
      %v194 = vsub.s32 1, %v193
      %v195 = vrot.slane %v177, %v194
      %v196 = vmul.f32 %v171, %v195
      %v197 = vmul.f32 %v172, %v195
      %v198 = vmul.f32 %v173, %v195
      %v199 = vmul.f32 %v174, %v195
      %v204 = vrot.slane %v196, 1
      %v205 = vrot.slane %v197, 1
      %v206 = vrot.slane %v198, 1
      %v207 = vrot.slane %v199, 1
      %v212 = vadd.f32 %v188, %v204
      %v213 = vadd.f32 %v189, %v205
      %v214 = vadd.f32 %v190, %v206
      %v215 = vadd.f32 %v191, %v207
      %v216 = vlaneseq
      %v217 = vshrl.u32 %v216, 7
      %v218 = vsub.s32 2, %v217
      %v219 = vrot.slane %v177, %v218
      %v220 = vmul.f32 %v171, %v219
      %v221 = vmul.f32 %v172, %v219
      %v222 = vmul.f32 %v173, %v219
      %v223 = vmul.f32 %v174, %v219
      %v228 = vrot.slane %v220, 2
      %v229 = vrot.slane %v221, 2
      %v230 = vrot.slane %v222, 2
      %v231 = vrot.slane %v223, 2
      %v236 = vadd.f32 %v212, %v228
      %v237 = vadd.f32 %v213, %v229
      %v238 = vadd.f32 %v214, %v230
      %v239 = vadd.f32 %v215, %v231
      %v240 = vlaneseq
      %v241 = vshrl.u32 %v240, 7
      %v242 = vsub.s32 0, %v241
      %v243 = vrot.slane %v178, %v242
      %v244 = vmul.f32 %v172, %v243
      %v245 = vmul.f32 %v173, %v243
      %v246 = vmul.f32 %v174, %v243
      %v247 = vmul.f32 %v175, %v243
      %v248 = vadd.f32 %v236, %v244
      %v249 = vadd.f32 %v237, %v245
      %v250 = vadd.f32 %v238, %v246
      %v251 = vadd.f32 %v239, %v247
      %v252 = vlaneseq
      %v253 = vshrl.u32 %v252, 7
      %v254 = vsub.s32 1, %v253
      %v255 = vrot.slane %v178, %v254
      %v256 = vmul.f32 %v172, %v255
      %v257 = vmul.f32 %v173, %v255
      %v258 = vmul.f32 %v174, %v255
      %v259 = vmul.f32 %v175, %v255
      %v264 = vrot.slane %v256, 1
      %v265 = vrot.slane %v257, 1
      %v266 = vrot.slane %v258, 1
      %v267 = vrot.slane %v259, 1
      %v272 = vadd.f32 %v248, %v264
      %v273 = vadd.f32 %v249, %v265
      %v274 = vadd.f32 %v250, %v266
      %v275 = vadd.f32 %v251, %v267
      %v276 = vlaneseq
      %v277 = vshrl.u32 %v276, 7
      %v278 = vsub.s32 2, %v277
      %v279 = vrot.slane %v178, %v278
      %v280 = vmul.f32 %v172, %v279
      %v281 = vmul.f32 %v173, %v279
      %v282 = vmul.f32 %v174, %v279
      %v283 = vmul.f32 %v175, %v279
      %v288 = vrot.slane %v280, 2
      %v289 = vrot.slane %v281, 2
      %v290 = vrot.slane %v282, 2
      %v291 = vrot.slane %v283, 2
      %v296 = vadd.f32 %v272, %v288
      %v297 = vadd.f32 %v273, %v289
      %v298 = vadd.f32 %v274, %v290
      %v299 = vadd.f32 %v275, %v291
      %v300 = vlaneseq
      %v301 = vshrl.u32 %v300, 7
      %v302 = vsub.s32 0, %v301
      %v303 = vrot.slane %v179, %v302
      %v304 = vmul.f32 %v173, %v303
      %v305 = vmul.f32 %v174, %v303
      %v306 = vmul.f32 %v175, %v303
      %v307 = vmul.f32 %v176, %v303
      %v308 = vadd.f32 %v296, %v304
      %v309 = vadd.f32 %v297, %v305
      %v310 = vadd.f32 %v298, %v306
      %v311 = vadd.f32 %v299, %v307
      %v312 = vlaneseq
      %v313 = vshrl.u32 %v312, 7
      %v314 = vsub.s32 1, %v313
      %v315 = vrot.slane %v179, %v314
      %v316 = vmul.f32 %v173, %v315
      %v317 = vmul.f32 %v174, %v315
      %v318 = vmul.f32 %v175, %v315
      %v319 = vmul.f32 %v176, %v315
      %v324 = vrot.slane %v316, 1
      %v325 = vrot.slane %v317, 1
      %v326 = vrot.slane %v318, 1
      %v327 = vrot.slane %v319, 1
      %v332 = vadd.f32 %v308, %v324
      %v333 = vadd.f32 %v309, %v325
      %v334 = vadd.f32 %v310, %v326
      %v335 = vadd.f32 %v311, %v327
      %v336 = vlaneseq
      %v337 = vshrl.u32 %v336, 7
      %v338 = vsub.s32 2, %v337
      %v339 = vrot.slane %v179, %v338
      %v340 = vmul.f32 %v173, %v339
      %v341 = vmul.f32 %v174, %v339
      %v342 = vmul.f32 %v175, %v339
      %v343 = vmul.f32 %v176, %v339
      %v348 = vrot.slane %v340, 2
      %v349 = vrot.slane %v341, 2
      %v350 = vrot.slane %v342, 2
      %v351 = vrot.slane %v343, 2
      %v356 = vadd.f32 %v332, %v348
      %v357 = vadd.f32 %v333, %v349
      %v358 = vadd.f32 %v334, %v350
      %v359 = vadd.f32 %v335, %v351
      %v360 = vld [vmem:[%s2] sm:$0x1]
      %v362 = vlaneseq
      %v363 = vshrl.u32 %v362, 7
      %v364 = vsub.s32 0, %v363
      %v365 = vrot.slane %v360, %v364
      %v367 = vadd.f32 %v356, %v365
      %v368 = vadd.f32 %v357, %v365
      %v369 = vadd.f32 %v358, %v365
      %v370 = vadd.f32 %v359, %v365
      %vm371 = vcmask 519168
      %372 = vst.msk [vmem:[%s170] sm:$0xf] %vm371, %v367
      %373 = vst.msk [vmem:[%s170 + $0x4] sm:$0xf] %vm371, %v368
      %374 = vst.msk [vmem:[%s170 + $0x8] sm:$0xf] %vm371, %v369
      %375 = vst.msk [vmem:[%s170 + $0xc] sm:$0xf] %vm371, %v370
      %p376 = scmp.lt.s32.totalorder %s14, 1
      %s377 = scalar_select %p376, %s14, 1
      %s378 = smul.addr %s377, 4
      %s379 = smul.addr %s378, 4
      %s380 = scalar_lea.vmem %s3, %s379
      // Predicated region
      $region33: #{clip_forward.60} parent=31 // pred_check
        %p381 = pneg %p100
      $region34: #{clip_forward.60} parent=31 // pred_check_branch
        %383 = sbr.rel (%p381) target = $region36
      $region35: #{clip_forward.60} parent=31 // pred_region
        _
      $region36: #{clip_forward.60} parent=31 // pred_fallthru
        _
    $region32: #{clip_forward.60} parent=5 // pred_fallthru
      _
    %p384 = scmp.le.s32.totalorder 2, %s9
    // Predicated region
    $region37: #{clip_forward.60} parent=5 // pred_check
      %p385 = pneg %p384
    $region38: #{clip_forward.60} parent=5 // pred_check_branch
      %387 = sbr.rel (%p385) target = $region40
    $region39: #{clip_forward.60} parent=5 // pred_region
      %s388 = ssub.s32 %s9, 2
      // Predicated region
      $region41: #{clip_forward.60} parent=39 // pred_check
        %p389 = pneg %p106
      $region42: #{clip_forward.60} parent=39 // pred_check_branch
        %391 = sbr.rel (%p389) target = $region44
      $region43: #{clip_forward.60} parent=39 // pred_region
        %p392 = scmp.lt.s32.totalorder %s15, 1
        %s393 = scalar_select %p392, %s15, 1
        %s394 = smul.addr %s393, 4
        %s395 = smul.addr %s394, 4
        %s396 = scalar_lea.vmem %s3, %s395
      $region44: #{clip_forward.60} parent=39 // pred_fallthru
        _
    $region40: #{clip_forward.60} parent=5 // pred_fallthru
      _
  $region6: #{clip_forward.60} parent=0 // loop_footer
    %s13 = sadd.s32 1, %s9
  $region7: #{clip_forward.60} parent=0 // loop_footer_branch
    %8 = sbr.rel target = $region3
  $region8: #{clip_forward.60} parent=0 // loop_exit
    _

// kernel: clip_forward.62
$region0: #{clip_forward.62}
  #allocation0 [shape = 'u32[]', space=smem, size = 0x4, offset = 0x4, fixed_abs, tag = 'smem constant byte address 0x4 - core index']
  #allocation1 [shape = 'u32[144,128]{1,0:T(1,128)}', space=vmem, size = 0x12000, scoped, tag = 'internal scratch']
  %s0 = inlined_call_operand.vmem [shape: f32[8,64], index: 0, kind: input, shape index: {}]
  %s1 = inlined_call_operand.vmem [shape: f32[64,64], index: 1, kind: input, shape index: {}]
  %s2 = inlined_call_operand.vmem [shape: f32[1,64], index: 2, kind: input, shape index: {}]
  %s3 = inlined_call_operand.vmem [shape: f32[1,64], index: 3, kind: input, shape index: {}]
  %s4 = inlined_call_operand.vmem [shape: f32[1,64], index: 4, kind: input, shape index: {}]
  %s5 = inlined_call_operand.vmem [shape: f32[8,64], index: 5, kind: output, shape index: {}]
  %s6 = sld [smem:[#allocation0]]
  $region30: #{clip_forward.62} parent=0
    _
  %s8 = ssub.s32 1, %s6
  %s9 = scalar_select 0, %s8, %s6
  // Predicated region
  $region2: #{clip_forward.62} parent=0 // pred_check
    _
  $region3: #{clip_forward.62} parent=0 // pred_check_branch
    %11 = sbr.rel (0) target = $region5
  $region4: #{clip_forward.62} parent=0 // pred_region
    _
  $region5: #{clip_forward.62} parent=0 // pred_fallthru
    _
  // Predicated region
  $region6: #{clip_forward.62} parent=0 // pred_check
    _
  $region7: #{clip_forward.62} parent=0 // pred_check_branch
    %13 = sbr.rel (0) target = $region9
  $region8: #{clip_forward.62} parent=0 // pred_region
    _
  $region9: #{clip_forward.62} parent=0 // pred_fallthru
    _
  // Predicated region
  $region10: #{clip_forward.62} parent=0 // pred_check
    _
  $region11: #{clip_forward.62} parent=0 // pred_check_branch
    %15 = sbr.rel (0) target = $region13
  $region12: #{clip_forward.62} parent=0 // pred_region
    _
  $region13: #{clip_forward.62} parent=0 // pred_fallthru
    _
  // Predicated region
  $region14: #{clip_forward.62} parent=0 // pred_check
    _
  $region15: #{clip_forward.62} parent=0 // pred_check_branch
    %17 = sbr.rel (0) target = $region17
  $region16: #{clip_forward.62} parent=0 // pred_region
    _
  $region17: #{clip_forward.62} parent=0 // pred_fallthru
    _
  // Predicated region
  $region18: #{clip_forward.62} parent=0 // pred_check
    _
  $region19: #{clip_forward.62} parent=0 // pred_check_branch
    %19 = sbr.rel (0) target = $region21
  $region20: #{clip_forward.62} parent=0 // pred_region
    _
  $region21: #{clip_forward.62} parent=0 // pred_fallthru
    _
  %v20 = vld [vmem:[%s0] sm:$0xff]
  %vm21 = vcmask 523264
  %v22 = vsel %vm21, %v20, 0.0
  %23 = vadd.xlane.f32.xlu0 %v22
  %v24 = vpop.xlane.xlu0 %23
  %v25 = vrcp.pop 64.0
  %v26 = vmul.f32 %v24, %v25
  %v27 = vsub.f32 0.0, %v26
  %v28 = vmul.f32 %v27, 1.442695
  %v29 = vpow.pop %v28
  %v30 = vadd.f32 %v29, 1.0
  %v31 = vrcp.pop %v30
  %v32 = vmul.f32 %v20, %v31
  %v33 = vld [vmem:[%s1] sm:$0xff]
  %v34 = vld [vmem:[%s1 + $0x8] sm:$0xff]
  %v35 = vld [vmem:[%s1 + $0x10] sm:$0xff]
  %v36 = vld [vmem:[%s1 + $0x18] sm:$0xff]
  %v37 = vld [vmem:[%s1 + $0x20] sm:$0xff]
  %v38 = vld [vmem:[%s1 + $0x28] sm:$0xff]
  %v39 = vld [vmem:[%s1 + $0x30] sm:$0xff]
  %v40 = vld [vmem:[%s1 + $0x38] sm:$0xff]
  %v41 = vld [vmem:[%s2] sm:$0x1]
  %v43 = vlaneseq
  %v44 = vshrl.u32 %v43, 7
  %v45 = vsub.s32 0, %v44
  %v46 = vrot.slane %v41, %v45
  %v49 = vsel %vm21, %v32, 0
  %51 = vmatprep.subr.mxu0 0.0
  %52 = vmatpush1.msra.mxu0 %v33
  %53 = vmatprep.subr.mxu0 0.0
  %54 = vmatpush1.msra.mxu0 %v34
  %55 = vmatprep.subr.mxu0 0.0
  %56 = vmatpush1.msra.mxu0 %v35
  %57 = vmatprep.subr.mxu0 0.0
  %58 = vmatpush1.msra.mxu0 %v36
  %59 = vmatprep.subr.mxu0 0.0
  %60 = vmatpush1.msra.mxu0 %v37
  %61 = vmatprep.subr.mxu0 0.0
  %62 = vmatpush1.msra.mxu0 %v38
  %63 = vmatprep.subr.mxu0 0.0
  %64 = vmatpush1.msra.mxu0 %v39
  %65 = vmatprep.subr.mxu0 0.0
  %66 = vmatpush1.msra.mxu0 %v40
  %67 = vmatprep.subr.mxu0 0.0
  %68 = vmatpush1.msra.mxu0 0.0
  %69 = vmatprep.subr.mxu0 0.0
  %70 = vmatpush1.msra.mxu0 0.0
  %71 = vmatprep.subr.mxu0 0.0
  %72 = vmatpush1.msra.mxu0 0.0
  %73 = vmatprep.subr.mxu0 0.0
  %74 = vmatpush1.msra.mxu0 0.0
  %75 = vmatprep.subr.mxu0 0.0
  %76 = vmatpush1.msra.mxu0 0.0
  %77 = vmatprep.subr.mxu0 0.0
  %78 = vmatpush1.msra.mxu0 0.0
  %79 = vmatprep.subr.mxu0 0.0
  %80 = vmatpush1.msra.mxu0 0.0
  %81 = vmatprep.subr.mxu0 0.0
  %82 = vmatpush1.msra.mxu0 0.0
  %83 = vmatprep.subr.mxu0 0.0
  %84 = vmatpush1.msra.mxu0 0.0
  %85 = vmatprep.subr.mxu0 0.0
  %86 = vmatpush1.msra.mxu0 0.0
  %87 = vmatprep.subr.mxu0 0.0
  %88 = vmatpush1.msra.mxu0 0.0
  %89 = vmatprep.subr.mxu0 0.0
  %90 = vmatpush1.msra.mxu0 0.0
  %91 = vmatprep.subr.mxu0 0.0
  %92 = vmatpush1.msra.mxu0 0.0
  %93 = vmatprep.subr.mxu0 0.0
  %94 = vmatpush1.msra.mxu0 0.0
  %95 = vmatprep.subr.mxu0 0.0
  %96 = vmatpush1.msra.mxu0 0.0
  %97 = vmatprep.subr.mxu0 0.0
  %98 = vmatpush1.msra.mxu0 0.0
  %99 = vmatprep.subr.mxu0 0.0
  %100 = vmatpush1.msra.mxu0 0.0
  %101 = vmatprep.subr.mxu0 0.0
  %102 = vmatpush1.msra.mxu0 0.0
  %103 = vmatprep.subr.mxu0 0.0
  %104 = vmatpush1.msra.mxu0 0.0
  %105 = vmatprep.subr.mxu0 0.0
  %106 = vmatpush1.msra.mxu0 0.0
  %107 = vmatprep.subr.mxu0 0.0
  %108 = vmatpush1.msra.mxu0 0.0
  %109 = vmatprep.subr.mxu0 0.0
  %110 = vmatpush1.msra.mxu0 0.0
  %111 = vmatprep.subr.mxu0 0.0
  %112 = vmatpush1.msra.mxu0 0.0
  %113 = vmatprep.subr.mxu0 0.0
  %114 = vmatpush1.msra.mxu0 0.0
  %115 = vmatprep.mubr.f32.mxu0 0.0
  %116 = vmatmul.mubr.f32.gmra.mrb[0].mxu0 %v49
  %v117 = vpop.f32.mrb[0].mxu0
  %v118 = vadd.f32 %v46, %v117
  %v119 = vpop.f32.mrb[0].mxu0
  %120 = vdwg.mxu0
  %v121 = vmul.f32 %v118, -1.702
  %v122 = vmul.f32 %v121, 1.442695
  %v123 = vpow.pop %v122
  %v124 = vadd.f32 %v123, 1.0
  %v125 = vrcp.pop %v124
  %v126 = vmul.f32 %v118, %v125
  %v127 = vld [vmem:[%s3] sm:$0x1]
  %v128 = vld [vmem:[%s4] sm:$0x1]
  %v129 = vsel %vm21, %v126, 0.0
  %130 = vadd.xlane.f32.xlu0 %v129
  %v131 = vpop.xlane.xlu0 %130
  %v132 = vmul.f32 %v131, %v25
  %v133 = vsub.f32 %v126, %v132
  %v134 = vmul.f32 %v133, %v133
  %v135 = vsel %vm21, %v134, 0.0
  %136 = vadd.xlane.f32.xlu0 %v135
  %v137 = vpop.xlane.xlu0 %136
  %v138 = vmul.f32 %v137, %v25
  %v139 = vadd.f32 %v138, 1e-05
  %v140 = vrsqrt.pop %v139
  %v141 = vmul.f32 %v133, %v140
  %v143 = vlaneseq
  %v144 = vshrl.u32 %v143, 7
  %v145 = vsub.s32 0, %v144
  %v146 = vrot.slane %v127, %v145
  %v148 = vmul.f32 %v141, %v146
  %v150 = vlaneseq
  %v151 = vshrl.u32 %v150, 7
  %v152 = vsub.s32 0, %v151
  %v153 = vrot.slane %v128, %v152
  %v155 = vadd.f32 %v148, %v153
  %156 = vst.msk [vmem:[%s5] sm:$0xff] %vm21, %v155
  // Predicated region
  $region22: #{clip_forward.62} parent=0 // pred_check
    _
  $region23: #{clip_forward.62} parent=0 // pred_check_branch
    %158 = sbr.rel (0) target = $region25
  $region24: #{clip_forward.62} parent=0 // pred_region
    _
  $region25: #{clip_forward.62} parent=0 // pred_fallthru
    _
  // Predicated region
  $region26: #{clip_forward.62} parent=0 // pred_check
    _
  $region27: #{clip_forward.62} parent=0 // pred_check_branch
    %160 = sbr.rel (0) target = $region29
  $region28: #{clip_forward.62} parent=0 // pred_region
    _
  $region29: #{clip_forward.62} parent=0 // pred_fallthru
    _

// kernel: clip_forward.61
$region0: #{clip_forward.61}
  #allocation0 [shape = 'u32[]', space=smem, size = 0x4, offset = 0x4, fixed_abs, tag = 'smem constant byte address 0x4 - core index']
  #allocation1 [shape = 'u32[144,128]{1,0:T(1,128)}', space=vmem, size = 0x12000, scoped, tag = 'internal scratch']
  %s0 = inlined_call_operand.vmem [shape: f32[8,64], index: 0, kind: input, shape index: {}]
  %s1 = inlined_call_operand.vmem [shape: f32[1,64], index: 1, kind: input, shape index: {}]
  %s2 = inlined_call_operand.vmem [shape: f32[1,64], index: 2, kind: input, shape index: {}]
  %s3 = inlined_call_operand.vmem [shape: f32[8,64], index: 3, kind: output, shape index: {}]
  %s4 = sld [smem:[#allocation0]]
  $region22: #{clip_forward.61} parent=0
    _
  %s6 = ssub.s32 1, %s4
  %s7 = scalar_select 0, %s6, %s4
  // Predicated region
  $region2: #{clip_forward.61} parent=0 // pred_check
    _
  $region3: #{clip_forward.61} parent=0 // pred_check_branch
    %9 = sbr.rel (0) target = $region5
  $region4: #{clip_forward.61} parent=0 // pred_region
    _
  $region5: #{clip_forward.61} parent=0 // pred_fallthru
    _
  // Predicated region
  $region6: #{clip_forward.61} parent=0 // pred_check
    _
  $region7: #{clip_forward.61} parent=0 // pred_check_branch
    %11 = sbr.rel (0) target = $region9
  $region8: #{clip_forward.61} parent=0 // pred_region
    _
  $region9: #{clip_forward.61} parent=0 // pred_fallthru
    _
  // Predicated region
  $region10: #{clip_forward.61} parent=0 // pred_check
    _
  $region11: #{clip_forward.61} parent=0 // pred_check_branch
    %13 = sbr.rel (0) target = $region13
  $region12: #{clip_forward.61} parent=0 // pred_region
    _
  $region13: #{clip_forward.61} parent=0 // pred_fallthru
    _
  %v14 = vld [vmem:[%s0] sm:$0xff]
  %v15 = vld [vmem:[%s1] sm:$0x1]
  %v16 = vld [vmem:[%s2] sm:$0x1]
  %vm17 = vcmask 523264
  %v18 = vsel %vm17, %v14, 0.0
  %19 = vadd.xlane.f32.xlu0 %v18
  %v20 = vpop.xlane.xlu0 %19
  %v21 = vrcp.pop 64.0
  %v22 = vmul.f32 %v20, %v21
  %v23 = vsub.f32 %v14, %v22
  %v24 = vmul.f32 %v23, %v23
  %v25 = vsel %vm17, %v24, 0.0
  %26 = vadd.xlane.f32.xlu0 %v25
  %v27 = vpop.xlane.xlu0 %26
  %v28 = vmul.f32 %v27, %v21
  %v29 = vadd.f32 %v28, 1e-05
  %v30 = vrsqrt.pop %v29
  %v31 = vmul.f32 %v23, %v30
  %v33 = vlaneseq
  %v34 = vshrl.u32 %v33, 7
  %v35 = vsub.s32 0, %v34
  %v36 = vrot.slane %v15, %v35
  %v38 = vmul.f32 %v31, %v36
  %v40 = vlaneseq
  %v41 = vshrl.u32 %v40, 7
  %v42 = vsub.s32 0, %v41
  %v43 = vrot.slane %v16, %v42
  %v45 = vadd.f32 %v38, %v43
  %46 = vst.msk [vmem:[%s3] sm:$0xff] %vm17, %v45
  // Predicated region
  $region14: #{clip_forward.61} parent=0 // pred_check
    _
  $region15: #{clip_forward.61} parent=0 // pred_check_branch
    %48 = sbr.rel (0) target = $region17
  $region16: #{clip_forward.61} parent=0 // pred_region
    _
  $region17: #{clip_forward.61} parent=0 // pred_fallthru
    _
  // Predicated region
  $region18: #{clip_forward.61} parent=0 // pred_check
    _
  $region19: #{clip_forward.61} parent=0 // pred_check_branch
    %50 = sbr.rel (0) target = $region21
  $region20: #{clip_forward.61} parent=0 // pred_region
    _
  $region21: #{clip_forward.61} parent=0 // pred_fallthru
    _

// kernel: clip_forward.63
$region0: #{clip_forward.63}
  #allocation0 [shape = 'u32[]', space=smem, size = 0x4, offset = 0x4, fixed_abs, tag = 'smem constant byte address 0x4 - core index']
  #allocation1 [shape = 'u32[144,128]{1,0:T(1,128)}', space=vmem, size = 0x12000, scoped, tag = 'internal scratch']
  %s0 = inlined_call_operand.vmem [shape: f32[10,64], index: 0, kind: input, shape index: {}]
  %s1 = inlined_call_operand.vmem [shape: f32[1,64], index: 1, kind: input, shape index: {}]
  %s2 = inlined_call_operand.vmem [shape: f32[1,64], index: 2, kind: input, shape index: {}]
  %s3 = inlined_call_operand.vmem [shape: f32[64,192], index: 3, kind: input, shape index: {}]
  %s4 = inlined_call_operand.vmem [shape: f32[1,192], index: 4, kind: input, shape index: {}]
  %s5 = inlined_call_operand.vmem [shape: f32[10,192], index: 5, kind: output, shape index: {}]
  %s6 = sld [smem:[#allocation0]]
  $region30: #{clip_forward.63} parent=0
    _
  %s8 = ssub.s32 1, %s6
  %s9 = scalar_select 0, %s8, %s6
  // Predicated region
  $region2: #{clip_forward.63} parent=0 // pred_check
    _
  $region3: #{clip_forward.63} parent=0 // pred_check_branch
    %11 = sbr.rel (0) target = $region5
  $region4: #{clip_forward.63} parent=0 // pred_region
    _
  $region5: #{clip_forward.63} parent=0 // pred_fallthru
    _
  // Predicated region
  $region6: #{clip_forward.63} parent=0 // pred_check
    _
  $region7: #{clip_forward.63} parent=0 // pred_check_branch
    %13 = sbr.rel (0) target = $region9
  $region8: #{clip_forward.63} parent=0 // pred_region
    _
  $region9: #{clip_forward.63} parent=0 // pred_fallthru
    _
  // Predicated region
  $region10: #{clip_forward.63} parent=0 // pred_check
    _
  $region11: #{clip_forward.63} parent=0 // pred_check_branch
    %15 = sbr.rel (0) target = $region13
  $region12: #{clip_forward.63} parent=0 // pred_region
    _
  $region13: #{clip_forward.63} parent=0 // pred_fallthru
    _
  // Predicated region
  $region14: #{clip_forward.63} parent=0 // pred_check
    _
  $region15: #{clip_forward.63} parent=0 // pred_check_branch
    %17 = sbr.rel (0) target = $region17
  $region16: #{clip_forward.63} parent=0 // pred_region
    _
  $region17: #{clip_forward.63} parent=0 // pred_fallthru
    _
  // Predicated region
  $region18: #{clip_forward.63} parent=0 // pred_check
    _
  $region19: #{clip_forward.63} parent=0 // pred_check_branch
    %19 = sbr.rel (0) target = $region21
  $region20: #{clip_forward.63} parent=0 // pred_region
    _
  $region21: #{clip_forward.63} parent=0 // pred_fallthru
    _
  %v20 = vld [vmem:[%s0] sm:$0xff]
  %v21 = vld [vmem:[%s0 + $0x8] sm:$0x3]
  %v22 = vld [vmem:[%s1] sm:$0x1]
  %v23 = vld [vmem:[%s2] sm:$0x1]
  %vm24 = vcmask 523264
  %v25 = vsel %vm24, %v20, 0.0
  %26 = vadd.xlane.f32.xlu0 %v25
  %v27 = vpop.xlane.xlu0 %26
  %vm28 = vcmask 517120
  %v29 = vsel %vm28, %v21, 0.0
  %30 = vadd.xlane.f32.xlu0 %v29
  %v31 = vpop.xlane.xlu0 %30
  %v32 = vrcp.pop 64.0
  %v33 = vmul.f32 %v27, %v32
  %v34 = vmul.f32 %v31, %v32
  %v35 = vsub.f32 %v20, %v33
  %v36 = vsub.f32 %v21, %v34
  %v37 = vmul.f32 %v35, %v35
  %v38 = vmul.f32 %v36, %v36
  %v39 = vsel %vm24, %v37, 0.0
  %40 = vadd.xlane.f32.xlu0 %v39
  %v41 = vpop.xlane.xlu0 %40
  %v42 = vsel %vm28, %v38, 0.0
  %43 = vadd.xlane.f32.xlu0 %v42
  %v44 = vpop.xlane.xlu0 %43
  %v45 = vmul.f32 %v41, %v32
  %v46 = vmul.f32 %v44, %v32
  %v47 = vadd.f32 %v45, 1e-05
  %v48 = vadd.f32 %v46, 1e-05
  %v49 = vrsqrt.pop %v47
  %v50 = vrsqrt.pop %v48
  %v51 = vmul.f32 %v35, %v49
  %v52 = vmul.f32 %v36, %v50
  %v54 = vlaneseq
  %v55 = vshrl.u32 %v54, 7
  %v56 = vsub.s32 0, %v55
  %v57 = vrot.slane %v22, %v56
  %v59 = vmul.f32 %v51, %v57
  %v60 = vmul.f32 %v52, %v57
  %v62 = vlaneseq
  %v63 = vshrl.u32 %v62, 7
  %v64 = vsub.s32 0, %v63
  %v65 = vrot.slane %v23, %v64
  %v67 = vadd.f32 %v59, %v65
  %v68 = vadd.f32 %v60, %v65
  %v69 = vld [vmem:[%s3] sm:$0xff]
  %v70 = vld [vmem:[%s3 + $0x8] sm:$0xff]
  %v71 = vld [vmem:[%s3 + $0x10] sm:$0xff]
  %v72 = vld [vmem:[%s3 + $0x18] sm:$0xff]
  %v73 = vld [vmem:[%s3 + $0x20] sm:$0xff]
  %v74 = vld [vmem:[%s3 + $0x28] sm:$0xff]
  %v75 = vld [vmem:[%s3 + $0x30] sm:$0xff]
  %v76 = vld [vmem:[%s3 + $0x38] sm:$0xff]
  %v77 = vld [vmem:[%s3 + $0x40] sm:$0xff]
  %v78 = vld [vmem:[%s3 + $0x48] sm:$0xff]
  %v79 = vld [vmem:[%s3 + $0x50] sm:$0xff]
  %v80 = vld [vmem:[%s3 + $0x58] sm:$0xff]
  %v81 = vld [vmem:[%s3 + $0x60] sm:$0xff]
  %v82 = vld [vmem:[%s3 + $0x68] sm:$0xff]
  %v83 = vld [vmem:[%s3 + $0x70] sm:$0xff]
  %v84 = vld [vmem:[%s3 + $0x78] sm:$0xff]
  %v85 = vld [vmem:[%s4] sm:$0x3]
  %v87 = vlaneseq
  %v88 = vshrl.u32 %v87, 7
  %v89 = vsub.s32 0, %v88
  %v90 = vrot.slane %v85, %v89
  %v91 = vlaneseq
  %v92 = vshrl.u32 %v91, 7
  %v93 = vsub.s32 1, %v92
  %v94 = vrot.slane %v85, %v93
  %v98 = vsel %vm24, %v67, 0
  %v101 = vsel %vm24, %v68, 0
  %103 = vmatprep.subr.mxu0 %v70
  %104 = vmatpush1.msra.mxu0 %v69
  %105 = vmatprep.subr.mxu0 %v72
  %106 = vmatpush1.msra.mxu0 %v71
  %107 = vmatprep.subr.mxu0 %v74
  %108 = vmatpush1.msra.mxu0 %v73
  %109 = vmatprep.subr.mxu0 %v76
  %110 = vmatpush1.msra.mxu0 %v75
  %111 = vmatprep.subr.mxu0 %v78
  %112 = vmatpush1.msra.mxu0 %v77
  %113 = vmatprep.subr.mxu0 %v80
  %114 = vmatpush1.msra.mxu0 %v79
  %115 = vmatprep.subr.mxu0 %v82
  %116 = vmatpush1.msra.mxu0 %v81
  %117 = vmatprep.subr.mxu0 %v84
  %118 = vmatpush1.msra.mxu0 %v83
  %119 = vmatprep.subr.mxu0 0.0
  %120 = vmatpush1.msra.mxu0 0.0
  %121 = vmatprep.subr.mxu0 0.0
  %122 = vmatpush1.msra.mxu0 0.0
  %123 = vmatprep.subr.mxu0 0.0
  %124 = vmatpush1.msra.mxu0 0.0
  %125 = vmatprep.subr.mxu0 0.0
  %126 = vmatpush1.msra.mxu0 0.0
  %127 = vmatprep.subr.mxu0 0.0
  %128 = vmatpush1.msra.mxu0 0.0
  %129 = vmatprep.subr.mxu0 0.0
  %130 = vmatpush1.msra.mxu0 0.0
  %131 = vmatprep.subr.mxu0 0.0
  %132 = vmatpush1.msra.mxu0 0.0
  %133 = vmatprep.subr.mxu0 0.0
  %134 = vmatpush1.msra.mxu0 0.0
  %135 = vmatprep.subr.mxu0 0.0
  %136 = vmatpush1.msra.mxu0 0.0
  %137 = vmatprep.subr.mxu0 0.0
  %138 = vmatpush1.msra.mxu0 0.0
  %139 = vmatprep.subr.mxu0 0.0
  %140 = vmatpush1.msra.mxu0 0.0
  %141 = vmatprep.subr.mxu0 0.0
  %142 = vmatpush1.msra.mxu0 0.0
  %143 = vmatprep.subr.mxu0 0.0
  %144 = vmatpush1.msra.mxu0 0.0
  %145 = vmatprep.subr.mxu0 0.0
  %146 = vmatpush1.msra.mxu0 0.0
  %147 = vmatprep.subr.mxu0 0.0
  %148 = vmatpush1.msra.mxu0 0.0
  %149 = vmatprep.subr.mxu0 0.0
  %150 = vmatpush1.msra.mxu0 0.0
  %151 = vmatprep.subr.mxu0 0.0
  %152 = vmatpush1.msra.mxu0 0.0
  %153 = vmatprep.subr.mxu0 0.0
  %154 = vmatpush1.msra.mxu0 0.0
  %155 = vmatprep.subr.mxu0 0.0
  %156 = vmatpush1.msra.mxu0 0.0
  %157 = vmatprep.subr.mxu0 0.0
  %158 = vmatpush1.msra.mxu0 0.0
  %159 = vmatprep.subr.mxu0 0.0
  %160 = vmatpush1.msra.mxu0 0.0
  %161 = vmatprep.subr.mxu0 0.0
  %162 = vmatpush1.msra.mxu0 0.0
  %163 = vmatprep.subr.mxu0 0.0
  %164 = vmatpush1.msra.mxu0 0.0
  %165 = vmatprep.subr.mxu0 0.0
  %166 = vmatpush1.msra.mxu0 0.0
  %167 = vmatprep.mubr.f32.mxu0 0.0
  %168 = vmatmul.mubr.f32.gmra.mrb[0].mxu0 %v98
  %v169 = vpop.f32.mrb[0].mxu0
  %v170 = vadd.f32 %v90, %v169
  %v171 = vpop.f32.mrb[0].mxu0
  %v172 = vadd.f32 %v94, %v171
  %173 = vmatprep.mubr.f32.mxu0 0.0
  %174 = vmatmul.mubr.f32.gmra.mrb[0].mxu0 %v101
  %v175 = vpop.f32.mrb[0].mxu0
  %v176 = vadd.f32 %v90, %v175
  %v177 = vpop.f32.mrb[0].mxu0
  %v178 = vadd.f32 %v94, %v177
  %179 = vdwg.mxu0
  %180 = vst [vmem:[%s5] sm:$0xff] %v170
  %181 = vst.msk [vmem:[%s5 + $0x8] sm:$0xff] %vm24, %v172
  %182 = vst [vmem:[%s5 + $0x10] sm:$0x3] %v176
  %183 = vst.msk [vmem:[%s5 + $0x18] sm:$0x3] %vm28, %v178
  // Predicated region
  $region22: #{clip_forward.63} parent=0 // pred_check
    _
  $region23: #{clip_forward.63} parent=0 // pred_check_branch
    %185 = sbr.rel (0) target = $region25
  $region24: #{clip_forward.63} parent=0 // pred_region
    _
  $region25: #{clip_forward.63} parent=0 // pred_fallthru
    _
  // Predicated region
  $region26: #{clip_forward.63} parent=0 // pred_check
    _
  $region27: #{clip_forward.63} parent=0 // pred_check_branch
    %187 = sbr.rel (0) target = $region29
  $region28: #{clip_forward.63} parent=0 // pred_region
    _
  $region29: #{clip_forward.63} parent=0 // pred_fallthru
    _

// kernel: clip_forward.64
$region0: #{clip_forward.64}
  #allocation0 [shape = 'u32[]', space=smem, size = 0x4, offset = 0x4, fixed_abs, tag = 'smem constant byte address 0x4 - core index']
  #allocation1 [shape = 'u32[144,128]{1,0:T(1,128)}', space=vmem, size = 0x12000, scoped, tag = 'internal scratch']
  %s0 = inlined_call_operand.vmem [shape: f32[2,5,192], index: 0, kind: input, shape index: {}]
  %s1 = inlined_call_operand.vmem [shape: f32[2,1,5], index: 1, kind: input, shape index: {}]
  %s2 = inlined_call_operand.vmem [shape: f32[2,5,64], index: 2, kind: output, shape index: {}]
  %s3 = sld [smem:[#allocation0]]
  $region41: #{clip_forward.64} parent=0
    _
  %s5 = ssub.s32 1, %s3
  %s6 = scalar_select 0, %s5, %s3
  loop: start=0, step=1, limit=4
  $region2: #{clip_forward.64} parent=0 // loop_pre_header
    _
  $region3: #{clip_forward.64} parent=0 // loop_header
    %s8 = sphi 0, %s12
    %p9 = scmp.ge.s32.totalorder %s8, 4
    %s18 = sphi 0, %s20
    %s21 = sphi 0, %s18
    %s22 = sphi 0, %s21
    %s38 = sphi 0, %s22
    %s44 = sphi 0, %s46
    %s47 = sphi 0, %s44
    %s48 = sphi 0, %s47
    %s64 = sphi 0, %s48
    %s70 = sphi 0, %s72
    %s73 = sphi 0, %s70
    %s74 = sphi 0, %s73
    %s90 = sphi 0, %s74
  $region4: #{clip_forward.64} parent=0 // loop_header_branch
    %11 = sbr.rel (%p9) target = $region8
  $region5: #{clip_forward.64} parent=0 // loop_body
    %s13 = ssub.s32 %s8, 1
    %s14 = ssub.s32 %s8, 2
    %s15 = sadd.s32 %s8, 1
    %s16 = ssub.s32 %s8, %s15
    %p17 = scmp.eq.s32.totalorder %s16, 0
    %s19 = sadd.s32 %s18, 1
    %s20 = scalar_select %p17, %s18, %s19
    %p23 = pneg %p17
    %p24 = scmp.eq.s32.totalorder %s8, 1
    %p25 = por %p23, %p24
    %p26 = scmp.ne.s32.totalorder %s18, %s21
    %p27 = scmp.eq.s32.totalorder %s8, 0
    %p28 = por %p26, %p27
    %p29 = scmp.ne.s32.totalorder %s18, %s21
    %p30 = scmp.eq.s32.totalorder %s13, 1
    %p31 = por %p29, %p30
    %p32 = scmp.ne.s32.totalorder %s21, %s22
    %p33 = scmp.eq.s32.totalorder %s13, 0
    %p34 = por %p32, %p33
    %p35 = scmp.ne.s32.totalorder %s21, %s22
    %p36 = scmp.eq.s32.totalorder %s14, 1
    %p37 = por %p35, %p36
    %p39 = scmp.ne.s32.totalorder %s22, %s38
    %p40 = scmp.eq.s32.totalorder %s14, 0
    %p41 = por %p39, %p40
    %s42 = ssub.s32 %s8, %s15
    %p43 = scmp.eq.s32.totalorder %s42, 0
    %s45 = sadd.s32 %s44, 1
    %s46 = scalar_select %p43, %s44, %s45
    %p49 = pneg %p43
    %p50 = scmp.eq.s32.totalorder %s8, 1
    %p51 = por %p49, %p50
    %p52 = scmp.ne.s32.totalorder %s44, %s47
    %p53 = scmp.eq.s32.totalorder %s8, 0
    %p54 = por %p52, %p53
    %p55 = scmp.ne.s32.totalorder %s44, %s47
    %p56 = scmp.eq.s32.totalorder %s13, 1
    %p57 = por %p55, %p56
    %p58 = scmp.ne.s32.totalorder %s47, %s48
    %p59 = scmp.eq.s32.totalorder %s13, 0
    %p60 = por %p58, %p59
    %p61 = scmp.ne.s32.totalorder %s47, %s48
    %p62 = scmp.eq.s32.totalorder %s14, 1
    %p63 = por %p61, %p62
    %p65 = scmp.ne.s32.totalorder %s48, %s64
    %p66 = scmp.eq.s32.totalorder %s14, 0
    %p67 = por %p65, %p66
    %s68 = ssub.s32 %s8, %s15
    %p69 = scmp.eq.s32.totalorder %s68, 0
    %s71 = sadd.s32 %s70, 1
    %s72 = scalar_select %p69, %s70, %s71
    %p75 = pneg %p69
    %p76 = scmp.eq.s32.totalorder %s8, 1
    %p77 = por %p75, %p76
    %p78 = scmp.ne.s32.totalorder %s70, %s73
    %p79 = scmp.eq.s32.totalorder %s8, 0
    %p80 = por %p78, %p79
    %p81 = scmp.ne.s32.totalorder %s70, %s73
    %p82 = scmp.eq.s32.totalorder %s13, 1
    %p83 = por %p81, %p82
    %p84 = scmp.ne.s32.totalorder %s73, %s74
    %p85 = scmp.eq.s32.totalorder %s13, 0
    %p86 = por %p84, %p85
    %p87 = scmp.ne.s32.totalorder %s73, %s74
    %p88 = scmp.eq.s32.totalorder %s14, 1
    %p89 = por %p87, %p88
    %p91 = scmp.ne.s32.totalorder %s74, %s90
    %p92 = scmp.eq.s32.totalorder %s14, 0
    %p93 = por %p91, %p92
    %p94 = scmp.le.s32.totalorder 1, %s8
    %p95 = scmp.lt.s32.totalorder %s8, 3
    %p96 = pnand %p94, %p95
    %p97 = pneg %p96
    // Predicated region
    $region9: #{clip_forward.64} parent=5 // pred_check
      _
    $region10: #{clip_forward.64} parent=5 // pred_check_branch
      %99 = sbr.rel (%p96) target = $region12
    $region11: #{clip_forward.64} parent=5 // pred_region
      %s100 = ssub.s32 %s8, 1
    $region12: #{clip_forward.64} parent=5 // pred_fallthru
      _
    %p101 = scmp.lt.s32.totalorder %s8, 2
    // Predicated region
    $region13: #{clip_forward.64} parent=5 // pred_check
      %p102 = pneg %p101
    $region14: #{clip_forward.64} parent=5 // pred_check_branch
      %104 = sbr.rel (%p102) target = $region16
    $region15: #{clip_forward.64} parent=5 // pred_region
      // Predicated region
      $region17: #{clip_forward.64} parent=15 // pred_check
        %p105 = pneg %p28
      $region18: #{clip_forward.64} parent=15 // pred_check_branch
        %107 = sbr.rel (%p105) target = $region20
      $region19: #{clip_forward.64} parent=15 // pred_region
        %p108 = scmp.lt.s32.totalorder %s8, 1
        %s109 = scalar_select %p108, %s8, 1
        %s110 = smul.addr %s109, 2
        %s111 = smul.addr %s110, 8
        %s112 = scalar_lea.vmem %s0, %s111
      $region20: #{clip_forward.64} parent=15 // pred_fallthru
        _
      // Predicated region
      $region21: #{clip_forward.64} parent=15 // pred_check
        %p113 = pneg %p54
      $region22: #{clip_forward.64} parent=15 // pred_check_branch
        %115 = sbr.rel (%p113) target = $region24
      $region23: #{clip_forward.64} parent=15 // pred_region
        %p116 = scmp.lt.s32.totalorder %s8, 1
        %s117 = scalar_select %p116, %s8, 1
        %s118 = scalar_lea.vmem %s1, %s117
      $region24: #{clip_forward.64} parent=15 // pred_fallthru
        _
    $region16: #{clip_forward.64} parent=5 // pred_fallthru
      _
    %p119 = scmp.le.s32.totalorder 1, %s8
    %p120 = scmp.lt.s32.totalorder %s8, 3
    %p121 = pnand %p119, %p120
    %p122 = pneg %p121
    // Predicated region
    $region25: #{clip_forward.64} parent=5 // pred_check
      _
    $region26: #{clip_forward.64} parent=5 // pred_check_branch
      %124 = sbr.rel (%p121) target = $region28
    $region27: #{clip_forward.64} parent=5 // pred_region
      %s125 = ssub.s32 %s8, 1
      %p126 = scmp.lt.s32.totalorder %s13, 1
      %s127 = scalar_select %p126, %s13, 1
      %s128 = smul.addr %s127, 2
      %s129 = smul.addr %s128, 8
      %s130 = scalar_lea.vmem %s0, %s129
      %p131 = pneg %p34
      %p132 = pneg %p31
      %p133 = scmp.lt.s32.totalorder %s13, 1
      %s134 = scalar_select %p133, %s13, 1
      %s135 = scalar_lea.vmem %s1, %s134
      %p136 = pneg %p60
      %p137 = pneg %p57
      %p138 = pneg %p86
      %p139 = pneg %p83
      %p140 = scmp.lt.s32.totalorder %s13, 1
      %s141 = scalar_select %p140, %s13, 1
      %s142 = smul.addr %s141, 8
      %s143 = scalar_lea.vmem %s2, %s142
      %p144 = scmp.lt.s32.totalorder %s13, 1
      %s145 = scalar_select %p144, %s13, 1
      %s146 = smul.addr %s145, 2
      %s147 = smul.addr %s146, 8
      %s148 = scalar_lea.vmem %s0, %s147
      %p149 = scmp.lt.s32.totalorder %s13, 1
      %s150 = scalar_select %p149, %s13, 1
      %s151 = scalar_lea.vmem %s1, %s150
      %p152 = scmp.lt.s32.totalorder %s13, 1
      %s153 = scalar_select %p152, %s13, 1
      %s154 = smul.addr %s153, 8
      %s155 = scalar_lea.vmem %s2, %s154
      %v156 = vld [vmem:[%s148] sm:$0x1f]
      %v157 = vld [vmem:[%s148 + $0x8] sm:$0x1f]
      %v158 = vld [vmem:[%s151] sm:$0x1]
      %v159 = vmul.f32 %v156, 0.125
      %v161 = vlaneseq
      %v162 = vshrl.u32 %v161, 7
      %v163 = vsub.s32 0, %v162
      %v164 = vrot.slane %v158, %v163
      %167 = vrot.lane.b32.xlu0 %v156, 64
      %v168 = vpop.permute.xlu0 %167
      %vm169 = vcmask 523264
      %v171 = vsel %vm169, %v159, 0
      %v173 = vsel %vm169, %v168, 0
      %175 = vmatprep.subr.mxu0 0.0
      %176 = vmatpush1.xpose.msra.mxu0 %v173
      %177 = vmatprep.subr.mxu0 0.0
      %178 = vmatpush1.xpose.msra.mxu0 0.0
      %179 = vmatprep.subr.mxu0 0.0
      %180 = vmatpush1.xpose.msra.mxu0 0.0
      %181 = vmatprep.subr.mxu0 0.0
      %182 = vmatpush1.xpose.msra.mxu0 0.0
      %183 = vmatprep.subr.mxu0 0.0
      %184 = vmatpush1.xpose.msra.mxu0 0.0
      %185 = vmatprep.subr.mxu0 0.0
      %186 = vmatpush1.xpose.msra.mxu0 0.0
      %187 = vmatprep.subr.mxu0 0.0
      %188 = vmatpush1.xpose.msra.mxu0 0.0
      %189 = vmatprep.subr.mxu0 0.0
      %190 = vmatpush1.xpose.msra.mxu0 0.0
      %191 = vmatprep.subr.mxu0 0.0
      %192 = vmatpush1.xpose.msra.mxu0 0.0
      %193 = vmatprep.subr.mxu0 0.0
      %194 = vmatpush1.xpose.msra.mxu0 0.0
      %195 = vmatprep.subr.mxu0 0.0
      %196 = vmatpush1.xpose.msra.mxu0 0.0
      %197 = vmatprep.subr.mxu0 0.0
      %198 = vmatpush1.xpose.msra.mxu0 0.0
      %199 = vmatprep.subr.mxu0 0.0
      %200 = vmatpush1.xpose.msra.mxu0 0.0
      %201 = vmatprep.subr.mxu0 0.0
      %202 = vmatpush1.xpose.msra.mxu0 0.0
      %203 = vmatprep.subr.mxu0 0.0
      %204 = vmatpush1.xpose.msra.mxu0 0.0
      %205 = vmatprep.subr.mxu0 0.0
      %206 = vmatpush1.xpose.msra.mxu0 0.0
      %207 = vmatprep.subr.mxu0 0.0
      %208 = vmatpush1.xpose.msra.mxu0 0.0
      %209 = vmatprep.subr.mxu0 0.0
      %210 = vmatpush1.xpose.msra.mxu0 0.0
      %211 = vmatprep.subr.mxu0 0.0
      %212 = vmatpush1.xpose.msra.mxu0 0.0
      %213 = vmatprep.subr.mxu0 0.0
      %214 = vmatpush1.xpose.msra.mxu0 0.0
      %215 = vmatprep.subr.mxu0 0.0
      %216 = vmatpush1.xpose.msra.mxu0 0.0
      %217 = vmatprep.subr.mxu0 0.0
      %218 = vmatpush1.xpose.msra.mxu0 0.0
      %219 = vmatprep.subr.mxu0 0.0
      %220 = vmatpush1.xpose.msra.mxu0 0.0
      %221 = vmatprep.subr.mxu0 0.0
      %222 = vmatpush1.xpose.msra.mxu0 0.0
      %223 = vmatprep.subr.mxu0 0.0
      %224 = vmatpush1.xpose.msra.mxu0 0.0
      %225 = vmatprep.subr.mxu0 0.0
      %226 = vmatpush1.xpose.msra.mxu0 0.0
      %227 = vmatprep.subr.mxu0 0.0
      %228 = vmatpush1.xpose.msra.mxu0 0.0
      %229 = vmatprep.subr.mxu0 0.0
      %230 = vmatpush1.xpose.msra.mxu0 0.0
      %231 = vmatprep.subr.mxu0 0.0
      %232 = vmatpush1.xpose.msra.mxu0 0.0
      %233 = vmatprep.subr.mxu0 0.0
      %234 = vmatpush1.xpose.msra.mxu0 0.0
      %235 = vmatprep.subr.mxu0 0.0
      %236 = vmatpush1.xpose.msra.mxu0 0.0
      %237 = vmatprep.subr.mxu0 0.0
      %238 = vmatpush1.xpose.msra.mxu0 0.0
      %239 = vmatprep.mubr.f32.mxu0 0.0
      %240 = vmatmul.mubr.f32.gmra.mrb[0].mxu0 %v171
      %v241 = vpop.f32.mrb[0].mxu0
      %v242 = vadd.f32 %v164, %v241
      %v243 = vpop.f32.mrb[0].mxu0
      %244 = vdwg.mxu0
      %vm245 = vcmask 36864
      %v246 = vsel %vm245, %v242, -inf
      %247 = vmax.xlane.f32.xlu0 %v246
      %v248 = vpop.xlane.xlu0 %247
      %v249 = vsub.f32 %v242, %v248
      %v250 = vmul.f32 %v249, 1.442695
      %v251 = vpow.pop %v250
      %v252 = vsel %vm245, %v251, 0.0
      %253 = vadd.xlane.f32.xlu0 %v252
      %v254 = vpop.xlane.xlu0 %253
      %v255 = vrcp.pop %v254
      %v256 = vmul.f32 %v251, %v255
      %vm257 = vcmask 39936
      %v259 = vsel %vm257, %v256, 0
      %vm261 = vcmask 1044480
      %v263 = vsel %vm261, %v157, 0
      %265 = vmatprep.subr.mxu0 0.0
      %266 = vmatpush1.msra.mxu0 %v263
      %267 = vmatprep.subr.mxu0 0.0
      %268 = vmatpush1.msra.mxu0 0.0
      %269 = vmatprep.subr.mxu0 0.0
      %270 = vmatpush1.msra.mxu0 0.0
      %271 = vmatprep.subr.mxu0 0.0
      %272 = vmatpush1.msra.mxu0 0.0
      %273 = vmatprep.subr.mxu0 0.0
      %274 = vmatpush1.msra.mxu0 0.0
      %275 = vmatprep.subr.mxu0 0.0
      %276 = vmatpush1.msra.mxu0 0.0
      %277 = vmatprep.subr.mxu0 0.0
      %278 = vmatpush1.msra.mxu0 0.0
      %279 = vmatprep.subr.mxu0 0.0
      %280 = vmatpush1.msra.mxu0 0.0
      %281 = vmatprep.subr.mxu0 0.0
      %282 = vmatpush1.msra.mxu0 0.0
      %283 = vmatprep.subr.mxu0 0.0
      %284 = vmatpush1.msra.mxu0 0.0
      %285 = vmatprep.subr.mxu0 0.0
      %286 = vmatpush1.msra.mxu0 0.0
      %287 = vmatprep.subr.mxu0 0.0
      %288 = vmatpush1.msra.mxu0 0.0
      %289 = vmatprep.subr.mxu0 0.0
      %290 = vmatpush1.msra.mxu0 0.0
      %291 = vmatprep.subr.mxu0 0.0
      %292 = vmatpush1.msra.mxu0 0.0
      %293 = vmatprep.subr.mxu0 0.0
      %294 = vmatpush1.msra.mxu0 0.0
      %295 = vmatprep.subr.mxu0 0.0
      %296 = vmatpush1.msra.mxu0 0.0
      %297 = vmatprep.subr.mxu0 0.0
      %298 = vmatpush1.msra.mxu0 0.0
      %299 = vmatprep.subr.mxu0 0.0
      %300 = vmatpush1.msra.mxu0 0.0
      %301 = vmatprep.subr.mxu0 0.0
      %302 = vmatpush1.msra.mxu0 0.0
      %303 = vmatprep.subr.mxu0 0.0
      %304 = vmatpush1.msra.mxu0 0.0
      %305 = vmatprep.subr.mxu0 0.0
      %306 = vmatpush1.msra.mxu0 0.0
      %307 = vmatprep.subr.mxu0 0.0
      %308 = vmatpush1.msra.mxu0 0.0
      %309 = vmatprep.subr.mxu0 0.0
      %310 = vmatpush1.msra.mxu0 0.0
      %311 = vmatprep.subr.mxu0 0.0
      %312 = vmatpush1.msra.mxu0 0.0
      %313 = vmatprep.subr.mxu0 0.0
      %314 = vmatpush1.msra.mxu0 0.0
      %315 = vmatprep.subr.mxu0 0.0
      %316 = vmatpush1.msra.mxu0 0.0
      %317 = vmatprep.subr.mxu0 0.0
      %318 = vmatpush1.msra.mxu0 0.0
      %319 = vmatprep.subr.mxu0 0.0
      %320 = vmatpush1.msra.mxu0 0.0
      %321 = vmatprep.subr.mxu0 0.0
      %322 = vmatpush1.msra.mxu0 0.0
      %323 = vmatprep.subr.mxu0 0.0
      %324 = vmatpush1.msra.mxu0 0.0
      %325 = vmatprep.subr.mxu0 0.0
      %326 = vmatpush1.msra.mxu0 0.0
      %327 = vmatprep.subr.mxu0 0.0
      %328 = vmatpush1.msra.mxu0 0.0
      %329 = vmatprep.mubr.f32.mxu0 0.0
      %330 = vmatmul.mubr.f32.gmra.mrb[0].mxu0 %v259
      %v331 = vpop.f32.mrb[0].mxu0
      %v332 = vadd.f32 0.0, %v331
      %v333 = vpop.f32.mrb[0].mxu0
      %334 = vdwg.mxu0
      %vm335 = vcmask 520192
      %336 = vst.msk [vmem:[%s155] sm:$0x1f] %vm335, %v332
      %p337 = scmp.lt.s32.totalorder %s13, 1
      %s338 = scalar_select %p337, %s13, 1
      %s339 = smul.addr %s338, 8
      %s340 = scalar_lea.vmem %s2, %s339
      // Predicated region
      $region29: #{clip_forward.64} parent=27 // pred_check
        %p341 = pneg %p83
      $region30: #{clip_forward.64} parent=27 // pred_check_branch
        %343 = sbr.rel (%p341) target = $region32
      $region31: #{clip_forward.64} parent=27 // pred_region
        _
      $region32: #{clip_forward.64} parent=27 // pred_fallthru
        _
    $region28: #{clip_forward.64} parent=5 // pred_fallthru
      _
    %p344 = scmp.le.s32.totalorder 2, %s8
    // Predicated region
    $region33: #{clip_forward.64} parent=5 // pred_check
      %p345 = pneg %p344
    $region34: #{clip_forward.64} parent=5 // pred_check_branch
      %347 = sbr.rel (%p345) target = $region36
    $region35: #{clip_forward.64} parent=5 // pred_region
      %s348 = ssub.s32 %s8, 2
      // Predicated region
      $region37: #{clip_forward.64} parent=35 // pred_check
        %p349 = pneg %p89
      $region38: #{clip_forward.64} parent=35 // pred_check_branch
        %351 = sbr.rel (%p349) target = $region40
      $region39: #{clip_forward.64} parent=35 // pred_region
        %p352 = scmp.lt.s32.totalorder %s14, 1
        %s353 = scalar_select %p352, %s14, 1
        %s354 = smul.addr %s353, 8
        %s355 = scalar_lea.vmem %s2, %s354
      $region40: #{clip_forward.64} parent=35 // pred_fallthru
        _
    $region36: #{clip_forward.64} parent=5 // pred_fallthru
      _
  $region6: #{clip_forward.64} parent=0 // loop_footer
    %s12 = sadd.s32 1, %s8
  $region7: #{clip_forward.64} parent=0 // loop_footer_branch
    %7 = sbr.rel target = $region3
  $region8: #{clip_forward.64} parent=0 // loop_exit
    _

// kernel: clip_forward.65
$region0: #{clip_forward.65}
  #allocation0 [shape = 'u32[]', space=smem, size = 0x4, offset = 0x4, fixed_abs, tag = 'smem constant byte address 0x4 - core index']
  #allocation1 [shape = 'u32[144,128]{1,0:T(1,128)}', space=vmem, size = 0x12000, scoped, tag = 'internal scratch']
  #allocation2 [shape = 'f32[10,64]{1,0:T(8,128)}', space=vmem, size = 0x2000, scoped, tag = 'scratch operand']
  %s0 = inlined_call_operand.vmem [shape: f32[10,64], index: 0, kind: input, shape index: {}]
  %s1 = inlined_call_operand.vmem [shape: f32[64,64], index: 1, kind: input, shape index: {}]
  %s2 = inlined_call_operand.vmem [shape: f32[1,64], index: 2, kind: input, shape index: {}]
  %s3 = inlined_call_operand.vmem [shape: f32[10,64], index: 3, kind: output, shape index: {}]
  %s4 = sld [smem:[#allocation0]]
  $region30: #{clip_forward.65} parent=0
    _
  %s6 = ssub.s32 1, %s4
  %s7 = scalar_select 0, %s6, %s4
  // Predicated region
  $region2: #{clip_forward.65} parent=0 // pred_check
    _
  $region3: #{clip_forward.65} parent=0 // pred_check_branch
    %9 = sbr.rel (0) target = $region5
  $region4: #{clip_forward.65} parent=0 // pred_region
    _
  $region5: #{clip_forward.65} parent=0 // pred_fallthru
    _
  // Predicated region
  $region6: #{clip_forward.65} parent=0 // pred_check
    _
  $region7: #{clip_forward.65} parent=0 // pred_check_branch
    %11 = sbr.rel (0) target = $region9
  $region8: #{clip_forward.65} parent=0 // pred_region
    _
  $region9: #{clip_forward.65} parent=0 // pred_fallthru
    _
  // Predicated region
  $region10: #{clip_forward.65} parent=0 // pred_check
    _
  $region11: #{clip_forward.65} parent=0 // pred_check_branch
    %13 = sbr.rel (0) target = $region13
  $region12: #{clip_forward.65} parent=0 // pred_region
    _
  $region13: #{clip_forward.65} parent=0 // pred_fallthru
    _
  %p14 = scmp.eq.s32.totalorder 0, 0
  // Predicated region
  $region14: #{clip_forward.65} parent=0 // pred_check
    %p15 = pneg %p14
  $region15: #{clip_forward.65} parent=0 // pred_check_branch
    %17 = sbr.rel (%p15) target = $region17
  $region16: #{clip_forward.65} parent=0 // pred_region
    %vm18 = vcmask 523264
    %19 = vst.msk [vmem:[#allocation2] sm:$0xff] %vm18, 0.0
    %vm20 = vcmask 517120
    %21 = vst.msk [vmem:[#allocation2 + $0x8] sm:$0x3] %vm20, 0.0
  $region17: #{clip_forward.65} parent=0 // pred_fallthru
    _
  %v22 = vld [vmem:[#allocation2] sm:$0xff]
  %v23 = vld [vmem:[#allocation2 + $0x8] sm:$0x3]
  %v24 = vld [vmem:[%s0] sm:$0xff]
  %v25 = vld [vmem:[%s0 + $0x8] sm:$0x3]
  %v26 = vld [vmem:[%s1] sm:$0xff]
  %v27 = vld [vmem:[%s1 + $0x8] sm:$0xff]
  %v28 = vld [vmem:[%s1 + $0x10] sm:$0xff]
  %v29 = vld [vmem:[%s1 + $0x18] sm:$0xff]
  %v30 = vld [vmem:[%s1 + $0x20] sm:$0xff]
  %v31 = vld [vmem:[%s1 + $0x28] sm:$0xff]
  %v32 = vld [vmem:[%s1 + $0x30] sm:$0xff]
  %v33 = vld [vmem:[%s1 + $0x38] sm:$0xff]
  %vm34 = vcmask 523264
  %v36 = vsel %vm34, %v24, 0
  %v39 = vsel %vm34, %v25, 0
  %41 = vmatprep.subr.mxu0 0.0
  %42 = vmatpush1.msra.mxu0 %v26
  %43 = vmatprep.subr.mxu0 0.0
  %44 = vmatpush1.msra.mxu0 %v27
  %45 = vmatprep.subr.mxu0 0.0
  %46 = vmatpush1.msra.mxu0 %v28
  %47 = vmatprep.subr.mxu0 0.0
  %48 = vmatpush1.msra.mxu0 %v29
  %49 = vmatprep.subr.mxu0 0.0
  %50 = vmatpush1.msra.mxu0 %v30
  %51 = vmatprep.subr.mxu0 0.0
  %52 = vmatpush1.msra.mxu0 %v31
  %53 = vmatprep.subr.mxu0 0.0
  %54 = vmatpush1.msra.mxu0 %v32
  %55 = vmatprep.subr.mxu0 0.0
  %56 = vmatpush1.msra.mxu0 %v33
  %57 = vmatprep.subr.mxu0 0.0
  %58 = vmatpush1.msra.mxu0 0.0
  %59 = vmatprep.subr.mxu0 0.0
  %60 = vmatpush1.msra.mxu0 0.0
  %61 = vmatprep.subr.mxu0 0.0
  %62 = vmatpush1.msra.mxu0 0.0
  %63 = vmatprep.subr.mxu0 0.0
  %64 = vmatpush1.msra.mxu0 0.0
  %65 = vmatprep.subr.mxu0 0.0
  %66 = vmatpush1.msra.mxu0 0.0
  %67 = vmatprep.subr.mxu0 0.0
  %68 = vmatpush1.msra.mxu0 0.0
  %69 = vmatprep.subr.mxu0 0.0
  %70 = vmatpush1.msra.mxu0 0.0
  %71 = vmatprep.subr.mxu0 0.0
  %72 = vmatpush1.msra.mxu0 0.0
  %73 = vmatprep.subr.mxu0 0.0
  %74 = vmatpush1.msra.mxu0 0.0
  %75 = vmatprep.subr.mxu0 0.0
  %76 = vmatpush1.msra.mxu0 0.0
  %77 = vmatprep.subr.mxu0 0.0
  %78 = vmatpush1.msra.mxu0 0.0
  %79 = vmatprep.subr.mxu0 0.0
  %80 = vmatpush1.msra.mxu0 0.0
  %81 = vmatprep.subr.mxu0 0.0
  %82 = vmatpush1.msra.mxu0 0.0
  %83 = vmatprep.subr.mxu0 0.0
  %84 = vmatpush1.msra.mxu0 0.0
  %85 = vmatprep.subr.mxu0 0.0
  %86 = vmatpush1.msra.mxu0 0.0
  %87 = vmatprep.subr.mxu0 0.0
  %88 = vmatpush1.msra.mxu0 0.0
  %89 = vmatprep.subr.mxu0 0.0
  %90 = vmatpush1.msra.mxu0 0.0
  %91 = vmatprep.subr.mxu0 0.0
  %92 = vmatpush1.msra.mxu0 0.0
  %93 = vmatprep.subr.mxu0 0.0
  %94 = vmatpush1.msra.mxu0 0.0
  %95 = vmatprep.subr.mxu0 0.0
  %96 = vmatpush1.msra.mxu0 0.0
  %97 = vmatprep.subr.mxu0 0.0
  %98 = vmatpush1.msra.mxu0 0.0
  %99 = vmatprep.subr.mxu0 0.0
  %100 = vmatpush1.msra.mxu0 0.0
  %101 = vmatprep.subr.mxu0 0.0
  %102 = vmatpush1.msra.mxu0 0.0
  %103 = vmatprep.subr.mxu0 0.0
  %104 = vmatpush1.msra.mxu0 0.0
  %105 = vmatprep.mubr.f32.mxu0 0.0
  %106 = vmatmul.mubr.f32.gmra.mrb[0].mxu0 %v36
  %v107 = vpop.f32.mrb[0].mxu0
  %v108 = vadd.f32 0.0, %v107
  %v109 = vpop.f32.mrb[0].mxu0
  %110 = vmatprep.mubr.f32.mxu0 0.0
  %111 = vmatmul.mubr.f32.gmra.mrb[0].mxu0 %v39
  %v112 = vpop.f32.mrb[0].mxu0
  %v113 = vadd.f32 0.0, %v112
  %v114 = vpop.f32.mrb[0].mxu0
  %115 = vdwg.mxu0
  %v116 = vadd.f32 %v22, %v108
  %v117 = vadd.f32 %v23, %v113
  %118 = vst.msk [vmem:[#allocation2] sm:$0xff] %vm34, %v116
  %vm119 = vcmask 517120
  %120 = vst.msk [vmem:[#allocation2 + $0x8] sm:$0x3] %vm119, %v117
  // Predicated region
  $region18: #{clip_forward.65} parent=0 // pred_check
    %p121 = pneg %p14
  $region19: #{clip_forward.65} parent=0 // pred_check_branch
    %123 = sbr.rel (%p121) target = $region21
  $region20: #{clip_forward.65} parent=0 // pred_region
    %v124 = vld [vmem:[#allocation2] sm:$0xff]
    %v125 = vld [vmem:[#allocation2 + $0x8] sm:$0x3]
    %v126 = vld [vmem:[%s2] sm:$0x1]
    %v128 = vlaneseq
    %v129 = vshrl.u32 %v128, 7
    %v130 = vsub.s32 0, %v129
    %v131 = vrot.slane %v126, %v130
    %v133 = vadd.f32 %v124, %v131
    %v134 = vadd.f32 %v125, %v131
    %135 = vst.msk [vmem:[%s3] sm:$0xff] %vm34, %v133
    %136 = vst.msk [vmem:[%s3 + $0x8] sm:$0x3] %vm119, %v134
  $region21: #{clip_forward.65} parent=0 // pred_fallthru
    _
  // Predicated region
  $region22: #{clip_forward.65} parent=0 // pred_check
    _
  $region23: #{clip_forward.65} parent=0 // pred_check_branch
    %138 = sbr.rel (0) target = $region25
  $region24: #{clip_forward.65} parent=0 // pred_region
    _
  $region25: #{clip_forward.65} parent=0 // pred_fallthru
    _
  // Predicated region
  $region26: #{clip_forward.65} parent=0 // pred_check
    _
  $region27: #{clip_forward.65} parent=0 // pred_check_branch
    %140 = sbr.rel (0) target = $region29
  $region28: #{clip_forward.65} parent=0 // pred_region
    _
  $region29: #{clip_forward.65} parent=0 // pred_fallthru
    _

// kernel: clip_forward.66
$region0: #{clip_forward.66}
  #allocation0 [shape = 'u32[]', space=smem, size = 0x4, offset = 0x4, fixed_abs, tag = 'smem constant byte address 0x4 - core index']
  #allocation1 [shape = 'u32[144,128]{1,0:T(1,128)}', space=vmem, size = 0x12000, scoped, tag = 'internal scratch']
  %s0 = inlined_call_operand.vmem [shape: f32[10,64], index: 0, kind: input, shape index: {}]
  %s1 = inlined_call_operand.vmem [shape: f32[1,64], index: 1, kind: input, shape index: {}]
  %s2 = inlined_call_operand.vmem [shape: f32[1,64], index: 2, kind: input, shape index: {}]
  %s3 = inlined_call_operand.vmem [shape: f32[64,256], index: 3, kind: input, shape index: {}]
  %s4 = inlined_call_operand.vmem [shape: f32[1,256], index: 4, kind: input, shape index: {}]
  %s5 = inlined_call_operand.vmem [shape: f32[10,256], index: 5, kind: output, shape index: {}]
  %s6 = sld [smem:[#allocation0]]
  $region30: #{clip_forward.66} parent=0
    _
  %s8 = ssub.s32 1, %s6
  %s9 = scalar_select 0, %s8, %s6
  // Predicated region
  $region2: #{clip_forward.66} parent=0 // pred_check
    _
  $region3: #{clip_forward.66} parent=0 // pred_check_branch
    %11 = sbr.rel (0) target = $region5
  $region4: #{clip_forward.66} parent=0 // pred_region
    _
  $region5: #{clip_forward.66} parent=0 // pred_fallthru
    _
  // Predicated region
  $region6: #{clip_forward.66} parent=0 // pred_check
    _
  $region7: #{clip_forward.66} parent=0 // pred_check_branch
    %13 = sbr.rel (0) target = $region9
  $region8: #{clip_forward.66} parent=0 // pred_region
    _
  $region9: #{clip_forward.66} parent=0 // pred_fallthru
    _
  // Predicated region
  $region10: #{clip_forward.66} parent=0 // pred_check
    _
  $region11: #{clip_forward.66} parent=0 // pred_check_branch
    %15 = sbr.rel (0) target = $region13
  $region12: #{clip_forward.66} parent=0 // pred_region
    _
  $region13: #{clip_forward.66} parent=0 // pred_fallthru
    _
  // Predicated region
  $region14: #{clip_forward.66} parent=0 // pred_check
    _
  $region15: #{clip_forward.66} parent=0 // pred_check_branch
    %17 = sbr.rel (0) target = $region17
  $region16: #{clip_forward.66} parent=0 // pred_region
    _
  $region17: #{clip_forward.66} parent=0 // pred_fallthru
    _
  // Predicated region
  $region18: #{clip_forward.66} parent=0 // pred_check
    _
  $region19: #{clip_forward.66} parent=0 // pred_check_branch
    %19 = sbr.rel (0) target = $region21
  $region20: #{clip_forward.66} parent=0 // pred_region
    _
  $region21: #{clip_forward.66} parent=0 // pred_fallthru
    _
  %v20 = vld [vmem:[%s0] sm:$0xff]
  %v21 = vld [vmem:[%s0 + $0x8] sm:$0x3]
  %v22 = vld [vmem:[%s1] sm:$0x1]
  %v23 = vld [vmem:[%s2] sm:$0x1]
  %vm24 = vcmask 523264
  %v25 = vsel %vm24, %v20, 0.0
  %26 = vadd.xlane.f32.xlu0 %v25
  %v27 = vpop.xlane.xlu0 %26
  %vm28 = vcmask 517120
  %v29 = vsel %vm28, %v21, 0.0
  %30 = vadd.xlane.f32.xlu0 %v29
  %v31 = vpop.xlane.xlu0 %30
  %v32 = vrcp.pop 64.0
  %v33 = vmul.f32 %v27, %v32
  %v34 = vmul.f32 %v31, %v32
  %v35 = vsub.f32 %v20, %v33
  %v36 = vsub.f32 %v21, %v34
  %v37 = vmul.f32 %v35, %v35
  %v38 = vmul.f32 %v36, %v36
  %v39 = vsel %vm24, %v37, 0.0
  %40 = vadd.xlane.f32.xlu0 %v39
  %v41 = vpop.xlane.xlu0 %40
  %v42 = vsel %vm28, %v38, 0.0
  %43 = vadd.xlane.f32.xlu0 %v42
  %v44 = vpop.xlane.xlu0 %43
  %v45 = vmul.f32 %v41, %v32
  %v46 = vmul.f32 %v44, %v32
  %v47 = vadd.f32 %v45, 1e-05
  %v48 = vadd.f32 %v46, 1e-05
  %v49 = vrsqrt.pop %v47
  %v50 = vrsqrt.pop %v48
  %v51 = vmul.f32 %v35, %v49
  %v52 = vmul.f32 %v36, %v50
  %v54 = vlaneseq
  %v55 = vshrl.u32 %v54, 7
  %v56 = vsub.s32 0, %v55
  %v57 = vrot.slane %v22, %v56
  %v59 = vmul.f32 %v51, %v57
  %v60 = vmul.f32 %v52, %v57
  %v62 = vlaneseq
  %v63 = vshrl.u32 %v62, 7
  %v64 = vsub.s32 0, %v63
  %v65 = vrot.slane %v23, %v64
  %v67 = vadd.f32 %v59, %v65
  %v68 = vadd.f32 %v60, %v65
  %v69 = vld [vmem:[%s3] sm:$0xff]
  %v70 = vld [vmem:[%s3 + $0x8] sm:$0xff]
  %v71 = vld [vmem:[%s3 + $0x10] sm:$0xff]
  %v72 = vld [vmem:[%s3 + $0x18] sm:$0xff]
  %v73 = vld [vmem:[%s3 + $0x20] sm:$0xff]
  %v74 = vld [vmem:[%s3 + $0x28] sm:$0xff]
  %v75 = vld [vmem:[%s3 + $0x30] sm:$0xff]
  %v76 = vld [vmem:[%s3 + $0x38] sm:$0xff]
  %v77 = vld [vmem:[%s3 + $0x40] sm:$0xff]
  %v78 = vld [vmem:[%s3 + $0x48] sm:$0xff]
  %v79 = vld [vmem:[%s3 + $0x50] sm:$0xff]
  %v80 = vld [vmem:[%s3 + $0x58] sm:$0xff]
  %v81 = vld [vmem:[%s3 + $0x60] sm:$0xff]
  %v82 = vld [vmem:[%s3 + $0x68] sm:$0xff]
  %v83 = vld [vmem:[%s3 + $0x70] sm:$0xff]
  %v84 = vld [vmem:[%s3 + $0x78] sm:$0xff]
  %v85 = vld [vmem:[%s4] sm:$0x3]
  %v87 = vlaneseq
  %v88 = vshrl.u32 %v87, 7
  %v89 = vsub.s32 0, %v88
  %v90 = vrot.slane %v85, %v89
  %v91 = vlaneseq
  %v92 = vshrl.u32 %v91, 7
  %v93 = vsub.s32 1, %v92
  %v94 = vrot.slane %v85, %v93
  %v98 = vsel %vm24, %v67, 0
  %v101 = vsel %vm24, %v68, 0
  %103 = vmatprep.subr.mxu0 %v70
  %104 = vmatpush1.msra.mxu0 %v69
  %105 = vmatprep.subr.mxu0 %v72
  %106 = vmatpush1.msra.mxu0 %v71
  %107 = vmatprep.subr.mxu0 %v74
  %108 = vmatpush1.msra.mxu0 %v73
  %109 = vmatprep.subr.mxu0 %v76
  %110 = vmatpush1.msra.mxu0 %v75
  %111 = vmatprep.subr.mxu0 %v78
  %112 = vmatpush1.msra.mxu0 %v77
  %113 = vmatprep.subr.mxu0 %v80
  %114 = vmatpush1.msra.mxu0 %v79
  %115 = vmatprep.subr.mxu0 %v82
  %116 = vmatpush1.msra.mxu0 %v81
  %117 = vmatprep.subr.mxu0 %v84
  %118 = vmatpush1.msra.mxu0 %v83
  %119 = vmatprep.subr.mxu0 0.0
  %120 = vmatpush1.msra.mxu0 0.0
  %121 = vmatprep.subr.mxu0 0.0
  %122 = vmatpush1.msra.mxu0 0.0
  %123 = vmatprep.subr.mxu0 0.0
  %124 = vmatpush1.msra.mxu0 0.0
  %125 = vmatprep.subr.mxu0 0.0
  %126 = vmatpush1.msra.mxu0 0.0
  %127 = vmatprep.subr.mxu0 0.0
  %128 = vmatpush1.msra.mxu0 0.0
  %129 = vmatprep.subr.mxu0 0.0
  %130 = vmatpush1.msra.mxu0 0.0
  %131 = vmatprep.subr.mxu0 0.0
  %132 = vmatpush1.msra.mxu0 0.0
  %133 = vmatprep.subr.mxu0 0.0
  %134 = vmatpush1.msra.mxu0 0.0
  %135 = vmatprep.subr.mxu0 0.0
  %136 = vmatpush1.msra.mxu0 0.0
  %137 = vmatprep.subr.mxu0 0.0
  %138 = vmatpush1.msra.mxu0 0.0
  %139 = vmatprep.subr.mxu0 0.0
  %140 = vmatpush1.msra.mxu0 0.0
  %141 = vmatprep.subr.mxu0 0.0
  %142 = vmatpush1.msra.mxu0 0.0
  %143 = vmatprep.subr.mxu0 0.0
  %144 = vmatpush1.msra.mxu0 0.0
  %145 = vmatprep.subr.mxu0 0.0
  %146 = vmatpush1.msra.mxu0 0.0
  %147 = vmatprep.subr.mxu0 0.0
  %148 = vmatpush1.msra.mxu0 0.0
  %149 = vmatprep.subr.mxu0 0.0
  %150 = vmatpush1.msra.mxu0 0.0
  %151 = vmatprep.subr.mxu0 0.0
  %152 = vmatpush1.msra.mxu0 0.0
  %153 = vmatprep.subr.mxu0 0.0
  %154 = vmatpush1.msra.mxu0 0.0
  %155 = vmatprep.subr.mxu0 0.0
  %156 = vmatpush1.msra.mxu0 0.0
  %157 = vmatprep.subr.mxu0 0.0
  %158 = vmatpush1.msra.mxu0 0.0
  %159 = vmatprep.subr.mxu0 0.0
  %160 = vmatpush1.msra.mxu0 0.0
  %161 = vmatprep.subr.mxu0 0.0
  %162 = vmatpush1.msra.mxu0 0.0
  %163 = vmatprep.subr.mxu0 0.0
  %164 = vmatpush1.msra.mxu0 0.0
  %165 = vmatprep.subr.mxu0 0.0
  %166 = vmatpush1.msra.mxu0 0.0
  %167 = vmatprep.mubr.f32.mxu0 0.0
  %168 = vmatmul.mubr.f32.gmra.mrb[0].mxu0 %v98
  %v169 = vpop.f32.mrb[0].mxu0
  %v170 = vadd.f32 %v90, %v169
  %v171 = vpop.f32.mrb[0].mxu0
  %v172 = vadd.f32 %v94, %v171
  %173 = vmatprep.mubr.f32.mxu0 0.0
  %174 = vmatmul.mubr.f32.gmra.mrb[0].mxu0 %v101
  %v175 = vpop.f32.mrb[0].mxu0
  %v176 = vadd.f32 %v90, %v175
  %v177 = vpop.f32.mrb[0].mxu0
  %v178 = vadd.f32 %v94, %v177
  %179 = vdwg.mxu0
  %v180 = vmul.f32 %v170, -1.702
  %v181 = vmul.f32 %v172, -1.702
  %v182 = vmul.f32 %v176, -1.702
  %v183 = vmul.f32 %v178, -1.702
  %v184 = vmul.f32 %v180, 1.442695
  %v185 = vpow.pop %v184
  %v186 = vmul.f32 %v181, 1.442695
  %v187 = vpow.pop %v186
  %v188 = vmul.f32 %v182, 1.442695
  %v189 = vpow.pop %v188
  %v190 = vmul.f32 %v183, 1.442695
  %v191 = vpow.pop %v190
  %v192 = vadd.f32 %v185, 1.0
  %v193 = vadd.f32 %v187, 1.0
  %v194 = vadd.f32 %v189, 1.0
  %v195 = vadd.f32 %v191, 1.0
  %v196 = vrcp.pop %v192
  %v197 = vrcp.pop %v193
  %v198 = vrcp.pop %v194
  %v199 = vrcp.pop %v195
  %v200 = vmul.f32 %v170, %v196
  %v201 = vmul.f32 %v172, %v197
  %v202 = vmul.f32 %v176, %v198
  %v203 = vmul.f32 %v178, %v199
  %204 = vst [vmem:[%s5] sm:$0xff] %v200
  %205 = vst [vmem:[%s5 + $0x8] sm:$0xff] %v201
  %206 = vst [vmem:[%s5 + $0x10] sm:$0x3] %v202
  %207 = vst [vmem:[%s5 + $0x18] sm:$0x3] %v203
  // Predicated region
  $region22: #{clip_forward.66} parent=0 // pred_check
    _
  $region23: #{clip_forward.66} parent=0 // pred_check_branch
    %209 = sbr.rel (0) target = $region25
  $region24: #{clip_forward.66} parent=0 // pred_region
    _
  $region25: #{clip_forward.66} parent=0 // pred_fallthru
    _
  // Predicated region
  $region26: #{clip_forward.66} parent=0 // pred_check
    _
  $region27: #{clip_forward.66} parent=0 // pred_check_branch
    %211 = sbr.rel (0) target = $region29
  $region28: #{clip_forward.66} parent=0 // pred_region
    _
  $region29: #{clip_forward.66} parent=0 // pred_fallthru
    _

// kernel: clip_forward.67
$region0: #{clip_forward.67}
  #allocation0 [shape = 'u32[]', space=smem, size = 0x4, offset = 0x4, fixed_abs, tag = 'smem constant byte address 0x4 - core index']
  #allocation1 [shape = 'u32[144,128]{1,0:T(1,128)}', space=vmem, size = 0x12000, scoped, tag = 'internal scratch']
  #allocation2 [shape = 'f32[10,64]{1,0:T(8,128)}', space=vmem, size = 0x2000, scoped, tag = 'scratch operand']
  %s0 = inlined_call_operand.vmem [shape: f32[10,256], index: 0, kind: input, shape index: {}]
  %s1 = inlined_call_operand.vmem [shape: f32[256,64], index: 1, kind: input, shape index: {}]
  %s2 = inlined_call_operand.vmem [shape: f32[1,64], index: 2, kind: input, shape index: {}]
  %s3 = inlined_call_operand.vmem [shape: f32[10,64], index: 3, kind: output, shape index: {}]
  %s4 = sld [smem:[#allocation0]]
  $region30: #{clip_forward.67} parent=0
    _
  %s6 = ssub.s32 1, %s4
  %s7 = scalar_select 0, %s6, %s4
  // Predicated region
  $region2: #{clip_forward.67} parent=0 // pred_check
    _
  $region3: #{clip_forward.67} parent=0 // pred_check_branch
    %9 = sbr.rel (0) target = $region5
  $region4: #{clip_forward.67} parent=0 // pred_region
    _
  $region5: #{clip_forward.67} parent=0 // pred_fallthru
    _
  // Predicated region
  $region6: #{clip_forward.67} parent=0 // pred_check
    _
  $region7: #{clip_forward.67} parent=0 // pred_check_branch
    %11 = sbr.rel (0) target = $region9
  $region8: #{clip_forward.67} parent=0 // pred_region
    _
  $region9: #{clip_forward.67} parent=0 // pred_fallthru
    _
  // Predicated region
  $region10: #{clip_forward.67} parent=0 // pred_check
    _
  $region11: #{clip_forward.67} parent=0 // pred_check_branch
    %13 = sbr.rel (0) target = $region13
  $region12: #{clip_forward.67} parent=0 // pred_region
    _
  $region13: #{clip_forward.67} parent=0 // pred_fallthru
    _
  %p14 = scmp.eq.s32.totalorder 0, 0
  // Predicated region
  $region14: #{clip_forward.67} parent=0 // pred_check
    %p15 = pneg %p14
  $region15: #{clip_forward.67} parent=0 // pred_check_branch
    %17 = sbr.rel (%p15) target = $region17
  $region16: #{clip_forward.67} parent=0 // pred_region
    %vm18 = vcmask 523264
    %19 = vst.msk [vmem:[#allocation2] sm:$0xff] %vm18, 0.0
    %vm20 = vcmask 517120
    %21 = vst.msk [vmem:[#allocation2 + $0x8] sm:$0x3] %vm20, 0.0
  $region17: #{clip_forward.67} parent=0 // pred_fallthru
    _
  %v22 = vld [vmem:[#allocation2] sm:$0xff]
  %v23 = vld [vmem:[#allocation2 + $0x8] sm:$0x3]
  %v24 = vld [vmem:[%s0] sm:$0xff]
  %v25 = vld [vmem:[%s0 + $0x8] sm:$0xff]
  %v26 = vld [vmem:[%s0 + $0x10] sm:$0x3]
  %v27 = vld [vmem:[%s0 + $0x18] sm:$0x3]
  %v28 = vld [vmem:[%s1] sm:$0xff]
  %v29 = vld [vmem:[%s1 + $0x8] sm:$0xff]
  %v30 = vld [vmem:[%s1 + $0x10] sm:$0xff]
  %v31 = vld [vmem:[%s1 + $0x18] sm:$0xff]
  %v32 = vld [vmem:[%s1 + $0x20] sm:$0xff]
  %v33 = vld [vmem:[%s1 + $0x28] sm:$0xff]
  %v34 = vld [vmem:[%s1 + $0x30] sm:$0xff]
  %v35 = vld [vmem:[%s1 + $0x38] sm:$0xff]
  %v36 = vld [vmem:[%s1 + $0x40] sm:$0xff]
  %v37 = vld [vmem:[%s1 + $0x48] sm:$0xff]
  %v38 = vld [vmem:[%s1 + $0x50] sm:$0xff]
  %v39 = vld [vmem:[%s1 + $0x58] sm:$0xff]
  %v40 = vld [vmem:[%s1 + $0x60] sm:$0xff]
  %v41 = vld [vmem:[%s1 + $0x68] sm:$0xff]
  %v42 = vld [vmem:[%s1 + $0x70] sm:$0xff]
  %v43 = vld [vmem:[%s1 + $0x78] sm:$0xff]
  %v44 = vld [vmem:[%s1 + $0x80] sm:$0xff]
  %v45 = vld [vmem:[%s1 + $0x88] sm:$0xff]
  %v46 = vld [vmem:[%s1 + $0x90] sm:$0xff]
  %v47 = vld [vmem:[%s1 + $0x98] sm:$0xff]
  %v48 = vld [vmem:[%s1 + $0xa0] sm:$0xff]
  %v49 = vld [vmem:[%s1 + $0xa8] sm:$0xff]
  %v50 = vld [vmem:[%s1 + $0xb0] sm:$0xff]
  %v51 = vld [vmem:[%s1 + $0xb8] sm:$0xff]
  %v52 = vld [vmem:[%s1 + $0xc0] sm:$0xff]
  %v53 = vld [vmem:[%s1 + $0xc8] sm:$0xff]
  %v54 = vld [vmem:[%s1 + $0xd0] sm:$0xff]
  %v55 = vld [vmem:[%s1 + $0xd8] sm:$0xff]
  %v56 = vld [vmem:[%s1 + $0xe0] sm:$0xff]
  %v57 = vld [vmem:[%s1 + $0xe8] sm:$0xff]
  %v58 = vld [vmem:[%s1 + $0xf0] sm:$0xff]
  %v59 = vld [vmem:[%s1 + $0xf8] sm:$0xff]
  %60 = vmatprep.subr.mxu0 0.0
  %61 = vmatpush1.msra.mxu0 %v28
  %62 = vmatprep.subr.mxu0 0.0
  %63 = vmatpush1.msra.mxu0 %v29
  %64 = vmatprep.subr.mxu0 0.0
  %65 = vmatpush1.msra.mxu0 %v30
  %66 = vmatprep.subr.mxu0 0.0
  %67 = vmatpush1.msra.mxu0 %v31
  %68 = vmatprep.subr.mxu0 0.0
  %69 = vmatpush1.msra.mxu0 %v32
  %70 = vmatprep.subr.mxu0 0.0
  %71 = vmatpush1.msra.mxu0 %v33
  %72 = vmatprep.subr.mxu0 0.0
  %73 = vmatpush1.msra.mxu0 %v34
  %74 = vmatprep.subr.mxu0 0.0
  %75 = vmatpush1.msra.mxu0 %v35
  %76 = vmatprep.subr.mxu0 0.0
  %77 = vmatpush1.msra.mxu0 %v36
  %78 = vmatprep.subr.mxu0 0.0
  %79 = vmatpush1.msra.mxu0 %v37
  %80 = vmatprep.subr.mxu0 0.0
  %81 = vmatpush1.msra.mxu0 %v38
  %82 = vmatprep.subr.mxu0 0.0
  %83 = vmatpush1.msra.mxu0 %v39
  %84 = vmatprep.subr.mxu0 0.0
  %85 = vmatpush1.msra.mxu0 %v40
  %86 = vmatprep.subr.mxu0 0.0
  %87 = vmatpush1.msra.mxu0 %v41
  %88 = vmatprep.subr.mxu0 0.0
  %89 = vmatpush1.msra.mxu0 %v42
  %90 = vmatprep.subr.mxu0 0.0
  %91 = vmatpush1.msra.mxu0 %v43
  %92 = vmatprep.subr.mxu0 0.0
  %93 = vmatpush1.msra.mxu0 %v44
  %94 = vmatprep.subr.mxu0 0.0
  %95 = vmatpush1.msra.mxu0 %v45
  %96 = vmatprep.subr.mxu0 0.0
  %97 = vmatpush1.msra.mxu0 %v46
  %98 = vmatprep.subr.mxu0 0.0
  %99 = vmatpush1.msra.mxu0 %v47
  %100 = vmatprep.subr.mxu0 0.0
  %101 = vmatpush1.msra.mxu0 %v48
  %102 = vmatprep.subr.mxu0 0.0
  %103 = vmatpush1.msra.mxu0 %v49
  %104 = vmatprep.subr.mxu0 0.0
  %105 = vmatpush1.msra.mxu0 %v50
  %106 = vmatprep.subr.mxu0 0.0
  %107 = vmatpush1.msra.mxu0 %v51
  %108 = vmatprep.subr.mxu0 0.0
  %109 = vmatpush1.msra.mxu0 %v52
  %110 = vmatprep.subr.mxu0 0.0
  %111 = vmatpush1.msra.mxu0 %v53
  %112 = vmatprep.subr.mxu0 0.0
  %113 = vmatpush1.msra.mxu0 %v54
  %114 = vmatprep.subr.mxu0 0.0
  %115 = vmatpush1.msra.mxu0 %v55
  %116 = vmatprep.subr.mxu0 0.0
  %117 = vmatpush1.msra.mxu0 %v56
  %118 = vmatprep.subr.mxu0 0.0
  %119 = vmatpush1.msra.mxu0 %v57
  %120 = vmatprep.subr.mxu0 0.0
  %121 = vmatpush1.msra.mxu0 %v58
  %122 = vmatprep.subr.mxu0 0.0
  %123 = vmatpush1.msra.mxu0 %v59
  %124 = vmatprep.mubr.f32.mxu0 %v25
  %125 = vmatmul.mubr.f32.gmra.mrb[0].mxu0 %v24
  %v126 = vpop.f32.mrb[0].mxu0
  %v127 = vadd.f32 0.0, %v126
  %v128 = vpop.f32.mrb[0].mxu0
  %129 = vmatprep.mubr.f32.mxu0 %v27
  %130 = vmatmul.mubr.f32.gmra.mrb[0].mxu0 %v26
  %v131 = vpop.f32.mrb[0].mxu0
  %v132 = vadd.f32 0.0, %v131
  %v133 = vpop.f32.mrb[0].mxu0
  %134 = vdwg.mxu0
  %v135 = vadd.f32 %v22, %v127
  %v136 = vadd.f32 %v23, %v132
  %vm137 = vcmask 523264
  %138 = vst.msk [vmem:[#allocation2] sm:$0xff] %vm137, %v135
  %vm139 = vcmask 517120
  %140 = vst.msk [vmem:[#allocation2 + $0x8] sm:$0x3] %vm139, %v136
  // Predicated region
  $region18: #{clip_forward.67} parent=0 // pred_check
    %p141 = pneg %p14
  $region19: #{clip_forward.67} parent=0 // pred_check_branch
    %143 = sbr.rel (%p141) target = $region21
  $region20: #{clip_forward.67} parent=0 // pred_region
    %v144 = vld [vmem:[#allocation2] sm:$0xff]
    %v145 = vld [vmem:[#allocation2 + $0x8] sm:$0x3]
    %v146 = vld [vmem:[%s2] sm:$0x1]
    %v148 = vlaneseq
    %v149 = vshrl.u32 %v148, 7
    %v150 = vsub.s32 0, %v149
    %v151 = vrot.slane %v146, %v150
    %v153 = vadd.f32 %v144, %v151
    %v154 = vadd.f32 %v145, %v151
    %155 = vst.msk [vmem:[%s3] sm:$0xff] %vm137, %v153
    %156 = vst.msk [vmem:[%s3 + $0x8] sm:$0x3] %vm139, %v154
  $region21: #{clip_forward.67} parent=0 // pred_fallthru
    _
  // Predicated region
  $region22: #{clip_forward.67} parent=0 // pred_check
    _
  $region23: #{clip_forward.67} parent=0 // pred_check_branch
    %158 = sbr.rel (0) target = $region25
  $region24: #{clip_forward.67} parent=0 // pred_region
    _
  $region25: #{clip_forward.67} parent=0 // pred_fallthru
    _
  // Predicated region
  $region26: #{clip_forward.67} parent=0 // pred_check
    _
  $region27: #{clip_forward.67} parent=0 // pred_check_branch
    %160 = sbr.rel (0) target = $region29
  $region28: #{clip_forward.67} parent=0 // pred_region
    _
  $region29: #{clip_forward.67} parent=0 // pred_fallthru
    _

// kernel: clip_forward.73
$region0: #{clip_forward.73}
  #allocation0 [shape = 'u32[]', space=smem, size = 0x4, offset = 0x4, fixed_abs, tag = 'smem constant byte address 0x4 - core index']
  #allocation1 [shape = 'u32[144,128]{1,0:T(1,128)}', space=vmem, size = 0x12000, scoped, tag = 'internal scratch']
  %s0 = inlined_call_operand.vmem [shape: f32[2,64], index: 0, kind: input, shape index: {}]
  %s1 = inlined_call_operand.vmem [shape: f32[1,64], index: 1, kind: input, shape index: {}]
  %s2 = inlined_call_operand.vmem [shape: f32[1,64], index: 2, kind: input, shape index: {}]
  %s3 = inlined_call_operand.vmem [shape: f32[64,16], index: 3, kind: input, shape index: {}]
  %s4 = inlined_call_operand.vmem [shape: f32[1,16], index: 4, kind: input, shape index: {}]
  %s5 = inlined_call_operand.vmem [shape: f32[2,16], index: 5, kind: output, shape index: {}]
  %s6 = sld [smem:[#allocation0]]
  $region30: #{clip_forward.73} parent=0
    _
  %s8 = ssub.s32 1, %s6
  %s9 = scalar_select 0, %s8, %s6
  // Predicated region
  $region2: #{clip_forward.73} parent=0 // pred_check
    _
  $region3: #{clip_forward.73} parent=0 // pred_check_branch
    %11 = sbr.rel (0) target = $region5
  $region4: #{clip_forward.73} parent=0 // pred_region
    _
  $region5: #{clip_forward.73} parent=0 // pred_fallthru
    _
  // Predicated region
  $region6: #{clip_forward.73} parent=0 // pred_check
    _
  $region7: #{clip_forward.73} parent=0 // pred_check_branch
    %13 = sbr.rel (0) target = $region9
  $region8: #{clip_forward.73} parent=0 // pred_region
    _
  $region9: #{clip_forward.73} parent=0 // pred_fallthru
    _
  // Predicated region
  $region10: #{clip_forward.73} parent=0 // pred_check
    _
  $region11: #{clip_forward.73} parent=0 // pred_check_branch
    %15 = sbr.rel (0) target = $region13
  $region12: #{clip_forward.73} parent=0 // pred_region
    _
  $region13: #{clip_forward.73} parent=0 // pred_fallthru
    _
  // Predicated region
  $region14: #{clip_forward.73} parent=0 // pred_check
    _
  $region15: #{clip_forward.73} parent=0 // pred_check_branch
    %17 = sbr.rel (0) target = $region17
  $region16: #{clip_forward.73} parent=0 // pred_region
    _
  $region17: #{clip_forward.73} parent=0 // pred_fallthru
    _
  // Predicated region
  $region18: #{clip_forward.73} parent=0 // pred_check
    _
  $region19: #{clip_forward.73} parent=0 // pred_check_branch
    %19 = sbr.rel (0) target = $region21
  $region20: #{clip_forward.73} parent=0 // pred_region
    _
  $region21: #{clip_forward.73} parent=0 // pred_fallthru
    _
  %v20 = vld [vmem:[%s0] sm:$0x3]
  %v21 = vld [vmem:[%s1] sm:$0x1]
  %v22 = vld [vmem:[%s2] sm:$0x1]
  %vm23 = vcmask 517120
  %v24 = vsel %vm23, %v20, 0.0
  %25 = vadd.xlane.f32.xlu0 %v24
  %v26 = vpop.xlane.xlu0 %25
  %v27 = vrcp.pop 64.0
  %v28 = vmul.f32 %v26, %v27
  %v29 = vsub.f32 %v20, %v28
  %v30 = vmul.f32 %v29, %v29
  %v31 = vsel %vm23, %v30, 0.0
  %32 = vadd.xlane.f32.xlu0 %v31
  %v33 = vpop.xlane.xlu0 %32
  %v34 = vmul.f32 %v33, %v27
  %v35 = vadd.f32 %v34, 1e-05
  %v36 = vrsqrt.pop %v35
  %v37 = vmul.f32 %v29, %v36
  %v39 = vlaneseq
  %v40 = vshrl.u32 %v39, 7
  %v41 = vsub.s32 0, %v40
  %v42 = vrot.slane %v21, %v41
  %v44 = vmul.f32 %v37, %v42
  %v46 = vlaneseq
  %v47 = vshrl.u32 %v46, 7
  %v48 = vsub.s32 0, %v47
  %v49 = vrot.slane %v22, %v48
  %v51 = vadd.f32 %v44, %v49
  %v52 = vld [vmem:[%s3] sm:$0xff]
  %v53 = vld [vmem:[%s3 + $0x8] sm:$0xff]
  %v54 = vld [vmem:[%s3 + $0x10] sm:$0xff]
  %v55 = vld [vmem:[%s3 + $0x18] sm:$0xff]
  %v56 = vld [vmem:[%s3 + $0x20] sm:$0xff]
  %v57 = vld [vmem:[%s3 + $0x28] sm:$0xff]
  %v58 = vld [vmem:[%s3 + $0x30] sm:$0xff]
  %v59 = vld [vmem:[%s3 + $0x38] sm:$0xff]
  %v60 = vld [vmem:[%s4] sm:$0x1]
  %v62 = vlaneseq
  %v63 = vshrl.u32 %v62, 7
  %v64 = vsub.s32 0, %v63
  %v65 = vrot.slane %v60, %v64
  %vm67 = vcmask 523264
  %v69 = vsel %vm67, %v51, 0
  %71 = vmatprep.subr.mxu0 0.0
  %72 = vmatpush1.msra.mxu0 %v52
  %73 = vmatprep.subr.mxu0 0.0
  %74 = vmatpush1.msra.mxu0 %v53
  %75 = vmatprep.subr.mxu0 0.0
  %76 = vmatpush1.msra.mxu0 %v54
  %77 = vmatprep.subr.mxu0 0.0
  %78 = vmatpush1.msra.mxu0 %v55
  %79 = vmatprep.subr.mxu0 0.0
  %80 = vmatpush1.msra.mxu0 %v56
  %81 = vmatprep.subr.mxu0 0.0
  %82 = vmatpush1.msra.mxu0 %v57
  %83 = vmatprep.subr.mxu0 0.0
  %84 = vmatpush1.msra.mxu0 %v58
  %85 = vmatprep.subr.mxu0 0.0
  %86 = vmatpush1.msra.mxu0 %v59
  %87 = vmatprep.subr.mxu0 0.0
  %88 = vmatpush1.msra.mxu0 0.0
  %89 = vmatprep.subr.mxu0 0.0
  %90 = vmatpush1.msra.mxu0 0.0
  %91 = vmatprep.subr.mxu0 0.0
  %92 = vmatpush1.msra.mxu0 0.0
  %93 = vmatprep.subr.mxu0 0.0
  %94 = vmatpush1.msra.mxu0 0.0
  %95 = vmatprep.subr.mxu0 0.0
  %96 = vmatpush1.msra.mxu0 0.0
  %97 = vmatprep.subr.mxu0 0.0
  %98 = vmatpush1.msra.mxu0 0.0
  %99 = vmatprep.subr.mxu0 0.0
  %100 = vmatpush1.msra.mxu0 0.0
  %101 = vmatprep.subr.mxu0 0.0
  %102 = vmatpush1.msra.mxu0 0.0
  %103 = vmatprep.subr.mxu0 0.0
  %104 = vmatpush1.msra.mxu0 0.0
  %105 = vmatprep.subr.mxu0 0.0
  %106 = vmatpush1.msra.mxu0 0.0
  %107 = vmatprep.subr.mxu0 0.0
  %108 = vmatpush1.msra.mxu0 0.0
  %109 = vmatprep.subr.mxu0 0.0
  %110 = vmatpush1.msra.mxu0 0.0
  %111 = vmatprep.subr.mxu0 0.0
  %112 = vmatpush1.msra.mxu0 0.0
  %113 = vmatprep.subr.mxu0 0.0
  %114 = vmatpush1.msra.mxu0 0.0
  %115 = vmatprep.subr.mxu0 0.0
  %116 = vmatpush1.msra.mxu0 0.0
  %117 = vmatprep.subr.mxu0 0.0
  %118 = vmatpush1.msra.mxu0 0.0
  %119 = vmatprep.subr.mxu0 0.0
  %120 = vmatpush1.msra.mxu0 0.0
  %121 = vmatprep.subr.mxu0 0.0
  %122 = vmatpush1.msra.mxu0 0.0
  %123 = vmatprep.subr.mxu0 0.0
  %124 = vmatpush1.msra.mxu0 0.0
  %125 = vmatprep.subr.mxu0 0.0
  %126 = vmatpush1.msra.mxu0 0.0
  %127 = vmatprep.subr.mxu0 0.0
  %128 = vmatpush1.msra.mxu0 0.0
  %129 = vmatprep.subr.mxu0 0.0
  %130 = vmatpush1.msra.mxu0 0.0
  %131 = vmatprep.subr.mxu0 0.0
  %132 = vmatpush1.msra.mxu0 0.0
  %133 = vmatprep.subr.mxu0 0.0
  %134 = vmatpush1.msra.mxu0 0.0
  %135 = vmatprep.mubr.f32.mxu0 0.0
  %136 = vmatmul.mubr.f32.gmra.mrb[0].mxu0 %v69
  %v137 = vpop.f32.mrb[0].mxu0
  %v138 = vadd.f32 %v65, %v137
  %v139 = vpop.f32.mrb[0].mxu0
  %140 = vdwg.mxu0
  %vm141 = vcmask 123904
  %142 = vst.msk [vmem:[%s5] sm:$0x3] %vm141, %v138
  // Predicated region
  $region22: #{clip_forward.73} parent=0 // pred_check
    _
  $region23: #{clip_forward.73} parent=0 // pred_check_branch
    %144 = sbr.rel (0) target = $region25
  $region24: #{clip_forward.73} parent=0 // pred_region
    _
  $region25: #{clip_forward.73} parent=0 // pred_fallthru
    _
  // Predicated region
  $region26: #{clip_forward.73} parent=0 // pred_check
    _
  $region27: #{clip_forward.73} parent=0 // pred_check_branch
    %146 = sbr.rel (0) target = $region29
  $region28: #{clip_forward.73} parent=0 // pred_region
    _
  $region29: #{clip_forward.73} parent=0 // pred_fallthru
    _

// kernel: clip_forward.74
$region0: #{clip_forward.74}
  #allocation0 [shape = 'u32[]', space=smem, size = 0x4, offset = 0x4, fixed_abs, tag = 'smem constant byte address 0x4 - core index']
  #allocation1 [shape = 'u32[144,128]{1,0:T(1,128)}', space=vmem, size = 0x12000, scoped, tag = 'internal scratch']
  %s0 = inlined_call_operand.vmem [shape: f32[24,32], index: 0, kind: input, shape index: {}]
  %s1 = inlined_call_operand.vmem [shape: f32[1,32], index: 1, kind: input, shape index: {}]
  %s2 = inlined_call_operand.vmem [shape: f32[1,32], index: 2, kind: input, shape index: {}]
  %s3 = inlined_call_operand.vmem [shape: f32[32,96], index: 3, kind: input, shape index: {}]
  %s4 = inlined_call_operand.vmem [shape: f32[1,96], index: 4, kind: input, shape index: {}]
  %s5 = inlined_call_operand.vmem [shape: f32[24,96], index: 5, kind: output, shape index: {}]
  %s6 = sld [smem:[#allocation0]]
  $region30: #{clip_forward.74} parent=0
    _
  %s8 = ssub.s32 1, %s6
  %s9 = scalar_select 0, %s8, %s6
  // Predicated region
  $region2: #{clip_forward.74} parent=0 // pred_check
    _
  $region3: #{clip_forward.74} parent=0 // pred_check_branch
    %11 = sbr.rel (0) target = $region5
  $region4: #{clip_forward.74} parent=0 // pred_region
    _
  $region5: #{clip_forward.74} parent=0 // pred_fallthru
    _
  // Predicated region
  $region6: #{clip_forward.74} parent=0 // pred_check
    _
  $region7: #{clip_forward.74} parent=0 // pred_check_branch
    %13 = sbr.rel (0) target = $region9
  $region8: #{clip_forward.74} parent=0 // pred_region
    _
  $region9: #{clip_forward.74} parent=0 // pred_fallthru
    _
  // Predicated region
  $region10: #{clip_forward.74} parent=0 // pred_check
    _
  $region11: #{clip_forward.74} parent=0 // pred_check_branch
    %15 = sbr.rel (0) target = $region13
  $region12: #{clip_forward.74} parent=0 // pred_region
    _
  $region13: #{clip_forward.74} parent=0 // pred_fallthru
    _
  // Predicated region
  $region14: #{clip_forward.74} parent=0 // pred_check
    _
  $region15: #{clip_forward.74} parent=0 // pred_check_branch
    %17 = sbr.rel (0) target = $region17
  $region16: #{clip_forward.74} parent=0 // pred_region
    _
  $region17: #{clip_forward.74} parent=0 // pred_fallthru
    _
  // Predicated region
  $region18: #{clip_forward.74} parent=0 // pred_check
    _
  $region19: #{clip_forward.74} parent=0 // pred_check_branch
    %19 = sbr.rel (0) target = $region21
  $region20: #{clip_forward.74} parent=0 // pred_region
    _
  $region21: #{clip_forward.74} parent=0 // pred_fallthru
    _
  %v20 = vld [vmem:[%s0] sm:$0xff]
  %v21 = vld [vmem:[%s0 + $0x8] sm:$0xff]
  %v22 = vld [vmem:[%s0 + $0x10] sm:$0xff]
  %v23 = vld [vmem:[%s1] sm:$0x1]
  %v24 = vld [vmem:[%s2] sm:$0x1]
  %vm25 = vcmask 261120
  %v26 = vsel %vm25, %v20, 0.0
  %27 = vadd.xlane.f32.xlu0 %v26
  %v28 = vpop.xlane.xlu0 %27
  %v29 = vsel %vm25, %v21, 0.0
  %30 = vadd.xlane.f32.xlu0 %v29
  %v31 = vpop.xlane.xlu0 %30
  %v32 = vsel %vm25, %v22, 0.0
  %33 = vadd.xlane.f32.xlu0 %v32
  %v34 = vpop.xlane.xlu0 %33
  %v35 = vrcp.pop 32.0
  %v36 = vmul.f32 %v28, %v35
  %v37 = vmul.f32 %v31, %v35
  %v38 = vmul.f32 %v34, %v35
  %v39 = vsub.f32 %v20, %v36
  %v40 = vsub.f32 %v21, %v37
  %v41 = vsub.f32 %v22, %v38
  %v42 = vmul.f32 %v39, %v39
  %v43 = vmul.f32 %v40, %v40
  %v44 = vmul.f32 %v41, %v41
  %v45 = vsel %vm25, %v42, 0.0
  %46 = vadd.xlane.f32.xlu0 %v45
  %v47 = vpop.xlane.xlu0 %46
  %v48 = vsel %vm25, %v43, 0.0
  %49 = vadd.xlane.f32.xlu0 %v48
  %v50 = vpop.xlane.xlu0 %49
  %v51 = vsel %vm25, %v44, 0.0
  %52 = vadd.xlane.f32.xlu0 %v51
  %v53 = vpop.xlane.xlu0 %52
  %v54 = vmul.f32 %v47, %v35
  %v55 = vmul.f32 %v50, %v35
  %v56 = vmul.f32 %v53, %v35
  %v57 = vadd.f32 %v54, 1e-05
  %v58 = vadd.f32 %v55, 1e-05
  %v59 = vadd.f32 %v56, 1e-05
  %v60 = vrsqrt.pop %v57
  %v61 = vrsqrt.pop %v58
  %v62 = vrsqrt.pop %v59
  %v63 = vmul.f32 %v39, %v60
  %v64 = vmul.f32 %v40, %v61
  %v65 = vmul.f32 %v41, %v62
  %v67 = vlaneseq
  %v68 = vshrl.u32 %v67, 7
  %v69 = vsub.s32 0, %v68
  %v70 = vrot.slane %v23, %v69
  %v72 = vmul.f32 %v63, %v70
  %v73 = vmul.f32 %v64, %v70
  %v74 = vmul.f32 %v65, %v70
  %v76 = vlaneseq
  %v77 = vshrl.u32 %v76, 7
  %v78 = vsub.s32 0, %v77
  %v79 = vrot.slane %v24, %v78
  %v81 = vadd.f32 %v72, %v79
  %v82 = vadd.f32 %v73, %v79
  %v83 = vadd.f32 %v74, %v79
  %v84 = vld [vmem:[%s3] sm:$0xff]
  %v85 = vld [vmem:[%s3 + $0x8] sm:$0xff]
  %v86 = vld [vmem:[%s3 + $0x10] sm:$0xff]
  %v87 = vld [vmem:[%s3 + $0x18] sm:$0xff]
  %v88 = vld [vmem:[%s4] sm:$0x1]
  %v90 = vlaneseq
  %v91 = vshrl.u32 %v90, 7
  %v92 = vsub.s32 0, %v91
  %v93 = vrot.slane %v88, %v92
  %v96 = vsel %vm25, %v81, 0
  %v99 = vsel %vm25, %v82, 0
  %v102 = vsel %vm25, %v83, 0
  %104 = vmatprep.subr.mxu0 0.0
  %105 = vmatpush1.msra.mxu0 %v84
  %106 = vmatprep.subr.mxu0 0.0
  %107 = vmatpush1.msra.mxu0 %v85
  %108 = vmatprep.subr.mxu0 0.0
  %109 = vmatpush1.msra.mxu0 %v86
  %110 = vmatprep.subr.mxu0 0.0
  %111 = vmatpush1.msra.mxu0 %v87
  %112 = vmatprep.subr.mxu0 0.0
  %113 = vmatpush1.msra.mxu0 0.0
  %114 = vmatprep.subr.mxu0 0.0
  %115 = vmatpush1.msra.mxu0 0.0
  %116 = vmatprep.subr.mxu0 0.0
  %117 = vmatpush1.msra.mxu0 0.0
  %118 = vmatprep.subr.mxu0 0.0
  %119 = vmatpush1.msra.mxu0 0.0
  %120 = vmatprep.subr.mxu0 0.0
  %121 = vmatpush1.msra.mxu0 0.0
  %122 = vmatprep.subr.mxu0 0.0
  %123 = vmatpush1.msra.mxu0 0.0
  %124 = vmatprep.subr.mxu0 0.0
  %125 = vmatpush1.msra.mxu0 0.0
  %126 = vmatprep.subr.mxu0 0.0
  %127 = vmatpush1.msra.mxu0 0.0
  %128 = vmatprep.subr.mxu0 0.0
  %129 = vmatpush1.msra.mxu0 0.0
  %130 = vmatprep.subr.mxu0 0.0
  %131 = vmatpush1.msra.mxu0 0.0
  %132 = vmatprep.subr.mxu0 0.0
  %133 = vmatpush1.msra.mxu0 0.0
  %134 = vmatprep.subr.mxu0 0.0
  %135 = vmatpush1.msra.mxu0 0.0
  %136 = vmatprep.subr.mxu0 0.0
  %137 = vmatpush1.msra.mxu0 0.0
  %138 = vmatprep.subr.mxu0 0.0
  %139 = vmatpush1.msra.mxu0 0.0
  %140 = vmatprep.subr.mxu0 0.0
  %141 = vmatpush1.msra.mxu0 0.0
  %142 = vmatprep.subr.mxu0 0.0
  %143 = vmatpush1.msra.mxu0 0.0
  %144 = vmatprep.subr.mxu0 0.0
  %145 = vmatpush1.msra.mxu0 0.0
  %146 = vmatprep.subr.mxu0 0.0
  %147 = vmatpush1.msra.mxu0 0.0
  %148 = vmatprep.subr.mxu0 0.0
  %149 = vmatpush1.msra.mxu0 0.0
  %150 = vmatprep.subr.mxu0 0.0
  %151 = vmatpush1.msra.mxu0 0.0
  %152 = vmatprep.subr.mxu0 0.0
  %153 = vmatpush1.msra.mxu0 0.0
  %154 = vmatprep.subr.mxu0 0.0
  %155 = vmatpush1.msra.mxu0 0.0
  %156 = vmatprep.subr.mxu0 0.0
  %157 = vmatpush1.msra.mxu0 0.0
  %158 = vmatprep.subr.mxu0 0.0
  %159 = vmatpush1.msra.mxu0 0.0
  %160 = vmatprep.subr.mxu0 0.0
  %161 = vmatpush1.msra.mxu0 0.0
  %162 = vmatprep.subr.mxu0 0.0
  %163 = vmatpush1.msra.mxu0 0.0
  %164 = vmatprep.subr.mxu0 0.0
  %165 = vmatpush1.msra.mxu0 0.0
  %166 = vmatprep.subr.mxu0 0.0
  %167 = vmatpush1.msra.mxu0 0.0
  %168 = vmatprep.mubr.f32.mxu0 0.0
  %169 = vmatmul.mubr.f32.gmra.mrb[0].mxu0 %v96
  %v170 = vpop.f32.mrb[0].mxu0
  %v171 = vadd.f32 %v93, %v170
  %v172 = vpop.f32.mrb[0].mxu0
  %173 = vmatprep.mubr.f32.mxu0 0.0
  %174 = vmatmul.mubr.f32.gmra.mrb[0].mxu0 %v99
  %v175 = vpop.f32.mrb[0].mxu0
  %v176 = vadd.f32 %v93, %v175
  %v177 = vpop.f32.mrb[0].mxu0
  %178 = vmatprep.mubr.f32.mxu0 0.0
  %179 = vmatmul.mubr.f32.gmra.mrb[0].mxu0 %v102
  %v180 = vpop.f32.mrb[0].mxu0
  %v181 = vadd.f32 %v93, %v180
  %v182 = vpop.f32.mrb[0].mxu0
  %183 = vdwg.mxu0
  %vm184 = vcmask 785408
  %185 = vst.msk [vmem:[%s5] sm:$0xff] %vm184, %v171
  %186 = vst.msk [vmem:[%s5 + $0x8] sm:$0xff] %vm184, %v176
  %187 = vst.msk [vmem:[%s5 + $0x10] sm:$0xff] %vm184, %v181
  // Predicated region
  $region22: #{clip_forward.74} parent=0 // pred_check
    _
  $region23: #{clip_forward.74} parent=0 // pred_check_branch
    %189 = sbr.rel (0) target = $region25
  $region24: #{clip_forward.74} parent=0 // pred_region
    _
  $region25: #{clip_forward.74} parent=0 // pred_fallthru
    _
  // Predicated region
  $region26: #{clip_forward.74} parent=0 // pred_check
    _
  $region27: #{clip_forward.74} parent=0 // pred_check_branch
    %191 = sbr.rel (0) target = $region29
  $region28: #{clip_forward.74} parent=0 // pred_region
    _
  $region29: #{clip_forward.74} parent=0 // pred_fallthru
    _

// kernel: clip_forward.76
$region0: #{clip_forward.76}
  #allocation0 [shape = 'u32[]', space=smem, size = 0x4, offset = 0x4, fixed_abs, tag = 'smem constant byte address 0x4 - core index']
  #allocation1 [shape = 'u32[144,128]{1,0:T(1,128)}', space=vmem, size = 0x12000, scoped, tag = 'internal scratch']
  #allocation2 [shape = 'f32[24,32]{1,0:T(8,128)}', space=vmem, size = 0x3000, scoped, tag = 'scratch operand']
  %s0 = inlined_call_operand.vmem [shape: f32[24,32], index: 0, kind: input, shape index: {}]
  %s1 = inlined_call_operand.vmem [shape: f32[32,32], index: 1, kind: input, shape index: {}]
  %s2 = inlined_call_operand.vmem [shape: f32[1,32], index: 2, kind: input, shape index: {}]
  %s3 = inlined_call_operand.vmem [shape: f32[24,32], index: 3, kind: output, shape index: {}]
  %s4 = sld [smem:[#allocation0]]
  $region30: #{clip_forward.76} parent=0
    _
  %s6 = ssub.s32 1, %s4
  %s7 = scalar_select 0, %s6, %s4
  // Predicated region
  $region2: #{clip_forward.76} parent=0 // pred_check
    _
  $region3: #{clip_forward.76} parent=0 // pred_check_branch
    %9 = sbr.rel (0) target = $region5
  $region4: #{clip_forward.76} parent=0 // pred_region
    _
  $region5: #{clip_forward.76} parent=0 // pred_fallthru
    _
  // Predicated region
  $region6: #{clip_forward.76} parent=0 // pred_check
    _
  $region7: #{clip_forward.76} parent=0 // pred_check_branch
    %11 = sbr.rel (0) target = $region9
  $region8: #{clip_forward.76} parent=0 // pred_region
    _
  $region9: #{clip_forward.76} parent=0 // pred_fallthru
    _
  // Predicated region
  $region10: #{clip_forward.76} parent=0 // pred_check
    _
  $region11: #{clip_forward.76} parent=0 // pred_check_branch
    %13 = sbr.rel (0) target = $region13
  $region12: #{clip_forward.76} parent=0 // pred_region
    _
  $region13: #{clip_forward.76} parent=0 // pred_fallthru
    _
  %p14 = scmp.eq.s32.totalorder 0, 0
  // Predicated region
  $region14: #{clip_forward.76} parent=0 // pred_check
    %p15 = pneg %p14
  $region15: #{clip_forward.76} parent=0 // pred_check_branch
    %17 = sbr.rel (%p15) target = $region17
  $region16: #{clip_forward.76} parent=0 // pred_region
    %vm18 = vcmask 261120
    %19 = vst.msk [vmem:[#allocation2] sm:$0xff] %vm18, 0.0
    %20 = vst.msk [vmem:[#allocation2 + $0x8] sm:$0xff] %vm18, 0.0
    %21 = vst.msk [vmem:[#allocation2 + $0x10] sm:$0xff] %vm18, 0.0
  $region17: #{clip_forward.76} parent=0 // pred_fallthru
    _
  %v22 = vld [vmem:[#allocation2] sm:$0xff]
  %v23 = vld [vmem:[#allocation2 + $0x8] sm:$0xff]
  %v24 = vld [vmem:[#allocation2 + $0x10] sm:$0xff]
  %v25 = vld [vmem:[%s0] sm:$0xff]
  %v26 = vld [vmem:[%s0 + $0x8] sm:$0xff]
  %v27 = vld [vmem:[%s0 + $0x10] sm:$0xff]
  %v28 = vld [vmem:[%s1] sm:$0xff]
  %v29 = vld [vmem:[%s1 + $0x8] sm:$0xff]
  %v30 = vld [vmem:[%s1 + $0x10] sm:$0xff]
  %v31 = vld [vmem:[%s1 + $0x18] sm:$0xff]
  %vm32 = vcmask 261120
  %v34 = vsel %vm32, %v25, 0
  %v37 = vsel %vm32, %v26, 0
  %v40 = vsel %vm32, %v27, 0
  %42 = vmatprep.subr.mxu0 0.0
  %43 = vmatpush1.msra.mxu0 %v28
  %44 = vmatprep.subr.mxu0 0.0
  %45 = vmatpush1.msra.mxu0 %v29
  %46 = vmatprep.subr.mxu0 0.0
  %47 = vmatpush1.msra.mxu0 %v30
  %48 = vmatprep.subr.mxu0 0.0
  %49 = vmatpush1.msra.mxu0 %v31
  %50 = vmatprep.subr.mxu0 0.0
  %51 = vmatpush1.msra.mxu0 0.0
  %52 = vmatprep.subr.mxu0 0.0
  %53 = vmatpush1.msra.mxu0 0.0
  %54 = vmatprep.subr.mxu0 0.0
  %55 = vmatpush1.msra.mxu0 0.0
  %56 = vmatprep.subr.mxu0 0.0
  %57 = vmatpush1.msra.mxu0 0.0
  %58 = vmatprep.subr.mxu0 0.0
  %59 = vmatpush1.msra.mxu0 0.0
  %60 = vmatprep.subr.mxu0 0.0
  %61 = vmatpush1.msra.mxu0 0.0
  %62 = vmatprep.subr.mxu0 0.0
  %63 = vmatpush1.msra.mxu0 0.0
  %64 = vmatprep.subr.mxu0 0.0
  %65 = vmatpush1.msra.mxu0 0.0
  %66 = vmatprep.subr.mxu0 0.0
  %67 = vmatpush1.msra.mxu0 0.0
  %68 = vmatprep.subr.mxu0 0.0
  %69 = vmatpush1.msra.mxu0 0.0
  %70 = vmatprep.subr.mxu0 0.0
  %71 = vmatpush1.msra.mxu0 0.0
  %72 = vmatprep.subr.mxu0 0.0
  %73 = vmatpush1.msra.mxu0 0.0
  %74 = vmatprep.subr.mxu0 0.0
  %75 = vmatpush1.msra.mxu0 0.0
  %76 = vmatprep.subr.mxu0 0.0
  %77 = vmatpush1.msra.mxu0 0.0
  %78 = vmatprep.subr.mxu0 0.0
  %79 = vmatpush1.msra.mxu0 0.0
  %80 = vmatprep.subr.mxu0 0.0
  %81 = vmatpush1.msra.mxu0 0.0
  %82 = vmatprep.subr.mxu0 0.0
  %83 = vmatpush1.msra.mxu0 0.0
  %84 = vmatprep.subr.mxu0 0.0
  %85 = vmatpush1.msra.mxu0 0.0
  %86 = vmatprep.subr.mxu0 0.0
  %87 = vmatpush1.msra.mxu0 0.0
  %88 = vmatprep.subr.mxu0 0.0
  %89 = vmatpush1.msra.mxu0 0.0
  %90 = vmatprep.subr.mxu0 0.0
  %91 = vmatpush1.msra.mxu0 0.0
  %92 = vmatprep.subr.mxu0 0.0
  %93 = vmatpush1.msra.mxu0 0.0
  %94 = vmatprep.subr.mxu0 0.0
  %95 = vmatpush1.msra.mxu0 0.0
  %96 = vmatprep.subr.mxu0 0.0
  %97 = vmatpush1.msra.mxu0 0.0
  %98 = vmatprep.subr.mxu0 0.0
  %99 = vmatpush1.msra.mxu0 0.0
  %100 = vmatprep.subr.mxu0 0.0
  %101 = vmatpush1.msra.mxu0 0.0
  %102 = vmatprep.subr.mxu0 0.0
  %103 = vmatpush1.msra.mxu0 0.0
  %104 = vmatprep.subr.mxu0 0.0
  %105 = vmatpush1.msra.mxu0 0.0
  %106 = vmatprep.mubr.f32.mxu0 0.0
  %107 = vmatmul.mubr.f32.gmra.mrb[0].mxu0 %v34
  %v108 = vpop.f32.mrb[0].mxu0
  %v109 = vadd.f32 0.0, %v108
  %v110 = vpop.f32.mrb[0].mxu0
  %111 = vmatprep.mubr.f32.mxu0 0.0
  %112 = vmatmul.mubr.f32.gmra.mrb[0].mxu0 %v37
  %v113 = vpop.f32.mrb[0].mxu0
  %v114 = vadd.f32 0.0, %v113
  %v115 = vpop.f32.mrb[0].mxu0
  %116 = vmatprep.mubr.f32.mxu0 0.0
  %117 = vmatmul.mubr.f32.gmra.mrb[0].mxu0 %v40
  %v118 = vpop.f32.mrb[0].mxu0
  %v119 = vadd.f32 0.0, %v118
  %v120 = vpop.f32.mrb[0].mxu0
  %121 = vdwg.mxu0
  %v122 = vadd.f32 %v22, %v109
  %v123 = vadd.f32 %v23, %v114
  %v124 = vadd.f32 %v24, %v119
  %125 = vst.msk [vmem:[#allocation2] sm:$0xff] %vm32, %v122
  %126 = vst.msk [vmem:[#allocation2 + $0x8] sm:$0xff] %vm32, %v123
  %127 = vst.msk [vmem:[#allocation2 + $0x10] sm:$0xff] %vm32, %v124
  // Predicated region
  $region18: #{clip_forward.76} parent=0 // pred_check
    %p128 = pneg %p14
  $region19: #{clip_forward.76} parent=0 // pred_check_branch
    %130 = sbr.rel (%p128) target = $region21
  $region20: #{clip_forward.76} parent=0 // pred_region
    %v131 = vld [vmem:[#allocation2] sm:$0xff]
    %v132 = vld [vmem:[#allocation2 + $0x8] sm:$0xff]
    %v133 = vld [vmem:[#allocation2 + $0x10] sm:$0xff]
    %v134 = vld [vmem:[%s2] sm:$0x1]
    %v136 = vlaneseq
    %v137 = vshrl.u32 %v136, 7
    %v138 = vsub.s32 0, %v137
    %v139 = vrot.slane %v134, %v138
    %v141 = vadd.f32 %v131, %v139
    %v142 = vadd.f32 %v132, %v139
    %v143 = vadd.f32 %v133, %v139
    %144 = vst.msk [vmem:[%s3] sm:$0xff] %vm32, %v141
    %145 = vst.msk [vmem:[%s3 + $0x8] sm:$0xff] %vm32, %v142
    %146 = vst.msk [vmem:[%s3 + $0x10] sm:$0xff] %vm32, %v143
  $region21: #{clip_forward.76} parent=0 // pred_fallthru
    _
  // Predicated region
  $region22: #{clip_forward.76} parent=0 // pred_check
    _
  $region23: #{clip_forward.76} parent=0 // pred_check_branch
    %148 = sbr.rel (0) target = $region25
  $region24: #{clip_forward.76} parent=0 // pred_region
    _
  $region25: #{clip_forward.76} parent=0 // pred_fallthru
    _
  // Predicated region
  $region26: #{clip_forward.76} parent=0 // pred_check
    _
  $region27: #{clip_forward.76} parent=0 // pred_check_branch
    %150 = sbr.rel (0) target = $region29
  $region28: #{clip_forward.76} parent=0 // pred_region
    _
  $region29: #{clip_forward.76} parent=0 // pred_fallthru
    _

// kernel: clip_forward.77
$region0: #{clip_forward.77}
  #allocation0 [shape = 'u32[]', space=smem, size = 0x4, offset = 0x4, fixed_abs, tag = 'smem constant byte address 0x4 - core index']
  #allocation1 [shape = 'u32[144,128]{1,0:T(1,128)}', space=vmem, size = 0x12000, scoped, tag = 'internal scratch']
  %s0 = inlined_call_operand.vmem [shape: f32[24,32], index: 0, kind: input, shape index: {}]
  %s1 = inlined_call_operand.vmem [shape: f32[1,32], index: 1, kind: input, shape index: {}]
  %s2 = inlined_call_operand.vmem [shape: f32[1,32], index: 2, kind: input, shape index: {}]
  %s3 = inlined_call_operand.vmem [shape: f32[32,128], index: 3, kind: input, shape index: {}]
  %s4 = inlined_call_operand.vmem [shape: f32[1,128], index: 4, kind: input, shape index: {}]
  %s5 = inlined_call_operand.vmem [shape: f32[24,128], index: 5, kind: output, shape index: {}]
  %s6 = sld [smem:[#allocation0]]
  $region30: #{clip_forward.77} parent=0
    _
  %s8 = ssub.s32 1, %s6
  %s9 = scalar_select 0, %s8, %s6
  // Predicated region
  $region2: #{clip_forward.77} parent=0 // pred_check
    _
  $region3: #{clip_forward.77} parent=0 // pred_check_branch
    %11 = sbr.rel (0) target = $region5
  $region4: #{clip_forward.77} parent=0 // pred_region
    _
  $region5: #{clip_forward.77} parent=0 // pred_fallthru
    _
  // Predicated region
  $region6: #{clip_forward.77} parent=0 // pred_check
    _
  $region7: #{clip_forward.77} parent=0 // pred_check_branch
    %13 = sbr.rel (0) target = $region9
  $region8: #{clip_forward.77} parent=0 // pred_region
    _
  $region9: #{clip_forward.77} parent=0 // pred_fallthru
    _
  // Predicated region
  $region10: #{clip_forward.77} parent=0 // pred_check
    _
  $region11: #{clip_forward.77} parent=0 // pred_check_branch
    %15 = sbr.rel (0) target = $region13
  $region12: #{clip_forward.77} parent=0 // pred_region
    _
  $region13: #{clip_forward.77} parent=0 // pred_fallthru
    _
  // Predicated region
  $region14: #{clip_forward.77} parent=0 // pred_check
    _
  $region15: #{clip_forward.77} parent=0 // pred_check_branch
    %17 = sbr.rel (0) target = $region17
  $region16: #{clip_forward.77} parent=0 // pred_region
    _
  $region17: #{clip_forward.77} parent=0 // pred_fallthru
    _
  // Predicated region
  $region18: #{clip_forward.77} parent=0 // pred_check
    _
  $region19: #{clip_forward.77} parent=0 // pred_check_branch
    %19 = sbr.rel (0) target = $region21
  $region20: #{clip_forward.77} parent=0 // pred_region
    _
  $region21: #{clip_forward.77} parent=0 // pred_fallthru
    _
  %v20 = vld [vmem:[%s0] sm:$0xff]
  %v21 = vld [vmem:[%s0 + $0x8] sm:$0xff]
  %v22 = vld [vmem:[%s0 + $0x10] sm:$0xff]
  %v23 = vld [vmem:[%s1] sm:$0x1]
  %v24 = vld [vmem:[%s2] sm:$0x1]
  %vm25 = vcmask 261120
  %v26 = vsel %vm25, %v20, 0.0
  %27 = vadd.xlane.f32.xlu0 %v26
  %v28 = vpop.xlane.xlu0 %27
  %v29 = vsel %vm25, %v21, 0.0
  %30 = vadd.xlane.f32.xlu0 %v29
  %v31 = vpop.xlane.xlu0 %30
  %v32 = vsel %vm25, %v22, 0.0
  %33 = vadd.xlane.f32.xlu0 %v32
  %v34 = vpop.xlane.xlu0 %33
  %v35 = vrcp.pop 32.0
  %v36 = vmul.f32 %v28, %v35
  %v37 = vmul.f32 %v31, %v35
  %v38 = vmul.f32 %v34, %v35
  %v39 = vsub.f32 %v20, %v36
  %v40 = vsub.f32 %v21, %v37
  %v41 = vsub.f32 %v22, %v38
  %v42 = vmul.f32 %v39, %v39
  %v43 = vmul.f32 %v40, %v40
  %v44 = vmul.f32 %v41, %v41
  %v45 = vsel %vm25, %v42, 0.0
  %46 = vadd.xlane.f32.xlu0 %v45
  %v47 = vpop.xlane.xlu0 %46
  %v48 = vsel %vm25, %v43, 0.0
  %49 = vadd.xlane.f32.xlu0 %v48
  %v50 = vpop.xlane.xlu0 %49
  %v51 = vsel %vm25, %v44, 0.0
  %52 = vadd.xlane.f32.xlu0 %v51
  %v53 = vpop.xlane.xlu0 %52
  %v54 = vmul.f32 %v47, %v35
  %v55 = vmul.f32 %v50, %v35
  %v56 = vmul.f32 %v53, %v35
  %v57 = vadd.f32 %v54, 1e-05
  %v58 = vadd.f32 %v55, 1e-05
  %v59 = vadd.f32 %v56, 1e-05
  %v60 = vrsqrt.pop %v57
  %v61 = vrsqrt.pop %v58
  %v62 = vrsqrt.pop %v59
  %v63 = vmul.f32 %v39, %v60
  %v64 = vmul.f32 %v40, %v61
  %v65 = vmul.f32 %v41, %v62
  %v67 = vlaneseq
  %v68 = vshrl.u32 %v67, 7
  %v69 = vsub.s32 0, %v68
  %v70 = vrot.slane %v23, %v69
  %v72 = vmul.f32 %v63, %v70
  %v73 = vmul.f32 %v64, %v70
  %v74 = vmul.f32 %v65, %v70
  %v76 = vlaneseq
  %v77 = vshrl.u32 %v76, 7
  %v78 = vsub.s32 0, %v77
  %v79 = vrot.slane %v24, %v78
  %v81 = vadd.f32 %v72, %v79
  %v82 = vadd.f32 %v73, %v79
  %v83 = vadd.f32 %v74, %v79
  %v84 = vld [vmem:[%s3] sm:$0xff]
  %v85 = vld [vmem:[%s3 + $0x8] sm:$0xff]
  %v86 = vld [vmem:[%s3 + $0x10] sm:$0xff]
  %v87 = vld [vmem:[%s3 + $0x18] sm:$0xff]
  %v88 = vld [vmem:[%s4] sm:$0x1]
  %v90 = vlaneseq
  %v91 = vshrl.u32 %v90, 7
  %v92 = vsub.s32 0, %v91
  %v93 = vrot.slane %v88, %v92
  %v96 = vsel %vm25, %v81, 0
  %v99 = vsel %vm25, %v82, 0
  %v102 = vsel %vm25, %v83, 0
  %104 = vmatprep.subr.mxu0 0.0
  %105 = vmatpush1.msra.mxu0 %v84
  %106 = vmatprep.subr.mxu0 0.0
  %107 = vmatpush1.msra.mxu0 %v85
  %108 = vmatprep.subr.mxu0 0.0
  %109 = vmatpush1.msra.mxu0 %v86
  %110 = vmatprep.subr.mxu0 0.0
  %111 = vmatpush1.msra.mxu0 %v87
  %112 = vmatprep.subr.mxu0 0.0
  %113 = vmatpush1.msra.mxu0 0.0
  %114 = vmatprep.subr.mxu0 0.0
  %115 = vmatpush1.msra.mxu0 0.0
  %116 = vmatprep.subr.mxu0 0.0
  %117 = vmatpush1.msra.mxu0 0.0
  %118 = vmatprep.subr.mxu0 0.0
  %119 = vmatpush1.msra.mxu0 0.0
  %120 = vmatprep.subr.mxu0 0.0
  %121 = vmatpush1.msra.mxu0 0.0
  %122 = vmatprep.subr.mxu0 0.0
  %123 = vmatpush1.msra.mxu0 0.0
  %124 = vmatprep.subr.mxu0 0.0
  %125 = vmatpush1.msra.mxu0 0.0
  %126 = vmatprep.subr.mxu0 0.0
  %127 = vmatpush1.msra.mxu0 0.0
  %128 = vmatprep.subr.mxu0 0.0
  %129 = vmatpush1.msra.mxu0 0.0
  %130 = vmatprep.subr.mxu0 0.0
  %131 = vmatpush1.msra.mxu0 0.0
  %132 = vmatprep.subr.mxu0 0.0
  %133 = vmatpush1.msra.mxu0 0.0
  %134 = vmatprep.subr.mxu0 0.0
  %135 = vmatpush1.msra.mxu0 0.0
  %136 = vmatprep.subr.mxu0 0.0
  %137 = vmatpush1.msra.mxu0 0.0
  %138 = vmatprep.subr.mxu0 0.0
  %139 = vmatpush1.msra.mxu0 0.0
  %140 = vmatprep.subr.mxu0 0.0
  %141 = vmatpush1.msra.mxu0 0.0
  %142 = vmatprep.subr.mxu0 0.0
  %143 = vmatpush1.msra.mxu0 0.0
  %144 = vmatprep.subr.mxu0 0.0
  %145 = vmatpush1.msra.mxu0 0.0
  %146 = vmatprep.subr.mxu0 0.0
  %147 = vmatpush1.msra.mxu0 0.0
  %148 = vmatprep.subr.mxu0 0.0
  %149 = vmatpush1.msra.mxu0 0.0
  %150 = vmatprep.subr.mxu0 0.0
  %151 = vmatpush1.msra.mxu0 0.0
  %152 = vmatprep.subr.mxu0 0.0
  %153 = vmatpush1.msra.mxu0 0.0
  %154 = vmatprep.subr.mxu0 0.0
  %155 = vmatpush1.msra.mxu0 0.0
  %156 = vmatprep.subr.mxu0 0.0
  %157 = vmatpush1.msra.mxu0 0.0
  %158 = vmatprep.subr.mxu0 0.0
  %159 = vmatpush1.msra.mxu0 0.0
  %160 = vmatprep.subr.mxu0 0.0
  %161 = vmatpush1.msra.mxu0 0.0
  %162 = vmatprep.subr.mxu0 0.0
  %163 = vmatpush1.msra.mxu0 0.0
  %164 = vmatprep.subr.mxu0 0.0
  %165 = vmatpush1.msra.mxu0 0.0
  %166 = vmatprep.subr.mxu0 0.0
  %167 = vmatpush1.msra.mxu0 0.0
  %168 = vmatprep.mubr.f32.mxu0 0.0
  %169 = vmatmul.mubr.f32.gmra.mrb[0].mxu0 %v96
  %v170 = vpop.f32.mrb[0].mxu0
  %v171 = vadd.f32 %v93, %v170
  %v172 = vpop.f32.mrb[0].mxu0
  %173 = vmatprep.mubr.f32.mxu0 0.0
  %174 = vmatmul.mubr.f32.gmra.mrb[0].mxu0 %v99
  %v175 = vpop.f32.mrb[0].mxu0
  %v176 = vadd.f32 %v93, %v175
  %v177 = vpop.f32.mrb[0].mxu0
  %178 = vmatprep.mubr.f32.mxu0 0.0
  %179 = vmatmul.mubr.f32.gmra.mrb[0].mxu0 %v102
  %v180 = vpop.f32.mrb[0].mxu0
  %v181 = vadd.f32 %v93, %v180
  %v182 = vpop.f32.mrb[0].mxu0
  %183 = vdwg.mxu0
  %v184 = vmul.f32 %v171, -1.702
  %v185 = vmul.f32 %v176, -1.702
  %v186 = vmul.f32 %v181, -1.702
  %v187 = vmul.f32 %v184, 1.442695
  %v188 = vpow.pop %v187
  %v189 = vmul.f32 %v185, 1.442695
  %v190 = vpow.pop %v189
  %v191 = vmul.f32 %v186, 1.442695
  %v192 = vpow.pop %v191
  %v193 = vadd.f32 %v188, 1.0
  %v194 = vadd.f32 %v190, 1.0
  %v195 = vadd.f32 %v192, 1.0
  %v196 = vrcp.pop %v193
  %v197 = vrcp.pop %v194
  %v198 = vrcp.pop %v195
  %v199 = vmul.f32 %v171, %v196
  %v200 = vmul.f32 %v176, %v197
  %v201 = vmul.f32 %v181, %v198
  %202 = vst [vmem:[%s5] sm:$0xff] %v199
  %203 = vst [vmem:[%s5 + $0x8] sm:$0xff] %v200
  %204 = vst [vmem:[%s5 + $0x10] sm:$0xff] %v201
  // Predicated region
  $region22: #{clip_forward.77} parent=0 // pred_check
    _
  $region23: #{clip_forward.77} parent=0 // pred_check_branch
    %206 = sbr.rel (0) target = $region25
  $region24: #{clip_forward.77} parent=0 // pred_region
    _
  $region25: #{clip_forward.77} parent=0 // pred_fallthru
    _
  // Predicated region
  $region26: #{clip_forward.77} parent=0 // pred_check
    _
  $region27: #{clip_forward.77} parent=0 // pred_check_branch
    %208 = sbr.rel (0) target = $region29
  $region28: #{clip_forward.77} parent=0 // pred_region
    _
  $region29: #{clip_forward.77} parent=0 // pred_fallthru
    _

// kernel: clip_forward.75
$region0: #{clip_forward.75}
  #allocation0 [shape = 'u32[]', space=smem, size = 0x4, offset = 0x4, fixed_abs, tag = 'smem constant byte address 0x4 - core index']
  #allocation1 [shape = 'u32[144,128]{1,0:T(1,128)}', space=vmem, size = 0x12000, scoped, tag = 'internal scratch']
  %s0 = inlined_call_operand.vmem [shape: f32[3,8,96], index: 0, kind: input, shape index: {}]
  %s1 = inlined_call_operand.vmem [shape: f32[3,1,8], index: 1, kind: input, shape index: {}]
  %s2 = inlined_call_operand.vmem [shape: f32[3,8,32], index: 2, kind: output, shape index: {}]
  %s3 = sld [smem:[#allocation0]]
  $region41: #{clip_forward.75} parent=0
    _
  %s5 = ssub.s32 1, %s3
  %s6 = scalar_select 0, %s5, %s3
  loop: start=0, step=1, limit=5
  $region2: #{clip_forward.75} parent=0 // loop_pre_header
    _
  $region3: #{clip_forward.75} parent=0 // loop_header
    %s8 = sphi 0, %s12
    %p9 = scmp.ge.s32.totalorder %s8, 5
    %s18 = sphi 0, %s20
    %s21 = sphi 0, %s18
    %s22 = sphi 0, %s21
    %s38 = sphi 0, %s22
    %s44 = sphi 0, %s46
    %s47 = sphi 0, %s44
    %s48 = sphi 0, %s47
    %s64 = sphi 0, %s48
    %s70 = sphi 0, %s72
    %s73 = sphi 0, %s70
    %s74 = sphi 0, %s73
    %s90 = sphi 0, %s74
  $region4: #{clip_forward.75} parent=0 // loop_header_branch
    %11 = sbr.rel (%p9) target = $region8
  $region5: #{clip_forward.75} parent=0 // loop_body
    %s13 = ssub.s32 %s8, 1
    %s14 = ssub.s32 %s8, 2
    %s15 = sadd.s32 %s8, 1
    %s16 = ssub.s32 %s8, %s15
    %p17 = scmp.eq.s32.totalorder %s16, 0
    %s19 = sadd.s32 %s18, 1
    %s20 = scalar_select %p17, %s18, %s19
    %p23 = pneg %p17
    %p24 = scmp.eq.s32.totalorder %s8, 2
    %p25 = por %p23, %p24
    %p26 = scmp.ne.s32.totalorder %s18, %s21
    %p27 = scmp.eq.s32.totalorder %s8, 0
    %p28 = por %p26, %p27
    %p29 = scmp.ne.s32.totalorder %s18, %s21
    %p30 = scmp.eq.s32.totalorder %s13, 2
    %p31 = por %p29, %p30
    %p32 = scmp.ne.s32.totalorder %s21, %s22
    %p33 = scmp.eq.s32.totalorder %s13, 0
    %p34 = por %p32, %p33
    %p35 = scmp.ne.s32.totalorder %s21, %s22
    %p36 = scmp.eq.s32.totalorder %s14, 2
    %p37 = por %p35, %p36
    %p39 = scmp.ne.s32.totalorder %s22, %s38
    %p40 = scmp.eq.s32.totalorder %s14, 0
    %p41 = por %p39, %p40
    %s42 = ssub.s32 %s8, %s15
    %p43 = scmp.eq.s32.totalorder %s42, 0
    %s45 = sadd.s32 %s44, 1
    %s46 = scalar_select %p43, %s44, %s45
    %p49 = pneg %p43
    %p50 = scmp.eq.s32.totalorder %s8, 2
    %p51 = por %p49, %p50
    %p52 = scmp.ne.s32.totalorder %s44, %s47
    %p53 = scmp.eq.s32.totalorder %s8, 0
    %p54 = por %p52, %p53
    %p55 = scmp.ne.s32.totalorder %s44, %s47
    %p56 = scmp.eq.s32.totalorder %s13, 2
    %p57 = por %p55, %p56
    %p58 = scmp.ne.s32.totalorder %s47, %s48
    %p59 = scmp.eq.s32.totalorder %s13, 0
    %p60 = por %p58, %p59
    %p61 = scmp.ne.s32.totalorder %s47, %s48
    %p62 = scmp.eq.s32.totalorder %s14, 2
    %p63 = por %p61, %p62
    %p65 = scmp.ne.s32.totalorder %s48, %s64
    %p66 = scmp.eq.s32.totalorder %s14, 0
    %p67 = por %p65, %p66
    %s68 = ssub.s32 %s8, %s15
    %p69 = scmp.eq.s32.totalorder %s68, 0
    %s71 = sadd.s32 %s70, 1
    %s72 = scalar_select %p69, %s70, %s71
    %p75 = pneg %p69
    %p76 = scmp.eq.s32.totalorder %s8, 2
    %p77 = por %p75, %p76
    %p78 = scmp.ne.s32.totalorder %s70, %s73
    %p79 = scmp.eq.s32.totalorder %s8, 0
    %p80 = por %p78, %p79
    %p81 = scmp.ne.s32.totalorder %s70, %s73
    %p82 = scmp.eq.s32.totalorder %s13, 2
    %p83 = por %p81, %p82
    %p84 = scmp.ne.s32.totalorder %s73, %s74
    %p85 = scmp.eq.s32.totalorder %s13, 0
    %p86 = por %p84, %p85
    %p87 = scmp.ne.s32.totalorder %s73, %s74
    %p88 = scmp.eq.s32.totalorder %s14, 2
    %p89 = por %p87, %p88
    %p91 = scmp.ne.s32.totalorder %s74, %s90
    %p92 = scmp.eq.s32.totalorder %s14, 0
    %p93 = por %p91, %p92
    %p94 = scmp.le.s32.totalorder 1, %s8
    %p95 = scmp.lt.s32.totalorder %s8, 4
    %p96 = pnand %p94, %p95
    %p97 = pneg %p96
    // Predicated region
    $region9: #{clip_forward.75} parent=5 // pred_check
      _
    $region10: #{clip_forward.75} parent=5 // pred_check_branch
      %99 = sbr.rel (%p96) target = $region12
    $region11: #{clip_forward.75} parent=5 // pred_region
      %s100 = ssub.s32 %s8, 1
    $region12: #{clip_forward.75} parent=5 // pred_fallthru
      _
    %p101 = scmp.lt.s32.totalorder %s8, 3
    // Predicated region
    $region13: #{clip_forward.75} parent=5 // pred_check
      %p102 = pneg %p101
    $region14: #{clip_forward.75} parent=5 // pred_check_branch
      %104 = sbr.rel (%p102) target = $region16
    $region15: #{clip_forward.75} parent=5 // pred_region
      // Predicated region
      $region17: #{clip_forward.75} parent=15 // pred_check
        %p105 = pneg %p28
      $region18: #{clip_forward.75} parent=15 // pred_check_branch
        %107 = sbr.rel (%p105) target = $region20
      $region19: #{clip_forward.75} parent=15 // pred_region
        %p108 = scmp.lt.s32.totalorder %s8, 2
        %s109 = scalar_select %p108, %s8, 2
        %s110 = smul.addr %s109, 8
        %s111 = scalar_lea.vmem %s0, %s110
      $region20: #{clip_forward.75} parent=15 // pred_fallthru
        _
      // Predicated region
      $region21: #{clip_forward.75} parent=15 // pred_check
        %p112 = pneg %p54
      $region22: #{clip_forward.75} parent=15 // pred_check_branch
        %114 = sbr.rel (%p112) target = $region24
      $region23: #{clip_forward.75} parent=15 // pred_region
        %p115 = scmp.lt.s32.totalorder %s8, 2
        %s116 = scalar_select %p115, %s8, 2
        %s117 = scalar_lea.vmem %s1, %s116
      $region24: #{clip_forward.75} parent=15 // pred_fallthru
        _
    $region16: #{clip_forward.75} parent=5 // pred_fallthru
      _
    %p118 = scmp.le.s32.totalorder 1, %s8
    %p119 = scmp.lt.s32.totalorder %s8, 4
    %p120 = pnand %p118, %p119
    %p121 = pneg %p120
    // Predicated region
    $region25: #{clip_forward.75} parent=5 // pred_check
      _
    $region26: #{clip_forward.75} parent=5 // pred_check_branch
      %123 = sbr.rel (%p120) target = $region28
    $region27: #{clip_forward.75} parent=5 // pred_region
      %s124 = ssub.s32 %s8, 1
      %p125 = scmp.lt.s32.totalorder %s13, 2
      %s126 = scalar_select %p125, %s13, 2
      %s127 = smul.addr %s126, 8
      %s128 = scalar_lea.vmem %s0, %s127
      %p129 = pneg %p34
      %p130 = pneg %p31
      %p131 = scmp.lt.s32.totalorder %s13, 2
      %s132 = scalar_select %p131, %s13, 2
      %s133 = scalar_lea.vmem %s1, %s132
      %p134 = pneg %p60
      %p135 = pneg %p57
      %p136 = pneg %p86
      %p137 = pneg %p83
      %p138 = scmp.lt.s32.totalorder %s13, 2
      %s139 = scalar_select %p138, %s13, 2
      %s140 = smul.addr %s139, 8
      %s141 = scalar_lea.vmem %s2, %s140
      %p142 = scmp.lt.s32.totalorder %s13, 2
      %s143 = scalar_select %p142, %s13, 2
      %s144 = smul.addr %s143, 8
      %s145 = scalar_lea.vmem %s0, %s144
      %p146 = scmp.lt.s32.totalorder %s13, 2
      %s147 = scalar_select %p146, %s13, 2
      %s148 = scalar_lea.vmem %s1, %s147
      %p149 = scmp.lt.s32.totalorder %s13, 2
      %s150 = scalar_select %p149, %s13, 2
      %s151 = smul.addr %s150, 8
      %s152 = scalar_lea.vmem %s2, %s151
      %v153 = vld [vmem:[%s145] sm:$0xff]
      %v154 = vld [vmem:[%s148] sm:$0x1]
      %v155 = vmul.f32 %v153, 0.35355338
      %v157 = vlaneseq
      %v158 = vshrl.u32 %v157, 7
      %v159 = vsub.s32 0, %v158
      %v160 = vrot.slane %v154, %v159
      %163 = vrot.lane.b32.xlu0 %v153, 96
      %v164 = vpop.permute.xlu0 %163
      %vm165 = vcmask 64512
      %v167 = vsel %vm165, %v155, 0
      %v169 = vsel %vm165, %v164, 0
      %171 = vmatprep.subr.mxu0 0.0
      %172 = vmatpush1.xpose.msra.mxu0 %v169
      %173 = vmatprep.subr.mxu0 0.0
      %174 = vmatpush1.xpose.msra.mxu0 0.0
      %175 = vmatprep.subr.mxu0 0.0
      %176 = vmatpush1.xpose.msra.mxu0 0.0
      %177 = vmatprep.subr.mxu0 0.0
      %178 = vmatpush1.xpose.msra.mxu0 0.0
      %179 = vmatprep.subr.mxu0 0.0
      %180 = vmatpush1.xpose.msra.mxu0 0.0
      %181 = vmatprep.subr.mxu0 0.0
      %182 = vmatpush1.xpose.msra.mxu0 0.0
      %183 = vmatprep.subr.mxu0 0.0
      %184 = vmatpush1.xpose.msra.mxu0 0.0
      %185 = vmatprep.subr.mxu0 0.0
      %186 = vmatpush1.xpose.msra.mxu0 0.0
      %187 = vmatprep.subr.mxu0 0.0
      %188 = vmatpush1.xpose.msra.mxu0 0.0
      %189 = vmatprep.subr.mxu0 0.0
      %190 = vmatpush1.xpose.msra.mxu0 0.0
      %191 = vmatprep.subr.mxu0 0.0
      %192 = vmatpush1.xpose.msra.mxu0 0.0
      %193 = vmatprep.subr.mxu0 0.0
      %194 = vmatpush1.xpose.msra.mxu0 0.0
      %195 = vmatprep.subr.mxu0 0.0
      %196 = vmatpush1.xpose.msra.mxu0 0.0
      %197 = vmatprep.subr.mxu0 0.0
      %198 = vmatpush1.xpose.msra.mxu0 0.0
      %199 = vmatprep.subr.mxu0 0.0
      %200 = vmatpush1.xpose.msra.mxu0 0.0
      %201 = vmatprep.subr.mxu0 0.0
      %202 = vmatpush1.xpose.msra.mxu0 0.0
      %203 = vmatprep.subr.mxu0 0.0
      %204 = vmatpush1.xpose.msra.mxu0 0.0
      %205 = vmatprep.subr.mxu0 0.0
      %206 = vmatpush1.xpose.msra.mxu0 0.0
      %207 = vmatprep.subr.mxu0 0.0
      %208 = vmatpush1.xpose.msra.mxu0 0.0
      %209 = vmatprep.subr.mxu0 0.0
      %210 = vmatpush1.xpose.msra.mxu0 0.0
      %211 = vmatprep.subr.mxu0 0.0
      %212 = vmatpush1.xpose.msra.mxu0 0.0
      %213 = vmatprep.subr.mxu0 0.0
      %214 = vmatpush1.xpose.msra.mxu0 0.0
      %215 = vmatprep.subr.mxu0 0.0
      %216 = vmatpush1.xpose.msra.mxu0 0.0
      %217 = vmatprep.subr.mxu0 0.0
      %218 = vmatpush1.xpose.msra.mxu0 0.0
      %219 = vmatprep.subr.mxu0 0.0
      %220 = vmatpush1.xpose.msra.mxu0 0.0
      %221 = vmatprep.subr.mxu0 0.0
      %222 = vmatpush1.xpose.msra.mxu0 0.0
      %223 = vmatprep.subr.mxu0 0.0
      %224 = vmatpush1.xpose.msra.mxu0 0.0
      %225 = vmatprep.subr.mxu0 0.0
      %226 = vmatpush1.xpose.msra.mxu0 0.0
      %227 = vmatprep.subr.mxu0 0.0
      %228 = vmatpush1.xpose.msra.mxu0 0.0
      %229 = vmatprep.subr.mxu0 0.0
      %230 = vmatpush1.xpose.msra.mxu0 0.0
      %231 = vmatprep.subr.mxu0 0.0
      %232 = vmatpush1.xpose.msra.mxu0 0.0
      %233 = vmatprep.subr.mxu0 0.0
      %234 = vmatpush1.xpose.msra.mxu0 0.0
      %235 = vmatprep.mubr.f32.mxu0 0.0
      %236 = vmatmul.mubr.f32.gmra.mrb[0].mxu0 %v167
      %v237 = vpop.f32.mrb[0].mxu0
      %v238 = vadd.f32 %v160, %v237
      %v239 = vpop.f32.mrb[0].mxu0
      %240 = vdwg.mxu0
      %v241 = vsel %vm165, %v238, -inf
      %242 = vmax.xlane.f32.xlu0 %v241
      %v243 = vpop.xlane.xlu0 %242
      %v244 = vsub.f32 %v238, %v243
      %v245 = vmul.f32 %v244, 1.442695
      %v246 = vpow.pop %v245
      %v247 = vsel %vm165, %v246, 0.0
      %248 = vadd.xlane.f32.xlu0 %v247
      %v249 = vpop.xlane.xlu0 %248
      %v250 = vrcp.pop %v249
      %v251 = vmul.f32 %v246, %v250
      %252 = vrot.lane.b32.xlu0 %v153, 64
      %v253 = vpop.permute.xlu0 %252
      %v256 = vsel %vm165, %v251, 0
      %258 = vmatprep.subr.mxu0 0.0
      %259 = vmatpush1.msra.mxu0 %v253
      %260 = vmatprep.subr.mxu0 0.0
      %261 = vmatpush1.msra.mxu0 0.0
      %262 = vmatprep.subr.mxu0 0.0
      %263 = vmatpush1.msra.mxu0 0.0
      %264 = vmatprep.subr.mxu0 0.0
      %265 = vmatpush1.msra.mxu0 0.0
      %266 = vmatprep.subr.mxu0 0.0
      %267 = vmatpush1.msra.mxu0 0.0
      %268 = vmatprep.subr.mxu0 0.0
      %269 = vmatpush1.msra.mxu0 0.0
      %270 = vmatprep.subr.mxu0 0.0
      %271 = vmatpush1.msra.mxu0 0.0
      %272 = vmatprep.subr.mxu0 0.0
      %273 = vmatpush1.msra.mxu0 0.0
      %274 = vmatprep.subr.mxu0 0.0
      %275 = vmatpush1.msra.mxu0 0.0
      %276 = vmatprep.subr.mxu0 0.0
      %277 = vmatpush1.msra.mxu0 0.0
      %278 = vmatprep.subr.mxu0 0.0
      %279 = vmatpush1.msra.mxu0 0.0
      %280 = vmatprep.subr.mxu0 0.0
      %281 = vmatpush1.msra.mxu0 0.0
      %282 = vmatprep.subr.mxu0 0.0
      %283 = vmatpush1.msra.mxu0 0.0
      %284 = vmatprep.subr.mxu0 0.0
      %285 = vmatpush1.msra.mxu0 0.0
      %286 = vmatprep.subr.mxu0 0.0
      %287 = vmatpush1.msra.mxu0 0.0
      %288 = vmatprep.subr.mxu0 0.0
      %289 = vmatpush1.msra.mxu0 0.0
      %290 = vmatprep.subr.mxu0 0.0
      %291 = vmatpush1.msra.mxu0 0.0
      %292 = vmatprep.subr.mxu0 0.0
      %293 = vmatpush1.msra.mxu0 0.0
      %294 = vmatprep.subr.mxu0 0.0
      %295 = vmatpush1.msra.mxu0 0.0
      %296 = vmatprep.subr.mxu0 0.0
      %297 = vmatpush1.msra.mxu0 0.0
      %298 = vmatprep.subr.mxu0 0.0
      %299 = vmatpush1.msra.mxu0 0.0
      %300 = vmatprep.subr.mxu0 0.0
      %301 = vmatpush1.msra.mxu0 0.0
      %302 = vmatprep.subr.mxu0 0.0
      %303 = vmatpush1.msra.mxu0 0.0
      %304 = vmatprep.subr.mxu0 0.0
      %305 = vmatpush1.msra.mxu0 0.0
      %306 = vmatprep.subr.mxu0 0.0
      %307 = vmatpush1.msra.mxu0 0.0
      %308 = vmatprep.subr.mxu0 0.0
      %309 = vmatpush1.msra.mxu0 0.0
      %310 = vmatprep.subr.mxu0 0.0
      %311 = vmatpush1.msra.mxu0 0.0
      %312 = vmatprep.subr.mxu0 0.0
      %313 = vmatpush1.msra.mxu0 0.0
      %314 = vmatprep.subr.mxu0 0.0
      %315 = vmatpush1.msra.mxu0 0.0
      %316 = vmatprep.subr.mxu0 0.0
      %317 = vmatpush1.msra.mxu0 0.0
      %318 = vmatprep.subr.mxu0 0.0
      %319 = vmatpush1.msra.mxu0 0.0
      %320 = vmatprep.subr.mxu0 0.0
      %321 = vmatpush1.msra.mxu0 0.0
      %322 = vmatprep.mubr.f32.mxu0 0.0
      %323 = vmatmul.mubr.f32.gmra.mrb[0].mxu0 %v256
      %v324 = vpop.f32.mrb[0].mxu0
      %v325 = vadd.f32 0.0, %v324
      %v326 = vpop.f32.mrb[0].mxu0
      %327 = vdwg.mxu0
      %328 = vrot.lane.b32.xlu0 %v155, 120
      %v329 = vpop.permute.xlu0 %328
      %330 = vrot.lane.b32.xlu0 %v153, 88
      %v331 = vpop.permute.xlu0 %330
      %v332 = vsel %vm165, %v329, 0
      %v334 = vsel %vm165, %v331, 0
      %336 = vmatprep.subr.mxu0 0.0
      %337 = vmatpush1.xpose.msra.mxu0 %v334
      %338 = vmatprep.subr.mxu0 0.0
      %339 = vmatpush1.xpose.msra.mxu0 0.0
      %340 = vmatprep.subr.mxu0 0.0
      %341 = vmatpush1.xpose.msra.mxu0 0.0
      %342 = vmatprep.subr.mxu0 0.0
      %343 = vmatpush1.xpose.msra.mxu0 0.0
      %344 = vmatprep.subr.mxu0 0.0
      %345 = vmatpush1.xpose.msra.mxu0 0.0
      %346 = vmatprep.subr.mxu0 0.0
      %347 = vmatpush1.xpose.msra.mxu0 0.0
      %348 = vmatprep.subr.mxu0 0.0
      %349 = vmatpush1.xpose.msra.mxu0 0.0
      %350 = vmatprep.subr.mxu0 0.0
      %351 = vmatpush1.xpose.msra.mxu0 0.0
      %352 = vmatprep.subr.mxu0 0.0
      %353 = vmatpush1.xpose.msra.mxu0 0.0
      %354 = vmatprep.subr.mxu0 0.0
      %355 = vmatpush1.xpose.msra.mxu0 0.0
      %356 = vmatprep.subr.mxu0 0.0
      %357 = vmatpush1.xpose.msra.mxu0 0.0
      %358 = vmatprep.subr.mxu0 0.0
      %359 = vmatpush1.xpose.msra.mxu0 0.0
      %360 = vmatprep.subr.mxu0 0.0
      %361 = vmatpush1.xpose.msra.mxu0 0.0
      %362 = vmatprep.subr.mxu0 0.0
      %363 = vmatpush1.xpose.msra.mxu0 0.0
      %364 = vmatprep.subr.mxu0 0.0
      %365 = vmatpush1.xpose.msra.mxu0 0.0
      %366 = vmatprep.subr.mxu0 0.0
      %367 = vmatpush1.xpose.msra.mxu0 0.0
      %368 = vmatprep.subr.mxu0 0.0
      %369 = vmatpush1.xpose.msra.mxu0 0.0
      %370 = vmatprep.subr.mxu0 0.0
      %371 = vmatpush1.xpose.msra.mxu0 0.0
      %372 = vmatprep.subr.mxu0 0.0
      %373 = vmatpush1.xpose.msra.mxu0 0.0
      %374 = vmatprep.subr.mxu0 0.0
      %375 = vmatpush1.xpose.msra.mxu0 0.0
      %376 = vmatprep.subr.mxu0 0.0
      %377 = vmatpush1.xpose.msra.mxu0 0.0
      %378 = vmatprep.subr.mxu0 0.0
      %379 = vmatpush1.xpose.msra.mxu0 0.0
      %380 = vmatprep.subr.mxu0 0.0
      %381 = vmatpush1.xpose.msra.mxu0 0.0
      %382 = vmatprep.subr.mxu0 0.0
      %383 = vmatpush1.xpose.msra.mxu0 0.0
      %384 = vmatprep.subr.mxu0 0.0
      %385 = vmatpush1.xpose.msra.mxu0 0.0
      %386 = vmatprep.subr.mxu0 0.0
      %387 = vmatpush1.xpose.msra.mxu0 0.0
      %388 = vmatprep.subr.mxu0 0.0
      %389 = vmatpush1.xpose.msra.mxu0 0.0
      %390 = vmatprep.subr.mxu0 0.0
      %391 = vmatpush1.xpose.msra.mxu0 0.0
      %392 = vmatprep.subr.mxu0 0.0
      %393 = vmatpush1.xpose.msra.mxu0 0.0
      %394 = vmatprep.subr.mxu0 0.0
      %395 = vmatpush1.xpose.msra.mxu0 0.0
      %396 = vmatprep.subr.mxu0 0.0
      %397 = vmatpush1.xpose.msra.mxu0 0.0
      %398 = vmatprep.subr.mxu0 0.0
      %399 = vmatpush1.xpose.msra.mxu0 0.0
      %400 = vmatprep.mubr.f32.mxu0 0.0
      %401 = vmatmul.mubr.f32.gmra.mrb[0].mxu0 %v332
      %v402 = vpop.f32.mrb[0].mxu0
      %v403 = vadd.f32 %v160, %v402
      %v404 = vpop.f32.mrb[0].mxu0
      %405 = vdwg.mxu0
      %v406 = vsel %vm165, %v403, -inf
      %407 = vmax.xlane.f32.xlu0 %v406
      %v408 = vpop.xlane.xlu0 %407
      %v409 = vsub.f32 %v403, %v408
      %v410 = vmul.f32 %v409, 1.442695
      %v411 = vpow.pop %v410
      %v412 = vsel %vm165, %v411, 0.0
      %413 = vadd.xlane.f32.xlu0 %v412
      %v414 = vpop.xlane.xlu0 %413
      %v415 = vrcp.pop %v414
      %v416 = vmul.f32 %v411, %v415
      %417 = vrot.lane.b32.xlu0 %v153, 56
      %v418 = vpop.permute.xlu0 %417
      %v421 = vsel %vm165, %v416, 0
      %423 = vmatprep.subr.mxu0 0.0
      %424 = vmatpush1.msra.mxu0 %v418
      %425 = vmatprep.subr.mxu0 0.0
      %426 = vmatpush1.msra.mxu0 0.0
      %427 = vmatprep.subr.mxu0 0.0
      %428 = vmatpush1.msra.mxu0 0.0
      %429 = vmatprep.subr.mxu0 0.0
      %430 = vmatpush1.msra.mxu0 0.0
      %431 = vmatprep.subr.mxu0 0.0
      %432 = vmatpush1.msra.mxu0 0.0
      %433 = vmatprep.subr.mxu0 0.0
      %434 = vmatpush1.msra.mxu0 0.0
      %435 = vmatprep.subr.mxu0 0.0
      %436 = vmatpush1.msra.mxu0 0.0
      %437 = vmatprep.subr.mxu0 0.0
      %438 = vmatpush1.msra.mxu0 0.0
      %439 = vmatprep.subr.mxu0 0.0
      %440 = vmatpush1.msra.mxu0 0.0
      %441 = vmatprep.subr.mxu0 0.0
      %442 = vmatpush1.msra.mxu0 0.0
      %443 = vmatprep.subr.mxu0 0.0
      %444 = vmatpush1.msra.mxu0 0.0
      %445 = vmatprep.subr.mxu0 0.0
      %446 = vmatpush1.msra.mxu0 0.0
      %447 = vmatprep.subr.mxu0 0.0
      %448 = vmatpush1.msra.mxu0 0.0
      %449 = vmatprep.subr.mxu0 0.0
      %450 = vmatpush1.msra.mxu0 0.0
      %451 = vmatprep.subr.mxu0 0.0
      %452 = vmatpush1.msra.mxu0 0.0
      %453 = vmatprep.subr.mxu0 0.0
      %454 = vmatpush1.msra.mxu0 0.0
      %455 = vmatprep.subr.mxu0 0.0
      %456 = vmatpush1.msra.mxu0 0.0
      %457 = vmatprep.subr.mxu0 0.0
      %458 = vmatpush1.msra.mxu0 0.0
      %459 = vmatprep.subr.mxu0 0.0
      %460 = vmatpush1.msra.mxu0 0.0
      %461 = vmatprep.subr.mxu0 0.0
      %462 = vmatpush1.msra.mxu0 0.0
      %463 = vmatprep.subr.mxu0 0.0
      %464 = vmatpush1.msra.mxu0 0.0
      %465 = vmatprep.subr.mxu0 0.0
      %466 = vmatpush1.msra.mxu0 0.0
      %467 = vmatprep.subr.mxu0 0.0
      %468 = vmatpush1.msra.mxu0 0.0
      %469 = vmatprep.subr.mxu0 0.0
      %470 = vmatpush1.msra.mxu0 0.0
      %471 = vmatprep.subr.mxu0 0.0
      %472 = vmatpush1.msra.mxu0 0.0
      %473 = vmatprep.subr.mxu0 0.0
      %474 = vmatpush1.msra.mxu0 0.0
      %475 = vmatprep.subr.mxu0 0.0
      %476 = vmatpush1.msra.mxu0 0.0
      %477 = vmatprep.subr.mxu0 0.0
      %478 = vmatpush1.msra.mxu0 0.0
      %479 = vmatprep.subr.mxu0 0.0
      %480 = vmatpush1.msra.mxu0 0.0
      %481 = vmatprep.subr.mxu0 0.0
      %482 = vmatpush1.msra.mxu0 0.0
      %483 = vmatprep.subr.mxu0 0.0
      %484 = vmatpush1.msra.mxu0 0.0
      %485 = vmatprep.subr.mxu0 0.0
      %486 = vmatpush1.msra.mxu0 0.0
      %487 = vmatprep.mubr.f32.mxu0 0.0
      %488 = vmatmul.mubr.f32.gmra.mrb[0].mxu0 %v421
      %v489 = vpop.f32.mrb[0].mxu0
      %v490 = vadd.f32 0.0, %v489
      %v491 = vpop.f32.mrb[0].mxu0
      %492 = vdwg.mxu0
      %493 = vrot.lane.b32.xlu0 %v155, 112
      %v494 = vpop.permute.xlu0 %493
      %495 = vrot.lane.b32.xlu0 %v153, 80
      %v496 = vpop.permute.xlu0 %495
      %v497 = vsel %vm165, %v494, 0
      %v499 = vsel %vm165, %v496, 0
      %501 = vmatprep.subr.mxu0 0.0
      %502 = vmatpush1.xpose.msra.mxu0 %v499
      %503 = vmatprep.subr.mxu0 0.0
      %504 = vmatpush1.xpose.msra.mxu0 0.0
      %505 = vmatprep.subr.mxu0 0.0
      %506 = vmatpush1.xpose.msra.mxu0 0.0
      %507 = vmatprep.subr.mxu0 0.0
      %508 = vmatpush1.xpose.msra.mxu0 0.0
      %509 = vmatprep.subr.mxu0 0.0
      %510 = vmatpush1.xpose.msra.mxu0 0.0
      %511 = vmatprep.subr.mxu0 0.0
      %512 = vmatpush1.xpose.msra.mxu0 0.0
      %513 = vmatprep.subr.mxu0 0.0
      %514 = vmatpush1.xpose.msra.mxu0 0.0
      %515 = vmatprep.subr.mxu0 0.0
      %516 = vmatpush1.xpose.msra.mxu0 0.0
      %517 = vmatprep.subr.mxu0 0.0
      %518 = vmatpush1.xpose.msra.mxu0 0.0
      %519 = vmatprep.subr.mxu0 0.0
      %520 = vmatpush1.xpose.msra.mxu0 0.0
      %521 = vmatprep.subr.mxu0 0.0
      %522 = vmatpush1.xpose.msra.mxu0 0.0
      %523 = vmatprep.subr.mxu0 0.0
      %524 = vmatpush1.xpose.msra.mxu0 0.0
      %525 = vmatprep.subr.mxu0 0.0
      %526 = vmatpush1.xpose.msra.mxu0 0.0
      %527 = vmatprep.subr.mxu0 0.0
      %528 = vmatpush1.xpose.msra.mxu0 0.0
      %529 = vmatprep.subr.mxu0 0.0
      %530 = vmatpush1.xpose.msra.mxu0 0.0
      %531 = vmatprep.subr.mxu0 0.0
      %532 = vmatpush1.xpose.msra.mxu0 0.0
      %533 = vmatprep.subr.mxu0 0.0
      %534 = vmatpush1.xpose.msra.mxu0 0.0
      %535 = vmatprep.subr.mxu0 0.0
      %536 = vmatpush1.xpose.msra.mxu0 0.0
      %537 = vmatprep.subr.mxu0 0.0
      %538 = vmatpush1.xpose.msra.mxu0 0.0
      %539 = vmatprep.subr.mxu0 0.0
      %540 = vmatpush1.xpose.msra.mxu0 0.0
      %541 = vmatprep.subr.mxu0 0.0
      %542 = vmatpush1.xpose.msra.mxu0 0.0
      %543 = vmatprep.subr.mxu0 0.0
      %544 = vmatpush1.xpose.msra.mxu0 0.0
      %545 = vmatprep.subr.mxu0 0.0
      %546 = vmatpush1.xpose.msra.mxu0 0.0
      %547 = vmatprep.subr.mxu0 0.0
      %548 = vmatpush1.xpose.msra.mxu0 0.0
      %549 = vmatprep.subr.mxu0 0.0
      %550 = vmatpush1.xpose.msra.mxu0 0.0
      %551 = vmatprep.subr.mxu0 0.0
      %552 = vmatpush1.xpose.msra.mxu0 0.0
      %553 = vmatprep.subr.mxu0 0.0
      %554 = vmatpush1.xpose.msra.mxu0 0.0
      %555 = vmatprep.subr.mxu0 0.0
      %556 = vmatpush1.xpose.msra.mxu0 0.0
      %557 = vmatprep.subr.mxu0 0.0
      %558 = vmatpush1.xpose.msra.mxu0 0.0
      %559 = vmatprep.subr.mxu0 0.0
      %560 = vmatpush1.xpose.msra.mxu0 0.0
      %561 = vmatprep.subr.mxu0 0.0
      %562 = vmatpush1.xpose.msra.mxu0 0.0
      %563 = vmatprep.subr.mxu0 0.0
      %564 = vmatpush1.xpose.msra.mxu0 0.0
      %565 = vmatprep.mubr.f32.mxu0 0.0
      %566 = vmatmul.mubr.f32.gmra.mrb[0].mxu0 %v497
      %v567 = vpop.f32.mrb[0].mxu0
      %v568 = vadd.f32 %v160, %v567
      %v569 = vpop.f32.mrb[0].mxu0
      %570 = vdwg.mxu0
      %v571 = vsel %vm165, %v568, -inf
      %572 = vmax.xlane.f32.xlu0 %v571
      %v573 = vpop.xlane.xlu0 %572
      %v574 = vsub.f32 %v568, %v573
      %v575 = vmul.f32 %v574, 1.442695
      %v576 = vpow.pop %v575
      %v577 = vsel %vm165, %v576, 0.0
      %578 = vadd.xlane.f32.xlu0 %v577
      %v579 = vpop.xlane.xlu0 %578
      %v580 = vrcp.pop %v579
      %v581 = vmul.f32 %v576, %v580
      %582 = vrot.lane.b32.xlu0 %v153, 48
      %v583 = vpop.permute.xlu0 %582
      %v586 = vsel %vm165, %v581, 0
      %588 = vmatprep.subr.mxu0 0.0
      %589 = vmatpush1.msra.mxu0 %v583
      %590 = vmatprep.subr.mxu0 0.0
      %591 = vmatpush1.msra.mxu0 0.0
      %592 = vmatprep.subr.mxu0 0.0
      %593 = vmatpush1.msra.mxu0 0.0
      %594 = vmatprep.subr.mxu0 0.0
      %595 = vmatpush1.msra.mxu0 0.0
      %596 = vmatprep.subr.mxu0 0.0
      %597 = vmatpush1.msra.mxu0 0.0
      %598 = vmatprep.subr.mxu0 0.0
      %599 = vmatpush1.msra.mxu0 0.0
      %600 = vmatprep.subr.mxu0 0.0
      %601 = vmatpush1.msra.mxu0 0.0
      %602 = vmatprep.subr.mxu0 0.0
      %603 = vmatpush1.msra.mxu0 0.0
      %604 = vmatprep.subr.mxu0 0.0
      %605 = vmatpush1.msra.mxu0 0.0
      %606 = vmatprep.subr.mxu0 0.0
      %607 = vmatpush1.msra.mxu0 0.0
      %608 = vmatprep.subr.mxu0 0.0
      %609 = vmatpush1.msra.mxu0 0.0
      %610 = vmatprep.subr.mxu0 0.0
      %611 = vmatpush1.msra.mxu0 0.0
      %612 = vmatprep.subr.mxu0 0.0
      %613 = vmatpush1.msra.mxu0 0.0
      %614 = vmatprep.subr.mxu0 0.0
      %615 = vmatpush1.msra.mxu0 0.0
      %616 = vmatprep.subr.mxu0 0.0
      %617 = vmatpush1.msra.mxu0 0.0
      %618 = vmatprep.subr.mxu0 0.0
      %619 = vmatpush1.msra.mxu0 0.0
      %620 = vmatprep.subr.mxu0 0.0
      %621 = vmatpush1.msra.mxu0 0.0
      %622 = vmatprep.subr.mxu0 0.0
      %623 = vmatpush1.msra.mxu0 0.0
      %624 = vmatprep.subr.mxu0 0.0
      %625 = vmatpush1.msra.mxu0 0.0
      %626 = vmatprep.subr.mxu0 0.0
      %627 = vmatpush1.msra.mxu0 0.0
      %628 = vmatprep.subr.mxu0 0.0
      %629 = vmatpush1.msra.mxu0 0.0
      %630 = vmatprep.subr.mxu0 0.0
      %631 = vmatpush1.msra.mxu0 0.0
      %632 = vmatprep.subr.mxu0 0.0
      %633 = vmatpush1.msra.mxu0 0.0
      %634 = vmatprep.subr.mxu0 0.0
      %635 = vmatpush1.msra.mxu0 0.0
      %636 = vmatprep.subr.mxu0 0.0
      %637 = vmatpush1.msra.mxu0 0.0
      %638 = vmatprep.subr.mxu0 0.0
      %639 = vmatpush1.msra.mxu0 0.0
      %640 = vmatprep.subr.mxu0 0.0
      %641 = vmatpush1.msra.mxu0 0.0
      %642 = vmatprep.subr.mxu0 0.0
      %643 = vmatpush1.msra.mxu0 0.0
      %644 = vmatprep.subr.mxu0 0.0
      %645 = vmatpush1.msra.mxu0 0.0
      %646 = vmatprep.subr.mxu0 0.0
      %647 = vmatpush1.msra.mxu0 0.0
      %648 = vmatprep.subr.mxu0 0.0
      %649 = vmatpush1.msra.mxu0 0.0
      %650 = vmatprep.subr.mxu0 0.0
      %651 = vmatpush1.msra.mxu0 0.0
      %652 = vmatprep.mubr.f32.mxu0 0.0
      %653 = vmatmul.mubr.f32.gmra.mrb[0].mxu0 %v586
      %v654 = vpop.f32.mrb[0].mxu0
      %v655 = vadd.f32 0.0, %v654
      %v656 = vpop.f32.mrb[0].mxu0
      %657 = vdwg.mxu0
      %658 = vrot.lane.b32.xlu0 %v155, 104
      %v659 = vpop.permute.xlu0 %658
      %660 = vrot.lane.b32.xlu0 %v153, 72
      %v661 = vpop.permute.xlu0 %660
      %v662 = vsel %vm165, %v659, 0
      %v664 = vsel %vm165, %v661, 0
      %666 = vmatprep.subr.mxu0 0.0
      %667 = vmatpush1.xpose.msra.mxu0 %v664
      %668 = vmatprep.subr.mxu0 0.0
      %669 = vmatpush1.xpose.msra.mxu0 0.0
      %670 = vmatprep.subr.mxu0 0.0
      %671 = vmatpush1.xpose.msra.mxu0 0.0
      %672 = vmatprep.subr.mxu0 0.0
      %673 = vmatpush1.xpose.msra.mxu0 0.0
      %674 = vmatprep.subr.mxu0 0.0
      %675 = vmatpush1.xpose.msra.mxu0 0.0
      %676 = vmatprep.subr.mxu0 0.0
      %677 = vmatpush1.xpose.msra.mxu0 0.0
      %678 = vmatprep.subr.mxu0 0.0
      %679 = vmatpush1.xpose.msra.mxu0 0.0
      %680 = vmatprep.subr.mxu0 0.0
      %681 = vmatpush1.xpose.msra.mxu0 0.0
      %682 = vmatprep.subr.mxu0 0.0
      %683 = vmatpush1.xpose.msra.mxu0 0.0
      %684 = vmatprep.subr.mxu0 0.0
      %685 = vmatpush1.xpose.msra.mxu0 0.0
      %686 = vmatprep.subr.mxu0 0.0
      %687 = vmatpush1.xpose.msra.mxu0 0.0
      %688 = vmatprep.subr.mxu0 0.0
      %689 = vmatpush1.xpose.msra.mxu0 0.0
      %690 = vmatprep.subr.mxu0 0.0
      %691 = vmatpush1.xpose.msra.mxu0 0.0
      %692 = vmatprep.subr.mxu0 0.0
      %693 = vmatpush1.xpose.msra.mxu0 0.0
      %694 = vmatprep.subr.mxu0 0.0
      %695 = vmatpush1.xpose.msra.mxu0 0.0
      %696 = vmatprep.subr.mxu0 0.0
      %697 = vmatpush1.xpose.msra.mxu0 0.0
      %698 = vmatprep.subr.mxu0 0.0
      %699 = vmatpush1.xpose.msra.mxu0 0.0
      %700 = vmatprep.subr.mxu0 0.0
      %701 = vmatpush1.xpose.msra.mxu0 0.0
      %702 = vmatprep.subr.mxu0 0.0
      %703 = vmatpush1.xpose.msra.mxu0 0.0
      %704 = vmatprep.subr.mxu0 0.0
      %705 = vmatpush1.xpose.msra.mxu0 0.0
      %706 = vmatprep.subr.mxu0 0.0
      %707 = vmatpush1.xpose.msra.mxu0 0.0
      %708 = vmatprep.subr.mxu0 0.0
      %709 = vmatpush1.xpose.msra.mxu0 0.0
      %710 = vmatprep.subr.mxu0 0.0
      %711 = vmatpush1.xpose.msra.mxu0 0.0
      %712 = vmatprep.subr.mxu0 0.0
      %713 = vmatpush1.xpose.msra.mxu0 0.0
      %714 = vmatprep.subr.mxu0 0.0
      %715 = vmatpush1.xpose.msra.mxu0 0.0
      %716 = vmatprep.subr.mxu0 0.0
      %717 = vmatpush1.xpose.msra.mxu0 0.0
      %718 = vmatprep.subr.mxu0 0.0
      %719 = vmatpush1.xpose.msra.mxu0 0.0
      %720 = vmatprep.subr.mxu0 0.0
      %721 = vmatpush1.xpose.msra.mxu0 0.0
      %722 = vmatprep.subr.mxu0 0.0
      %723 = vmatpush1.xpose.msra.mxu0 0.0
      %724 = vmatprep.subr.mxu0 0.0
      %725 = vmatpush1.xpose.msra.mxu0 0.0
      %726 = vmatprep.subr.mxu0 0.0
      %727 = vmatpush1.xpose.msra.mxu0 0.0
      %728 = vmatprep.subr.mxu0 0.0
      %729 = vmatpush1.xpose.msra.mxu0 0.0
      %730 = vmatprep.mubr.f32.mxu0 0.0
      %731 = vmatmul.mubr.f32.gmra.mrb[0].mxu0 %v662
      %v732 = vpop.f32.mrb[0].mxu0
      %v733 = vadd.f32 %v160, %v732
      %v734 = vpop.f32.mrb[0].mxu0
      %735 = vdwg.mxu0
      %v736 = vsel %vm165, %v733, -inf
      %737 = vmax.xlane.f32.xlu0 %v736
      %v738 = vpop.xlane.xlu0 %737
      %v739 = vsub.f32 %v733, %v738
      %v740 = vmul.f32 %v739, 1.442695
      %v741 = vpow.pop %v740
      %v742 = vsel %vm165, %v741, 0.0
      %743 = vadd.xlane.f32.xlu0 %v742
      %v744 = vpop.xlane.xlu0 %743
      %v745 = vrcp.pop %v744
      %v746 = vmul.f32 %v741, %v745
      %747 = vrot.lane.b32.xlu0 %v153, 40
      %v748 = vpop.permute.xlu0 %747
      %v751 = vsel %vm165, %v746, 0
      %753 = vmatprep.subr.mxu0 0.0
      %754 = vmatpush1.msra.mxu0 %v748
      %755 = vmatprep.subr.mxu0 0.0
      %756 = vmatpush1.msra.mxu0 0.0
      %757 = vmatprep.subr.mxu0 0.0
      %758 = vmatpush1.msra.mxu0 0.0
      %759 = vmatprep.subr.mxu0 0.0
      %760 = vmatpush1.msra.mxu0 0.0
      %761 = vmatprep.subr.mxu0 0.0
      %762 = vmatpush1.msra.mxu0 0.0
      %763 = vmatprep.subr.mxu0 0.0
      %764 = vmatpush1.msra.mxu0 0.0
      %765 = vmatprep.subr.mxu0 0.0
      %766 = vmatpush1.msra.mxu0 0.0
      %767 = vmatprep.subr.mxu0 0.0
      %768 = vmatpush1.msra.mxu0 0.0
      %769 = vmatprep.subr.mxu0 0.0
      %770 = vmatpush1.msra.mxu0 0.0
      %771 = vmatprep.subr.mxu0 0.0
      %772 = vmatpush1.msra.mxu0 0.0
      %773 = vmatprep.subr.mxu0 0.0
      %774 = vmatpush1.msra.mxu0 0.0
      %775 = vmatprep.subr.mxu0 0.0
      %776 = vmatpush1.msra.mxu0 0.0
      %777 = vmatprep.subr.mxu0 0.0
      %778 = vmatpush1.msra.mxu0 0.0
      %779 = vmatprep.subr.mxu0 0.0
      %780 = vmatpush1.msra.mxu0 0.0
      %781 = vmatprep.subr.mxu0 0.0
      %782 = vmatpush1.msra.mxu0 0.0
      %783 = vmatprep.subr.mxu0 0.0
      %784 = vmatpush1.msra.mxu0 0.0
      %785 = vmatprep.subr.mxu0 0.0
      %786 = vmatpush1.msra.mxu0 0.0
      %787 = vmatprep.subr.mxu0 0.0
      %788 = vmatpush1.msra.mxu0 0.0
      %789 = vmatprep.subr.mxu0 0.0
      %790 = vmatpush1.msra.mxu0 0.0
      %791 = vmatprep.subr.mxu0 0.0
      %792 = vmatpush1.msra.mxu0 0.0
      %793 = vmatprep.subr.mxu0 0.0
      %794 = vmatpush1.msra.mxu0 0.0
      %795 = vmatprep.subr.mxu0 0.0
      %796 = vmatpush1.msra.mxu0 0.0
      %797 = vmatprep.subr.mxu0 0.0
      %798 = vmatpush1.msra.mxu0 0.0
      %799 = vmatprep.subr.mxu0 0.0
      %800 = vmatpush1.msra.mxu0 0.0
      %801 = vmatprep.subr.mxu0 0.0
      %802 = vmatpush1.msra.mxu0 0.0
      %803 = vmatprep.subr.mxu0 0.0
      %804 = vmatpush1.msra.mxu0 0.0
      %805 = vmatprep.subr.mxu0 0.0
      %806 = vmatpush1.msra.mxu0 0.0
      %807 = vmatprep.subr.mxu0 0.0
      %808 = vmatpush1.msra.mxu0 0.0
      %809 = vmatprep.subr.mxu0 0.0
      %810 = vmatpush1.msra.mxu0 0.0
      %811 = vmatprep.subr.mxu0 0.0
      %812 = vmatpush1.msra.mxu0 0.0
      %813 = vmatprep.subr.mxu0 0.0
      %814 = vmatpush1.msra.mxu0 0.0
      %815 = vmatprep.subr.mxu0 0.0
      %816 = vmatpush1.msra.mxu0 0.0
      %817 = vmatprep.mubr.f32.mxu0 0.0
      %818 = vmatmul.mubr.f32.gmra.mrb[0].mxu0 %v751
      %v819 = vpop.f32.mrb[0].mxu0
      %v820 = vadd.f32 0.0, %v819
      %v821 = vpop.f32.mrb[0].mxu0
      %822 = vdwg.mxu0
      %824 = vrot.lane.b32.xlu0 %v490, 8
      %v825 = vpop.permute.xlu0 %824
      %828 = vrot.lane.b32.xlu0 %v655, 16
      %v829 = vpop.permute.xlu0 %828
      %832 = vrot.lane.b32.xlu0 %v820, 24
      %v833 = vpop.permute.xlu0 %832
      %v835 = vsel %vm165, %v325, %v825
      %vm836 = vcmask 130048
      %v837 = vsel %vm836, %v835, %v829
      %vm838 = vcmask 195584
      %v839 = vsel %vm838, %v837, %v833
      %vm840 = vcmask 261120
      %841 = vst.msk [vmem:[%s152] sm:$0xff] %vm840, %v839
      %p842 = scmp.lt.s32.totalorder %s13, 2
      %s843 = scalar_select %p842, %s13, 2
      %s844 = smul.addr %s843, 8
      %s845 = scalar_lea.vmem %s2, %s844
      // Predicated region
      $region29: #{clip_forward.75} parent=27 // pred_check
        %p846 = pneg %p83
      $region30: #{clip_forward.75} parent=27 // pred_check_branch
        %848 = sbr.rel (%p846) target = $region32
      $region31: #{clip_forward.75} parent=27 // pred_region
        _
      $region32: #{clip_forward.75} parent=27 // pred_fallthru
        _
    $region28: #{clip_forward.75} parent=5 // pred_fallthru
      _
    %p849 = scmp.le.s32.totalorder 2, %s8
    // Predicated region
    $region33: #{clip_forward.75} parent=5 // pred_check
      %p850 = pneg %p849
    $region34: #{clip_forward.75} parent=5 // pred_check_branch
      %852 = sbr.rel (%p850) target = $region36
    $region35: #{clip_forward.75} parent=5 // pred_region
      %s853 = ssub.s32 %s8, 2
      // Predicated region
      $region37: #{clip_forward.75} parent=35 // pred_check
        %p854 = pneg %p89
      $region38: #{clip_forward.75} parent=35 // pred_check_branch
        %856 = sbr.rel (%p854) target = $region40
      $region39: #{clip_forward.75} parent=35 // pred_region
        %p857 = scmp.lt.s32.totalorder %s14, 2
        %s858 = scalar_select %p857, %s14, 2
        %s859 = smul.addr %s858, 8
        %s860 = scalar_lea.vmem %s2, %s859
      $region40: #{clip_forward.75} parent=35 // pred_fallthru
        _
    $region36: #{clip_forward.75} parent=5 // pred_fallthru
      _
  $region6: #{clip_forward.75} parent=0 // loop_footer
    %s12 = sadd.s32 1, %s8
  $region7: #{clip_forward.75} parent=0 // loop_footer_branch
    %7 = sbr.rel target = $region3
  $region8: #{clip_forward.75} parent=0 // loop_exit
    _

// kernel: clip_forward.78
$region0: #{clip_forward.78}
  #allocation0 [shape = 'u32[]', space=smem, size = 0x4, offset = 0x4, fixed_abs, tag = 'smem constant byte address 0x4 - core index']
  #allocation1 [shape = 'u32[144,128]{1,0:T(1,128)}', space=vmem, size = 0x12000, scoped, tag = 'internal scratch']
  #allocation2 [shape = 'f32[24,32]{1,0:T(8,128)}', space=vmem, size = 0x3000, scoped, tag = 'scratch operand']
  %s0 = inlined_call_operand.vmem [shape: f32[24,128], index: 0, kind: input, shape index: {}]
  %s1 = inlined_call_operand.vmem [shape: f32[128,32], index: 1, kind: input, shape index: {}]
  %s2 = inlined_call_operand.vmem [shape: f32[1,32], index: 2, kind: input, shape index: {}]
  %s3 = inlined_call_operand.vmem [shape: f32[24,32], index: 3, kind: output, shape index: {}]
  %s4 = sld [smem:[#allocation0]]
  $region30: #{clip_forward.78} parent=0
    _
  %s6 = ssub.s32 1, %s4
  %s7 = scalar_select 0, %s6, %s4
  // Predicated region
  $region2: #{clip_forward.78} parent=0 // pred_check
    _
  $region3: #{clip_forward.78} parent=0 // pred_check_branch
    %9 = sbr.rel (0) target = $region5
  $region4: #{clip_forward.78} parent=0 // pred_region
    _
  $region5: #{clip_forward.78} parent=0 // pred_fallthru
    _
  // Predicated region
  $region6: #{clip_forward.78} parent=0 // pred_check
    _
  $region7: #{clip_forward.78} parent=0 // pred_check_branch
    %11 = sbr.rel (0) target = $region9
  $region8: #{clip_forward.78} parent=0 // pred_region
    _
  $region9: #{clip_forward.78} parent=0 // pred_fallthru
    _
  // Predicated region
  $region10: #{clip_forward.78} parent=0 // pred_check
    _
  $region11: #{clip_forward.78} parent=0 // pred_check_branch
    %13 = sbr.rel (0) target = $region13
  $region12: #{clip_forward.78} parent=0 // pred_region
    _
  $region13: #{clip_forward.78} parent=0 // pred_fallthru
    _
  %p14 = scmp.eq.s32.totalorder 0, 0
  // Predicated region
  $region14: #{clip_forward.78} parent=0 // pred_check
    %p15 = pneg %p14
  $region15: #{clip_forward.78} parent=0 // pred_check_branch
    %17 = sbr.rel (%p15) target = $region17
  $region16: #{clip_forward.78} parent=0 // pred_region
    %vm18 = vcmask 261120
    %19 = vst.msk [vmem:[#allocation2] sm:$0xff] %vm18, 0.0
    %20 = vst.msk [vmem:[#allocation2 + $0x8] sm:$0xff] %vm18, 0.0
    %21 = vst.msk [vmem:[#allocation2 + $0x10] sm:$0xff] %vm18, 0.0
  $region17: #{clip_forward.78} parent=0 // pred_fallthru
    _
  %v22 = vld [vmem:[#allocation2] sm:$0xff]
  %v23 = vld [vmem:[#allocation2 + $0x8] sm:$0xff]
  %v24 = vld [vmem:[#allocation2 + $0x10] sm:$0xff]
  %v25 = vld [vmem:[%s0] sm:$0xff]
  %v26 = vld [vmem:[%s0 + $0x8] sm:$0xff]
  %v27 = vld [vmem:[%s0 + $0x10] sm:$0xff]
  %v28 = vld [vmem:[%s1] sm:$0xff]
  %v29 = vld [vmem:[%s1 + $0x8] sm:$0xff]
  %v30 = vld [vmem:[%s1 + $0x10] sm:$0xff]
  %v31 = vld [vmem:[%s1 + $0x18] sm:$0xff]
  %v32 = vld [vmem:[%s1 + $0x20] sm:$0xff]
  %v33 = vld [vmem:[%s1 + $0x28] sm:$0xff]
  %v34 = vld [vmem:[%s1 + $0x30] sm:$0xff]
  %v35 = vld [vmem:[%s1 + $0x38] sm:$0xff]
  %v36 = vld [vmem:[%s1 + $0x40] sm:$0xff]
  %v37 = vld [vmem:[%s1 + $0x48] sm:$0xff]
  %v38 = vld [vmem:[%s1 + $0x50] sm:$0xff]
  %v39 = vld [vmem:[%s1 + $0x58] sm:$0xff]
  %v40 = vld [vmem:[%s1 + $0x60] sm:$0xff]
  %v41 = vld [vmem:[%s1 + $0x68] sm:$0xff]
  %v42 = vld [vmem:[%s1 + $0x70] sm:$0xff]
  %v43 = vld [vmem:[%s1 + $0x78] sm:$0xff]
  %44 = vmatprep.subr.mxu0 0.0
  %45 = vmatpush1.msra.mxu0 %v28
  %46 = vmatprep.subr.mxu0 0.0
  %47 = vmatpush1.msra.mxu0 %v29
  %48 = vmatprep.subr.mxu0 0.0
  %49 = vmatpush1.msra.mxu0 %v30
  %50 = vmatprep.subr.mxu0 0.0
  %51 = vmatpush1.msra.mxu0 %v31
  %52 = vmatprep.subr.mxu0 0.0
  %53 = vmatpush1.msra.mxu0 %v32
  %54 = vmatprep.subr.mxu0 0.0
  %55 = vmatpush1.msra.mxu0 %v33
  %56 = vmatprep.subr.mxu0 0.0
  %57 = vmatpush1.msra.mxu0 %v34
  %58 = vmatprep.subr.mxu0 0.0
  %59 = vmatpush1.msra.mxu0 %v35
  %60 = vmatprep.subr.mxu0 0.0
  %61 = vmatpush1.msra.mxu0 %v36
  %62 = vmatprep.subr.mxu0 0.0
  %63 = vmatpush1.msra.mxu0 %v37
  %64 = vmatprep.subr.mxu0 0.0
  %65 = vmatpush1.msra.mxu0 %v38
  %66 = vmatprep.subr.mxu0 0.0
  %67 = vmatpush1.msra.mxu0 %v39
  %68 = vmatprep.subr.mxu0 0.0
  %69 = vmatpush1.msra.mxu0 %v40
  %70 = vmatprep.subr.mxu0 0.0
  %71 = vmatpush1.msra.mxu0 %v41
  %72 = vmatprep.subr.mxu0 0.0
  %73 = vmatpush1.msra.mxu0 %v42
  %74 = vmatprep.subr.mxu0 0.0
  %75 = vmatpush1.msra.mxu0 %v43
  %76 = vmatprep.subr.mxu0 0.0
  %77 = vmatpush1.msra.mxu0 0.0
  %78 = vmatprep.subr.mxu0 0.0
  %79 = vmatpush1.msra.mxu0 0.0
  %80 = vmatprep.subr.mxu0 0.0
  %81 = vmatpush1.msra.mxu0 0.0
  %82 = vmatprep.subr.mxu0 0.0
  %83 = vmatpush1.msra.mxu0 0.0
  %84 = vmatprep.subr.mxu0 0.0
  %85 = vmatpush1.msra.mxu0 0.0
  %86 = vmatprep.subr.mxu0 0.0
  %87 = vmatpush1.msra.mxu0 0.0
  %88 = vmatprep.subr.mxu0 0.0
  %89 = vmatpush1.msra.mxu0 0.0
  %90 = vmatprep.subr.mxu0 0.0
  %91 = vmatpush1.msra.mxu0 0.0
  %92 = vmatprep.subr.mxu0 0.0
  %93 = vmatpush1.msra.mxu0 0.0
  %94 = vmatprep.subr.mxu0 0.0
  %95 = vmatpush1.msra.mxu0 0.0
  %96 = vmatprep.subr.mxu0 0.0
  %97 = vmatpush1.msra.mxu0 0.0
  %98 = vmatprep.subr.mxu0 0.0
  %99 = vmatpush1.msra.mxu0 0.0
  %100 = vmatprep.subr.mxu0 0.0
  %101 = vmatpush1.msra.mxu0 0.0
  %102 = vmatprep.subr.mxu0 0.0
  %103 = vmatpush1.msra.mxu0 0.0
  %104 = vmatprep.subr.mxu0 0.0
  %105 = vmatpush1.msra.mxu0 0.0
  %106 = vmatprep.subr.mxu0 0.0
  %107 = vmatpush1.msra.mxu0 0.0
  %108 = vmatprep.mubr.f32.mxu0 0.0
  %109 = vmatmul.mubr.f32.gmra.mrb[0].mxu0 %v25
  %v110 = vpop.f32.mrb[0].mxu0
  %v111 = vadd.f32 0.0, %v110
  %v112 = vpop.f32.mrb[0].mxu0
  %113 = vmatprep.mubr.f32.mxu0 0.0
  %114 = vmatmul.mubr.f32.gmra.mrb[0].mxu0 %v26
  %v115 = vpop.f32.mrb[0].mxu0
  %v116 = vadd.f32 0.0, %v115
  %v117 = vpop.f32.mrb[0].mxu0
  %118 = vmatprep.mubr.f32.mxu0 0.0
  %119 = vmatmul.mubr.f32.gmra.mrb[0].mxu0 %v27
  %v120 = vpop.f32.mrb[0].mxu0
  %v121 = vadd.f32 0.0, %v120
  %v122 = vpop.f32.mrb[0].mxu0
  %123 = vdwg.mxu0
  %v124 = vadd.f32 %v22, %v111
  %v125 = vadd.f32 %v23, %v116
  %v126 = vadd.f32 %v24, %v121
  %vm127 = vcmask 261120
  %128 = vst.msk [vmem:[#allocation2] sm:$0xff] %vm127, %v124
  %129 = vst.msk [vmem:[#allocation2 + $0x8] sm:$0xff] %vm127, %v125
  %130 = vst.msk [vmem:[#allocation2 + $0x10] sm:$0xff] %vm127, %v126
  // Predicated region
  $region18: #{clip_forward.78} parent=0 // pred_check
    %p131 = pneg %p14
  $region19: #{clip_forward.78} parent=0 // pred_check_branch
    %133 = sbr.rel (%p131) target = $region21
  $region20: #{clip_forward.78} parent=0 // pred_region
    %v134 = vld [vmem:[#allocation2] sm:$0xff]
    %v135 = vld [vmem:[#allocation2 + $0x8] sm:$0xff]
    %v136 = vld [vmem:[#allocation2 + $0x10] sm:$0xff]
    %v137 = vld [vmem:[%s2] sm:$0x1]
    %v139 = vlaneseq
    %v140 = vshrl.u32 %v139, 7
    %v141 = vsub.s32 0, %v140
    %v142 = vrot.slane %v137, %v141
    %v144 = vadd.f32 %v134, %v142
    %v145 = vadd.f32 %v135, %v142
    %v146 = vadd.f32 %v136, %v142
    %147 = vst.msk [vmem:[%s3] sm:$0xff] %vm127, %v144
    %148 = vst.msk [vmem:[%s3 + $0x8] sm:$0xff] %vm127, %v145
    %149 = vst.msk [vmem:[%s3 + $0x10] sm:$0xff] %vm127, %v146
  $region21: #{clip_forward.78} parent=0 // pred_fallthru
    _
  // Predicated region
  $region22: #{clip_forward.78} parent=0 // pred_check
    _
  $region23: #{clip_forward.78} parent=0 // pred_check_branch
    %151 = sbr.rel (0) target = $region25
  $region24: #{clip_forward.78} parent=0 // pred_region
    _
  $region25: #{clip_forward.78} parent=0 // pred_fallthru
    _
  // Predicated region
  $region26: #{clip_forward.78} parent=0 // pred_check
    _
  $region27: #{clip_forward.78} parent=0 // pred_check_branch
    %153 = sbr.rel (0) target = $region29
  $region28: #{clip_forward.78} parent=0 // pred_region
    _
  $region29: #{clip_forward.78} parent=0 // pred_fallthru
    _

// kernel: clip_forward.85
$region0: #{clip_forward.85}
  #allocation0 [shape = 'u32[]', space=smem, size = 0x4, offset = 0x4, fixed_abs, tag = 'smem constant byte address 0x4 - core index']
  #allocation1 [shape = 'u32[144,128]{1,0:T(1,128)}', space=vmem, size = 0x12000, scoped, tag = 'internal scratch']
  %s0 = inlined_call_operand.vmem [shape: f32[2,16], index: 0, kind: input, shape index: {}]
  %s1 = inlined_call_operand.vmem [shape: f32[3,16], index: 1, kind: input, shape index: {}]
  %s2 = inlined_call_operand.hbm [shape: f32[2,3], index: 2, kind: output, shape index: {}]
  %s3 = sld [smem:[#allocation0]]
  $region18: #{clip_forward.85} parent=0
    _
  %s5 = ssub.s32 1, %s3
  %s6 = scalar_select 0, %s5, %s3
  $region1: #{clip_forward.85} parent=0
    #allocation2 [shape = 'u8[1024]{0}', space=vmem, size = 0x400, scoped, tag = 'output window, operand 0, single buffered']
    #allocation3 [shape = 's32[1]{0}', space=sflag, size = 0x4, scoped, tag = 'scoped memory for clip_forward.85']
    %7 = vsyncpa [#allocation3], 0
    // Predicated region
    $region2: #{clip_forward.85} parent=1 // pred_check
      _
    $region3: #{clip_forward.85} parent=1 // pred_check_branch
      %9 = sbr.rel (0) target = $region5
    $region4: #{clip_forward.85} parent=1 // pred_region
      _
    $region5: #{clip_forward.85} parent=1 // pred_fallthru
      _
    // Predicated region
    $region6: #{clip_forward.85} parent=1 // pred_check
      _
    $region7: #{clip_forward.85} parent=1 // pred_check_branch
      %11 = sbr.rel (0) target = $region9
    $region8: #{clip_forward.85} parent=1 // pred_region
      _
    $region9: #{clip_forward.85} parent=1 // pred_fallthru
      _
    %v12 = vld [vmem:[%s0] sm:$0x3]
    %v13 = vld [vmem:[%s1] sm:$0x7]
    %vm14 = vcmask 130048
    %v16 = vsel %vm14, %v12, 0
    %v19 = vsel %vm14, %v13, 0
    %21 = vmatprep.subr.mxu0 0.0
    %22 = vmatpush1.xpose.msra.mxu0 %v19
    %23 = vmatprep.subr.mxu0 0.0
    %24 = vmatpush1.xpose.msra.mxu0 0.0
    %25 = vmatprep.subr.mxu0 0.0
    %26 = vmatpush1.xpose.msra.mxu0 0.0
    %27 = vmatprep.subr.mxu0 0.0
    %28 = vmatpush1.xpose.msra.mxu0 0.0
    %29 = vmatprep.subr.mxu0 0.0
    %30 = vmatpush1.xpose.msra.mxu0 0.0
    %31 = vmatprep.subr.mxu0 0.0
    %32 = vmatpush1.xpose.msra.mxu0 0.0
    %33 = vmatprep.subr.mxu0 0.0
    %34 = vmatpush1.xpose.msra.mxu0 0.0
    %35 = vmatprep.subr.mxu0 0.0
    %36 = vmatpush1.xpose.msra.mxu0 0.0
    %37 = vmatprep.subr.mxu0 0.0
    %38 = vmatpush1.xpose.msra.mxu0 0.0
    %39 = vmatprep.subr.mxu0 0.0
    %40 = vmatpush1.xpose.msra.mxu0 0.0
    %41 = vmatprep.subr.mxu0 0.0
    %42 = vmatpush1.xpose.msra.mxu0 0.0
    %43 = vmatprep.subr.mxu0 0.0
    %44 = vmatpush1.xpose.msra.mxu0 0.0
    %45 = vmatprep.subr.mxu0 0.0
    %46 = vmatpush1.xpose.msra.mxu0 0.0
    %47 = vmatprep.subr.mxu0 0.0
    %48 = vmatpush1.xpose.msra.mxu0 0.0
    %49 = vmatprep.subr.mxu0 0.0
    %50 = vmatpush1.xpose.msra.mxu0 0.0
    %51 = vmatprep.subr.mxu0 0.0
    %52 = vmatpush1.xpose.msra.mxu0 0.0
    %53 = vmatprep.subr.mxu0 0.0
    %54 = vmatpush1.xpose.msra.mxu0 0.0
    %55 = vmatprep.subr.mxu0 0.0
    %56 = vmatpush1.xpose.msra.mxu0 0.0
    %57 = vmatprep.subr.mxu0 0.0
    %58 = vmatpush1.xpose.msra.mxu0 0.0
    %59 = vmatprep.subr.mxu0 0.0
    %60 = vmatpush1.xpose.msra.mxu0 0.0
    %61 = vmatprep.subr.mxu0 0.0
    %62 = vmatpush1.xpose.msra.mxu0 0.0
    %63 = vmatprep.subr.mxu0 0.0
    %64 = vmatpush1.xpose.msra.mxu0 0.0
    %65 = vmatprep.subr.mxu0 0.0
    %66 = vmatpush1.xpose.msra.mxu0 0.0
    %67 = vmatprep.subr.mxu0 0.0
    %68 = vmatpush1.xpose.msra.mxu0 0.0
    %69 = vmatprep.subr.mxu0 0.0
    %70 = vmatpush1.xpose.msra.mxu0 0.0
    %71 = vmatprep.subr.mxu0 0.0
    %72 = vmatpush1.xpose.msra.mxu0 0.0
    %73 = vmatprep.subr.mxu0 0.0
    %74 = vmatpush1.xpose.msra.mxu0 0.0
    %75 = vmatprep.subr.mxu0 0.0
    %76 = vmatpush1.xpose.msra.mxu0 0.0
    %77 = vmatprep.subr.mxu0 0.0
    %78 = vmatpush1.xpose.msra.mxu0 0.0
    %79 = vmatprep.subr.mxu0 0.0
    %80 = vmatpush1.xpose.msra.mxu0 0.0
    %81 = vmatprep.subr.mxu0 0.0
    %82 = vmatpush1.xpose.msra.mxu0 0.0
    %83 = vmatprep.subr.mxu0 0.0
    %84 = vmatpush1.xpose.msra.mxu0 0.0
    %85 = vmatprep.mubr.f32.mxu0 0.0
    %86 = vmatmul.mubr.f32.gmra.mrb[0].mxu0 %v16
    %v87 = vpop.f32.mrb[0].mxu0
    %v88 = vadd.f32 0.0, %v87
    %v89 = vpop.f32.mrb[0].mxu0
    %90 = vdwg.mxu0
    %v91 = vmul.f32 %v12, %v12
    %vm92 = vcmask 123904
    %v93 = vsel %vm92, %v91, 0.0
    %94 = vadd.xlane.f32.xlu0 %v93
    %v95 = vpop.xlane.xlu0 %94
    %v96 = vrsqrt.pop %v95
    %v97 = vmul.f32 %v95, %v96
    %vm98 = vcmp.eq.f32.partialorder %v95, inf
    %v99 = vsel %vm98, %v95, %v97
    %vm100 = vcmp.eq.f32.partialorder %v95, 0.0
    %v101 = vand.u32 %v95, 2147483648
    %v102 = vsel %vm100, %v101, %v99
    %v103 = vmul.f32 %v13, %v13
    %vm104 = vcmask 124928
    %v105 = vsel %vm104, %v103, 0.0
    %106 = vadd.xlane.f32.xlu0 %v105
    %v107 = vpop.xlane.xlu0 %106
    %v108 = vrsqrt.pop %v107
    %v109 = vmul.f32 %v107, %v108
    %vm110 = vcmp.eq.f32.partialorder %v107, inf
    %v111 = vsel %vm110, %v107, %v109
    %vm112 = vcmp.eq.f32.partialorder %v107, 0.0
    %v113 = vand.u32 %v107, 2147483648
    %v114 = vsel %vm112, %v113, %v111
    %115 = vxpose.xlu0.b32.start [1/16] %v114, 128
    %116 = vxpose.xlu0.b32.cont [2/16] 0.0, 128
    %117 = vxpose.xlu0.b32.cont [3/16] 0.0, 128
    %118 = vxpose.xlu0.b32.cont [4/16] 0.0, 128
    %119 = vxpose.xlu0.b32.cont [5/16] 0.0, 128
    %120 = vxpose.xlu0.b32.cont [6/16] 0.0, 128
    %121 = vxpose.xlu0.b32.cont [7/16] 0.0, 128
    %122 = vxpose.xlu0.b32.cont [8/16] 0.0, 128
    %123 = vxpose.xlu0.b32.cont [9/16] 0.0, 128
    %124 = vxpose.xlu0.b32.cont [10/16] 0.0, 128
    %125 = vxpose.xlu0.b32.cont [11/16] 0.0, 128
    %126 = vxpose.xlu0.b32.cont [12/16] 0.0, 128
    %127 = vxpose.xlu0.b32.cont [13/16] 0.0, 128
    %128 = vxpose.xlu0.b32.cont [14/16] 0.0, 128
    %129 = vxpose.xlu0.b32.cont [15/16] 0.0, 128
    %130 = vxpose.xlu0.b32.end [16/16] 0.0, 128
    %v131 = vpop.trf.xlu0
    %v132 = vpop.trf.xlu0
    %v133 = vpop.trf.xlu0
    %v134 = vpop.trf.xlu0
    %v135 = vpop.trf.xlu0
    %v136 = vpop.trf.xlu0
    %v137 = vpop.trf.xlu0
    %v138 = vpop.trf.xlu0
    %v139 = vpop.trf.xlu0
    %v140 = vpop.trf.xlu0
    %v141 = vpop.trf.xlu0
    %v142 = vpop.trf.xlu0
    %v143 = vpop.trf.xlu0
    %v144 = vpop.trf.xlu0
    %v145 = vpop.trf.xlu0
    %v146 = vpop.trf.xlu0
    %v147 = vlaneseq
    %v148 = vshrl.u32 %v147, 7
    %v149 = vsub.s32 0, %v148
    %v150 = vrot.slane %v131, %v149
    %v151 = vmul.f32 %v102, %v150
    %v152 = vmax.f32 %v151, 1e-08
    %v153 = vrcp.pop %v152
    %v154 = vmul.f32 %v88, %v153
    %vm155 = vcmask 17408
    %156 = vst.msk [vmem:[#allocation2] sm:$0x3] %vm155, %v154
    // Predicated region
    $region10: #{clip_forward.85} parent=1 // pred_check
      _
    $region11: #{clip_forward.85} parent=1 // pred_check_branch
      %158 = sbr.rel (0) target = $region13
    $region12: #{clip_forward.85} parent=1 // pred_region
      %s160 = ssub.s32 32, 32
      %161 = vsyncadd [#allocation3], %s160
      %s163 = sshll.u32 [#allocation2], 4
      %s164 = int_to_ptr.vmem [resolvable:$true] %s163
      %166 = dma.vmem_to_hbm [thread:$0]  %s164, 32, %s2, [#allocation3]
    $region13: #{clip_forward.85} parent=1 // pred_fallthru
      _
    // Predicated region
    $region14: #{clip_forward.85} parent=1 // pred_check
      _
    $region15: #{clip_forward.85} parent=1 // pred_check_branch
      %168 = sbr.rel (0) target = $region17
    $region16: #{clip_forward.85} parent=1 // pred_region
      %169 = dma.done [#allocation3], 32
    $region17: #{clip_forward.85} parent=1 // pred_fallthru
      _
    %170 = vsyncpa [#allocation3], 1

// kernel: clip_forward.84
$region0: #{clip_forward.84}
  #allocation0 [shape = 'u32[]', space=smem, size = 0x4, offset = 0x4, fixed_abs, tag = 'smem constant byte address 0x4 - core index']
  #allocation1 [shape = 'u32[144,128]{1,0:T(1,128)}', space=vmem, size = 0x12000, scoped, tag = 'internal scratch']
  %s0 = inlined_call_operand.vmem [shape: f32[3,32], index: 0, kind: input, shape index: {}]
  %s1 = inlined_call_operand.vmem [shape: f32[1,32], index: 1, kind: input, shape index: {}]
  %s2 = inlined_call_operand.vmem [shape: f32[1,32], index: 2, kind: input, shape index: {}]
  %s3 = inlined_call_operand.vmem [shape: f32[32,16], index: 3, kind: input, shape index: {}]
  %s4 = inlined_call_operand.vmem [shape: f32[1,16], index: 4, kind: input, shape index: {}]
  %s5 = inlined_call_operand.vmem [shape: f32[3,16], index: 5, kind: output, shape index: {}]
  %s6 = sld [smem:[#allocation0]]
  $region30: #{clip_forward.84} parent=0
    _
  %s8 = ssub.s32 1, %s6
  %s9 = scalar_select 0, %s8, %s6
  // Predicated region
  $region2: #{clip_forward.84} parent=0 // pred_check
    _
  $region3: #{clip_forward.84} parent=0 // pred_check_branch
    %11 = sbr.rel (0) target = $region5
  $region4: #{clip_forward.84} parent=0 // pred_region
    _
  $region5: #{clip_forward.84} parent=0 // pred_fallthru
    _
  // Predicated region
  $region6: #{clip_forward.84} parent=0 // pred_check
    _
  $region7: #{clip_forward.84} parent=0 // pred_check_branch
    %13 = sbr.rel (0) target = $region9
  $region8: #{clip_forward.84} parent=0 // pred_region
    _
  $region9: #{clip_forward.84} parent=0 // pred_fallthru
    _
  // Predicated region
  $region10: #{clip_forward.84} parent=0 // pred_check
    _
  $region11: #{clip_forward.84} parent=0 // pred_check_branch
    %15 = sbr.rel (0) target = $region13
  $region12: #{clip_forward.84} parent=0 // pred_region
    _
  $region13: #{clip_forward.84} parent=0 // pred_fallthru
    _
  // Predicated region
  $region14: #{clip_forward.84} parent=0 // pred_check
    _
  $region15: #{clip_forward.84} parent=0 // pred_check_branch
    %17 = sbr.rel (0) target = $region17
  $region16: #{clip_forward.84} parent=0 // pred_region
    _
  $region17: #{clip_forward.84} parent=0 // pred_fallthru
    _
  // Predicated region
  $region18: #{clip_forward.84} parent=0 // pred_check
    _
  $region19: #{clip_forward.84} parent=0 // pred_check_branch
    %19 = sbr.rel (0) target = $region21
  $region20: #{clip_forward.84} parent=0 // pred_region
    _
  $region21: #{clip_forward.84} parent=0 // pred_fallthru
    _
  %v20 = vld [vmem:[%s0] sm:$0x7]
  %v21 = vld [vmem:[%s1] sm:$0x1]
  %v22 = vld [vmem:[%s2] sm:$0x1]
  %vm23 = vcmask 256000
  %v24 = vsel %vm23, %v20, 0.0
  %25 = vadd.xlane.f32.xlu0 %v24
  %v26 = vpop.xlane.xlu0 %25
  %v27 = vrcp.pop 32.0
  %v28 = vmul.f32 %v26, %v27
  %v29 = vsub.f32 %v20, %v28
  %v30 = vmul.f32 %v29, %v29
  %v31 = vsel %vm23, %v30, 0.0
  %32 = vadd.xlane.f32.xlu0 %v31
  %v33 = vpop.xlane.xlu0 %32
  %v34 = vmul.f32 %v33, %v27
  %v35 = vadd.f32 %v34, 1e-05
  %v36 = vrsqrt.pop %v35
  %v37 = vmul.f32 %v29, %v36
  %v39 = vlaneseq
  %v40 = vshrl.u32 %v39, 7
  %v41 = vsub.s32 0, %v40
  %v42 = vrot.slane %v21, %v41
  %v44 = vmul.f32 %v37, %v42
  %v46 = vlaneseq
  %v47 = vshrl.u32 %v46, 7
  %v48 = vsub.s32 0, %v47
  %v49 = vrot.slane %v22, %v48
  %v51 = vadd.f32 %v44, %v49
  %v52 = vld [vmem:[%s3] sm:$0xff]
  %v53 = vld [vmem:[%s3 + $0x8] sm:$0xff]
  %v54 = vld [vmem:[%s3 + $0x10] sm:$0xff]
  %v55 = vld [vmem:[%s3 + $0x18] sm:$0xff]
  %v56 = vld [vmem:[%s4] sm:$0x1]
  %v58 = vlaneseq
  %v59 = vshrl.u32 %v58, 7
  %v60 = vsub.s32 0, %v59
  %v61 = vrot.slane %v56, %v60
  %vm63 = vcmask 261120
  %v65 = vsel %vm63, %v51, 0
  %67 = vmatprep.subr.mxu0 0.0
  %68 = vmatpush1.msra.mxu0 %v52
  %69 = vmatprep.subr.mxu0 0.0
  %70 = vmatpush1.msra.mxu0 %v53
  %71 = vmatprep.subr.mxu0 0.0
  %72 = vmatpush1.msra.mxu0 %v54
  %73 = vmatprep.subr.mxu0 0.0
  %74 = vmatpush1.msra.mxu0 %v55
  %75 = vmatprep.subr.mxu0 0.0
  %76 = vmatpush1.msra.mxu0 0.0
  %77 = vmatprep.subr.mxu0 0.0
  %78 = vmatpush1.msra.mxu0 0.0
  %79 = vmatprep.subr.mxu0 0.0
  %80 = vmatpush1.msra.mxu0 0.0
  %81 = vmatprep.subr.mxu0 0.0
  %82 = vmatpush1.msra.mxu0 0.0
  %83 = vmatprep.subr.mxu0 0.0
  %84 = vmatpush1.msra.mxu0 0.0
  %85 = vmatprep.subr.mxu0 0.0
  %86 = vmatpush1.msra.mxu0 0.0
  %87 = vmatprep.subr.mxu0 0.0
  %88 = vmatpush1.msra.mxu0 0.0
  %89 = vmatprep.subr.mxu0 0.0
  %90 = vmatpush1.msra.mxu0 0.0
  %91 = vmatprep.subr.mxu0 0.0
  %92 = vmatpush1.msra.mxu0 0.0
  %93 = vmatprep.subr.mxu0 0.0
  %94 = vmatpush1.msra.mxu0 0.0
  %95 = vmatprep.subr.mxu0 0.0
  %96 = vmatpush1.msra.mxu0 0.0
  %97 = vmatprep.subr.mxu0 0.0
  %98 = vmatpush1.msra.mxu0 0.0
  %99 = vmatprep.subr.mxu0 0.0
  %100 = vmatpush1.msra.mxu0 0.0
  %101 = vmatprep.subr.mxu0 0.0
  %102 = vmatpush1.msra.mxu0 0.0
  %103 = vmatprep.subr.mxu0 0.0
  %104 = vmatpush1.msra.mxu0 0.0
  %105 = vmatprep.subr.mxu0 0.0
  %106 = vmatpush1.msra.mxu0 0.0
  %107 = vmatprep.subr.mxu0 0.0
  %108 = vmatpush1.msra.mxu0 0.0
  %109 = vmatprep.subr.mxu0 0.0
  %110 = vmatpush1.msra.mxu0 0.0
  %111 = vmatprep.subr.mxu0 0.0
  %112 = vmatpush1.msra.mxu0 0.0
  %113 = vmatprep.subr.mxu0 0.0
  %114 = vmatpush1.msra.mxu0 0.0
  %115 = vmatprep.subr.mxu0 0.0
  %116 = vmatpush1.msra.mxu0 0.0
  %117 = vmatprep.subr.mxu0 0.0
  %118 = vmatpush1.msra.mxu0 0.0
  %119 = vmatprep.subr.mxu0 0.0
  %120 = vmatpush1.msra.mxu0 0.0
  %121 = vmatprep.subr.mxu0 0.0
  %122 = vmatpush1.msra.mxu0 0.0
  %123 = vmatprep.subr.mxu0 0.0
  %124 = vmatpush1.msra.mxu0 0.0
  %125 = vmatprep.subr.mxu0 0.0
  %126 = vmatpush1.msra.mxu0 0.0
  %127 = vmatprep.subr.mxu0 0.0
  %128 = vmatpush1.msra.mxu0 0.0
  %129 = vmatprep.subr.mxu0 0.0
  %130 = vmatpush1.msra.mxu0 0.0
  %131 = vmatprep.mubr.f32.mxu0 0.0
  %132 = vmatmul.mubr.f32.gmra.mrb[0].mxu0 %v65
  %v133 = vpop.f32.mrb[0].mxu0
  %v134 = vadd.f32 %v61, %v133
  %v135 = vpop.f32.mrb[0].mxu0
  %136 = vdwg.mxu0
  %vm137 = vcmask 124928
  %138 = vst.msk [vmem:[%s5] sm:$0x7] %vm137, %v134
  // Predicated region
  $region22: #{clip_forward.84} parent=0 // pred_check
    _
  $region23: #{clip_forward.84} parent=0 // pred_check_branch
    %140 = sbr.rel (0) target = $region25
  $region24: #{clip_forward.84} parent=0 // pred_region
    _
  $region25: #{clip_forward.84} parent=0 // pred_fallthru
    _
  // Predicated region
  $region26: #{clip_forward.84} parent=0 // pred_check
    _
  $region27: #{clip_forward.84} parent=0 // pred_check_branch
    %142 = sbr.rel (0) target = $region29
  $region28: #{clip_forward.84} parent=0 // pred_region
    _
  $region29: #{clip_forward.84} parent=0 // pred_fallthru
    _

</llo_original>
